<compile_context>
chip_gen: v7x
topology: tpu7x:2x2x1
jax: 0.10.0
libtpu: 0.0.40
codegen_flags: <defaults>
</compile_context>

<pallas_src>
import functools

import jax
import jax.numpy as jnp
import numpy as np
from jax.experimental import pallas as pl
from jax.experimental.pallas import tpu as pltpu


def _round_up(x, m):
    return (x + m - 1) // m * m


def _pick_time_chunk(T, max_chunk=16):
    """Largest chunk size <= max_chunk that divides T (falls back to 1)."""
    for tc in range(min(T, max_chunk), 0, -1):
        if T % tc == 0:
            return tc
    return 1


# ----------------------------------------------------------------------------
# Input-projection kernels (hoisted out of the recurrence).
# y = x @ W + b   /   y = x1 @ W1 + x2 @ W2 + b, row-tiled over M.
# Weights are already transposed, so no in-kernel transpose.
# ----------------------------------------------------------------------------
def _proj_kernel(x_ref, w_ref, b_ref, o_ref):
    o_ref[...] = (jnp.dot(x_ref[...], w_ref[...],
                          preferred_element_type=jnp.float32)
                  + b_ref[...])


def _dual_proj_kernel(x1_ref, w1_ref, x2_ref, w2_ref, b_ref, o_ref):
    # Consumes the previous layer's fwd/bwd outputs directly -> no concat copy.
    o_ref[...] = (jnp.dot(x1_ref[...], w1_ref[...], preferred_element_type=jnp.float32)
                  + jnp.dot(x2_ref[...], w2_ref[...], preferred_element_type=jnp.float32)
                  + b_ref[...])


def _row_tiled_proj(kernel, xs, ws, b, n_out, tm=512):
    """Row-tiled  y = sum_i xs[i] @ ws[i] + b,  y: (M, n_out) float32."""
    M = xs[0].shape[0]
    tm = min(tm, M)
    grid = (pl.cdiv(M, tm),)

    in_specs = []
    args = []
    for x, w in zip(xs, ws):
        in_specs.append(pl.BlockSpec((tm, x.shape[1]), lambda i: (i, 0)))
        in_specs.append(pl.BlockSpec((x.shape[1], n_out), lambda i: (0, 0)))
        args += [x, w]
    in_specs.append(pl.BlockSpec((1, n_out), lambda i: (0, 0)))
    args.append(b)

    return pl.pallas_call(
        kernel,
        out_shape=jax.ShapeDtypeStruct((M, n_out), jnp.float32),
        grid_spec=pltpu.PrefetchScalarGridSpec(
            num_scalar_prefetch=0,
            grid=grid,
            in_specs=in_specs,
            out_specs=pl.BlockSpec((tm, n_out), lambda i: (i, 0)),
        ),
        compiler_params=pltpu.CompilerParams(
            dimension_semantics=("parallel",)),
    )(*args)


# ----------------------------------------------------------------------------
# Fused bidirectional LSTM recurrence kernel.
# Grid iterates over time chunks; per chunk an unrolled static loop runs Tc
# steps of the forward direction (ascending time) and Tc steps of the backward
# direction (descending time, fed via a reversed index_map).
# Gate layout (columns of the 4*Hp pre-gate slab): [ i | f | o | g ], each Hp wide.
# ----------------------------------------------------------------------------
def _bilstm_chunk_kernel(pre_f_ref, pre_b_ref, whh_f_ref, whh_b_ref,
                         out_f_ref, out_b_ref,
                         hf, cf, hb, cb):
    t = pl.program_id(0)

    @pl.when(t == 0)
    def _():
        hf[...] = jnp.zeros_like(hf)
        cf[...] = jnp.zeros_like(cf)
        hb[...] = jnp.zeros_like(hb)
        cb[...] = jnp.zeros_like(cb)

    Tc = pre_f_ref.shape[0]
    Hp = hf.shape[-1]
    whh_f = whh_f_ref[...]        # (Hp, 4Hp), resident (constant index_map)
    whh_b = whh_b_ref[...]

    def cell(pre, h, c, whh):
        gates = pre + jnp.dot(h, whh, preferred_element_type=jnp.float32)
        sig = jax.nn.sigmoid(gates[:, :3 * Hp])        # i | f | o in one EUP slab
        i_g = sig[:, 0 * Hp:1 * Hp]
        f_g = sig[:, 1 * Hp:2 * Hp]
        o_g = sig[:, 2 * Hp:3 * Hp]
        g_g = jnp.tanh(gates[:, 3 * Hp:4 * Hp])
        c_new = f_g * c + i_g * g_g
        h_new = o_g * jnp.tanh(c_new)
        return h_new, c_new

    # Static Python loop = fully unrolled with static slice indices (Tc is small).
    for k in range(Tc):
        # forward direction: local step k (ascending global time)
        h_new, c_new = cell(pre_f_ref[k], hf[...], cf[...], whh_f)
        hf[...] = h_new
        cf[...] = c_new
        out_f_ref[k] = h_new

        # backward direction: local step Tc-1-k (descending global time;
        # this block is already the time-reversed chunk via its index_map)
        kb = Tc - 1 - k
        hb_new, cb_new = cell(pre_b_ref[kb], hb[...], cb[...], whh_b)
        hb[...] = hb_new
        cb[...] = cb_new
        out_b_ref[kb] = hb_new


def bilstm_layer(pre_all, whh_f, whh_b, T, Bp, Hp, time_chunk):
    """pre_all: (T, Bp, 8*Hp) pre-gates for both directions.

    Returns out_f, out_b: (T, Bp, Hp) each (padded hidden entries are zero).
    Final hiddens are out_f[T-1] and out_b[0]."""
    nchunks = T // time_chunk

    grid_spec = pltpu.PrefetchScalarGridSpec(
        num_scalar_prefetch=0,
        grid=(nchunks,),
        in_specs=[
            # forward pre-gates: chunk t, columns [0, 4Hp)
            pl.BlockSpec((time_chunk, Bp, 4 * Hp), lambda t: (t, 0, 0)),
            # backward pre-gates: reversed chunk order, columns [4Hp, 8Hp)
            pl.BlockSpec((time_chunk, Bp, 4 * Hp), lambda t: (nchunks - 1 - t, 0, 1)),
            pl.BlockSpec((Hp, 4 * Hp), lambda t: (0, 0)),   # W_hh fwd (resident)
            pl.BlockSpec((Hp, 4 * Hp), lambda t: (0, 0)),   # W_hh bwd (resident)
        ],
        out_specs=[
            pl.BlockSpec((time_chunk, Bp, Hp), lambda t: (t, 0, 0)),
            pl.BlockSpec((time_chunk, Bp, Hp), lambda t: (nchunks - 1 - t, 0, 0)),
        ],
        scratch_shapes=[
            pltpu.VMEM((Bp, Hp), jnp.float32),   # h fwd
            pltpu.VMEM((Bp, Hp), jnp.float32),   # c fwd
            pltpu.VMEM((Bp, Hp), jnp.float32),   # h bwd
            pltpu.VMEM((Bp, Hp), jnp.float32),   # c bwd
        ],
    )

    out_f, out_b = pl.pallas_call(
        _bilstm_chunk_kernel,
        out_shape=(
            jax.ShapeDtypeStruct((T, Bp, Hp), jnp.float32),
            jax.ShapeDtypeStruct((T, Bp, Hp), jnp.float32),
        ),
        grid_spec=grid_spec,
        compiler_params=pltpu.CompilerParams(
            dimension_semantics=("arbitrary",)),   # carried h/c state -> sequential
    )(pre_all, pre_all, whh_f, whh_b)              # same array, two column windows
    return out_f, out_b


# ----------------------------------------------------------------------------
# Parameter init (mimics PyTorch LSTM/Linear uniform(-1/sqrt(H), 1/sqrt(H)))
# ----------------------------------------------------------------------------
def init_params(key, vocab_size, embedding_dim, hidden_dim, output_dim, n_layers):
    params = {}
    k_emb, key = jax.random.split(key)
    params["embedding"] = jax.random.normal(
        k_emb, (vocab_size, embedding_dim), jnp.float32)

    bound = 1.0 / jnp.sqrt(hidden_dim)
    lstm_layers = []
    for layer in range(n_layers):
        in_size = embedding_dim if layer == 0 else 2 * hidden_dim
        dirs = []
        for _direction in range(2):   # forward, backward
            keys = jax.random.split(key, 5)
            key = keys[0]
            w_ih = jax.random.uniform(keys[1], (4 * hidden_dim, in_size),
                                      jnp.float32, -bound, bound)
            w_hh = jax.random.uniform(keys[2], (4 * hidden_dim, hidden_dim),
                                      jnp.float32, -bound, bound)
            b_ih = jax.random.uniform(keys[3], (4 * hidden_dim,),
                                      jnp.float32, -bound, bound)
            b_hh = jax.random.uniform(keys[4], (4 * hidden_dim,),
                                      jnp.float32, -bound, bound)
            dirs.append((w_ih, w_hh, b_ih, b_hh))
        lstm_layers.append(tuple(dirs))
    params["lstm"] = lstm_layers

    keys = jax.random.split(key, 3)
    fc_in = 2 * hidden_dim
    fc_bound = 1.0 / jnp.sqrt(fc_in)
    params["fc_w"] = jax.random.uniform(keys[1], (output_dim, fc_in),
                                        jnp.float32, -fc_bound, fc_bound)
    params["fc_b"] = jax.random.uniform(keys[2], (output_dim,),
                                        jnp.float32, -fc_bound, fc_bound)
    return params


# ----------------------------------------------------------------------------
# One-time host-side weight prep: transpose, reorder gates to (i, f, o, g),
# pad each gate block H -> Hp (multiple of 128), fuse both directions' input
# projections / biases into single (IN, 8*Hp) / (1, 8*Hp) tensors.
# Padded gate columns are all-zero, so padded hidden entries stay exactly 0.
# ----------------------------------------------------------------------------
def prepare_params(params, hidden_dim, n_layers):
    H = hidden_dim
    Hp = _round_up(H, 128)
    gate_order = (0, 1, 3, 2)          # PyTorch (i, f, g, o) -> kernel (i, f, o, g)

    def pack_gate_cols(m_t):
        # m_t: (rows, 4H) -> (rows, 4Hp), per-gate zero padding, sigmoid gates first.
        blocks = []
        for g in gate_order:
            blk = m_t[:, g * H:(g + 1) * H]
            blocks.append(jnp.pad(blk, ((0, 0), (0, Hp - H))))
        return jnp.concatenate(blocks, axis=1)

    layers = []
    for layer_idx in range(n_layers):
        w_in, whh, bias = [], [], []
        for (w_ih, w_hh, b_ih, b_hh) in params["lstm"][layer_idx]:
            w_in.append(pack_gate_cols(w_ih.T))                         # (IN, 4Hp)
            whh_t = pack_gate_cols(w_hh.T)                              # (H, 4Hp)
            whh.append(jnp.pad(whh_t, ((0, Hp - H), (0, 0))))           # (Hp, 4Hp)
            bias.append(pack_gate_cols((b_ih + b_hh).reshape(1, -1)))   # (1, 4Hp)

        entry = {"whh_f": whh[0], "whh_b": whh[1],
                 "b": jnp.concatenate(bias, axis=1)}                    # (1, 8Hp)
        if layer_idx == 0:
            entry["w_in"] = jnp.concatenate(w_in, axis=1)               # (E, 8Hp)
        else:
            # Layer input is [fwd hidden (padded to Hp) | bwd hidden (padded to Hp)]:
            # split the logical 2H rows into the two halves, pad each to Hp rows.
            entry["w_in_fhalf"] = jnp.concatenate(
                [jnp.pad(w[:H], ((0, Hp - H), (0, 0))) for w in w_in], axis=1)
            entry["w_in_bhalf"] = jnp.concatenate(
                [jnp.pad(w[H:], ((0, Hp - H), (0, 0))) for w in w_in], axis=1)
        layers.append(entry)

    return {"embedding": params["embedding"], "layers": layers,
            "fc_w": params["fc_w"], "fc_b": params["fc_b"]}


# ----------------------------------------------------------------------------
# Full forward pass (matches RNN.forward at eval time).
# ----------------------------------------------------------------------------
def rnn_forward(tokens, prepped, hidden_dim, n_layers):
    T, B = tokens.shape
    H = hidden_dim
    Hp = _round_up(H, 128)
    Bp = _round_up(B, 8)
    time_chunk = _pick_time_chunk(T)

    # Embedding lookup (gather) + dropout (identity at eval) kept in plain JAX glue.
    # TODO(synk): embedding gather left to XLA; a manual Pallas DMA-gather adds nothing here.
    tokens_p = jnp.pad(tokens, ((0, 0), (0, Bp - B)))       # pad batch (rows independent)
    embedded = prepped["embedding"][tokens_p]               # (T, Bp, E)
    E = embedded.shape[-1]

    layers = prepped["layers"]

    # Layer 0: one fused projection matmul for both directions -> (T, Bp, 8Hp)
    pre = _row_tiled_proj(_proj_kernel,
                          [embedded.reshape(T * Bp, E)], [layers[0]["w_in"]],
                          layers[0]["b"], 8 * Hp)
    pre = pre.reshape(T, Bp, 8 * Hp)
    out_f, out_b = bilstm_layer(pre, layers[0]["whh_f"], layers[0]["whh_b"],
                                T, Bp, Hp, time_chunk)

    for layer in layers[1:]:
        # Dual projection consumes fwd/bwd outputs directly (no concat materialized).
        pre = _row_tiled_proj(_dual_proj_kernel,
                              [out_f.reshape(T * Bp, Hp), out_b.reshape(T * Bp, Hp)],
                              [layer["w_in_fhalf"], layer["w_in_bhalf"]],
                              layer["b"], 8 * Hp)
        pre = pre.reshape(T, Bp, 8 * Hp)
        out_f, out_b = bilstm_layer(pre, layer["whh_f"], layer["whh_b"],
                                    T, Bp, Hp, time_chunk)

    # hidden[-2] = last-layer forward final h = out_f[T-1];
    # hidden[-1] = last-layer backward final h = out_b[0].
    h_f = out_f[T - 1, :B, :H]
    h_b = out_b[0, :B, :H]
    hidden = jnp.concatenate([h_f, h_b], axis=1)            # (B, 2H)

    # Final FC: (B, 2H) x (2H, O) matvec -> plain jnp (a pallas_call here is pure
    # launch overhead with a fully masked lane-width-1 store; see perf review).
    return hidden @ prepped["fc_w"].T + prepped["fc_b"]


# ----------------------------------------------------------------------------
# Pure-JAX reference (same math as the PyTorch module at eval time).
# ----------------------------------------------------------------------------
def reference_forward(tokens, params, hidden_dim, n_layers):
    H = hidden_dim
    emb = params["embedding"][tokens]                       # (T, B, E)

    def run_direction(x_seq, w_ih, w_hh, b_ih, b_hh, reverse):
        T_, B_, _ = x_seq.shape
        h = jnp.zeros((B_, H), jnp.float32)
        c = jnp.zeros((B_, H), jnp.float32)
        xs = x_seq[::-1] if reverse else x_seq
        outs = []
        for t in range(T_):
            g = xs[t] @ w_ih.T + h @ w_hh.T + b_ih + b_hh
            i_g = jax.nn.sigmoid(g[:, 0 * H:1 * H])
            f_g = jax.nn.sigmoid(g[:, 1 * H:2 * H])
            g_g = jnp.tanh(g[:, 2 * H:3 * H])
            o_g = jax.nn.sigmoid(g[:, 3 * H:4 * H])
            c = f_g * c + i_g * g_g
            h = o_g * jnp.tanh(c)
            outs.append(h)
        out = jnp.stack(outs)
        if reverse:
            out = out[::-1]
        return out, h

    x = emb
    h_f = h_b = None
    for layer in range(n_layers):
        fwd, bwd = params["lstm"][layer]
        out_f, h_f = run_direction(x, *fwd, reverse=False)
        out_b, h_b = run_direction(x, *bwd, reverse=True)
        x = jnp.concatenate([out_f, out_b], axis=-1)
    hidden = jnp.concatenate([h_f, h_b], axis=1)
    return hidden @ params["fc_w"].T + params["fc_b"]


if __name__ == "__main__":
    # Small, shape-consistent configuration
    vocab_size = 50
    embedding_dim = 16
    hidden_dim = 32
    output_dim = 1
    n_layers = 2
    seq_len = 8
    batch = 2

    key = jax.random.PRNGKey(0)
    k_tok, k_par = jax.random.split(key)
    tokens = jax.random.randint(k_tok, (seq_len, batch), 0, vocab_size,
                                dtype=jnp.int32)
    params = init_params(k_par, vocab_size, embedding_dim, hidden_dim,
                         output_dim, n_layers)
    prepped = prepare_params(params, hidden_dim, n_layers)    # one-time host prep

    fwd = jax.jit(functools.partial(rnn_forward,
                                    hidden_dim=hidden_dim, n_layers=n_layers))
    out = fwd(tokens, prepped)
    jax.block_until_ready(out)
    assert out.shape == (batch, output_dim)

    # Correctness check against the pure-JAX reference (loose tol for matmul precision).
    ref = reference_forward(tokens, params, hidden_dim, n_layers)
    np.testing.assert_allclose(np.asarray(out), np.asarray(ref),
                               atol=5e-2, rtol=5e-2)

    print("KERNEL_OK")
</pallas_src>

<mosaic_0001>
module attributes {stable_mosaic.version = 11 : i64} {
  func.func @_proj_kernel(%arg0: i32, %arg1: memref<64x16xf32, #tpu.memory_space<vmem>>, %arg2: memref<16x1024xf32, #tpu.memory_space<vmem>>, %arg3: memref<1x1024xf32, #tpu.memory_space<vmem>>, %arg4: memref<64x1024xf32, #tpu.memory_space<vmem>>) attributes {dimension_semantics = [#tpu.dimension_semantics<parallel>], iteration_bounds = array<i64: 1>, scalar_prefetch = 0 : i64, scratch_operands = 0 : i64, tpu.core_type = #tpu.core_type<tc>, window_params = [{transform_indices = @transform_0, window_bounds = array<i64: 64, 16>}, {pipeline_mode = #tpu.pipeline_mode<synchronous>, transform_indices = @transform_1, window_bounds = array<i64: 16, 1024>}, {pipeline_mode = #tpu.pipeline_mode<synchronous>, transform_indices = @transform_2, window_bounds = array<i64: 1, 1024>}, {transform_indices = @transform_3, window_bounds = array<i64: 64, 1024>}]} {
    %c0 = arith.constant 0 : index
    %c0_0 = arith.constant 0 : index
    %0 = vector.load %arg1[%c0, %c0_0] : memref<64x16xf32, #tpu.memory_space<vmem>>, vector<64x16xf32>
    %c0_1 = arith.constant 0 : index
    %c0_2 = arith.constant 0 : index
    %1 = vector.load %arg2[%c0_1, %c0_2] : memref<16x1024xf32, #tpu.memory_space<vmem>>, vector<16x1024xf32>
    %cst = arith.constant dense<0.000000e+00> : vector<64x1024xf32>
    %2 = tpu.matmul %0, %1, %cst {dimension_numbers = #tpu.dot_dimension_numbers<[1], [0], [0], [1], [0, 0, 1, 1], [], []>} : vector<64x16xf32>, vector<16x1024xf32>, vector<64x1024xf32> -> vector<64x1024xf32>
    %c0_3 = arith.constant 0 : index
    %c0_4 = arith.constant 0 : index
    %3 = vector.load %arg3[%c0_3, %c0_4] : memref<1x1024xf32, #tpu.memory_space<vmem>>, vector<1x1024xf32>
    %4 = vector.broadcast %3 : vector<1x1024xf32> to vector<64x1024xf32>
    %5 = arith.addf %2, %4 : vector<64x1024xf32>
    %c0_5 = arith.constant 0 : index
    %c0_6 = arith.constant 0 : index
    %6 = vector.load %arg4[%c0_5, %c0_6] : memref<64x1024xf32, #tpu.memory_space<vmem>>, vector<64x1024xf32>
    tpu.vector_store %arg4[%c0_5, %c0_6], %5 {strides = array<i32>} : memref<64x1024xf32, #tpu.memory_space<vmem>>, vector<64x1024xf32>,
    return
  }
  func.func @transform_0(%arg0: i32) -> (i32, i32) {
    %c0_i32 = arith.constant 0 : i32
    %c0_i32_0 = arith.constant 0 : i32
    return %arg0, %c0_i32 : i32, i32
  }
  func.func @transform_1(%arg0: i32) -> (i32, i32) {
    %c0_i32 = arith.constant 0 : i32
    %c0_i32_0 = arith.constant 0 : i32
    %c0_i32_1 = arith.constant 0 : i32
    return %c0_i32, %c0_i32_0 : i32, i32
  }
  func.func @transform_2(%arg0: i32) -> (i32, i32) {
    %c0_i32 = arith.constant 0 : i32
    %c0_i32_0 = arith.constant 0 : i32
    %c0_i32_1 = arith.constant 0 : i32
    return %c0_i32, %c0_i32_0 : i32, i32
  }
  func.func @transform_3(%arg0: i32) -> (i32, i32) {
    %c0_i32 = arith.constant 0 : i32
    %c0_i32_0 = arith.constant 0 : i32
    return %arg0, %c0_i32 : i32, i32
  }
}

module attributes {stable_mosaic.version = 11 : i64} {
  func.func @_dual_proj_kernel(%arg0: i32, %arg1: memref<64x128xf32, #tpu.memory_space<vmem>>, %arg2: memref<128x1024xf32, #tpu.memory_space<vmem>>, %arg3: memref<64x128xf32, #tpu.memory_space<vmem>>, %arg4: memref<128x1024xf32, #tpu.memory_space<vmem>>, %arg5: memref<1x1024xf32, #tpu.memory_space<vmem>>, %arg6: memref<64x1024xf32, #tpu.memory_space<vmem>>) attributes {dimension_semantics = [#tpu.dimension_semantics<parallel>], iteration_bounds = array<i64: 1>, scalar_prefetch = 0 : i64, scratch_operands = 0 : i64, tpu.core_type = #tpu.core_type<tc>, window_params = [{transform_indices = @transform_0, window_bounds = array<i64: 64, 128>}, {pipeline_mode = #tpu.pipeline_mode<synchronous>, transform_indices = @transform_1, window_bounds = array<i64: 128, 1024>}, {transform_indices = @transform_2, window_bounds = array<i64: 64, 128>}, {pipeline_mode = #tpu.pipeline_mode<synchronous>, transform_indices = @transform_3, window_bounds = array<i64: 128, 1024>}, {pipeline_mode = #tpu.pipeline_mode<synchronous>, transform_indices = @transform_4, window_bounds = array<i64: 1, 1024>}, {transform_indices = @transform_5, window_bounds = array<i64: 64, 1024>}]} {
    %c0 = arith.constant 0 : index
    %c0_0 = arith.constant 0 : index
    %0 = vector.load %arg1[%c0, %c0_0] : memref<64x128xf32, #tpu.memory_space<vmem>>, vector<64x128xf32>
    %c0_1 = arith.constant 0 : index
    %c0_2 = arith.constant 0 : index
    %1 = vector.load %arg2[%c0_1, %c0_2] : memref<128x1024xf32, #tpu.memory_space<vmem>>, vector<128x1024xf32>
    %cst = arith.constant dense<0.000000e+00> : vector<64x1024xf32>
    %2 = tpu.matmul %0, %1, %cst {dimension_numbers = #tpu.dot_dimension_numbers<[1], [0], [0], [1], [0, 0, 1, 1], [], []>} : vector<64x128xf32>, vector<128x1024xf32>, vector<64x1024xf32> -> vector<64x1024xf32>
    %c0_3 = arith.constant 0 : index
    %c0_4 = arith.constant 0 : index
    %3 = vector.load %arg3[%c0_3, %c0_4] : memref<64x128xf32, #tpu.memory_space<vmem>>, vector<64x128xf32>
    %c0_5 = arith.constant 0 : index
    %c0_6 = arith.constant 0 : index
    %4 = vector.load %arg4[%c0_5, %c0_6] : memref<128x1024xf32, #tpu.memory_space<vmem>>, vector<128x1024xf32>
    %cst_7 = arith.constant dense<0.000000e+00> : vector<64x1024xf32>
    %5 = tpu.matmul %3, %4, %cst_7 {dimension_numbers = #tpu.dot_dimension_numbers<[1], [0], [0], [1], [0, 0, 1, 1], [], []>} : vector<64x128xf32>, vector<128x1024xf32>, vector<64x1024xf32> -> vector<64x1024xf32>
    %6 = arith.addf %2, %5 : vector<64x1024xf32>
    %c0_8 = arith.constant 0 : index
    %c0_9 = arith.constant 0 : index
    %7 = vector.load %arg5[%c0_8, %c0_9] : memref<1x1024xf32, #tpu.memory_space<vmem>>, vector<1x1024xf32>
    %8 = vector.broadcast %7 : vector<1x1024xf32> to vector<64x1024xf32>
    %9 = arith.addf %6, %8 : vector<64x1024xf32>
    %c0_10 = arith.constant 0 : index
    %c0_11 = arith.constant 0 : index
    %10 = vector.load %arg6[%c0_10, %c0_11] : memref<64x1024xf32, #tpu.memory_space<vmem>>, vector<64x1024xf32>
    tpu.vector_store %arg6[%c0_10, %c0_11], %9 {strides = array<i32>} : memref<64x1024xf32, #tpu.memory_space<vmem>>, vector<64x1024xf32>,
    return
  }
  func.func @transform_0(%arg0: i32) -> (i32, i32) {
    %c0_i32 = arith.constant 0 : i32
    %c0_i32_0 = arith.constant 0 : i32
    return %arg0, %c0_i32 : i32, i32
  }
  func.func @transform_1(%arg0: i32) -> (i32, i32) {
    %c0_i32 = arith.constant 0 : i32
    %c0_i32_0 = arith.constant 0 : i32
    %c0_i32_1 = arith.constant 0 : i32
    return %c0_i32, %c0_i32_0 : i32, i32
  }
  func.func @transform_2(%arg0: i32) -> (i32, i32) {
    %c0_i32 = arith.constant 0 : i32
    %c0_i32_0 = arith.constant 0 : i32
    return %arg0, %c0_i32 : i32, i32
  }
  func.func @transform_3(%arg0: i32) -> (i32, i32) {
    %c0_i32 = arith.constant 0 : i32
    %c0_i32_0 = arith.constant 0 : i32
    %c0_i32_1 = arith.constant 0 : i32
    return %c0_i32, %c0_i32_0 : i32, i32
  }
  func.func @transform_4(%arg0: i32) -> (i32, i32) {
    %c0_i32 = arith.constant 0 : i32
    %c0_i32_0 = arith.constant 0 : i32
    %c0_i32_1 = arith.constant 0 : i32
    return %c0_i32, %c0_i32_0 : i32, i32
  }
  func.func @transform_5(%arg0: i32) -> (i32, i32) {
    %c0_i32 = arith.constant 0 : i32
    %c0_i32_0 = arith.constant 0 : i32
    return %arg0, %c0_i32 : i32, i32
  }
}

module attributes {stable_mosaic.version = 11 : i64} {
  func.func @_bilstm_chunk_kernel(%arg0: i32, %arg1: memref<8x8x512xf32, #tpu.memory_space<vmem>>, %arg2: memref<8x8x512xf32, #tpu.memory_space<vmem>>, %arg3: memref<128x512xf32, #tpu.memory_space<vmem>>, %arg4: memref<128x512xf32, #tpu.memory_space<vmem>>, %arg5: memref<8x8x128xf32, #tpu.memory_space<vmem>>, %arg6: memref<8x8x128xf32, #tpu.memory_space<vmem>>, %arg7: memref<8x128xf32, #tpu.memory_space<vmem>>, %arg8: memref<8x128xf32, #tpu.memory_space<vmem>>, %arg9: memref<8x128xf32, #tpu.memory_space<vmem>>, %arg10: memref<8x128xf32, #tpu.memory_space<vmem>>) attributes {dimension_semantics = [#tpu.dimension_semantics<arbitrary>], iteration_bounds = array<i64: 1>, scalar_prefetch = 0 : i64, scratch_operands = 4 : i64, tpu.core_type = #tpu.core_type<tc>, window_params = [{transform_indices = @transform_0, window_bounds = array<i64: 8, 8, 512>}, {transform_indices = @transform_1, window_bounds = array<i64: 8, 8, 512>}, {pipeline_mode = #tpu.pipeline_mode<synchronous>, transform_indices = @transform_2, window_bounds = array<i64: 128, 512>}, {pipeline_mode = #tpu.pipeline_mode<synchronous>, transform_indices = @transform_3, window_bounds = array<i64: 128, 512>}, {transform_indices = @transform_4, window_bounds = array<i64: 8, 8, 128>}, {transform_indices = @transform_5, window_bounds = array<i64: 8, 8, 128>}]} {
    %c0_i32 = arith.constant 0 : i32
    %0 = arith.cmpi eq, %arg0, %c0_i32 : i32
    %1 = arith.extui %0 : i1 to i32
    %c0_i32_0 = arith.constant 0 : i32
    %2 = arith.cmpi ne, %1, %c0_i32_0 : i32
    scf.if %2 {
      %cst_252 = arith.constant 0.000000e+00 : f32
      %437 = vector.broadcast %cst_252 : f32 to vector<8x128xf32>
      %c0_253 = arith.constant 0 : index
      %c0_254 = arith.constant 0 : index
      %438 = vector.load %arg7[%c0_253, %c0_254] : memref<8x128xf32, #tpu.memory_space<vmem>>, vector<8x128xf32>
      tpu.vector_store %arg7[%c0_253, %c0_254], %437 {strides = array<i32>} : memref<8x128xf32, #tpu.memory_space<vmem>>, vector<8x128xf32>,
      %cst_255 = arith.constant 0.000000e+00 : f32
      %439 = vector.broadcast %cst_255 : f32 to vector<8x128xf32>
      %c0_256 = arith.constant 0 : index
      %c0_257 = arith.constant 0 : index
      %440 = vector.load %arg8[%c0_256, %c0_257] : memref<8x128xf32, #tpu.memory_space<vmem>>, vector<8x128xf32>
      tpu.vector_store %arg8[%c0_256, %c0_257], %439 {strides = array<i32>} : memref<8x128xf32, #tpu.memory_space<vmem>>, vector<8x128xf32>,
      %cst_258 = arith.constant 0.000000e+00 : f32
      %441 = vector.broadcast %cst_258 : f32 to vector<8x128xf32>
      %c0_259 = arith.constant 0 : index
      %c0_260 = arith.constant 0 : index
      %442 = vector.load %arg9[%c0_259, %c0_260] : memref<8x128xf32, #tpu.memory_space<vmem>>, vector<8x128xf32>
      tpu.vector_store %arg9[%c0_259, %c0_260], %441 {strides = array<i32>} : memref<8x128xf32, #tpu.memory_space<vmem>>, vector<8x128xf32>,
      %cst_261 = arith.constant 0.000000e+00 : f32
      %443 = vector.broadcast %cst_261 : f32 to vector<8x128xf32>
      %c0_262 = arith.constant 0 : index
      %c0_263 = arith.constant 0 : index
      %444 = vector.load %arg10[%c0_262, %c0_263] : memref<8x128xf32, #tpu.memory_space<vmem>>, vector<8x128xf32>
      tpu.vector_store %arg10[%c0_262, %c0_263], %443 {strides = array<i32>} : memref<8x128xf32, #tpu.memory_space<vmem>>, vector<8x128xf32>,
    } else {
    }
    %c0 = arith.constant 0 : index
    %c0_1 = arith.constant 0 : index
    %3 = vector.load %arg3[%c0, %c0_1] : memref<128x512xf32, #tpu.memory_space<vmem>>, vector<128x512xf32>
    %c0_2 = arith.constant 0 : index
    %c0_3 = arith.constant 0 : index
    %4 = vector.load %arg4[%c0_2, %c0_3] : memref<128x512xf32, #tpu.memory_space<vmem>>, vector<128x512xf32>
    %c0_4 = arith.constant 0 : index
    %c0_5 = arith.constant 0 : index
    %c0_6 = arith.constant 0 : index
    %5 = vector.load %arg1[%c0_4, %c0_5, %c0_6] : memref<8x8x512xf32, #tpu.memory_space<vmem>>, vector<1x8x512xf32>
    %6 = vector.shape_cast %5 : vector<1x8x512xf32> to vector<8x512xf32>
    %c0_7 = arith.constant 0 : index
    %c0_8 = arith.constant 0 : index
    %7 = vector.load %arg7[%c0_7, %c0_8] : memref<8x128xf32, #tpu.memory_space<vmem>>, vector<8x128xf32>
    %c0_9 = arith.constant 0 : index
    %c0_10 = arith.constant 0 : index
    %8 = vector.load %arg8[%c0_9, %c0_10] : memref<8x128xf32, #tpu.memory_space<vmem>>, vector<8x128xf32>
    %cst = arith.constant dense<0.000000e+00> : vector<8x512xf32>
    %9 = tpu.matmul %7, %3, %cst {dimension_numbers = #tpu.dot_dimension_numbers<[1], [0], [0], [1], [0, 0, 1, 1], [], []>} : vector<8x128xf32>, vector<128x512xf32>, vector<8x512xf32> -> vector<8x512xf32>
    %10 = arith.addf %6, %9 : vector<8x512xf32>
    %11 = vector.extract_strided_slice %10 {offsets = [0, 0], sizes = [8, 384], strides = [1, 1]} : vector<8x512xf32> to vector<8x384xf32>
    %12 = arith.negf %11 : vector<8x384xf32>
    %13 = math.exp %12 : vector<8x384xf32>
    %cst_11 = arith.constant 1.000000e+00 : f32
    %14 = vector.broadcast %cst_11 : f32 to vector<8x384xf32>
    %15 = arith.addf %14, %13 : vector<8x384xf32>
    %16 = arith.divf %14, %15 : vector<8x384xf32>
    %17 = vector.extract_strided_slice %16 {offsets = [0, 0], sizes = [8, 128], strides = [1, 1]} : vector<8x384xf32> to vector<8x128xf32>
    %18 = vector.extract_strided_slice %16 {offsets = [0, 128], sizes = [8, 128], strides = [1, 1]} : vector<8x384xf32> to vector<8x128xf32>
    %19 = vector.extract_strided_slice %16 {offsets = [0, 256], sizes = [8, 128], strides = [1, 1]} : vector<8x384xf32> to vector<8x128xf32>
    %20 = vector.extract_strided_slice %10 {offsets = [0, 384], sizes = [8, 128], strides = [1, 1]} : vector<8x512xf32> to vector<8x128xf32>
    %21 = math.tanh %20 : vector<8x128xf32>
    %22 = arith.mulf %18, %8 : vector<8x128xf32>
    %23 = arith.mulf %17, %21 : vector<8x128xf32>
    %24 = arith.addf %22, %23 : vector<8x128xf32>
    %25 = math.tanh %24 : vector<8x128xf32>
    %26 = arith.mulf %19, %25 : vector<8x128xf32>
    %c0_12 = arith.constant 0 : index
    %c0_13 = arith.constant 0 : index
    %27 = vector.load %arg7[%c0_12, %c0_13] : memref<8x128xf32, #tpu.memory_space<vmem>>, vector<8x128xf32>
    tpu.vector_store %arg7[%c0_12, %c0_13], %26 {strides = array<i32>} : memref<8x128xf32, #tpu.memory_space<vmem>>, vector<8x128xf32>,
    %c0_14 = arith.constant 0 : index
    %c0_15 = arith.constant 0 : index
    %28 = vector.load %arg8[%c0_14, %c0_15] : memref<8x128xf32, #tpu.memory_space<vmem>>, vector<8x128xf32>
    tpu.vector_store %arg8[%c0_14, %c0_15], %24 {strides = array<i32>} : memref<8x128xf32, #tpu.memory_space<vmem>>, vector<8x128xf32>,
    %c0_16 = arith.constant 0 : index
    %c0_17 = arith.constant 0 : index
    %c0_18 = arith.constant 0 : index
    %29 = vector.load %arg5[%c0_16, %c0_17, %c0_18] : memref<8x8x128xf32, #tpu.memory_space<vmem>>, vector<1x8x128xf32>
    %30 = vector.shape_cast %29 : vector<1x8x128xf32> to vector<8x128xf32>
    %31 = vector.shape_cast %26 : vector<8x128xf32> to vector<1x8x128xf32>
    tpu.vector_store %arg5[%c0_16, %c0_17, %c0_18], %31 {strides = array<i32>} : memref<8x8x128xf32, #tpu.memory_space<vmem>>, vector<1x8x128xf32>,
    %c7 = arith.constant 7 : index
    %c0_19 = arith.constant 0 : index
    %c0_20 = arith.constant 0 : index
    %32 = vector.load %arg2[%c7, %c0_19, %c0_20] : memref<8x8x512xf32, #tpu.memory_space<vmem>>, vector<1x8x512xf32>
    %33 = vector.shape_cast %32 : vector<1x8x512xf32> to vector<8x512xf32>
    %c0_21 = arith.constant 0 : index
    %c0_22 = arith.constant 0 : index
    %34 = vector.load %arg9[%c0_21, %c0_22] : memref<8x128xf32, #tpu.memory_space<vmem>>, vector<8x128xf32>
    %c0_23 = arith.constant 0 : index
    %c0_24 = arith.constant 0 : index
    %35 = vector.load %arg10[%c0_23, %c0_24] : memref<8x128xf32, #tpu.memory_space<vmem>>, vector<8x128xf32>
    %cst_25 = arith.constant dense<0.000000e+00> : vector<8x512xf32>
    %36 = tpu.matmul %34, %4, %cst_25 {dimension_numbers = #tpu.dot_dimension_numbers<[1], [0], [0], [1], [0, 0, 1, 1], [], []>} : vector<8x128xf32>, vector<128x512xf32>, vector<8x512xf32> -> vector<8x512xf32>
    %37 = arith.addf %33, %36 : vector<8x512xf32>
    %38 = vector.extract_strided_slice %37 {offsets = [0, 0], sizes = [8, 384], strides = [1, 1]} : vector<8x512xf32> to vector<8x384xf32>
    %39 = arith.negf %38 : vector<8x384xf32>
    %40 = math.exp %39 : vector<8x384xf32>
    %cst_26 = arith.constant 1.000000e+00 : f32
    %41 = vector.broadcast %cst_26 : f32 to vector<8x384xf32>
    %42 = arith.addf %41, %40 : vector<8x384xf32>
    %43 = arith.divf %41, %42 : vector<8x384xf32>
    %44 = vector.extract_strided_slice %43 {offsets = [0, 0], sizes = [8, 128], strides = [1, 1]} : vector<8x384xf32> to vector<8x128xf32>
    %45 = vector.extract_strided_slice %43 {offsets = [0, 128], sizes = [8, 128], strides = [1, 1]} : vector<8x384xf32> to vector<8x128xf32>
    %46 = vector.extract_strided_slice %43 {offsets = [0, 256], sizes = [8, 128], strides = [1, 1]} : vector<8x384xf32> to vector<8x128xf32>
    %47 = vector.extract_strided_slice %37 {offsets = [0, 384], sizes = [8, 128], strides = [1, 1]} : vector<8x512xf32> to vector<8x128xf32>
    %48 = math.tanh %47 : vector<8x128xf32>
    %49 = arith.mulf %45, %35 : vector<8x128xf32>
    %50 = arith.mulf %44, %48 : vector<8x128xf32>
    %51 = arith.addf %49, %50 : vector<8x128xf32>
    %52 = math.tanh %51 : vector<8x128xf32>
    %53 = arith.mulf %46, %52 : vector<8x128xf32>
    %c0_27 = arith.constant 0 : index
    %c0_28 = arith.constant 0 : index
    %54 = vector.load %arg9[%c0_27, %c0_28] : memref<8x128xf32, #tpu.memory_space<vmem>>, vector<8x128xf32>
    tpu.vector_store %arg9[%c0_27, %c0_28], %53 {strides = array<i32>} : memref<8x128xf32, #tpu.memory_space<vmem>>, vector<8x128xf32>,
    %c0_29 = arith.constant 0 : index
    %c0_30 = arith.constant 0 : index
    %55 = vector.load %arg10[%c0_29, %c0_30] : memref<8x128xf32, #tpu.memory_space<vmem>>, vector<8x128xf32>
    tpu.vector_store %arg10[%c0_29, %c0_30], %51 {strides = array<i32>} : memref<8x128xf32, #tpu.memory_space<vmem>>, vector<8x128xf32>,
    %c7_31 = arith.constant 7 : index
    %c0_32 = arith.constant 0 : index
    %c0_33 = arith.constant 0 : index
    %56 = vector.load %arg6[%c7_31, %c0_32, %c0_33] : memref<8x8x128xf32, #tpu.memory_space<vmem>>, vector<1x8x128xf32>
    %57 = vector.shape_cast %56 : vector<1x8x128xf32> to vector<8x128xf32>
    %58 = vector.shape_cast %53 : vector<8x128xf32> to vector<1x8x128xf32>
    tpu.vector_store %arg6[%c7_31, %c0_32, %c0_33], %58 {strides = array<i32>} : memref<8x8x128xf32, #tpu.memory_space<vmem>>, vector<1x8x128xf32>,
    %c1 = arith.constant 1 : index
    %c0_34 = arith.constant 0 : index
    %c0_35 = arith.constant 0 : index
    %59 = vector.load %arg1[%c1, %c0_34, %c0_35] : memref<8x8x512xf32, #tpu.memory_space<vmem>>, vector<1x8x512xf32>
    %60 = vector.shape_cast %59 : vector<1x8x512xf32> to vector<8x512xf32>
    %c0_36 = arith.constant 0 : index
    %c0_37 = arith.constant 0 : index
    %61 = vector.load %arg7[%c0_36, %c0_37] : memref<8x128xf32, #tpu.memory_space<vmem>>, vector<8x128xf32>
    %c0_38 = arith.constant 0 : index
    %c0_39 = arith.constant 0 : index
    %62 = vector.load %arg8[%c0_38, %c0_39] : memref<8x128xf32, #tpu.memory_space<vmem>>, vector<8x128xf32>
    %cst_40 = arith.constant dense<0.000000e+00> : vector<8x512xf32>
    %63 = tpu.matmul %61, %3, %cst_40 {dimension_numbers = #tpu.dot_dimension_numbers<[1], [0], [0], [1], [0, 0, 1, 1], [], []>} : vector<8x128xf32>, vector<128x512xf32>, vector<8x512xf32> -> vector<8x512xf32>
    %64 = arith.addf %60, %63 : vector<8x512xf32>
    %65 = vector.extract_strided_slice %64 {offsets = [0, 0], sizes = [8, 384], strides = [1, 1]} : vector<8x512xf32> to vector<8x384xf32>
    %66 = arith.negf %65 : vector<8x384xf32>
    %67 = math.exp %66 : vector<8x384xf32>
    %cst_41 = arith.constant 1.000000e+00 : f32
    %68 = vector.broadcast %cst_41 : f32 to vector<8x384xf32>
    %69 = arith.addf %68, %67 : vector<8x384xf32>
    %70 = arith.divf %68, %69 : vector<8x384xf32>
    %71 = vector.extract_strided_slice %70 {offsets = [0, 0], sizes = [8, 128], strides = [1, 1]} : vector<8x384xf32> to vector<8x128xf32>
    %72 = vector.extract_strided_slice %70 {offsets = [0, 128], sizes = [8, 128], strides = [1, 1]} : vector<8x384xf32> to vector<8x128xf32>
    %73 = vector.extract_strided_slice %70 {offsets = [0, 256], sizes = [8, 128], strides = [1, 1]} : vector<8x384xf32> to vector<8x128xf32>
    %74 = vector.extract_strided_slice %64 {offsets = [0, 384], sizes = [8, 128], strides = [1, 1]} : vector<8x512xf32> to vector<8x128xf32>
    %75 = math.tanh %74 : vector<8x128xf32>
    %76 = arith.mulf %72, %62 : vector<8x128xf32>
    %77 = arith.mulf %71, %75 : vector<8x128xf32>
    %78 = arith.addf %76, %77 : vector<8x128xf32>
    %79 = math.tanh %78 : vector<8x128xf32>
    %80 = arith.mulf %73, %79 : vector<8x128xf32>
    %c0_42 = arith.constant 0 : index
    %c0_43 = arith.constant 0 : index
    %81 = vector.load %arg7[%c0_42, %c0_43] : memref<8x128xf32, #tpu.memory_space<vmem>>, vector<8x128xf32>
    tpu.vector_store %arg7[%c0_42, %c0_43], %80 {strides = array<i32>} : memref<8x128xf32, #tpu.memory_space<vmem>>, vector<8x128xf32>,
    %c0_44 = arith.constant 0 : index
    %c0_45 = arith.constant 0 : index
    %82 = vector.load %arg8[%c0_44, %c0_45] : memref<8x128xf32, #tpu.memory_space<vmem>>, vector<8x128xf32>
    tpu.vector_store %arg8[%c0_44, %c0_45], %78 {strides = array<i32>} : memref<8x128xf32, #tpu.memory_space<vmem>>, vector<8x128xf32>,
    %c1_46 = arith.constant 1 : index
    %c0_47 = arith.constant 0 : index
    %c0_48 = arith.constant 0 : index
    %83 = vector.load %arg5[%c1_46, %c0_47, %c0_48] : memref<8x8x128xf32, #tpu.memory_space<vmem>>, vector<1x8x128xf32>
    %84 = vector.shape_cast %83 : vector<1x8x128xf32> to vector<8x128xf32>
    %85 = vector.shape_cast %80 : vector<8x128xf32> to vector<1x8x128xf32>
    tpu.vector_store %arg5[%c1_46, %c0_47, %c0_48], %85 {strides = array<i32>} : memref<8x8x128xf32, #tpu.memory_space<vmem>>, vector<1x8x128xf32>,
    %c6 = arith.constant 6 : index
    %c0_49 = arith.constant 0 : index
    %c0_50 = arith.constant 0 : index
    %86 = vector.load %arg2[%c6, %c0_49, %c0_50] : memref<8x8x512xf32, #tpu.memory_space<vmem>>, vector<1x8x512xf32>
    %87 = vector.shape_cast %86 : vector<1x8x512xf32> to vector<8x512xf32>
    %c0_51 = arith.constant 0 : index
    %c0_52 = arith.constant 0 : index
    %88 = vector.load %arg9[%c0_51, %c0_52] : memref<8x128xf32, #tpu.memory_space<vmem>>, vector<8x128xf32>
    %c0_53 = arith.constant 0 : index
    %c0_54 = arith.constant 0 : index
    %89 = vector.load %arg10[%c0_53, %c0_54] : memref<8x128xf32, #tpu.memory_space<vmem>>, vector<8x128xf32>
    %cst_55 = arith.constant dense<0.000000e+00> : vector<8x512xf32>
    %90 = tpu.matmul %88, %4, %cst_55 {dimension_numbers = #tpu.dot_dimension_numbers<[1], [0], [0], [1], [0, 0, 1, 1], [], []>} : vector<8x128xf32>, vector<128x512xf32>, vector<8x512xf32> -> vector<8x512xf32>
    %91 = arith.addf %87, %90 : vector<8x512xf32>
    %92 = vector.extract_strided_slice %91 {offsets = [0, 0], sizes = [8, 384], strides = [1, 1]} : vector<8x512xf32> to vector<8x384xf32>
    %93 = arith.negf %92 : vector<8x384xf32>
    %94 = math.exp %93 : vector<8x384xf32>
    %cst_56 = arith.constant 1.000000e+00 : f32
    %95 = vector.broadcast %cst_56 : f32 to vector<8x384xf32>
    %96 = arith.addf %95, %94 : vector<8x384xf32>
    %97 = arith.divf %95, %96 : vector<8x384xf32>
    %98 = vector.extract_strided_slice %97 {offsets = [0, 0], sizes = [8, 128], strides = [1, 1]} : vector<8x384xf32> to vector<8x128xf32>
    %99 = vector.extract_strided_slice %97 {offsets = [0, 128], sizes = [8, 128], strides = [1, 1]} : vector<8x384xf32> to vector<8x128xf32>
    %100 = vector.extract_strided_slice %97 {offsets = [0, 256], sizes = [8, 128], strides = [1, 1]} : vector<8x384xf32> to vector<8x128xf32>
    %101 = vector.extract_strided_slice %91 {offsets = [0, 384], sizes = [8, 128], strides = [1, 1]} : vector<8x512xf32> to vector<8x128xf32>
    %102 = math.tanh %101 : vector<8x128xf32>
    %103 = arith.mulf %99, %89 : vector<8x128xf32>
    %104 = arith.mulf %98, %102 : vector<8x128xf32>
    %105 = arith.addf %103, %104 : vector<8x128xf32>
    %106 = math.tanh %105 : vector<8x128xf32>
    %107 = arith.mulf %100, %106 : vector<8x128xf32>
    %c0_57 = arith.constant 0 : index
    %c0_58 = arith.constant 0 : index
    %108 = vector.load %arg9[%c0_57, %c0_58] : memref<8x128xf32, #tpu.memory_space<vmem>>, vector<8x128xf32>
    tpu.vector_store %arg9[%c0_57, %c0_58], %107 {strides = array<i32>} : memref<8x128xf32, #tpu.memory_space<vmem>>, vector<8x128xf32>,
    %c0_59 = arith.constant 0 : index
    %c0_60 = arith.constant 0 : index
    %109 = vector.load %arg10[%c0_59, %c0_60] : memref<8x128xf32, #tpu.memory_space<vmem>>, vector<8x128xf32>
    tpu.vector_store %arg10[%c0_59, %c0_60], %105 {strides = array<i32>} : memref<8x128xf32, #tpu.memory_space<vmem>>, vector<8x128xf32>,
    %c6_61 = arith.constant 6 : index
    %c0_62 = arith.constant 0 : index
    %c0_63 = arith.constant 0 : index
    %110 = vector.load %arg6[%c6_61, %c0_62, %c0_63] : memref<8x8x128xf32, #tpu.memory_space<vmem>>, vector<1x8x128xf32>
    %111 = vector.shape_cast %110 : vector<1x8x128xf32> to vector<8x128xf32>
    %112 = vector.shape_cast %107 : vector<8x128xf32> to vector<1x8x128xf32>
    tpu.vector_store %arg6[%c6_61, %c0_62, %c0_63], %112 {strides = array<i32>} : memref<8x8x128xf32, #tpu.memory_space<vmem>>, vector<1x8x128xf32>,
    %c2 = arith.constant 2 : index
    %c0_64 = arith.constant 0 : index
    %c0_65 = arith.constant 0 : index
    %113 = vector.load %arg1[%c2, %c0_64, %c0_65] : memref<8x8x512xf32, #tpu.memory_space<vmem>>, vector<1x8x512xf32>
    %114 = vector.shape_cast %113 : vector<1x8x512xf32> to vector<8x512xf32>
    %c0_66 = arith.constant 0 : index
    %c0_67 = arith.constant 0 : index
    %115 = vector.load %arg7[%c0_66, %c0_67] : memref<8x128xf32, #tpu.memory_space<vmem>>, vector<8x128xf32>
    %c0_68 = arith.constant 0 : index
    %c0_69 = arith.constant 0 : index
    %116 = vector.load %arg8[%c0_68, %c0_69] : memref<8x128xf32, #tpu.memory_space<vmem>>, vector<8x128xf32>
    %cst_70 = arith.constant dense<0.000000e+00> : vector<8x512xf32>
    %117 = tpu.matmul %115, %3, %cst_70 {dimension_numbers = #tpu.dot_dimension_numbers<[1], [0], [0], [1], [0, 0, 1, 1], [], []>} : vector<8x128xf32>, vector<128x512xf32>, vector<8x512xf32> -> vector<8x512xf32>
    %118 = arith.addf %114, %117 : vector<8x512xf32>
    %119 = vector.extract_strided_slice %118 {offsets = [0, 0], sizes = [8, 384], strides = [1, 1]} : vector<8x512xf32> to vector<8x384xf32>
    %120 = arith.negf %119 : vector<8x384xf32>
    %121 = math.exp %120 : vector<8x384xf32>
    %cst_71 = arith.constant 1.000000e+00 : f32
    %122 = vector.broadcast %cst_71 : f32 to vector<8x384xf32>
    %123 = arith.addf %122, %121 : vector<8x384xf32>
    %124 = arith.divf %122, %123 : vector<8x384xf32>
    %125 = vector.extract_strided_slice %124 {offsets = [0, 0], sizes = [8, 128], strides = [1, 1]} : vector<8x384xf32> to vector<8x128xf32>
    %126 = vector.extract_strided_slice %124 {offsets = [0, 128], sizes = [8, 128], strides = [1, 1]} : vector<8x384xf32> to vector<8x128xf32>
    %127 = vector.extract_strided_slice %124 {offsets = [0, 256], sizes = [8, 128], strides = [1, 1]} : vector<8x384xf32> to vector<8x128xf32>
    %128 = vector.extract_strided_slice %118 {offsets = [0, 384], sizes = [8, 128], strides = [1, 1]} : vector<8x512xf32> to vector<8x128xf32>
    %129 = math.tanh %128 : vector<8x128xf32>
    %130 = arith.mulf %126, %116 : vector<8x128xf32>
    %131 = arith.mulf %125, %129 : vector<8x128xf32>
    %132 = arith.addf %130, %131 : vector<8x128xf32>
    %133 = math.tanh %132 : vector<8x128xf32>
    %134 = arith.mulf %127, %133 : vector<8x128xf32>
    %c0_72 = arith.constant 0 : index
    %c0_73 = arith.constant 0 : index
    %135 = vector.load %arg7[%c0_72, %c0_73] : memref<8x128xf32, #tpu.memory_space<vmem>>, vector<8x128xf32>
    tpu.vector_store %arg7[%c0_72, %c0_73], %134 {strides = array<i32>} : memref<8x128xf32, #tpu.memory_space<vmem>>, vector<8x128xf32>,
    %c0_74 = arith.constant 0 : index
    %c0_75 = arith.constant 0 : index
    %136 = vector.load %arg8[%c0_74, %c0_75] : memref<8x128xf32, #tpu.memory_space<vmem>>, vector<8x128xf32>
    tpu.vector_store %arg8[%c0_74, %c0_75], %132 {strides = array<i32>} : memref<8x128xf32, #tpu.memory_space<vmem>>, vector<8x128xf32>,
    %c2_76 = arith.constant 2 : index
    %c0_77 = arith.constant 0 : index
    %c0_78 = arith.constant 0 : index
    %137 = vector.load %arg5[%c2_76, %c0_77, %c0_78] : memref<8x8x128xf32, #tpu.memory_space<vmem>>, vector<1x8x128xf32>
    %138 = vector.shape_cast %137 : vector<1x8x128xf32> to vector<8x128xf32>
    %139 = vector.shape_cast %134 : vector<8x128xf32> to vector<1x8x128xf32>
    tpu.vector_store %arg5[%c2_76, %c0_77, %c0_78], %139 {strides = array<i32>} : memref<8x8x128xf32, #tpu.memory_space<vmem>>, vector<1x8x128xf32>,
    %c5 = arith.constant 5 : index
    %c0_79 = arith.constant 0 : index
    %c0_80 = arith.constant 0 : index
    %140 = vector.load %arg2[%c5, %c0_79, %c0_80] : memref<8x8x512xf32, #tpu.memory_space<vmem>>, vector<1x8x512xf32>
    %141 = vector.shape_cast %140 : vector<1x8x512xf32> to vector<8x512xf32>
    %c0_81 = arith.constant 0 : index
    %c0_82 = arith.constant 0 : index
    %142 = vector.load %arg9[%c0_81, %c0_82] : memref<8x128xf32, #tpu.memory_space<vmem>>, vector<8x128xf32>
    %c0_83 = arith.constant 0 : index
    %c0_84 = arith.constant 0 : index
    %143 = vector.load %arg10[%c0_83, %c0_84] : memref<8x128xf32, #tpu.memory_space<vmem>>, vector<8x128xf32>
    %cst_85 = arith.constant dense<0.000000e+00> : vector<8x512xf32>
    %144 = tpu.matmul %142, %4, %cst_85 {dimension_numbers = #tpu.dot_dimension_numbers<[1], [0], [0], [1], [0, 0, 1, 1], [], []>} : vector<8x128xf32>, vector<128x512xf32>, vector<8x512xf32> -> vector<8x512xf32>
    %145 = arith.addf %141, %144 : vector<8x512xf32>
    %146 = vector.extract_strided_slice %145 {offsets = [0, 0], sizes = [8, 384], strides = [1, 1]} : vector<8x512xf32> to vector<8x384xf32>
    %147 = arith.negf %146 : vector<8x384xf32>
    %148 = math.exp %147 : vector<8x384xf32>
    %cst_86 = arith.constant 1.000000e+00 : f32
    %149 = vector.broadcast %cst_86 : f32 to vector<8x384xf32>
    %150 = arith.addf %149, %148 : vector<8x384xf32>
    %151 = arith.divf %149, %150 : vector<8x384xf32>
    %152 = vector.extract_strided_slice %151 {offsets = [0, 0], sizes = [8, 128], strides = [1, 1]} : vector<8x384xf32> to vector<8x128xf32>
    %153 = vector.extract_strided_slice %151 {offsets = [0, 128], sizes = [8, 128], strides = [1, 1]} : vector<8x384xf32> to vector<8x128xf32>
    %154 = vector.extract_strided_slice %151 {offsets = [0, 256], sizes = [8, 128], strides = [1, 1]} : vector<8x384xf32> to vector<8x128xf32>
    %155 = vector.extract_strided_slice %145 {offsets = [0, 384], sizes = [8, 128], strides = [1, 1]} : vector<8x512xf32> to vector<8x128xf32>
    %156 = math.tanh %155 : vector<8x128xf32>
    %157 = arith.mulf %153, %143 : vector<8x128xf32>
    %158 = arith.mulf %152, %156 : vector<8x128xf32>
    %159 = arith.addf %157, %158 : vector<8x128xf32>
    %160 = math.tanh %159 : vector<8x128xf32>
    %161 = arith.mulf %154, %160 : vector<8x128xf32>
    %c0_87 = arith.constant 0 : index
    %c0_88 = arith.constant 0 : index
    %162 = vector.load %arg9[%c0_87, %c0_88] : memref<8x128xf32, #tpu.memory_space<vmem>>, vector<8x128xf32>
    tpu.vector_store %arg9[%c0_87, %c0_88], %161 {strides = array<i32>} : memref<8x128xf32, #tpu.memory_space<vmem>>, vector<8x128xf32>,
    %c0_89 = arith.constant 0 : index
    %c0_90 = arith.constant 0 : index
    %163 = vector.load %arg10[%c0_89, %c0_90] : memref<8x128xf32, #tpu.memory_space<vmem>>, vector<8x128xf32>
    tpu.vector_store %arg10[%c0_89, %c0_90], %159 {strides = array<i32>} : memref<8x128xf32, #tpu.memory_space<vmem>>, vector<8x128xf32>,
    %c5_91 = arith.constant 5 : index
    %c0_92 = arith.constant 0 : index
    %c0_93 = arith.constant 0 : index
    %164 = vector.load %arg6[%c5_91, %c0_92, %c0_93] : memref<8x8x128xf32, #tpu.memory_space<vmem>>, vector<1x8x128xf32>
    %165 = vector.shape_cast %164 : vector<1x8x128xf32> to vector<8x128xf32>
    %166 = vector.shape_cast %161 : vector<8x128xf32> to vector<1x8x128xf32>
    tpu.vector_store %arg6[%c5_91, %c0_92, %c0_93], %166 {strides = array<i32>} : memref<8x8x128xf32, #tpu.memory_space<vmem>>, vector<1x8x128xf32>,
    %c3 = arith.constant 3 : index
    %c0_94 = arith.constant 0 : index
    %c0_95 = arith.constant 0 : index
    %167 = vector.load %arg1[%c3, %c0_94, %c0_95] : memref<8x8x512xf32, #tpu.memory_space<vmem>>, vector<1x8x512xf32>
    %168 = vector.shape_cast %167 : vector<1x8x512xf32> to vector<8x512xf32>
    %c0_96 = arith.constant 0 : index
    %c0_97 = arith.constant 0 : index
    %169 = vector.load %arg7[%c0_96, %c0_97] : memref<8x128xf32, #tpu.memory_space<vmem>>, vector<8x128xf32>
    %c0_98 = arith.constant 0 : index
    %c0_99 = arith.constant 0 : index
    %170 = vector.load %arg8[%c0_98, %c0_99] : memref<8x128xf32, #tpu.memory_space<vmem>>, vector<8x128xf32>
    %cst_100 = arith.constant dense<0.000000e+00> : vector<8x512xf32>
    %171 = tpu.matmul %169, %3, %cst_100 {dimension_numbers = #tpu.dot_dimension_numbers<[1], [0], [0], [1], [0, 0, 1, 1], [], []>} : vector<8x128xf32>, vector<128x512xf32>, vector<8x512xf32> -> vector<8x512xf32>
    %172 = arith.addf %168, %171 : vector<8x512xf32>
    %173 = vector.extract_strided_slice %172 {offsets = [0, 0], sizes = [8, 384], strides = [1, 1]} : vector<8x512xf32> to vector<8x384xf32>
    %174 = arith.negf %173 : vector<8x384xf32>
    %175 = math.exp %174 : vector<8x384xf32>
    %cst_101 = arith.constant 1.000000e+00 : f32
    %176 = vector.broadcast %cst_101 : f32 to vector<8x384xf32>
    %177 = arith.addf %176, %175 : vector<8x384xf32>
    %178 = arith.divf %176, %177 : vector<8x384xf32>
    %179 = vector.extract_strided_slice %178 {offsets = [0, 0], sizes = [8, 128], strides = [1, 1]} : vector<8x384xf32> to vector<8x128xf32>
    %180 = vector.extract_strided_slice %178 {offsets = [0, 128], sizes = [8, 128], strides = [1, 1]} : vector<8x384xf32> to vector<8x128xf32>
    %181 = vector.extract_strided_slice %178 {offsets = [0, 256], sizes = [8, 128], strides = [1, 1]} : vector<8x384xf32> to vector<8x128xf32>
    %182 = vector.extract_strided_slice %172 {offsets = [0, 384], sizes = [8, 128], strides = [1, 1]} : vector<8x512xf32> to vector<8x128xf32>
    %183 = math.tanh %182 : vector<8x128xf32>
    %184 = arith.mulf %180, %170 : vector<8x128xf32>
    %185 = arith.mulf %179, %183 : vector<8x128xf32>
    %186 = arith.addf %184, %185 : vector<8x128xf32>
    %187 = math.tanh %186 : vector<8x128xf32>
    %188 = arith.mulf %181, %187 : vector<8x128xf32>
    %c0_102 = arith.constant 0 : index
    %c0_103 = arith.constant 0 : index
    %189 = vector.load %arg7[%c0_102, %c0_103] : memref<8x128xf32, #tpu.memory_space<vmem>>, vector<8x128xf32>
    tpu.vector_store %arg7[%c0_102, %c0_103], %188 {strides = array<i32>} : memref<8x128xf32, #tpu.memory_space<vmem>>, vector<8x128xf32>,
    %c0_104 = arith.constant 0 : index
    %c0_105 = arith.constant 0 : index
    %190 = vector.load %arg8[%c0_104, %c0_105] : memref<8x128xf32, #tpu.memory_space<vmem>>, vector<8x128xf32>
    tpu.vector_store %arg8[%c0_104, %c0_105], %186 {strides = array<i32>} : memref<8x128xf32, #tpu.memory_space<vmem>>, vector<8x128xf32>,
    %c3_106 = arith.constant 3 : index
    %c0_107 = arith.constant 0 : index
    %c0_108 = arith.constant 0 : index
    %191 = vector.load %arg5[%c3_106, %c0_107, %c0_108] : memref<8x8x128xf32, #tpu.memory_space<vmem>>, vector<1x8x128xf32>
    %192 = vector.shape_cast %191 : vector<1x8x128xf32> to vector<8x128xf32>
    %193 = vector.shape_cast %188 : vector<8x128xf32> to vector<1x8x128xf32>
    tpu.vector_store %arg5[%c3_106, %c0_107, %c0_108], %193 {strides = array<i32>} : memref<8x8x128xf32, #tpu.memory_space<vmem>>, vector<1x8x128xf32>,
    %c4 = arith.constant 4 : index
    %c0_109 = arith.constant 0 : index
    %c0_110 = arith.constant 0 : index
    %194 = vector.load %arg2[%c4, %c0_109, %c0_110] : memref<8x8x512xf32, #tpu.memory_space<vmem>>, vector<1x8x512xf32>
    %195 = vector.shape_cast %194 : vector<1x8x512xf32> to vector<8x512xf32>
    %c0_111 = arith.constant 0 : index
    %c0_112 = arith.constant 0 : index
    %196 = vector.load %arg9[%c0_111, %c0_112] : memref<8x128xf32, #tpu.memory_space<vmem>>, vector<8x128xf32>
    %c0_113 = arith.constant 0 : index
    %c0_114 = arith.constant 0 : index
    %197 = vector.load %arg10[%c0_113, %c0_114] : memref<8x128xf32, #tpu.memory_space<vmem>>, vector<8x128xf32>
    %cst_115 = arith.constant dense<0.000000e+00> : vector<8x512xf32>
    %198 = tpu.matmul %196, %4, %cst_115 {dimension_numbers = #tpu.dot_dimension_numbers<[1], [0], [0], [1], [0, 0, 1, 1], [], []>} : vector<8x128xf32>, vector<128x512xf32>, vector<8x512xf32> -> vector<8x512xf32>
    %199 = arith.addf %195, %198 : vector<8x512xf32>
    %200 = vector.extract_strided_slice %199 {offsets = [0, 0], sizes = [8, 384], strides = [1, 1]} : vector<8x512xf32> to vector<8x384xf32>
    %201 = arith.negf %200 : vector<8x384xf32>
    %202 = math.exp %201 : vector<8x384xf32>
    %cst_116 = arith.constant 1.000000e+00 : f32
    %203 = vector.broadcast %cst_116 : f32 to vector<8x384xf32>
    %204 = arith.addf %203, %202 : vector<8x384xf32>
    %205 = arith.divf %203, %204 : vector<8x384xf32>
    %206 = vector.extract_strided_slice %205 {offsets = [0, 0], sizes = [8, 128], strides = [1, 1]} : vector<8x384xf32> to vector<8x128xf32>
    %207 = vector.extract_strided_slice %205 {offsets = [0, 128], sizes = [8, 128], strides = [1, 1]} : vector<8x384xf32> to vector<8x128xf32>
    %208 = vector.extract_strided_slice %205 {offsets = [0, 256], sizes = [8, 128], strides = [1, 1]} : vector<8x384xf32> to vector<8x128xf32>
    %209 = vector.extract_strided_slice %199 {offsets = [0, 384], sizes = [8, 128], strides = [1, 1]} : vector<8x512xf32> to vector<8x128xf32>
    %210 = math.tanh %209 : vector<8x128xf32>
    %211 = arith.mulf %207, %197 : vector<8x128xf32>
    %212 = arith.mulf %206, %210 : vector<8x128xf32>
    %213 = arith.addf %211, %212 : vector<8x128xf32>
    %214 = math.tanh %213 : vector<8x128xf32>
    %215 = arith.mulf %208, %214 : vector<8x128xf32>
    %c0_117 = arith.constant 0 : index
    %c0_118 = arith.constant 0 : index
    %216 = vector.load %arg9[%c0_117, %c0_118] : memref<8x128xf32, #tpu.memory_space<vmem>>, vector<8x128xf32>
    tpu.vector_store %arg9[%c0_117, %c0_118], %215 {strides = array<i32>} : memref<8x128xf32, #tpu.memory_space<vmem>>, vector<8x128xf32>,
    %c0_119 = arith.constant 0 : index
    %c0_120 = arith.constant 0 : index
    %217 = vector.load %arg10[%c0_119, %c0_120] : memref<8x128xf32, #tpu.memory_space<vmem>>, vector<8x128xf32>
    tpu.vector_store %arg10[%c0_119, %c0_120], %213 {strides = array<i32>} : memref<8x128xf32, #tpu.memory_space<vmem>>, vector<8x128xf32>,
    %c4_121 = arith.constant 4 : index
    %c0_122 = arith.constant 0 : index
    %c0_123 = arith.constant 0 : index
    %218 = vector.load %arg6[%c4_121, %c0_122, %c0_123] : memref<8x8x128xf32, #tpu.memory_space<vmem>>, vector<1x8x128xf32>
    %219 = vector.shape_cast %218 : vector<1x8x128xf32> to vector<8x128xf32>
    %220 = vector.shape_cast %215 : vector<8x128xf32> to vector<1x8x128xf32>
    tpu.vector_store %arg6[%c4_121, %c0_122, %c0_123], %220 {strides = array<i32>} : memref<8x8x128xf32, #tpu.memory_space<vmem>>, vector<1x8x128xf32>,
    %c4_124 = arith.constant 4 : index
    %c0_125 = arith.constant 0 : index
    %c0_126 = arith.constant 0 : index
    %221 = vector.load %arg1[%c4_124, %c0_125, %c0_126] : memref<8x8x512xf32, #tpu.memory_space<vmem>>, vector<1x8x512xf32>
    %222 = vector.shape_cast %221 : vector<1x8x512xf32> to vector<8x512xf32>
    %c0_127 = arith.constant 0 : index
    %c0_128 = arith.constant 0 : index
    %223 = vector.load %arg7[%c0_127, %c0_128] : memref<8x128xf32, #tpu.memory_space<vmem>>, vector<8x128xf32>
    %c0_129 = arith.constant 0 : index
    %c0_130 = arith.constant 0 : index
    %224 = vector.load %arg8[%c0_129, %c0_130] : memref<8x128xf32, #tpu.memory_space<vmem>>, vector<8x128xf32>
    %cst_131 = arith.constant dense<0.000000e+00> : vector<8x512xf32>
    %225 = tpu.matmul %223, %3, %cst_131 {dimension_numbers = #tpu.dot_dimension_numbers<[1], [0], [0], [1], [0, 0, 1, 1], [], []>} : vector<8x128xf32>, vector<128x512xf32>, vector<8x512xf32> -> vector<8x512xf32>
    %226 = arith.addf %222, %225 : vector<8x512xf32>
    %227 = vector.extract_strided_slice %226 {offsets = [0, 0], sizes = [8, 384], strides = [1, 1]} : vector<8x512xf32> to vector<8x384xf32>
    %228 = arith.negf %227 : vector<8x384xf32>
    %229 = math.exp %228 : vector<8x384xf32>
    %cst_132 = arith.constant 1.000000e+00 : f32
    %230 = vector.broadcast %cst_132 : f32 to vector<8x384xf32>
    %231 = arith.addf %230, %229 : vector<8x384xf32>
    %232 = arith.divf %230, %231 : vector<8x384xf32>
    %233 = vector.extract_strided_slice %232 {offsets = [0, 0], sizes = [8, 128], strides = [1, 1]} : vector<8x384xf32> to vector<8x128xf32>
    %234 = vector.extract_strided_slice %232 {offsets = [0, 128], sizes = [8, 128], strides = [1, 1]} : vector<8x384xf32> to vector<8x128xf32>
    %235 = vector.extract_strided_slice %232 {offsets = [0, 256], sizes = [8, 128], strides = [1, 1]} : vector<8x384xf32> to vector<8x128xf32>
    %236 = vector.extract_strided_slice %226 {offsets = [0, 384], sizes = [8, 128], strides = [1, 1]} : vector<8x512xf32> to vector<8x128xf32>
    %237 = math.tanh %236 : vector<8x128xf32>
    %238 = arith.mulf %234, %224 : vector<8x128xf32>
    %239 = arith.mulf %233, %237 : vector<8x128xf32>
    %240 = arith.addf %238, %239 : vector<8x128xf32>
    %241 = math.tanh %240 : vector<8x128xf32>
    %242 = arith.mulf %235, %241 : vector<8x128xf32>
    %c0_133 = arith.constant 0 : index
    %c0_134 = arith.constant 0 : index
    %243 = vector.load %arg7[%c0_133, %c0_134] : memref<8x128xf32, #tpu.memory_space<vmem>>, vector<8x128xf32>
    tpu.vector_store %arg7[%c0_133, %c0_134], %242 {strides = array<i32>} : memref<8x128xf32, #tpu.memory_space<vmem>>, vector<8x128xf32>,
    %c0_135 = arith.constant 0 : index
    %c0_136 = arith.constant 0 : index
    %244 = vector.load %arg8[%c0_135, %c0_136] : memref<8x128xf32, #tpu.memory_space<vmem>>, vector<8x128xf32>
    tpu.vector_store %arg8[%c0_135, %c0_136], %240 {strides = array<i32>} : memref<8x128xf32, #tpu.memory_space<vmem>>, vector<8x128xf32>,
    %c4_137 = arith.constant 4 : index
    %c0_138 = arith.constant 0 : index
    %c0_139 = arith.constant 0 : index
    %245 = vector.load %arg5[%c4_137, %c0_138, %c0_139] : memref<8x8x128xf32, #tpu.memory_space<vmem>>, vector<1x8x128xf32>
    %246 = vector.shape_cast %245 : vector<1x8x128xf32> to vector<8x128xf32>
    %247 = vector.shape_cast %242 : vector<8x128xf32> to vector<1x8x128xf32>
    tpu.vector_store %arg5[%c4_137, %c0_138, %c0_139], %247 {strides = array<i32>} : memref<8x8x128xf32, #tpu.memory_space<vmem>>, vector<1x8x128xf32>,
    %c3_140 = arith.constant 3 : index
    %c0_141 = arith.constant 0 : index
    %c0_142 = arith.constant 0 : index
    %248 = vector.load %arg2[%c3_140, %c0_141, %c0_142] : memref<8x8x512xf32, #tpu.memory_space<vmem>>, vector<1x8x512xf32>
    %249 = vector.shape_cast %248 : vector<1x8x512xf32> to vector<8x512xf32>
    %c0_143 = arith.constant 0 : index
    %c0_144 = arith.constant 0 : index
    %250 = vector.load %arg9[%c0_143, %c0_144] : memref<8x128xf32, #tpu.memory_space<vmem>>, vector<8x128xf32>
    %c0_145 = arith.constant 0 : index
    %c0_146 = arith.constant 0 : index
    %251 = vector.load %arg10[%c0_145, %c0_146] : memref<8x128xf32, #tpu.memory_space<vmem>>, vector<8x128xf32>
    %cst_147 = arith.constant dense<0.000000e+00> : vector<8x512xf32>
    %252 = tpu.matmul %250, %4, %cst_147 {dimension_numbers = #tpu.dot_dimension_numbers<[1], [0], [0], [1], [0, 0, 1, 1], [], []>} : vector<8x128xf32>, vector<128x512xf32>, vector<8x512xf32> -> vector<8x512xf32>
    %253 = arith.addf %249, %252 : vector<8x512xf32>
    %254 = vector.extract_strided_slice %253 {offsets = [0, 0], sizes = [8, 384], strides = [1, 1]} : vector<8x512xf32> to vector<8x384xf32>
    %255 = arith.negf %254 : vector<8x384xf32>
    %256 = math.exp %255 : vector<8x384xf32>
    %cst_148 = arith.constant 1.000000e+00 : f32
    %257 = vector.broadcast %cst_148 : f32 to vector<8x384xf32>
    %258 = arith.addf %257, %256 : vector<8x384xf32>
    %259 = arith.divf %257, %258 : vector<8x384xf32>
    %260 = vector.extract_strided_slice %259 {offsets = [0, 0], sizes = [8, 128], strides = [1, 1]} : vector<8x384xf32> to vector<8x128xf32>
    %261 = vector.extract_strided_slice %259 {offsets = [0, 128], sizes = [8, 128], strides = [1, 1]} : vector<8x384xf32> to vector<8x128xf32>
    %262 = vector.extract_strided_slice %259 {offsets = [0, 256], sizes = [8, 128], strides = [1, 1]} : vector<8x384xf32> to vector<8x128xf32>
    %263 = vector.extract_strided_slice %253 {offsets = [0, 384], sizes = [8, 128], strides = [1, 1]} : vector<8x512xf32> to vector<8x128xf32>
    %264 = math.tanh %263 : vector<8x128xf32>
    %265 = arith.mulf %261, %251 : vector<8x128xf32>
    %266 = arith.mulf %260, %264 : vector<8x128xf32>
    %267 = arith.addf %265, %266 : vector<8x128xf32>
    %268 = math.tanh %267 : vector<8x128xf32>
    %269 = arith.mulf %262, %268 : vector<8x128xf32>
    %c0_149 = arith.constant 0 : index
    %c0_150 = arith.constant 0 : index
    %270 = vector.load %arg9[%c0_149, %c0_150] : memref<8x128xf32, #tpu.memory_space<vmem>>, vector<8x128xf32>
    tpu.vector_store %arg9[%c0_149, %c0_150], %269 {strides = array<i32>} : memref<8x128xf32, #tpu.memory_space<vmem>>, vector<8x128xf32>,
    %c0_151 = arith.constant 0 : index
    %c0_152 = arith.constant 0 : index
    %271 = vector.load %arg10[%c0_151, %c0_152] : memref<8x128xf32, #tpu.memory_space<vmem>>, vector<8x128xf32>
    tpu.vector_store %arg10[%c0_151, %c0_152], %267 {strides = array<i32>} : memref<8x128xf32, #tpu.memory_space<vmem>>, vector<8x128xf32>,
    %c3_153 = arith.constant 3 : index
    %c0_154 = arith.constant 0 : index
    %c0_155 = arith.constant 0 : index
    %272 = vector.load %arg6[%c3_153, %c0_154, %c0_155] : memref<8x8x128xf32, #tpu.memory_space<vmem>>, vector<1x8x128xf32>
    %273 = vector.shape_cast %272 : vector<1x8x128xf32> to vector<8x128xf32>
    %274 = vector.shape_cast %269 : vector<8x128xf32> to vector<1x8x128xf32>
    tpu.vector_store %arg6[%c3_153, %c0_154, %c0_155], %274 {strides = array<i32>} : memref<8x8x128xf32, #tpu.memory_space<vmem>>, vector<1x8x128xf32>,
    %c5_156 = arith.constant 5 : index
    %c0_157 = arith.constant 0 : index
    %c0_158 = arith.constant 0 : index
    %275 = vector.load %arg1[%c5_156, %c0_157, %c0_158] : memref<8x8x512xf32, #tpu.memory_space<vmem>>, vector<1x8x512xf32>
    %276 = vector.shape_cast %275 : vector<1x8x512xf32> to vector<8x512xf32>
    %c0_159 = arith.constant 0 : index
    %c0_160 = arith.constant 0 : index
    %277 = vector.load %arg7[%c0_159, %c0_160] : memref<8x128xf32, #tpu.memory_space<vmem>>, vector<8x128xf32>
    %c0_161 = arith.constant 0 : index
    %c0_162 = arith.constant 0 : index
    %278 = vector.load %arg8[%c0_161, %c0_162] : memref<8x128xf32, #tpu.memory_space<vmem>>, vector<8x128xf32>
    %cst_163 = arith.constant dense<0.000000e+00> : vector<8x512xf32>
    %279 = tpu.matmul %277, %3, %cst_163 {dimension_numbers = #tpu.dot_dimension_numbers<[1], [0], [0], [1], [0, 0, 1, 1], [], []>} : vector<8x128xf32>, vector<128x512xf32>, vector<8x512xf32> -> vector<8x512xf32>
    %280 = arith.addf %276, %279 : vector<8x512xf32>
    %281 = vector.extract_strided_slice %280 {offsets = [0, 0], sizes = [8, 384], strides = [1, 1]} : vector<8x512xf32> to vector<8x384xf32>
    %282 = arith.negf %281 : vector<8x384xf32>
    %283 = math.exp %282 : vector<8x384xf32>
    %cst_164 = arith.constant 1.000000e+00 : f32
    %284 = vector.broadcast %cst_164 : f32 to vector<8x384xf32>
    %285 = arith.addf %284, %283 : vector<8x384xf32>
    %286 = arith.divf %284, %285 : vector<8x384xf32>
    %287 = vector.extract_strided_slice %286 {offsets = [0, 0], sizes = [8, 128], strides = [1, 1]} : vector<8x384xf32> to vector<8x128xf32>
    %288 = vector.extract_strided_slice %286 {offsets = [0, 128], sizes = [8, 128], strides = [1, 1]} : vector<8x384xf32> to vector<8x128xf32>
    %289 = vector.extract_strided_slice %286 {offsets = [0, 256], sizes = [8, 128], strides = [1, 1]} : vector<8x384xf32> to vector<8x128xf32>
    %290 = vector.extract_strided_slice %280 {offsets = [0, 384], sizes = [8, 128], strides = [1, 1]} : vector<8x512xf32> to vector<8x128xf32>
    %291 = math.tanh %290 : vector<8x128xf32>
    %292 = arith.mulf %288, %278 : vector<8x128xf32>
    %293 = arith.mulf %287, %291 : vector<8x128xf32>
    %294 = arith.addf %292, %293 : vector<8x128xf32>
    %295 = math.tanh %294 : vector<8x128xf32>
    %296 = arith.mulf %289, %295 : vector<8x128xf32>
    %c0_165 = arith.constant 0 : index
    %c0_166 = arith.constant 0 : index
    %297 = vector.load %arg7[%c0_165, %c0_166] : memref<8x128xf32, #tpu.memory_space<vmem>>, vector<8x128xf32>
    tpu.vector_store %arg7[%c0_165, %c0_166], %296 {strides = array<i32>} : memref<8x128xf32, #tpu.memory_space<vmem>>, vector<8x128xf32>,
    %c0_167 = arith.constant 0 : index
    %c0_168 = arith.constant 0 : index
    %298 = vector.load %arg8[%c0_167, %c0_168] : memref<8x128xf32, #tpu.memory_space<vmem>>, vector<8x128xf32>
    tpu.vector_store %arg8[%c0_167, %c0_168], %294 {strides = array<i32>} : memref<8x128xf32, #tpu.memory_space<vmem>>, vector<8x128xf32>,
    %c5_169 = arith.constant 5 : index
    %c0_170 = arith.constant 0 : index
    %c0_171 = arith.constant 0 : index
    %299 = vector.load %arg5[%c5_169, %c0_170, %c0_171] : memref<8x8x128xf32, #tpu.memory_space<vmem>>, vector<1x8x128xf32>
    %300 = vector.shape_cast %299 : vector<1x8x128xf32> to vector<8x128xf32>
    %301 = vector.shape_cast %296 : vector<8x128xf32> to vector<1x8x128xf32>
    tpu.vector_store %arg5[%c5_169, %c0_170, %c0_171], %301 {strides = array<i32>} : memref<8x8x128xf32, #tpu.memory_space<vmem>>, vector<1x8x128xf32>,
    %c2_172 = arith.constant 2 : index
    %c0_173 = arith.constant 0 : index
    %c0_174 = arith.constant 0 : index
    %302 = vector.load %arg2[%c2_172, %c0_173, %c0_174] : memref<8x8x512xf32, #tpu.memory_space<vmem>>, vector<1x8x512xf32>
    %303 = vector.shape_cast %302 : vector<1x8x512xf32> to vector<8x512xf32>
    %c0_175 = arith.constant 0 : index
    %c0_176 = arith.constant 0 : index
    %304 = vector.load %arg9[%c0_175, %c0_176] : memref<8x128xf32, #tpu.memory_space<vmem>>, vector<8x128xf32>
    %c0_177 = arith.constant 0 : index
    %c0_178 = arith.constant 0 : index
    %305 = vector.load %arg10[%c0_177, %c0_178] : memref<8x128xf32, #tpu.memory_space<vmem>>, vector<8x128xf32>
    %cst_179 = arith.constant dense<0.000000e+00> : vector<8x512xf32>
    %306 = tpu.matmul %304, %4, %cst_179 {dimension_numbers = #tpu.dot_dimension_numbers<[1], [0], [0], [1], [0, 0, 1, 1], [], []>} : vector<8x128xf32>, vector<128x512xf32>, vector<8x512xf32> -> vector<8x512xf32>
    %307 = arith.addf %303, %306 : vector<8x512xf32>
    %308 = vector.extract_strided_slice %307 {offsets = [0, 0], sizes = [8, 384], strides = [1, 1]} : vector<8x512xf32> to vector<8x384xf32>
    %309 = arith.negf %308 : vector<8x384xf32>
    %310 = math.exp %309 : vector<8x384xf32>
    %cst_180 = arith.constant 1.000000e+00 : f32
    %311 = vector.broadcast %cst_180 : f32 to vector<8x384xf32>
    %312 = arith.addf %311, %310 : vector<8x384xf32>
    %313 = arith.divf %311, %312 : vector<8x384xf32>
    %314 = vector.extract_strided_slice %313 {offsets = [0, 0], sizes = [8, 128], strides = [1, 1]} : vector<8x384xf32> to vector<8x128xf32>
    %315 = vector.extract_strided_slice %313 {offsets = [0, 128], sizes = [8, 128], strides = [1, 1]} : vector<8x384xf32> to vector<8x128xf32>
    %316 = vector.extract_strided_slice %313 {offsets = [0, 256], sizes = [8, 128], strides = [1, 1]} : vector<8x384xf32> to vector<8x128xf32>
    %317 = vector.extract_strided_slice %307 {offsets = [0, 384], sizes = [8, 128], strides = [1, 1]} : vector<8x512xf32> to vector<8x128xf32>
    %318 = math.tanh %317 : vector<8x128xf32>
    %319 = arith.mulf %315, %305 : vector<8x128xf32>
    %320 = arith.mulf %314, %318 : vector<8x128xf32>
    %321 = arith.addf %319, %320 : vector<8x128xf32>
    %322 = math.tanh %321 : vector<8x128xf32>
    %323 = arith.mulf %316, %322 : vector<8x128xf32>
    %c0_181 = arith.constant 0 : index
    %c0_182 = arith.constant 0 : index
    %324 = vector.load %arg9[%c0_181, %c0_182] : memref<8x128xf32, #tpu.memory_space<vmem>>, vector<8x128xf32>
    tpu.vector_store %arg9[%c0_181, %c0_182], %323 {strides = array<i32>} : memref<8x128xf32, #tpu.memory_space<vmem>>, vector<8x128xf32>,
    %c0_183 = arith.constant 0 : index
    %c0_184 = arith.constant 0 : index
    %325 = vector.load %arg10[%c0_183, %c0_184] : memref<8x128xf32, #tpu.memory_space<vmem>>, vector<8x128xf32>
    tpu.vector_store %arg10[%c0_183, %c0_184], %321 {strides = array<i32>} : memref<8x128xf32, #tpu.memory_space<vmem>>, vector<8x128xf32>,
    %c2_185 = arith.constant 2 : index
    %c0_186 = arith.constant 0 : index
    %c0_187 = arith.constant 0 : index
    %326 = vector.load %arg6[%c2_185, %c0_186, %c0_187] : memref<8x8x128xf32, #tpu.memory_space<vmem>>, vector<1x8x128xf32>
    %327 = vector.shape_cast %326 : vector<1x8x128xf32> to vector<8x128xf32>
    %328 = vector.shape_cast %323 : vector<8x128xf32> to vector<1x8x128xf32>
    tpu.vector_store %arg6[%c2_185, %c0_186, %c0_187], %328 {strides = array<i32>} : memref<8x8x128xf32, #tpu.memory_space<vmem>>, vector<1x8x128xf32>,
    %c6_188 = arith.constant 6 : index
    %c0_189 = arith.constant 0 : index
    %c0_190 = arith.constant 0 : index
    %329 = vector.load %arg1[%c6_188, %c0_189, %c0_190] : memref<8x8x512xf32, #tpu.memory_space<vmem>>, vector<1x8x512xf32>
    %330 = vector.shape_cast %329 : vector<1x8x512xf32> to vector<8x512xf32>
    %c0_191 = arith.constant 0 : index
    %c0_192 = arith.constant 0 : index
    %331 = vector.load %arg7[%c0_191, %c0_192] : memref<8x128xf32, #tpu.memory_space<vmem>>, vector<8x128xf32>
    %c0_193 = arith.constant 0 : index
    %c0_194 = arith.constant 0 : index
    %332 = vector.load %arg8[%c0_193, %c0_194] : memref<8x128xf32, #tpu.memory_space<vmem>>, vector<8x128xf32>
    %cst_195 = arith.constant dense<0.000000e+00> : vector<8x512xf32>
    %333 = tpu.matmul %331, %3, %cst_195 {dimension_numbers = #tpu.dot_dimension_numbers<[1], [0], [0], [1], [0, 0, 1, 1], [], []>} : vector<8x128xf32>, vector<128x512xf32>, vector<8x512xf32> -> vector<8x512xf32>
    %334 = arith.addf %330, %333 : vector<8x512xf32>
    %335 = vector.extract_strided_slice %334 {offsets = [0, 0], sizes = [8, 384], strides = [1, 1]} : vector<8x512xf32> to vector<8x384xf32>
    %336 = arith.negf %335 : vector<8x384xf32>
    %337 = math.exp %336 : vector<8x384xf32>
    %cst_196 = arith.constant 1.000000e+00 : f32
    %338 = vector.broadcast %cst_196 : f32 to vector<8x384xf32>
    %339 = arith.addf %338, %337 : vector<8x384xf32>
    %340 = arith.divf %338, %339 : vector<8x384xf32>
    %341 = vector.extract_strided_slice %340 {offsets = [0, 0], sizes = [8, 128], strides = [1, 1]} : vector<8x384xf32> to vector<8x128xf32>
    %342 = vector.extract_strided_slice %340 {offsets = [0, 128], sizes = [8, 128], strides = [1, 1]} : vector<8x384xf32> to vector<8x128xf32>
    %343 = vector.extract_strided_slice %340 {offsets = [0, 256], sizes = [8, 128], strides = [1, 1]} : vector<8x384xf32> to vector<8x128xf32>
    %344 = vector.extract_strided_slice %334 {offsets = [0, 384], sizes = [8, 128], strides = [1, 1]} : vector<8x512xf32> to vector<8x128xf32>
    %345 = math.tanh %344 : vector<8x128xf32>
    %346 = arith.mulf %342, %332 : vector<8x128xf32>
    %347 = arith.mulf %341, %345 : vector<8x128xf32>
    %348 = arith.addf %346, %347 : vector<8x128xf32>
    %349 = math.tanh %348 : vector<8x128xf32>
    %350 = arith.mulf %343, %349 : vector<8x128xf32>
    %c0_197 = arith.constant 0 : index
    %c0_198 = arith.constant 0 : index
    %351 = vector.load %arg7[%c0_197, %c0_198] : memref<8x128xf32, #tpu.memory_space<vmem>>, vector<8x128xf32>
    tpu.vector_store %arg7[%c0_197, %c0_198], %350 {strides = array<i32>} : memref<8x128xf32, #tpu.memory_space<vmem>>, vector<8x128xf32>,
    %c0_199 = arith.constant 0 : index
    %c0_200 = arith.constant 0 : index
    %352 = vector.load %arg8[%c0_199, %c0_200] : memref<8x128xf32, #tpu.memory_space<vmem>>, vector<8x128xf32>
    tpu.vector_store %arg8[%c0_199, %c0_200], %348 {strides = array<i32>} : memref<8x128xf32, #tpu.memory_space<vmem>>, vector<8x128xf32>,
    %c6_201 = arith.constant 6 : index
    %c0_202 = arith.constant 0 : index
    %c0_203 = arith.constant 0 : index
    %353 = vector.load %arg5[%c6_201, %c0_202, %c0_203] : memref<8x8x128xf32, #tpu.memory_space<vmem>>, vector<1x8x128xf32>
    %354 = vector.shape_cast %353 : vector<1x8x128xf32> to vector<8x128xf32>
    %355 = vector.shape_cast %350 : vector<8x128xf32> to vector<1x8x128xf32>
    tpu.vector_store %arg5[%c6_201, %c0_202, %c0_203], %355 {strides = array<i32>} : memref<8x8x128xf32, #tpu.memory_space<vmem>>, vector<1x8x128xf32>,
    %c1_204 = arith.constant 1 : index
    %c0_205 = arith.constant 0 : index
    %c0_206 = arith.constant 0 : index
    %356 = vector.load %arg2[%c1_204, %c0_205, %c0_206] : memref<8x8x512xf32, #tpu.memory_space<vmem>>, vector<1x8x512xf32>
    %357 = vector.shape_cast %356 : vector<1x8x512xf32> to vector<8x512xf32>
    %c0_207 = arith.constant 0 : index
    %c0_208 = arith.constant 0 : index
    %358 = vector.load %arg9[%c0_207, %c0_208] : memref<8x128xf32, #tpu.memory_space<vmem>>, vector<8x128xf32>
    %c0_209 = arith.constant 0 : index
    %c0_210 = arith.constant 0 : index
    %359 = vector.load %arg10[%c0_209, %c0_210] : memref<8x128xf32, #tpu.memory_space<vmem>>, vector<8x128xf32>
    %cst_211 = arith.constant dense<0.000000e+00> : vector<8x512xf32>
    %360 = tpu.matmul %358, %4, %cst_211 {dimension_numbers = #tpu.dot_dimension_numbers<[1], [0], [0], [1], [0, 0, 1, 1], [], []>} : vector<8x128xf32>, vector<128x512xf32>, vector<8x512xf32> -> vector<8x512xf32>
    %361 = arith.addf %357, %360 : vector<8x512xf32>
    %362 = vector.extract_strided_slice %361 {offsets = [0, 0], sizes = [8, 384], strides = [1, 1]} : vector<8x512xf32> to vector<8x384xf32>
    %363 = arith.negf %362 : vector<8x384xf32>
    %364 = math.exp %363 : vector<8x384xf32>
    %cst_212 = arith.constant 1.000000e+00 : f32
    %365 = vector.broadcast %cst_212 : f32 to vector<8x384xf32>
    %366 = arith.addf %365, %364 : vector<8x384xf32>
    %367 = arith.divf %365, %366 : vector<8x384xf32>
    %368 = vector.extract_strided_slice %367 {offsets = [0, 0], sizes = [8, 128], strides = [1, 1]} : vector<8x384xf32> to vector<8x128xf32>
    %369 = vector.extract_strided_slice %367 {offsets = [0, 128], sizes = [8, 128], strides = [1, 1]} : vector<8x384xf32> to vector<8x128xf32>
    %370 = vector.extract_strided_slice %367 {offsets = [0, 256], sizes = [8, 128], strides = [1, 1]} : vector<8x384xf32> to vector<8x128xf32>
    %371 = vector.extract_strided_slice %361 {offsets = [0, 384], sizes = [8, 128], strides = [1, 1]} : vector<8x512xf32> to vector<8x128xf32>
    %372 = math.tanh %371 : vector<8x128xf32>
    %373 = arith.mulf %369, %359 : vector<8x128xf32>
    %374 = arith.mulf %368, %372 : vector<8x128xf32>
    %375 = arith.addf %373, %374 : vector<8x128xf32>
    %376 = math.tanh %375 : vector<8x128xf32>
    %377 = arith.mulf %370, %376 : vector<8x128xf32>
    %c0_213 = arith.constant 0 : index
    %c0_214 = arith.constant 0 : index
    %378 = vector.load %arg9[%c0_213, %c0_214] : memref<8x128xf32, #tpu.memory_space<vmem>>, vector<8x128xf32>
    tpu.vector_store %arg9[%c0_213, %c0_214], %377 {strides = array<i32>} : memref<8x128xf32, #tpu.memory_space<vmem>>, vector<8x128xf32>,
    %c0_215 = arith.constant 0 : index
    %c0_216 = arith.constant 0 : index
    %379 = vector.load %arg10[%c0_215, %c0_216] : memref<8x128xf32, #tpu.memory_space<vmem>>, vector<8x128xf32>
    tpu.vector_store %arg10[%c0_215, %c0_216], %375 {strides = array<i32>} : memref<8x128xf32, #tpu.memory_space<vmem>>, vector<8x128xf32>,
    %c1_217 = arith.constant 1 : index
    %c0_218 = arith.constant 0 : index
    %c0_219 = arith.constant 0 : index
    %380 = vector.load %arg6[%c1_217, %c0_218, %c0_219] : memref<8x8x128xf32, #tpu.memory_space<vmem>>, vector<1x8x128xf32>
    %381 = vector.shape_cast %380 : vector<1x8x128xf32> to vector<8x128xf32>
    %382 = vector.shape_cast %377 : vector<8x128xf32> to vector<1x8x128xf32>
    tpu.vector_store %arg6[%c1_217, %c0_218, %c0_219], %382 {strides = array<i32>} : memref<8x8x128xf32, #tpu.memory_space<vmem>>, vector<1x8x128xf32>,
    %c7_220 = arith.constant 7 : index
    %c0_221 = arith.constant 0 : index
    %c0_222 = arith.constant 0 : index
    %383 = vector.load %arg1[%c7_220, %c0_221, %c0_222] : memref<8x8x512xf32, #tpu.memory_space<vmem>>, vector<1x8x512xf32>
    %384 = vector.shape_cast %383 : vector<1x8x512xf32> to vector<8x512xf32>
    %c0_223 = arith.constant 0 : index
    %c0_224 = arith.constant 0 : index
    %385 = vector.load %arg7[%c0_223, %c0_224] : memref<8x128xf32, #tpu.memory_space<vmem>>, vector<8x128xf32>
    %c0_225 = arith.constant 0 : index
    %c0_226 = arith.constant 0 : index
    %386 = vector.load %arg8[%c0_225, %c0_226] : memref<8x128xf32, #tpu.memory_space<vmem>>, vector<8x128xf32>
    %cst_227 = arith.constant dense<0.000000e+00> : vector<8x512xf32>
    %387 = tpu.matmul %385, %3, %cst_227 {dimension_numbers = #tpu.dot_dimension_numbers<[1], [0], [0], [1], [0, 0, 1, 1], [], []>} : vector<8x128xf32>, vector<128x512xf32>, vector<8x512xf32> -> vector<8x512xf32>
    %388 = arith.addf %384, %387 : vector<8x512xf32>
    %389 = vector.extract_strided_slice %388 {offsets = [0, 0], sizes = [8, 384], strides = [1, 1]} : vector<8x512xf32> to vector<8x384xf32>
    %390 = arith.negf %389 : vector<8x384xf32>
    %391 = math.exp %390 : vector<8x384xf32>
    %cst_228 = arith.constant 1.000000e+00 : f32
    %392 = vector.broadcast %cst_228 : f32 to vector<8x384xf32>
    %393 = arith.addf %392, %391 : vector<8x384xf32>
    %394 = arith.divf %392, %393 : vector<8x384xf32>
    %395 = vector.extract_strided_slice %394 {offsets = [0, 0], sizes = [8, 128], strides = [1, 1]} : vector<8x384xf32> to vector<8x128xf32>
    %396 = vector.extract_strided_slice %394 {offsets = [0, 128], sizes = [8, 128], strides = [1, 1]} : vector<8x384xf32> to vector<8x128xf32>
    %397 = vector.extract_strided_slice %394 {offsets = [0, 256], sizes = [8, 128], strides = [1, 1]} : vector<8x384xf32> to vector<8x128xf32>
    %398 = vector.extract_strided_slice %388 {offsets = [0, 384], sizes = [8, 128], strides = [1, 1]} : vector<8x512xf32> to vector<8x128xf32>
    %399 = math.tanh %398 : vector<8x128xf32>
    %400 = arith.mulf %396, %386 : vector<8x128xf32>
    %401 = arith.mulf %395, %399 : vector<8x128xf32>
    %402 = arith.addf %400, %401 : vector<8x128xf32>
    %403 = math.tanh %402 : vector<8x128xf32>
    %404 = arith.mulf %397, %403 : vector<8x128xf32>
    %c0_229 = arith.constant 0 : index
    %c0_230 = arith.constant 0 : index
    %405 = vector.load %arg7[%c0_229, %c0_230] : memref<8x128xf32, #tpu.memory_space<vmem>>, vector<8x128xf32>
    tpu.vector_store %arg7[%c0_229, %c0_230], %404 {strides = array<i32>} : memref<8x128xf32, #tpu.memory_space<vmem>>, vector<8x128xf32>,
    %c0_231 = arith.constant 0 : index
    %c0_232 = arith.constant 0 : index
    %406 = vector.load %arg8[%c0_231, %c0_232] : memref<8x128xf32, #tpu.memory_space<vmem>>, vector<8x128xf32>
    tpu.vector_store %arg8[%c0_231, %c0_232], %402 {strides = array<i32>} : memref<8x128xf32, #tpu.memory_space<vmem>>, vector<8x128xf32>,
    %c7_233 = arith.constant 7 : index
    %c0_234 = arith.constant 0 : index
    %c0_235 = arith.constant 0 : index
    %407 = vector.load %arg5[%c7_233, %c0_234, %c0_235] : memref<8x8x128xf32, #tpu.memory_space<vmem>>, vector<1x8x128xf32>
    %408 = vector.shape_cast %407 : vector<1x8x128xf32> to vector<8x128xf32>
    %409 = vector.shape_cast %404 : vector<8x128xf32> to vector<1x8x128xf32>
    tpu.vector_store %arg5[%c7_233, %c0_234, %c0_235], %409 {strides = array<i32>} : memref<8x8x128xf32, #tpu.memory_space<vmem>>, vector<1x8x128xf32>,
    %c0_236 = arith.constant 0 : index
    %c0_237 = arith.constant 0 : index
    %c0_238 = arith.constant 0 : index
    %410 = vector.load %arg2[%c0_236, %c0_237, %c0_238] : memref<8x8x512xf32, #tpu.memory_space<vmem>>, vector<1x8x512xf32>
    %411 = vector.shape_cast %410 : vector<1x8x512xf32> to vector<8x512xf32>
    %c0_239 = arith.constant 0 : index
    %c0_240 = arith.constant 0 : index
    %412 = vector.load %arg9[%c0_239, %c0_240] : memref<8x128xf32, #tpu.memory_space<vmem>>, vector<8x128xf32>
    %c0_241 = arith.constant 0 : index
    %c0_242 = arith.constant 0 : index
    %413 = vector.load %arg10[%c0_241, %c0_242] : memref<8x128xf32, #tpu.memory_space<vmem>>, vector<8x128xf32>
    %cst_243 = arith.constant dense<0.000000e+00> : vector<8x512xf32>
    %414 = tpu.matmul %412, %4, %cst_243 {dimension_numbers = #tpu.dot_dimension_numbers<[1], [0], [0], [1], [0, 0, 1, 1], [], []>} : vector<8x128xf32>, vector<128x512xf32>, vector<8x512xf32> -> vector<8x512xf32>
    %415 = arith.addf %411, %414 : vector<8x512xf32>
    %416 = vector.extract_strided_slice %415 {offsets = [0, 0], sizes = [8, 384], strides = [1, 1]} : vector<8x512xf32> to vector<8x384xf32>
    %417 = arith.negf %416 : vector<8x384xf32>
    %418 = math.exp %417 : vector<8x384xf32>
    %cst_244 = arith.constant 1.000000e+00 : f32
    %419 = vector.broadcast %cst_244 : f32 to vector<8x384xf32>
    %420 = arith.addf %419, %418 : vector<8x384xf32>
    %421 = arith.divf %419, %420 : vector<8x384xf32>
    %422 = vector.extract_strided_slice %421 {offsets = [0, 0], sizes = [8, 128], strides = [1, 1]} : vector<8x384xf32> to vector<8x128xf32>
    %423 = vector.extract_strided_slice %421 {offsets = [0, 128], sizes = [8, 128], strides = [1, 1]} : vector<8x384xf32> to vector<8x128xf32>
    %424 = vector.extract_strided_slice %421 {offsets = [0, 256], sizes = [8, 128], strides = [1, 1]} : vector<8x384xf32> to vector<8x128xf32>
    %425 = vector.extract_strided_slice %415 {offsets = [0, 384], sizes = [8, 128], strides = [1, 1]} : vector<8x512xf32> to vector<8x128xf32>
    %426 = math.tanh %425 : vector<8x128xf32>
    %427 = arith.mulf %423, %413 : vector<8x128xf32>
    %428 = arith.mulf %422, %426 : vector<8x128xf32>
    %429 = arith.addf %427, %428 : vector<8x128xf32>
    %430 = math.tanh %429 : vector<8x128xf32>
    %431 = arith.mulf %424, %430 : vector<8x128xf32>
    %c0_245 = arith.constant 0 : index
    %c0_246 = arith.constant 0 : index
    %432 = vector.load %arg9[%c0_245, %c0_246] : memref<8x128xf32, #tpu.memory_space<vmem>>, vector<8x128xf32>
    tpu.vector_store %arg9[%c0_245, %c0_246], %431 {strides = array<i32>} : memref<8x128xf32, #tpu.memory_space<vmem>>, vector<8x128xf32>,
    %c0_247 = arith.constant 0 : index
    %c0_248 = arith.constant 0 : index
    %433 = vector.load %arg10[%c0_247, %c0_248] : memref<8x128xf32, #tpu.memory_space<vmem>>, vector<8x128xf32>
    tpu.vector_store %arg10[%c0_247, %c0_248], %429 {strides = array<i32>} : memref<8x128xf32, #tpu.memory_space<vmem>>, vector<8x128xf32>,
    %c0_249 = arith.constant 0 : index
    %c0_250 = arith.constant 0 : index
    %c0_251 = arith.constant 0 : index
    %434 = vector.load %arg6[%c0_249, %c0_250, %c0_251] : memref<8x8x128xf32, #tpu.memory_space<vmem>>, vector<1x8x128xf32>
    %435 = vector.shape_cast %434 : vector<1x8x128xf32> to vector<8x128xf32>
    %436 = vector.shape_cast %431 : vector<8x128xf32> to vector<1x8x128xf32>
    tpu.vector_store %arg6[%c0_249, %c0_250, %c0_251], %436 {strides = array<i32>} : memref<8x8x128xf32, #tpu.memory_space<vmem>>, vector<1x8x128xf32>,
    return
  }
  func.func @transform_0(%arg0: i32) -> (i32, i32, i32) {
    %c0_i32 = arith.constant 0 : i32
    %c0_i32_0 = arith.constant 0 : i32
    %c0_i32_1 = arith.constant 0 : i32
    return %arg0, %c0_i32, %c0_i32_0 : i32, i32, i32
  }
  func.func @transform_1(%arg0: i32) -> (i32, i32, i32) {
    %c0_i32 = arith.constant 0 : i32
    %0 = arith.subi %c0_i32, %arg0 : i32
    %c0_i32_0 = arith.constant 0 : i32
    %c1_i32 = arith.constant 1 : i32
    %c0_i32_1 = arith.constant 0 : i32
    return %0, %c0_i32_0, %c1_i32 : i32, i32, i32
  }
  func.func @transform_2(%arg0: i32) -> (i32, i32) {
    %c0_i32 = arith.constant 0 : i32
    %c0_i32_0 = arith.constant 0 : i32
    %c0_i32_1 = arith.constant 0 : i32
    return %c0_i32, %c0_i32_0 : i32, i32
  }
  func.func @transform_3(%arg0: i32) -> (i32, i32) {
    %c0_i32 = arith.constant 0 : i32
    %c0_i32_0 = arith.constant 0 : i32
    %c0_i32_1 = arith.constant 0 : i32
    return %c0_i32, %c0_i32_0 : i32, i32
  }
  func.func @transform_4(%arg0: i32) -> (i32, i32, i32) {
    %c0_i32 = arith.constant 0 : i32
    %c0_i32_0 = arith.constant 0 : i32
    %c0_i32_1 = arith.constant 0 : i32
    return %arg0, %c0_i32, %c0_i32_0 : i32, i32, i32
  }
  func.func @transform_5(%arg0: i32) -> (i32, i32, i32) {
    %c0_i32 = arith.constant 0 : i32
    %0 = arith.subi %c0_i32, %arg0 : i32
    %c0_i32_0 = arith.constant 0 : i32
    %c0_i32_1 = arith.constant 0 : i32
    %c0_i32_2 = arith.constant 0 : i32
    return %0, %c0_i32_0, %c0_i32_1 : i32, i32, i32
  }
}

</mosaic_0001>

<llo_original>
// kernel: rnn_forward.4
$region0: #{rnn_forward.4}
  #allocation0 [shape = 'u32[]', space=smem, size = 0x4, offset = 0x4, fixed_abs, tag = 'smem constant byte address 0x4 - core index']
  #allocation1 [shape = 'u32[144,128]{1,0:T(1,128)}', space=vmem, size = 0x12000, scoped, tag = 'internal scratch']
  %s0 = inlined_call_operand.vmem [shape: f32[64,16], index: 0, kind: input, shape index: {}]
  %s1 = inlined_call_operand.vmem [shape: f32[16,1024], index: 1, kind: input, shape index: {}]
  %s2 = inlined_call_operand.vmem [shape: f32[1,1024], index: 2, kind: input, shape index: {}]
  %s3 = inlined_call_operand.vmem [shape: f32[64,1024], index: 3, kind: output, shape index: {}]
  %s4 = sld [smem:[#allocation0]]
  $region22: #{rnn_forward.4} parent=0
    _
  %s6 = ssub.s32 1, %s4
  %s7 = scalar_select 0, %s6, %s4
  // Predicated region
  $region2: #{rnn_forward.4} parent=0 // pred_check
    _
  $region3: #{rnn_forward.4} parent=0 // pred_check_branch
    %9 = sbr.rel (0) target = $region5
  $region4: #{rnn_forward.4} parent=0 // pred_region
    _
  $region5: #{rnn_forward.4} parent=0 // pred_fallthru
    _
  // Predicated region
  $region6: #{rnn_forward.4} parent=0 // pred_check
    _
  $region7: #{rnn_forward.4} parent=0 // pred_check_branch
    %11 = sbr.rel (0) target = $region9
  $region8: #{rnn_forward.4} parent=0 // pred_region
    _
  $region9: #{rnn_forward.4} parent=0 // pred_fallthru
    _
  // Predicated region
  $region10: #{rnn_forward.4} parent=0 // pred_check
    _
  $region11: #{rnn_forward.4} parent=0 // pred_check_branch
    %13 = sbr.rel (0) target = $region13
  $region12: #{rnn_forward.4} parent=0 // pred_region
    _
  $region13: #{rnn_forward.4} parent=0 // pred_fallthru
    _
  %v14 = vld [vmem:[%s0] sm:$0xff]
  %v15 = vld [vmem:[%s0 + $0x8] sm:$0xff]
  %v16 = vld [vmem:[%s0 + $0x10] sm:$0xff]
  %v17 = vld [vmem:[%s0 + $0x18] sm:$0xff]
  %v18 = vld [vmem:[%s0 + $0x20] sm:$0xff]
  %v19 = vld [vmem:[%s0 + $0x28] sm:$0xff]
  %v20 = vld [vmem:[%s0 + $0x30] sm:$0xff]
  %v21 = vld [vmem:[%s0 + $0x38] sm:$0xff]
  %v22 = vld [vmem:[%s1] sm:$0xff]
  %v23 = vld [vmem:[%s1 + $0x8] sm:$0xff]
  %v24 = vld [vmem:[%s1 + $0x10] sm:$0xff]
  %v25 = vld [vmem:[%s1 + $0x18] sm:$0xff]
  %v26 = vld [vmem:[%s1 + $0x20] sm:$0xff]
  %v27 = vld [vmem:[%s1 + $0x28] sm:$0xff]
  %v28 = vld [vmem:[%s1 + $0x30] sm:$0xff]
  %v29 = vld [vmem:[%s1 + $0x38] sm:$0xff]
  %v30 = vld [vmem:[%s1 + $0x40] sm:$0xff]
  %v31 = vld [vmem:[%s1 + $0x48] sm:$0xff]
  %v32 = vld [vmem:[%s1 + $0x50] sm:$0xff]
  %v33 = vld [vmem:[%s1 + $0x58] sm:$0xff]
  %v34 = vld [vmem:[%s1 + $0x60] sm:$0xff]
  %v35 = vld [vmem:[%s1 + $0x68] sm:$0xff]
  %v36 = vld [vmem:[%s1 + $0x70] sm:$0xff]
  %v37 = vld [vmem:[%s1 + $0x78] sm:$0xff]
  %v38 = vld [vmem:[%s2] sm:$0xff]
  %v40 = vlaneseq
  %v41 = vshrl.u32 %v40, 7
  %v42 = vsub.s32 0, %v41
  %v43 = vrot.slane %v38, %v42
  %v44 = vlaneseq
  %v45 = vshrl.u32 %v44, 7
  %v46 = vsub.s32 1, %v45
  %v47 = vrot.slane %v38, %v46
  %v48 = vlaneseq
  %v49 = vshrl.u32 %v48, 7
  %v50 = vsub.s32 2, %v49
  %v51 = vrot.slane %v38, %v50
  %v52 = vlaneseq
  %v53 = vshrl.u32 %v52, 7
  %v54 = vsub.s32 3, %v53
  %v55 = vrot.slane %v38, %v54
  %v56 = vlaneseq
  %v57 = vshrl.u32 %v56, 7
  %v58 = vsub.s32 4, %v57
  %v59 = vrot.slane %v38, %v58
  %v60 = vlaneseq
  %v61 = vshrl.u32 %v60, 7
  %v62 = vsub.s32 5, %v61
  %v63 = vrot.slane %v38, %v62
  %v64 = vlaneseq
  %v65 = vshrl.u32 %v64, 7
  %v66 = vsub.s32 6, %v65
  %v67 = vrot.slane %v38, %v66
  %v68 = vlaneseq
  %v69 = vshrl.u32 %v68, 7
  %v70 = vsub.s32 7, %v69
  %v71 = vrot.slane %v38, %v70
  %vm80 = vcmask 130048
  %v82 = vsel %vm80, %v14, 0
  %v85 = vsel %vm80, %v15, 0
  %v88 = vsel %vm80, %v16, 0
  %v91 = vsel %vm80, %v17, 0
  %v94 = vsel %vm80, %v18, 0
  %v97 = vsel %vm80, %v19, 0
  %v100 = vsel %vm80, %v20, 0
  %v103 = vsel %vm80, %v21, 0
  %105 = vmatprep.subr.mxu0 %v23
  %106 = vmatpush1.msra.mxu0 %v22
  %107 = vmatprep.subr.mxu0 %v31
  %108 = vmatpush1.msra.mxu0 %v30
  %109 = vmatprep.subr.mxu0 0.0
  %110 = vmatpush1.msra.mxu0 0.0
  %111 = vmatprep.subr.mxu0 0.0
  %112 = vmatpush1.msra.mxu0 0.0
  %113 = vmatprep.subr.mxu0 0.0
  %114 = vmatpush1.msra.mxu0 0.0
  %115 = vmatprep.subr.mxu0 0.0
  %116 = vmatpush1.msra.mxu0 0.0
  %117 = vmatprep.subr.mxu0 0.0
  %118 = vmatpush1.msra.mxu0 0.0
  %119 = vmatprep.subr.mxu0 0.0
  %120 = vmatpush1.msra.mxu0 0.0
  %121 = vmatprep.subr.mxu0 0.0
  %122 = vmatpush1.msra.mxu0 0.0
  %123 = vmatprep.subr.mxu0 0.0
  %124 = vmatpush1.msra.mxu0 0.0
  %125 = vmatprep.subr.mxu0 0.0
  %126 = vmatpush1.msra.mxu0 0.0
  %127 = vmatprep.subr.mxu0 0.0
  %128 = vmatpush1.msra.mxu0 0.0
  %129 = vmatprep.subr.mxu0 0.0
  %130 = vmatpush1.msra.mxu0 0.0
  %131 = vmatprep.subr.mxu0 0.0
  %132 = vmatpush1.msra.mxu0 0.0
  %133 = vmatprep.subr.mxu0 0.0
  %134 = vmatpush1.msra.mxu0 0.0
  %135 = vmatprep.subr.mxu0 0.0
  %136 = vmatpush1.msra.mxu0 0.0
  %137 = vmatprep.subr.mxu0 0.0
  %138 = vmatpush1.msra.mxu0 0.0
  %139 = vmatprep.subr.mxu0 0.0
  %140 = vmatpush1.msra.mxu0 0.0
  %141 = vmatprep.subr.mxu0 0.0
  %142 = vmatpush1.msra.mxu0 0.0
  %143 = vmatprep.subr.mxu0 0.0
  %144 = vmatpush1.msra.mxu0 0.0
  %145 = vmatprep.subr.mxu0 0.0
  %146 = vmatpush1.msra.mxu0 0.0
  %147 = vmatprep.subr.mxu0 0.0
  %148 = vmatpush1.msra.mxu0 0.0
  %149 = vmatprep.subr.mxu0 0.0
  %150 = vmatpush1.msra.mxu0 0.0
  %151 = vmatprep.subr.mxu0 0.0
  %152 = vmatpush1.msra.mxu0 0.0
  %153 = vmatprep.subr.mxu0 0.0
  %154 = vmatpush1.msra.mxu0 0.0
  %155 = vmatprep.subr.mxu0 0.0
  %156 = vmatpush1.msra.mxu0 0.0
  %157 = vmatprep.subr.mxu0 0.0
  %158 = vmatpush1.msra.mxu0 0.0
  %159 = vmatprep.subr.mxu0 0.0
  %160 = vmatpush1.msra.mxu0 0.0
  %161 = vmatprep.subr.mxu0 0.0
  %162 = vmatpush1.msra.mxu0 0.0
  %163 = vmatprep.subr.mxu0 0.0
  %164 = vmatpush1.msra.mxu0 0.0
  %165 = vmatprep.subr.mxu0 0.0
  %166 = vmatpush1.msra.mxu0 0.0
  %167 = vmatprep.subr.mxu0 0.0
  %168 = vmatpush1.msra.mxu0 0.0
  %169 = vmatprep.mubr.f32.mxu0 0.0
  %170 = vmatmul.mubr.f32.gmra.mrb[0].mxu0 %v82
  %v171 = vpop.f32.mrb[0].mxu0
  %v172 = vadd.f32 %v43, %v171
  %v173 = vpop.f32.mrb[0].mxu0
  %v174 = vadd.f32 %v47, %v173
  %175 = vmatprep.mubr.f32.mxu0 0.0
  %176 = vmatmul.mubr.f32.gmra.mrb[0].mxu0 %v85
  %v177 = vpop.f32.mrb[0].mxu0
  %v178 = vadd.f32 %v43, %v177
  %v179 = vpop.f32.mrb[0].mxu0
  %v180 = vadd.f32 %v47, %v179
  %181 = vmatprep.mubr.f32.mxu0 0.0
  %182 = vmatmul.mubr.f32.gmra.mrb[0].mxu0 %v88
  %v183 = vpop.f32.mrb[0].mxu0
  %v184 = vadd.f32 %v43, %v183
  %v185 = vpop.f32.mrb[0].mxu0
  %v186 = vadd.f32 %v47, %v185
  %187 = vmatprep.mubr.f32.mxu0 0.0
  %188 = vmatmul.mubr.f32.gmra.mrb[0].mxu0 %v91
  %v189 = vpop.f32.mrb[0].mxu0
  %v190 = vadd.f32 %v43, %v189
  %v191 = vpop.f32.mrb[0].mxu0
  %v192 = vadd.f32 %v47, %v191
  %193 = vmatprep.mubr.f32.mxu0 0.0
  %194 = vmatmul.mubr.f32.gmra.mrb[0].mxu0 %v94
  %v195 = vpop.f32.mrb[0].mxu0
  %v196 = vadd.f32 %v43, %v195
  %v197 = vpop.f32.mrb[0].mxu0
  %v198 = vadd.f32 %v47, %v197
  %199 = vmatprep.mubr.f32.mxu0 0.0
  %200 = vmatmul.mubr.f32.gmra.mrb[0].mxu0 %v97
  %v201 = vpop.f32.mrb[0].mxu0
  %v202 = vadd.f32 %v43, %v201
  %v203 = vpop.f32.mrb[0].mxu0
  %v204 = vadd.f32 %v47, %v203
  %205 = vmatprep.mubr.f32.mxu0 0.0
  %206 = vmatmul.mubr.f32.gmra.mrb[0].mxu0 %v100
  %v207 = vpop.f32.mrb[0].mxu0
  %v208 = vadd.f32 %v43, %v207
  %v209 = vpop.f32.mrb[0].mxu0
  %v210 = vadd.f32 %v47, %v209
  %211 = vmatprep.mubr.f32.mxu0 0.0
  %212 = vmatmul.mubr.f32.gmra.mrb[0].mxu0 %v103
  %v213 = vpop.f32.mrb[0].mxu0
  %v214 = vadd.f32 %v43, %v213
  %v215 = vpop.f32.mrb[0].mxu0
  %v216 = vadd.f32 %v47, %v215
  %217 = vdwg.mxu0
  %218 = vmatprep.subr.mxu0 %v25
  %219 = vmatpush1.msra.mxu0 %v24
  %220 = vmatprep.subr.mxu0 %v33
  %221 = vmatpush1.msra.mxu0 %v32
  %222 = vmatprep.subr.mxu0 0.0
  %223 = vmatpush1.msra.mxu0 0.0
  %224 = vmatprep.subr.mxu0 0.0
  %225 = vmatpush1.msra.mxu0 0.0
  %226 = vmatprep.subr.mxu0 0.0
  %227 = vmatpush1.msra.mxu0 0.0
  %228 = vmatprep.subr.mxu0 0.0
  %229 = vmatpush1.msra.mxu0 0.0
  %230 = vmatprep.subr.mxu0 0.0
  %231 = vmatpush1.msra.mxu0 0.0
  %232 = vmatprep.subr.mxu0 0.0
  %233 = vmatpush1.msra.mxu0 0.0
  %234 = vmatprep.subr.mxu0 0.0
  %235 = vmatpush1.msra.mxu0 0.0
  %236 = vmatprep.subr.mxu0 0.0
  %237 = vmatpush1.msra.mxu0 0.0
  %238 = vmatprep.subr.mxu0 0.0
  %239 = vmatpush1.msra.mxu0 0.0
  %240 = vmatprep.subr.mxu0 0.0
  %241 = vmatpush1.msra.mxu0 0.0
  %242 = vmatprep.subr.mxu0 0.0
  %243 = vmatpush1.msra.mxu0 0.0
  %244 = vmatprep.subr.mxu0 0.0
  %245 = vmatpush1.msra.mxu0 0.0
  %246 = vmatprep.subr.mxu0 0.0
  %247 = vmatpush1.msra.mxu0 0.0
  %248 = vmatprep.subr.mxu0 0.0
  %249 = vmatpush1.msra.mxu0 0.0
  %250 = vmatprep.subr.mxu0 0.0
  %251 = vmatpush1.msra.mxu0 0.0
  %252 = vmatprep.subr.mxu0 0.0
  %253 = vmatpush1.msra.mxu0 0.0
  %254 = vmatprep.subr.mxu0 0.0
  %255 = vmatpush1.msra.mxu0 0.0
  %256 = vmatprep.subr.mxu0 0.0
  %257 = vmatpush1.msra.mxu0 0.0
  %258 = vmatprep.subr.mxu0 0.0
  %259 = vmatpush1.msra.mxu0 0.0
  %260 = vmatprep.subr.mxu0 0.0
  %261 = vmatpush1.msra.mxu0 0.0
  %262 = vmatprep.subr.mxu0 0.0
  %263 = vmatpush1.msra.mxu0 0.0
  %264 = vmatprep.subr.mxu0 0.0
  %265 = vmatpush1.msra.mxu0 0.0
  %266 = vmatprep.subr.mxu0 0.0
  %267 = vmatpush1.msra.mxu0 0.0
  %268 = vmatprep.subr.mxu0 0.0
  %269 = vmatpush1.msra.mxu0 0.0
  %270 = vmatprep.subr.mxu0 0.0
  %271 = vmatpush1.msra.mxu0 0.0
  %272 = vmatprep.subr.mxu0 0.0
  %273 = vmatpush1.msra.mxu0 0.0
  %274 = vmatprep.subr.mxu0 0.0
  %275 = vmatpush1.msra.mxu0 0.0
  %276 = vmatprep.subr.mxu0 0.0
  %277 = vmatpush1.msra.mxu0 0.0
  %278 = vmatprep.subr.mxu0 0.0
  %279 = vmatpush1.msra.mxu0 0.0
  %280 = vmatprep.subr.mxu0 0.0
  %281 = vmatpush1.msra.mxu0 0.0
  %282 = vmatprep.mubr.f32.mxu0 0.0
  %283 = vmatmul.mubr.f32.gmra.mrb[0].mxu0 %v82
  %v284 = vpop.f32.mrb[0].mxu0
  %v285 = vadd.f32 %v51, %v284
  %v286 = vpop.f32.mrb[0].mxu0
  %v287 = vadd.f32 %v55, %v286
  %288 = vmatprep.mubr.f32.mxu0 0.0
  %289 = vmatmul.mubr.f32.gmra.mrb[0].mxu0 %v85
  %v290 = vpop.f32.mrb[0].mxu0
  %v291 = vadd.f32 %v51, %v290
  %v292 = vpop.f32.mrb[0].mxu0
  %v293 = vadd.f32 %v55, %v292
  %294 = vmatprep.mubr.f32.mxu0 0.0
  %295 = vmatmul.mubr.f32.gmra.mrb[0].mxu0 %v88
  %v296 = vpop.f32.mrb[0].mxu0
  %v297 = vadd.f32 %v51, %v296
  %v298 = vpop.f32.mrb[0].mxu0
  %v299 = vadd.f32 %v55, %v298
  %300 = vmatprep.mubr.f32.mxu0 0.0
  %301 = vmatmul.mubr.f32.gmra.mrb[0].mxu0 %v91
  %v302 = vpop.f32.mrb[0].mxu0
  %v303 = vadd.f32 %v51, %v302
  %v304 = vpop.f32.mrb[0].mxu0
  %v305 = vadd.f32 %v55, %v304
  %306 = vmatprep.mubr.f32.mxu0 0.0
  %307 = vmatmul.mubr.f32.gmra.mrb[0].mxu0 %v94
  %v308 = vpop.f32.mrb[0].mxu0
  %v309 = vadd.f32 %v51, %v308
  %v310 = vpop.f32.mrb[0].mxu0
  %v311 = vadd.f32 %v55, %v310
  %312 = vmatprep.mubr.f32.mxu0 0.0
  %313 = vmatmul.mubr.f32.gmra.mrb[0].mxu0 %v97
  %v314 = vpop.f32.mrb[0].mxu0
  %v315 = vadd.f32 %v51, %v314
  %v316 = vpop.f32.mrb[0].mxu0
  %v317 = vadd.f32 %v55, %v316
  %318 = vmatprep.mubr.f32.mxu0 0.0
  %319 = vmatmul.mubr.f32.gmra.mrb[0].mxu0 %v100
  %v320 = vpop.f32.mrb[0].mxu0
  %v321 = vadd.f32 %v51, %v320
  %v322 = vpop.f32.mrb[0].mxu0
  %v323 = vadd.f32 %v55, %v322
  %324 = vmatprep.mubr.f32.mxu0 0.0
  %325 = vmatmul.mubr.f32.gmra.mrb[0].mxu0 %v103
  %v326 = vpop.f32.mrb[0].mxu0
  %v327 = vadd.f32 %v51, %v326
  %v328 = vpop.f32.mrb[0].mxu0
  %v329 = vadd.f32 %v55, %v328
  %330 = vdwg.mxu0
  %331 = vmatprep.subr.mxu0 %v27
  %332 = vmatpush1.msra.mxu0 %v26
  %333 = vmatprep.subr.mxu0 %v35
  %334 = vmatpush1.msra.mxu0 %v34
  %335 = vmatprep.subr.mxu0 0.0
  %336 = vmatpush1.msra.mxu0 0.0
  %337 = vmatprep.subr.mxu0 0.0
  %338 = vmatpush1.msra.mxu0 0.0
  %339 = vmatprep.subr.mxu0 0.0
  %340 = vmatpush1.msra.mxu0 0.0
  %341 = vmatprep.subr.mxu0 0.0
  %342 = vmatpush1.msra.mxu0 0.0
  %343 = vmatprep.subr.mxu0 0.0
  %344 = vmatpush1.msra.mxu0 0.0
  %345 = vmatprep.subr.mxu0 0.0
  %346 = vmatpush1.msra.mxu0 0.0
  %347 = vmatprep.subr.mxu0 0.0
  %348 = vmatpush1.msra.mxu0 0.0
  %349 = vmatprep.subr.mxu0 0.0
  %350 = vmatpush1.msra.mxu0 0.0
  %351 = vmatprep.subr.mxu0 0.0
  %352 = vmatpush1.msra.mxu0 0.0
  %353 = vmatprep.subr.mxu0 0.0
  %354 = vmatpush1.msra.mxu0 0.0
  %355 = vmatprep.subr.mxu0 0.0
  %356 = vmatpush1.msra.mxu0 0.0
  %357 = vmatprep.subr.mxu0 0.0
  %358 = vmatpush1.msra.mxu0 0.0
  %359 = vmatprep.subr.mxu0 0.0
  %360 = vmatpush1.msra.mxu0 0.0
  %361 = vmatprep.subr.mxu0 0.0
  %362 = vmatpush1.msra.mxu0 0.0
  %363 = vmatprep.subr.mxu0 0.0
  %364 = vmatpush1.msra.mxu0 0.0
  %365 = vmatprep.subr.mxu0 0.0
  %366 = vmatpush1.msra.mxu0 0.0
  %367 = vmatprep.subr.mxu0 0.0
  %368 = vmatpush1.msra.mxu0 0.0
  %369 = vmatprep.subr.mxu0 0.0
  %370 = vmatpush1.msra.mxu0 0.0
  %371 = vmatprep.subr.mxu0 0.0
  %372 = vmatpush1.msra.mxu0 0.0
  %373 = vmatprep.subr.mxu0 0.0
  %374 = vmatpush1.msra.mxu0 0.0
  %375 = vmatprep.subr.mxu0 0.0
  %376 = vmatpush1.msra.mxu0 0.0
  %377 = vmatprep.subr.mxu0 0.0
  %378 = vmatpush1.msra.mxu0 0.0
  %379 = vmatprep.subr.mxu0 0.0
  %380 = vmatpush1.msra.mxu0 0.0
  %381 = vmatprep.subr.mxu0 0.0
  %382 = vmatpush1.msra.mxu0 0.0
  %383 = vmatprep.subr.mxu0 0.0
  %384 = vmatpush1.msra.mxu0 0.0
  %385 = vmatprep.subr.mxu0 0.0
  %386 = vmatpush1.msra.mxu0 0.0
  %387 = vmatprep.subr.mxu0 0.0
  %388 = vmatpush1.msra.mxu0 0.0
  %389 = vmatprep.subr.mxu0 0.0
  %390 = vmatpush1.msra.mxu0 0.0
  %391 = vmatprep.subr.mxu0 0.0
  %392 = vmatpush1.msra.mxu0 0.0
  %393 = vmatprep.subr.mxu0 0.0
  %394 = vmatpush1.msra.mxu0 0.0
  %395 = vmatprep.mubr.f32.mxu0 0.0
  %396 = vmatmul.mubr.f32.gmra.mrb[0].mxu0 %v82
  %v397 = vpop.f32.mrb[0].mxu0
  %v398 = vadd.f32 %v59, %v397
  %v399 = vpop.f32.mrb[0].mxu0
  %v400 = vadd.f32 %v63, %v399
  %401 = vmatprep.mubr.f32.mxu0 0.0
  %402 = vmatmul.mubr.f32.gmra.mrb[0].mxu0 %v85
  %v403 = vpop.f32.mrb[0].mxu0
  %v404 = vadd.f32 %v59, %v403
  %v405 = vpop.f32.mrb[0].mxu0
  %v406 = vadd.f32 %v63, %v405
  %407 = vmatprep.mubr.f32.mxu0 0.0
  %408 = vmatmul.mubr.f32.gmra.mrb[0].mxu0 %v88
  %v409 = vpop.f32.mrb[0].mxu0
  %v410 = vadd.f32 %v59, %v409
  %v411 = vpop.f32.mrb[0].mxu0
  %v412 = vadd.f32 %v63, %v411
  %413 = vmatprep.mubr.f32.mxu0 0.0
  %414 = vmatmul.mubr.f32.gmra.mrb[0].mxu0 %v91
  %v415 = vpop.f32.mrb[0].mxu0
  %v416 = vadd.f32 %v59, %v415
  %v417 = vpop.f32.mrb[0].mxu0
  %v418 = vadd.f32 %v63, %v417
  %419 = vmatprep.mubr.f32.mxu0 0.0
  %420 = vmatmul.mubr.f32.gmra.mrb[0].mxu0 %v94
  %v421 = vpop.f32.mrb[0].mxu0
  %v422 = vadd.f32 %v59, %v421
  %v423 = vpop.f32.mrb[0].mxu0
  %v424 = vadd.f32 %v63, %v423
  %425 = vmatprep.mubr.f32.mxu0 0.0
  %426 = vmatmul.mubr.f32.gmra.mrb[0].mxu0 %v97
  %v427 = vpop.f32.mrb[0].mxu0
  %v428 = vadd.f32 %v59, %v427
  %v429 = vpop.f32.mrb[0].mxu0
  %v430 = vadd.f32 %v63, %v429
  %431 = vmatprep.mubr.f32.mxu0 0.0
  %432 = vmatmul.mubr.f32.gmra.mrb[0].mxu0 %v100
  %v433 = vpop.f32.mrb[0].mxu0
  %v434 = vadd.f32 %v59, %v433
  %v435 = vpop.f32.mrb[0].mxu0
  %v436 = vadd.f32 %v63, %v435
  %437 = vmatprep.mubr.f32.mxu0 0.0
  %438 = vmatmul.mubr.f32.gmra.mrb[0].mxu0 %v103
  %v439 = vpop.f32.mrb[0].mxu0
  %v440 = vadd.f32 %v59, %v439
  %v441 = vpop.f32.mrb[0].mxu0
  %v442 = vadd.f32 %v63, %v441
  %443 = vdwg.mxu0
  %444 = vmatprep.subr.mxu0 %v29
  %445 = vmatpush1.msra.mxu0 %v28
  %446 = vmatprep.subr.mxu0 %v37
  %447 = vmatpush1.msra.mxu0 %v36
  %448 = vmatprep.subr.mxu0 0.0
  %449 = vmatpush1.msra.mxu0 0.0
  %450 = vmatprep.subr.mxu0 0.0
  %451 = vmatpush1.msra.mxu0 0.0
  %452 = vmatprep.subr.mxu0 0.0
  %453 = vmatpush1.msra.mxu0 0.0
  %454 = vmatprep.subr.mxu0 0.0
  %455 = vmatpush1.msra.mxu0 0.0
  %456 = vmatprep.subr.mxu0 0.0
  %457 = vmatpush1.msra.mxu0 0.0
  %458 = vmatprep.subr.mxu0 0.0
  %459 = vmatpush1.msra.mxu0 0.0
  %460 = vmatprep.subr.mxu0 0.0
  %461 = vmatpush1.msra.mxu0 0.0
  %462 = vmatprep.subr.mxu0 0.0
  %463 = vmatpush1.msra.mxu0 0.0
  %464 = vmatprep.subr.mxu0 0.0
  %465 = vmatpush1.msra.mxu0 0.0
  %466 = vmatprep.subr.mxu0 0.0
  %467 = vmatpush1.msra.mxu0 0.0
  %468 = vmatprep.subr.mxu0 0.0
  %469 = vmatpush1.msra.mxu0 0.0
  %470 = vmatprep.subr.mxu0 0.0
  %471 = vmatpush1.msra.mxu0 0.0
  %472 = vmatprep.subr.mxu0 0.0
  %473 = vmatpush1.msra.mxu0 0.0
  %474 = vmatprep.subr.mxu0 0.0
  %475 = vmatpush1.msra.mxu0 0.0
  %476 = vmatprep.subr.mxu0 0.0
  %477 = vmatpush1.msra.mxu0 0.0
  %478 = vmatprep.subr.mxu0 0.0
  %479 = vmatpush1.msra.mxu0 0.0
  %480 = vmatprep.subr.mxu0 0.0
  %481 = vmatpush1.msra.mxu0 0.0
  %482 = vmatprep.subr.mxu0 0.0
  %483 = vmatpush1.msra.mxu0 0.0
  %484 = vmatprep.subr.mxu0 0.0
  %485 = vmatpush1.msra.mxu0 0.0
  %486 = vmatprep.subr.mxu0 0.0
  %487 = vmatpush1.msra.mxu0 0.0
  %488 = vmatprep.subr.mxu0 0.0
  %489 = vmatpush1.msra.mxu0 0.0
  %490 = vmatprep.subr.mxu0 0.0
  %491 = vmatpush1.msra.mxu0 0.0
  %492 = vmatprep.subr.mxu0 0.0
  %493 = vmatpush1.msra.mxu0 0.0
  %494 = vmatprep.subr.mxu0 0.0
  %495 = vmatpush1.msra.mxu0 0.0
  %496 = vmatprep.subr.mxu0 0.0
  %497 = vmatpush1.msra.mxu0 0.0
  %498 = vmatprep.subr.mxu0 0.0
  %499 = vmatpush1.msra.mxu0 0.0
  %500 = vmatprep.subr.mxu0 0.0
  %501 = vmatpush1.msra.mxu0 0.0
  %502 = vmatprep.subr.mxu0 0.0
  %503 = vmatpush1.msra.mxu0 0.0
  %504 = vmatprep.subr.mxu0 0.0
  %505 = vmatpush1.msra.mxu0 0.0
  %506 = vmatprep.subr.mxu0 0.0
  %507 = vmatpush1.msra.mxu0 0.0
  %508 = vmatprep.mubr.f32.mxu0 0.0
  %509 = vmatmul.mubr.f32.gmra.mrb[0].mxu0 %v82
  %v510 = vpop.f32.mrb[0].mxu0
  %v511 = vadd.f32 %v67, %v510
  %v512 = vpop.f32.mrb[0].mxu0
  %v513 = vadd.f32 %v71, %v512
  %514 = vmatprep.mubr.f32.mxu0 0.0
  %515 = vmatmul.mubr.f32.gmra.mrb[0].mxu0 %v85
  %v516 = vpop.f32.mrb[0].mxu0
  %v517 = vadd.f32 %v67, %v516
  %v518 = vpop.f32.mrb[0].mxu0
  %v519 = vadd.f32 %v71, %v518
  %520 = vmatprep.mubr.f32.mxu0 0.0
  %521 = vmatmul.mubr.f32.gmra.mrb[0].mxu0 %v88
  %v522 = vpop.f32.mrb[0].mxu0
  %v523 = vadd.f32 %v67, %v522
  %v524 = vpop.f32.mrb[0].mxu0
  %v525 = vadd.f32 %v71, %v524
  %526 = vmatprep.mubr.f32.mxu0 0.0
  %527 = vmatmul.mubr.f32.gmra.mrb[0].mxu0 %v91
  %v528 = vpop.f32.mrb[0].mxu0
  %v529 = vadd.f32 %v67, %v528
  %v530 = vpop.f32.mrb[0].mxu0
  %v531 = vadd.f32 %v71, %v530
  %532 = vmatprep.mubr.f32.mxu0 0.0
  %533 = vmatmul.mubr.f32.gmra.mrb[0].mxu0 %v94
  %v534 = vpop.f32.mrb[0].mxu0
  %v535 = vadd.f32 %v67, %v534
  %v536 = vpop.f32.mrb[0].mxu0
  %v537 = vadd.f32 %v71, %v536
  %538 = vmatprep.mubr.f32.mxu0 0.0
  %539 = vmatmul.mubr.f32.gmra.mrb[0].mxu0 %v97
  %v540 = vpop.f32.mrb[0].mxu0
  %v541 = vadd.f32 %v67, %v540
  %v542 = vpop.f32.mrb[0].mxu0
  %v543 = vadd.f32 %v71, %v542
  %544 = vmatprep.mubr.f32.mxu0 0.0
  %545 = vmatmul.mubr.f32.gmra.mrb[0].mxu0 %v100
  %v546 = vpop.f32.mrb[0].mxu0
  %v547 = vadd.f32 %v67, %v546
  %v548 = vpop.f32.mrb[0].mxu0
  %v549 = vadd.f32 %v71, %v548
  %550 = vmatprep.mubr.f32.mxu0 0.0
  %551 = vmatmul.mubr.f32.gmra.mrb[0].mxu0 %v103
  %v552 = vpop.f32.mrb[0].mxu0
  %v553 = vadd.f32 %v67, %v552
  %v554 = vpop.f32.mrb[0].mxu0
  %v555 = vadd.f32 %v71, %v554
  %556 = vdwg.mxu0
  %557 = vst [vmem:[%s3] sm:$0xff] %v172
  %558 = vst [vmem:[%s3 + $0x8] sm:$0xff] %v174
  %559 = vst [vmem:[%s3 + $0x10] sm:$0xff] %v285
  %560 = vst [vmem:[%s3 + $0x18] sm:$0xff] %v287
  %561 = vst [vmem:[%s3 + $0x20] sm:$0xff] %v398
  %562 = vst [vmem:[%s3 + $0x28] sm:$0xff] %v400
  %563 = vst [vmem:[%s3 + $0x30] sm:$0xff] %v511
  %564 = vst [vmem:[%s3 + $0x38] sm:$0xff] %v513
  %565 = vst [vmem:[%s3 + $0x40] sm:$0xff] %v178
  %566 = vst [vmem:[%s3 + $0x48] sm:$0xff] %v180
  %567 = vst [vmem:[%s3 + $0x50] sm:$0xff] %v291
  %568 = vst [vmem:[%s3 + $0x58] sm:$0xff] %v293
  %569 = vst [vmem:[%s3 + $0x60] sm:$0xff] %v404
  %570 = vst [vmem:[%s3 + $0x68] sm:$0xff] %v406
  %571 = vst [vmem:[%s3 + $0x70] sm:$0xff] %v517
  %572 = vst [vmem:[%s3 + $0x78] sm:$0xff] %v519
  %573 = vst [vmem:[%s3 + $0x80] sm:$0xff] %v184
  %574 = vst [vmem:[%s3 + $0x88] sm:$0xff] %v186
  %575 = vst [vmem:[%s3 + $0x90] sm:$0xff] %v297
  %576 = vst [vmem:[%s3 + $0x98] sm:$0xff] %v299
  %577 = vst [vmem:[%s3 + $0xa0] sm:$0xff] %v410
  %578 = vst [vmem:[%s3 + $0xa8] sm:$0xff] %v412
  %579 = vst [vmem:[%s3 + $0xb0] sm:$0xff] %v523
  %580 = vst [vmem:[%s3 + $0xb8] sm:$0xff] %v525
  %581 = vst [vmem:[%s3 + $0xc0] sm:$0xff] %v190
  %582 = vst [vmem:[%s3 + $0xc8] sm:$0xff] %v192
  %583 = vst [vmem:[%s3 + $0xd0] sm:$0xff] %v303
  %584 = vst [vmem:[%s3 + $0xd8] sm:$0xff] %v305
  %585 = vst [vmem:[%s3 + $0xe0] sm:$0xff] %v416
  %586 = vst [vmem:[%s3 + $0xe8] sm:$0xff] %v418
  %587 = vst [vmem:[%s3 + $0xf0] sm:$0xff] %v529
  %588 = vst [vmem:[%s3 + $0xf8] sm:$0xff] %v531
  %589 = vst [vmem:[%s3 + $0x100] sm:$0xff] %v196
  %590 = vst [vmem:[%s3 + $0x108] sm:$0xff] %v198
  %591 = vst [vmem:[%s3 + $0x110] sm:$0xff] %v309
  %592 = vst [vmem:[%s3 + $0x118] sm:$0xff] %v311
  %593 = vst [vmem:[%s3 + $0x120] sm:$0xff] %v422
  %594 = vst [vmem:[%s3 + $0x128] sm:$0xff] %v424
  %595 = vst [vmem:[%s3 + $0x130] sm:$0xff] %v535
  %596 = vst [vmem:[%s3 + $0x138] sm:$0xff] %v537
  %597 = vst [vmem:[%s3 + $0x140] sm:$0xff] %v202
  %598 = vst [vmem:[%s3 + $0x148] sm:$0xff] %v204
  %599 = vst [vmem:[%s3 + $0x150] sm:$0xff] %v315
  %600 = vst [vmem:[%s3 + $0x158] sm:$0xff] %v317
  %601 = vst [vmem:[%s3 + $0x160] sm:$0xff] %v428
  %602 = vst [vmem:[%s3 + $0x168] sm:$0xff] %v430
  %603 = vst [vmem:[%s3 + $0x170] sm:$0xff] %v541
  %604 = vst [vmem:[%s3 + $0x178] sm:$0xff] %v543
  %605 = vst [vmem:[%s3 + $0x180] sm:$0xff] %v208
  %606 = vst [vmem:[%s3 + $0x188] sm:$0xff] %v210
  %607 = vst [vmem:[%s3 + $0x190] sm:$0xff] %v321
  %608 = vst [vmem:[%s3 + $0x198] sm:$0xff] %v323
  %609 = vst [vmem:[%s3 + $0x1a0] sm:$0xff] %v434
  %610 = vst [vmem:[%s3 + $0x1a8] sm:$0xff] %v436
  %611 = vst [vmem:[%s3 + $0x1b0] sm:$0xff] %v547
  %612 = vst [vmem:[%s3 + $0x1b8] sm:$0xff] %v549
  %613 = vst [vmem:[%s3 + $0x1c0] sm:$0xff] %v214
  %614 = vst [vmem:[%s3 + $0x1c8] sm:$0xff] %v216
  %615 = vst [vmem:[%s3 + $0x1d0] sm:$0xff] %v327
  %616 = vst [vmem:[%s3 + $0x1d8] sm:$0xff] %v329
  %617 = vst [vmem:[%s3 + $0x1e0] sm:$0xff] %v440
  %618 = vst [vmem:[%s3 + $0x1e8] sm:$0xff] %v442
  %619 = vst [vmem:[%s3 + $0x1f0] sm:$0xff] %v553
  %620 = vst [vmem:[%s3 + $0x1f8] sm:$0xff] %v555
  // Predicated region
  $region14: #{rnn_forward.4} parent=0 // pred_check
    _
  $region15: #{rnn_forward.4} parent=0 // pred_check_branch
    %622 = sbr.rel (0) target = $region17
  $region16: #{rnn_forward.4} parent=0 // pred_region
    _
  $region17: #{rnn_forward.4} parent=0 // pred_fallthru
    _
  // Predicated region
  $region18: #{rnn_forward.4} parent=0 // pred_check
    _
  $region19: #{rnn_forward.4} parent=0 // pred_check_branch
    %624 = sbr.rel (0) target = $region21
  $region20: #{rnn_forward.4} parent=0 // pred_region
    _
  $region21: #{rnn_forward.4} parent=0 // pred_fallthru
    _

// kernel: rnn_forward.6
$region0: #{rnn_forward.6}
  #allocation0 [shape = 'u32[]', space=smem, size = 0x4, offset = 0x4, fixed_abs, tag = 'smem constant byte address 0x4 - core index']
  #allocation1 [shape = 'u32[144,128]{1,0:T(1,128)}', space=vmem, size = 0x12000, scoped, tag = 'internal scratch']
  %s0 = inlined_call_operand.vmem [shape: f32[64,128], index: 0, kind: input, shape index: {}]
  %s1 = inlined_call_operand.vmem [shape: f32[128,1024], index: 1, kind: input, shape index: {}]
  %s2 = inlined_call_operand.vmem [shape: f32[64,128], index: 2, kind: input, shape index: {}]
  %s3 = inlined_call_operand.vmem [shape: f32[128,1024], index: 3, kind: input, shape index: {}]
  %s4 = inlined_call_operand.vmem [shape: f32[1,1024], index: 4, kind: input, shape index: {}]
  %s5 = inlined_call_operand.vmem [shape: f32[64,1024], index: 5, kind: output, shape index: {}]
  %s6 = sld [smem:[#allocation0]]
  $region30: #{rnn_forward.6} parent=0
    _
  %s8 = ssub.s32 1, %s6
  %s9 = scalar_select 0, %s8, %s6
  // Predicated region
  $region2: #{rnn_forward.6} parent=0 // pred_check
    _
  $region3: #{rnn_forward.6} parent=0 // pred_check_branch
    %11 = sbr.rel (0) target = $region5
  $region4: #{rnn_forward.6} parent=0 // pred_region
    _
  $region5: #{rnn_forward.6} parent=0 // pred_fallthru
    _
  // Predicated region
  $region6: #{rnn_forward.6} parent=0 // pred_check
    _
  $region7: #{rnn_forward.6} parent=0 // pred_check_branch
    %13 = sbr.rel (0) target = $region9
  $region8: #{rnn_forward.6} parent=0 // pred_region
    _
  $region9: #{rnn_forward.6} parent=0 // pred_fallthru
    _
  // Predicated region
  $region10: #{rnn_forward.6} parent=0 // pred_check
    _
  $region11: #{rnn_forward.6} parent=0 // pred_check_branch
    %15 = sbr.rel (0) target = $region13
  $region12: #{rnn_forward.6} parent=0 // pred_region
    _
  $region13: #{rnn_forward.6} parent=0 // pred_fallthru
    _
  // Predicated region
  $region14: #{rnn_forward.6} parent=0 // pred_check
    _
  $region15: #{rnn_forward.6} parent=0 // pred_check_branch
    %17 = sbr.rel (0) target = $region17
  $region16: #{rnn_forward.6} parent=0 // pred_region
    _
  $region17: #{rnn_forward.6} parent=0 // pred_fallthru
    _
  // Predicated region
  $region18: #{rnn_forward.6} parent=0 // pred_check
    _
  $region19: #{rnn_forward.6} parent=0 // pred_check_branch
    %19 = sbr.rel (0) target = $region21
  $region20: #{rnn_forward.6} parent=0 // pred_region
    _
  $region21: #{rnn_forward.6} parent=0 // pred_fallthru
    _
  %v20 = vld [vmem:[%s0] sm:$0xff]
  %v21 = vld [vmem:[%s0 + $0x8] sm:$0xff]
  %v22 = vld [vmem:[%s0 + $0x10] sm:$0xff]
  %v23 = vld [vmem:[%s0 + $0x18] sm:$0xff]
  %v24 = vld [vmem:[%s0 + $0x20] sm:$0xff]
  %v25 = vld [vmem:[%s0 + $0x28] sm:$0xff]
  %v26 = vld [vmem:[%s0 + $0x30] sm:$0xff]
  %v27 = vld [vmem:[%s0 + $0x38] sm:$0xff]
  %v28 = vld [vmem:[%s1] sm:$0xff]
  %v29 = vld [vmem:[%s1 + $0x8] sm:$0xff]
  %v30 = vld [vmem:[%s1 + $0x10] sm:$0xff]
  %v31 = vld [vmem:[%s1 + $0x18] sm:$0xff]
  %v32 = vld [vmem:[%s1 + $0x20] sm:$0xff]
  %v33 = vld [vmem:[%s1 + $0x28] sm:$0xff]
  %v34 = vld [vmem:[%s1 + $0x30] sm:$0xff]
  %v35 = vld [vmem:[%s1 + $0x38] sm:$0xff]
  %v36 = vld [vmem:[%s1 + $0x40] sm:$0xff]
  %v37 = vld [vmem:[%s1 + $0x48] sm:$0xff]
  %v38 = vld [vmem:[%s1 + $0x50] sm:$0xff]
  %v39 = vld [vmem:[%s1 + $0x58] sm:$0xff]
  %v40 = vld [vmem:[%s1 + $0x60] sm:$0xff]
  %v41 = vld [vmem:[%s1 + $0x68] sm:$0xff]
  %v42 = vld [vmem:[%s1 + $0x70] sm:$0xff]
  %v43 = vld [vmem:[%s1 + $0x78] sm:$0xff]
  %v44 = vld [vmem:[%s1 + $0x80] sm:$0xff]
  %v45 = vld [vmem:[%s1 + $0x88] sm:$0xff]
  %v46 = vld [vmem:[%s1 + $0x90] sm:$0xff]
  %v47 = vld [vmem:[%s1 + $0x98] sm:$0xff]
  %v48 = vld [vmem:[%s1 + $0xa0] sm:$0xff]
  %v49 = vld [vmem:[%s1 + $0xa8] sm:$0xff]
  %v50 = vld [vmem:[%s1 + $0xb0] sm:$0xff]
  %v51 = vld [vmem:[%s1 + $0xb8] sm:$0xff]
  %v52 = vld [vmem:[%s1 + $0xc0] sm:$0xff]
  %v53 = vld [vmem:[%s1 + $0xc8] sm:$0xff]
  %v54 = vld [vmem:[%s1 + $0xd0] sm:$0xff]
  %v55 = vld [vmem:[%s1 + $0xd8] sm:$0xff]
  %v56 = vld [vmem:[%s1 + $0xe0] sm:$0xff]
  %v57 = vld [vmem:[%s1 + $0xe8] sm:$0xff]
  %v58 = vld [vmem:[%s1 + $0xf0] sm:$0xff]
  %v59 = vld [vmem:[%s1 + $0xf8] sm:$0xff]
  %v60 = vld [vmem:[%s1 + $0x100] sm:$0xff]
  %v61 = vld [vmem:[%s1 + $0x108] sm:$0xff]
  %v62 = vld [vmem:[%s1 + $0x110] sm:$0xff]
  %v63 = vld [vmem:[%s1 + $0x118] sm:$0xff]
  %v64 = vld [vmem:[%s1 + $0x120] sm:$0xff]
  %v65 = vld [vmem:[%s1 + $0x128] sm:$0xff]
  %v66 = vld [vmem:[%s1 + $0x130] sm:$0xff]
  %v67 = vld [vmem:[%s1 + $0x138] sm:$0xff]
  %v68 = vld [vmem:[%s1 + $0x140] sm:$0xff]
  %v69 = vld [vmem:[%s1 + $0x148] sm:$0xff]
  %v70 = vld [vmem:[%s1 + $0x150] sm:$0xff]
  %v71 = vld [vmem:[%s1 + $0x158] sm:$0xff]
  %v72 = vld [vmem:[%s1 + $0x160] sm:$0xff]
  %v73 = vld [vmem:[%s1 + $0x168] sm:$0xff]
  %v74 = vld [vmem:[%s1 + $0x170] sm:$0xff]
  %v75 = vld [vmem:[%s1 + $0x178] sm:$0xff]
  %v76 = vld [vmem:[%s1 + $0x180] sm:$0xff]
  %v77 = vld [vmem:[%s1 + $0x188] sm:$0xff]
  %v78 = vld [vmem:[%s1 + $0x190] sm:$0xff]
  %v79 = vld [vmem:[%s1 + $0x198] sm:$0xff]
  %v80 = vld [vmem:[%s1 + $0x1a0] sm:$0xff]
  %v81 = vld [vmem:[%s1 + $0x1a8] sm:$0xff]
  %v82 = vld [vmem:[%s1 + $0x1b0] sm:$0xff]
  %v83 = vld [vmem:[%s1 + $0x1b8] sm:$0xff]
  %v84 = vld [vmem:[%s1 + $0x1c0] sm:$0xff]
  %v85 = vld [vmem:[%s1 + $0x1c8] sm:$0xff]
  %v86 = vld [vmem:[%s1 + $0x1d0] sm:$0xff]
  %v87 = vld [vmem:[%s1 + $0x1d8] sm:$0xff]
  %v88 = vld [vmem:[%s1 + $0x1e0] sm:$0xff]
  %v89 = vld [vmem:[%s1 + $0x1e8] sm:$0xff]
  %v90 = vld [vmem:[%s1 + $0x1f0] sm:$0xff]
  %v91 = vld [vmem:[%s1 + $0x1f8] sm:$0xff]
  %v92 = vld [vmem:[%s1 + $0x200] sm:$0xff]
  %v93 = vld [vmem:[%s1 + $0x208] sm:$0xff]
  %v94 = vld [vmem:[%s1 + $0x210] sm:$0xff]
  %v95 = vld [vmem:[%s1 + $0x218] sm:$0xff]
  %v96 = vld [vmem:[%s1 + $0x220] sm:$0xff]
  %v97 = vld [vmem:[%s1 + $0x228] sm:$0xff]
  %v98 = vld [vmem:[%s1 + $0x230] sm:$0xff]
  %v99 = vld [vmem:[%s1 + $0x238] sm:$0xff]
  %v100 = vld [vmem:[%s1 + $0x240] sm:$0xff]
  %v101 = vld [vmem:[%s1 + $0x248] sm:$0xff]
  %v102 = vld [vmem:[%s1 + $0x250] sm:$0xff]
  %v103 = vld [vmem:[%s1 + $0x258] sm:$0xff]
  %v104 = vld [vmem:[%s1 + $0x260] sm:$0xff]
  %v105 = vld [vmem:[%s1 + $0x268] sm:$0xff]
  %v106 = vld [vmem:[%s1 + $0x270] sm:$0xff]
  %v107 = vld [vmem:[%s1 + $0x278] sm:$0xff]
  %v108 = vld [vmem:[%s1 + $0x280] sm:$0xff]
  %v109 = vld [vmem:[%s1 + $0x288] sm:$0xff]
  %v110 = vld [vmem:[%s1 + $0x290] sm:$0xff]
  %v111 = vld [vmem:[%s1 + $0x298] sm:$0xff]
  %v112 = vld [vmem:[%s1 + $0x2a0] sm:$0xff]
  %v113 = vld [vmem:[%s1 + $0x2a8] sm:$0xff]
  %v114 = vld [vmem:[%s1 + $0x2b0] sm:$0xff]
  %v115 = vld [vmem:[%s1 + $0x2b8] sm:$0xff]
  %v116 = vld [vmem:[%s1 + $0x2c0] sm:$0xff]
  %v117 = vld [vmem:[%s1 + $0x2c8] sm:$0xff]
  %v118 = vld [vmem:[%s1 + $0x2d0] sm:$0xff]
  %v119 = vld [vmem:[%s1 + $0x2d8] sm:$0xff]
  %v120 = vld [vmem:[%s1 + $0x2e0] sm:$0xff]
  %v121 = vld [vmem:[%s1 + $0x2e8] sm:$0xff]
  %v122 = vld [vmem:[%s1 + $0x2f0] sm:$0xff]
  %v123 = vld [vmem:[%s1 + $0x2f8] sm:$0xff]
  %v124 = vld [vmem:[%s1 + $0x300] sm:$0xff]
  %v125 = vld [vmem:[%s1 + $0x308] sm:$0xff]
  %v126 = vld [vmem:[%s1 + $0x310] sm:$0xff]
  %v127 = vld [vmem:[%s1 + $0x318] sm:$0xff]
  %v128 = vld [vmem:[%s1 + $0x320] sm:$0xff]
  %v129 = vld [vmem:[%s1 + $0x328] sm:$0xff]
  %v130 = vld [vmem:[%s1 + $0x330] sm:$0xff]
  %v131 = vld [vmem:[%s1 + $0x338] sm:$0xff]
  %v132 = vld [vmem:[%s1 + $0x340] sm:$0xff]
  %v133 = vld [vmem:[%s1 + $0x348] sm:$0xff]
  %v134 = vld [vmem:[%s1 + $0x350] sm:$0xff]
  %v135 = vld [vmem:[%s1 + $0x358] sm:$0xff]
  %v136 = vld [vmem:[%s1 + $0x360] sm:$0xff]
  %v137 = vld [vmem:[%s1 + $0x368] sm:$0xff]
  %v138 = vld [vmem:[%s1 + $0x370] sm:$0xff]
  %v139 = vld [vmem:[%s1 + $0x378] sm:$0xff]
  %v140 = vld [vmem:[%s1 + $0x380] sm:$0xff]
  %v141 = vld [vmem:[%s1 + $0x388] sm:$0xff]
  %v142 = vld [vmem:[%s1 + $0x390] sm:$0xff]
  %v143 = vld [vmem:[%s1 + $0x398] sm:$0xff]
  %v144 = vld [vmem:[%s1 + $0x3a0] sm:$0xff]
  %v145 = vld [vmem:[%s1 + $0x3a8] sm:$0xff]
  %v146 = vld [vmem:[%s1 + $0x3b0] sm:$0xff]
  %v147 = vld [vmem:[%s1 + $0x3b8] sm:$0xff]
  %v148 = vld [vmem:[%s1 + $0x3c0] sm:$0xff]
  %v149 = vld [vmem:[%s1 + $0x3c8] sm:$0xff]
  %v150 = vld [vmem:[%s1 + $0x3d0] sm:$0xff]
  %v151 = vld [vmem:[%s1 + $0x3d8] sm:$0xff]
  %v152 = vld [vmem:[%s1 + $0x3e0] sm:$0xff]
  %v153 = vld [vmem:[%s1 + $0x3e8] sm:$0xff]
  %v154 = vld [vmem:[%s1 + $0x3f0] sm:$0xff]
  %v155 = vld [vmem:[%s1 + $0x3f8] sm:$0xff]
  %v156 = vld [vmem:[%s2] sm:$0xff]
  %v157 = vld [vmem:[%s2 + $0x8] sm:$0xff]
  %v158 = vld [vmem:[%s2 + $0x10] sm:$0xff]
  %v159 = vld [vmem:[%s2 + $0x18] sm:$0xff]
  %v160 = vld [vmem:[%s2 + $0x20] sm:$0xff]
  %v161 = vld [vmem:[%s2 + $0x28] sm:$0xff]
  %v162 = vld [vmem:[%s2 + $0x30] sm:$0xff]
  %v163 = vld [vmem:[%s2 + $0x38] sm:$0xff]
  %v164 = vld [vmem:[%s3] sm:$0xff]
  %v165 = vld [vmem:[%s3 + $0x8] sm:$0xff]
  %v166 = vld [vmem:[%s3 + $0x10] sm:$0xff]
  %v167 = vld [vmem:[%s3 + $0x18] sm:$0xff]
  %v168 = vld [vmem:[%s3 + $0x20] sm:$0xff]
  %v169 = vld [vmem:[%s3 + $0x28] sm:$0xff]
  %v170 = vld [vmem:[%s3 + $0x30] sm:$0xff]
  %v171 = vld [vmem:[%s3 + $0x38] sm:$0xff]
  %v172 = vld [vmem:[%s3 + $0x40] sm:$0xff]
  %v173 = vld [vmem:[%s3 + $0x48] sm:$0xff]
  %v174 = vld [vmem:[%s3 + $0x50] sm:$0xff]
  %v175 = vld [vmem:[%s3 + $0x58] sm:$0xff]
  %v176 = vld [vmem:[%s3 + $0x60] sm:$0xff]
  %v177 = vld [vmem:[%s3 + $0x68] sm:$0xff]
  %v178 = vld [vmem:[%s3 + $0x70] sm:$0xff]
  %v179 = vld [vmem:[%s3 + $0x78] sm:$0xff]
  %v180 = vld [vmem:[%s3 + $0x80] sm:$0xff]
  %v181 = vld [vmem:[%s3 + $0x88] sm:$0xff]
  %v182 = vld [vmem:[%s3 + $0x90] sm:$0xff]
  %v183 = vld [vmem:[%s3 + $0x98] sm:$0xff]
  %v184 = vld [vmem:[%s3 + $0xa0] sm:$0xff]
  %v185 = vld [vmem:[%s3 + $0xa8] sm:$0xff]
  %v186 = vld [vmem:[%s3 + $0xb0] sm:$0xff]
  %v187 = vld [vmem:[%s3 + $0xb8] sm:$0xff]
  %v188 = vld [vmem:[%s3 + $0xc0] sm:$0xff]
  %v189 = vld [vmem:[%s3 + $0xc8] sm:$0xff]
  %v190 = vld [vmem:[%s3 + $0xd0] sm:$0xff]
  %v191 = vld [vmem:[%s3 + $0xd8] sm:$0xff]
  %v192 = vld [vmem:[%s3 + $0xe0] sm:$0xff]
  %v193 = vld [vmem:[%s3 + $0xe8] sm:$0xff]
  %v194 = vld [vmem:[%s3 + $0xf0] sm:$0xff]
  %v195 = vld [vmem:[%s3 + $0xf8] sm:$0xff]
  %v196 = vld [vmem:[%s3 + $0x100] sm:$0xff]
  %v197 = vld [vmem:[%s3 + $0x108] sm:$0xff]
  %v198 = vld [vmem:[%s3 + $0x110] sm:$0xff]
  %v199 = vld [vmem:[%s3 + $0x118] sm:$0xff]
  %v200 = vld [vmem:[%s3 + $0x120] sm:$0xff]
  %v201 = vld [vmem:[%s3 + $0x128] sm:$0xff]
  %v202 = vld [vmem:[%s3 + $0x130] sm:$0xff]
  %v203 = vld [vmem:[%s3 + $0x138] sm:$0xff]
  %v204 = vld [vmem:[%s3 + $0x140] sm:$0xff]
  %v205 = vld [vmem:[%s3 + $0x148] sm:$0xff]
  %v206 = vld [vmem:[%s3 + $0x150] sm:$0xff]
  %v207 = vld [vmem:[%s3 + $0x158] sm:$0xff]
  %v208 = vld [vmem:[%s3 + $0x160] sm:$0xff]
  %v209 = vld [vmem:[%s3 + $0x168] sm:$0xff]
  %v210 = vld [vmem:[%s3 + $0x170] sm:$0xff]
  %v211 = vld [vmem:[%s3 + $0x178] sm:$0xff]
  %v212 = vld [vmem:[%s3 + $0x180] sm:$0xff]
  %v213 = vld [vmem:[%s3 + $0x188] sm:$0xff]
  %v214 = vld [vmem:[%s3 + $0x190] sm:$0xff]
  %v215 = vld [vmem:[%s3 + $0x198] sm:$0xff]
  %v216 = vld [vmem:[%s3 + $0x1a0] sm:$0xff]
  %v217 = vld [vmem:[%s3 + $0x1a8] sm:$0xff]
  %v218 = vld [vmem:[%s3 + $0x1b0] sm:$0xff]
  %v219 = vld [vmem:[%s3 + $0x1b8] sm:$0xff]
  %v220 = vld [vmem:[%s3 + $0x1c0] sm:$0xff]
  %v221 = vld [vmem:[%s3 + $0x1c8] sm:$0xff]
  %v222 = vld [vmem:[%s3 + $0x1d0] sm:$0xff]
  %v223 = vld [vmem:[%s3 + $0x1d8] sm:$0xff]
  %v224 = vld [vmem:[%s3 + $0x1e0] sm:$0xff]
  %v225 = vld [vmem:[%s3 + $0x1e8] sm:$0xff]
  %v226 = vld [vmem:[%s3 + $0x1f0] sm:$0xff]
  %v227 = vld [vmem:[%s3 + $0x1f8] sm:$0xff]
  %v228 = vld [vmem:[%s3 + $0x200] sm:$0xff]
  %v229 = vld [vmem:[%s3 + $0x208] sm:$0xff]
  %v230 = vld [vmem:[%s3 + $0x210] sm:$0xff]
  %v231 = vld [vmem:[%s3 + $0x218] sm:$0xff]
  %v232 = vld [vmem:[%s3 + $0x220] sm:$0xff]
  %v233 = vld [vmem:[%s3 + $0x228] sm:$0xff]
  %v234 = vld [vmem:[%s3 + $0x230] sm:$0xff]
  %v235 = vld [vmem:[%s3 + $0x238] sm:$0xff]
  %v236 = vld [vmem:[%s3 + $0x240] sm:$0xff]
  %v237 = vld [vmem:[%s3 + $0x248] sm:$0xff]
  %v238 = vld [vmem:[%s3 + $0x250] sm:$0xff]
  %v239 = vld [vmem:[%s3 + $0x258] sm:$0xff]
  %v240 = vld [vmem:[%s3 + $0x260] sm:$0xff]
  %v241 = vld [vmem:[%s3 + $0x268] sm:$0xff]
  %v242 = vld [vmem:[%s3 + $0x270] sm:$0xff]
  %v243 = vld [vmem:[%s3 + $0x278] sm:$0xff]
  %v244 = vld [vmem:[%s3 + $0x280] sm:$0xff]
  %v245 = vld [vmem:[%s3 + $0x288] sm:$0xff]
  %v246 = vld [vmem:[%s3 + $0x290] sm:$0xff]
  %v247 = vld [vmem:[%s3 + $0x298] sm:$0xff]
  %v248 = vld [vmem:[%s3 + $0x2a0] sm:$0xff]
  %v249 = vld [vmem:[%s3 + $0x2a8] sm:$0xff]
  %v250 = vld [vmem:[%s3 + $0x2b0] sm:$0xff]
  %v251 = vld [vmem:[%s3 + $0x2b8] sm:$0xff]
  %v252 = vld [vmem:[%s3 + $0x2c0] sm:$0xff]
  %v253 = vld [vmem:[%s3 + $0x2c8] sm:$0xff]
  %v254 = vld [vmem:[%s3 + $0x2d0] sm:$0xff]
  %v255 = vld [vmem:[%s3 + $0x2d8] sm:$0xff]
  %v256 = vld [vmem:[%s3 + $0x2e0] sm:$0xff]
  %v257 = vld [vmem:[%s3 + $0x2e8] sm:$0xff]
  %v258 = vld [vmem:[%s3 + $0x2f0] sm:$0xff]
  %v259 = vld [vmem:[%s3 + $0x2f8] sm:$0xff]
  %v260 = vld [vmem:[%s3 + $0x300] sm:$0xff]
  %v261 = vld [vmem:[%s3 + $0x308] sm:$0xff]
  %v262 = vld [vmem:[%s3 + $0x310] sm:$0xff]
  %v263 = vld [vmem:[%s3 + $0x318] sm:$0xff]
  %v264 = vld [vmem:[%s3 + $0x320] sm:$0xff]
  %v265 = vld [vmem:[%s3 + $0x328] sm:$0xff]
  %v266 = vld [vmem:[%s3 + $0x330] sm:$0xff]
  %v267 = vld [vmem:[%s3 + $0x338] sm:$0xff]
  %v268 = vld [vmem:[%s3 + $0x340] sm:$0xff]
  %v269 = vld [vmem:[%s3 + $0x348] sm:$0xff]
  %v270 = vld [vmem:[%s3 + $0x350] sm:$0xff]
  %v271 = vld [vmem:[%s3 + $0x358] sm:$0xff]
  %v272 = vld [vmem:[%s3 + $0x360] sm:$0xff]
  %v273 = vld [vmem:[%s3 + $0x368] sm:$0xff]
  %v274 = vld [vmem:[%s3 + $0x370] sm:$0xff]
  %v275 = vld [vmem:[%s3 + $0x378] sm:$0xff]
  %v276 = vld [vmem:[%s3 + $0x380] sm:$0xff]
  %v277 = vld [vmem:[%s3 + $0x388] sm:$0xff]
  %v278 = vld [vmem:[%s3 + $0x390] sm:$0xff]
  %v279 = vld [vmem:[%s3 + $0x398] sm:$0xff]
  %v280 = vld [vmem:[%s3 + $0x3a0] sm:$0xff]
  %v281 = vld [vmem:[%s3 + $0x3a8] sm:$0xff]
  %v282 = vld [vmem:[%s3 + $0x3b0] sm:$0xff]
  %v283 = vld [vmem:[%s3 + $0x3b8] sm:$0xff]
  %v284 = vld [vmem:[%s3 + $0x3c0] sm:$0xff]
  %v285 = vld [vmem:[%s3 + $0x3c8] sm:$0xff]
  %v286 = vld [vmem:[%s3 + $0x3d0] sm:$0xff]
  %v287 = vld [vmem:[%s3 + $0x3d8] sm:$0xff]
  %v288 = vld [vmem:[%s3 + $0x3e0] sm:$0xff]
  %v289 = vld [vmem:[%s3 + $0x3e8] sm:$0xff]
  %v290 = vld [vmem:[%s3 + $0x3f0] sm:$0xff]
  %v291 = vld [vmem:[%s3 + $0x3f8] sm:$0xff]
  %292 = vmatprep.subr.mxu0 %v165
  %293 = vmatpush1.msra.mxu0 %v164
  %294 = vmatprep.subr.mxu0 %v173
  %295 = vmatpush1.msra.mxu0 %v172
  %296 = vmatprep.subr.mxu0 %v181
  %297 = vmatpush1.msra.mxu0 %v180
  %298 = vmatprep.subr.mxu0 %v189
  %299 = vmatpush1.msra.mxu0 %v188
  %300 = vmatprep.subr.mxu0 %v197
  %301 = vmatpush1.msra.mxu0 %v196
  %302 = vmatprep.subr.mxu0 %v205
  %303 = vmatpush1.msra.mxu0 %v204
  %304 = vmatprep.subr.mxu0 %v213
  %305 = vmatpush1.msra.mxu0 %v212
  %306 = vmatprep.subr.mxu0 %v221
  %307 = vmatpush1.msra.mxu0 %v220
  %308 = vmatprep.subr.mxu0 %v229
  %309 = vmatpush1.msra.mxu0 %v228
  %310 = vmatprep.subr.mxu0 %v237
  %311 = vmatpush1.msra.mxu0 %v236
  %312 = vmatprep.subr.mxu0 %v245
  %313 = vmatpush1.msra.mxu0 %v244
  %314 = vmatprep.subr.mxu0 %v253
  %315 = vmatpush1.msra.mxu0 %v252
  %316 = vmatprep.subr.mxu0 %v261
  %317 = vmatpush1.msra.mxu0 %v260
  %318 = vmatprep.subr.mxu0 %v269
  %319 = vmatpush1.msra.mxu0 %v268
  %320 = vmatprep.subr.mxu0 %v277
  %321 = vmatpush1.msra.mxu0 %v276
  %322 = vmatprep.subr.mxu0 %v285
  %323 = vmatpush1.msra.mxu0 %v284
  %324 = vmatprep.subr.mxu0 0.0
  %325 = vmatpush1.msra.mxu0 0.0
  %326 = vmatprep.subr.mxu0 0.0
  %327 = vmatpush1.msra.mxu0 0.0
  %328 = vmatprep.subr.mxu0 0.0
  %329 = vmatpush1.msra.mxu0 0.0
  %330 = vmatprep.subr.mxu0 0.0
  %331 = vmatpush1.msra.mxu0 0.0
  %332 = vmatprep.subr.mxu0 0.0
  %333 = vmatpush1.msra.mxu0 0.0
  %334 = vmatprep.subr.mxu0 0.0
  %335 = vmatpush1.msra.mxu0 0.0
  %336 = vmatprep.subr.mxu0 0.0
  %337 = vmatpush1.msra.mxu0 0.0
  %338 = vmatprep.subr.mxu0 0.0
  %339 = vmatpush1.msra.mxu0 0.0
  %340 = vmatprep.subr.mxu0 0.0
  %341 = vmatpush1.msra.mxu0 0.0
  %342 = vmatprep.subr.mxu0 0.0
  %343 = vmatpush1.msra.mxu0 0.0
  %344 = vmatprep.subr.mxu0 0.0
  %345 = vmatpush1.msra.mxu0 0.0
  %346 = vmatprep.subr.mxu0 0.0
  %347 = vmatpush1.msra.mxu0 0.0
  %348 = vmatprep.subr.mxu0 0.0
  %349 = vmatpush1.msra.mxu0 0.0
  %350 = vmatprep.subr.mxu0 0.0
  %351 = vmatpush1.msra.mxu0 0.0
  %352 = vmatprep.subr.mxu0 0.0
  %353 = vmatpush1.msra.mxu0 0.0
  %354 = vmatprep.subr.mxu0 0.0
  %355 = vmatpush1.msra.mxu0 0.0
  %356 = vmatprep.mubr.f32.mxu0 0.0
  %357 = vmatmul.mubr.f32.gmra.mrb[0].mxu0 %v156
  %v358 = vpop.f32.mrb[0].mxu0
  %v359 = vadd.f32 0.0, %v358
  %v360 = vpop.f32.mrb[0].mxu0
  %v361 = vadd.f32 0.0, %v360
  %362 = vmatprep.mubr.f32.mxu0 0.0
  %363 = vmatmul.mubr.f32.gmra.mrb[0].mxu0 %v157
  %v364 = vpop.f32.mrb[0].mxu0
  %v365 = vadd.f32 0.0, %v364
  %v366 = vpop.f32.mrb[0].mxu0
  %v367 = vadd.f32 0.0, %v366
  %368 = vmatprep.mubr.f32.mxu0 0.0
  %369 = vmatmul.mubr.f32.gmra.mrb[0].mxu0 %v158
  %v370 = vpop.f32.mrb[0].mxu0
  %v371 = vadd.f32 0.0, %v370
  %v372 = vpop.f32.mrb[0].mxu0
  %v373 = vadd.f32 0.0, %v372
  %374 = vmatprep.mubr.f32.mxu0 0.0
  %375 = vmatmul.mubr.f32.gmra.mrb[0].mxu0 %v159
  %v376 = vpop.f32.mrb[0].mxu0
  %v377 = vadd.f32 0.0, %v376
  %v378 = vpop.f32.mrb[0].mxu0
  %v379 = vadd.f32 0.0, %v378
  %380 = vmatprep.mubr.f32.mxu0 0.0
  %381 = vmatmul.mubr.f32.gmra.mrb[0].mxu0 %v160
  %v382 = vpop.f32.mrb[0].mxu0
  %v383 = vadd.f32 0.0, %v382
  %v384 = vpop.f32.mrb[0].mxu0
  %v385 = vadd.f32 0.0, %v384
  %386 = vmatprep.mubr.f32.mxu0 0.0
  %387 = vmatmul.mubr.f32.gmra.mrb[0].mxu0 %v161
  %v388 = vpop.f32.mrb[0].mxu0
  %v389 = vadd.f32 0.0, %v388
  %v390 = vpop.f32.mrb[0].mxu0
  %v391 = vadd.f32 0.0, %v390
  %392 = vmatprep.mubr.f32.mxu0 0.0
  %393 = vmatmul.mubr.f32.gmra.mrb[0].mxu0 %v162
  %v394 = vpop.f32.mrb[0].mxu0
  %v395 = vadd.f32 0.0, %v394
  %v396 = vpop.f32.mrb[0].mxu0
  %v397 = vadd.f32 0.0, %v396
  %398 = vmatprep.mubr.f32.mxu0 0.0
  %399 = vmatmul.mubr.f32.gmra.mrb[0].mxu0 %v163
  %v400 = vpop.f32.mrb[0].mxu0
  %v401 = vadd.f32 0.0, %v400
  %v402 = vpop.f32.mrb[0].mxu0
  %v403 = vadd.f32 0.0, %v402
  %404 = vdwg.mxu0
  %405 = vmatprep.subr.mxu0 %v167
  %406 = vmatpush1.msra.mxu0 %v166
  %407 = vmatprep.subr.mxu0 %v175
  %408 = vmatpush1.msra.mxu0 %v174
  %409 = vmatprep.subr.mxu0 %v183
  %410 = vmatpush1.msra.mxu0 %v182
  %411 = vmatprep.subr.mxu0 %v191
  %412 = vmatpush1.msra.mxu0 %v190
  %413 = vmatprep.subr.mxu0 %v199
  %414 = vmatpush1.msra.mxu0 %v198
  %415 = vmatprep.subr.mxu0 %v207
  %416 = vmatpush1.msra.mxu0 %v206
  %417 = vmatprep.subr.mxu0 %v215
  %418 = vmatpush1.msra.mxu0 %v214
  %419 = vmatprep.subr.mxu0 %v223
  %420 = vmatpush1.msra.mxu0 %v222
  %421 = vmatprep.subr.mxu0 %v231
  %422 = vmatpush1.msra.mxu0 %v230
  %423 = vmatprep.subr.mxu0 %v239
  %424 = vmatpush1.msra.mxu0 %v238
  %425 = vmatprep.subr.mxu0 %v247
  %426 = vmatpush1.msra.mxu0 %v246
  %427 = vmatprep.subr.mxu0 %v255
  %428 = vmatpush1.msra.mxu0 %v254
  %429 = vmatprep.subr.mxu0 %v263
  %430 = vmatpush1.msra.mxu0 %v262
  %431 = vmatprep.subr.mxu0 %v271
  %432 = vmatpush1.msra.mxu0 %v270
  %433 = vmatprep.subr.mxu0 %v279
  %434 = vmatpush1.msra.mxu0 %v278
  %435 = vmatprep.subr.mxu0 %v287
  %436 = vmatpush1.msra.mxu0 %v286
  %437 = vmatprep.subr.mxu0 0.0
  %438 = vmatpush1.msra.mxu0 0.0
  %439 = vmatprep.subr.mxu0 0.0
  %440 = vmatpush1.msra.mxu0 0.0
  %441 = vmatprep.subr.mxu0 0.0
  %442 = vmatpush1.msra.mxu0 0.0
  %443 = vmatprep.subr.mxu0 0.0
  %444 = vmatpush1.msra.mxu0 0.0
  %445 = vmatprep.subr.mxu0 0.0
  %446 = vmatpush1.msra.mxu0 0.0
  %447 = vmatprep.subr.mxu0 0.0
  %448 = vmatpush1.msra.mxu0 0.0
  %449 = vmatprep.subr.mxu0 0.0
  %450 = vmatpush1.msra.mxu0 0.0
  %451 = vmatprep.subr.mxu0 0.0
  %452 = vmatpush1.msra.mxu0 0.0
  %453 = vmatprep.subr.mxu0 0.0
  %454 = vmatpush1.msra.mxu0 0.0
  %455 = vmatprep.subr.mxu0 0.0
  %456 = vmatpush1.msra.mxu0 0.0
  %457 = vmatprep.subr.mxu0 0.0
  %458 = vmatpush1.msra.mxu0 0.0
  %459 = vmatprep.subr.mxu0 0.0
  %460 = vmatpush1.msra.mxu0 0.0
  %461 = vmatprep.subr.mxu0 0.0
  %462 = vmatpush1.msra.mxu0 0.0
  %463 = vmatprep.subr.mxu0 0.0
  %464 = vmatpush1.msra.mxu0 0.0
  %465 = vmatprep.subr.mxu0 0.0
  %466 = vmatpush1.msra.mxu0 0.0
  %467 = vmatprep.subr.mxu0 0.0
  %468 = vmatpush1.msra.mxu0 0.0
  %469 = vmatprep.mubr.f32.mxu0 0.0
  %470 = vmatmul.mubr.f32.gmra.mrb[0].mxu0 %v156
  %v471 = vpop.f32.mrb[0].mxu0
  %v472 = vadd.f32 0.0, %v471
  %v473 = vpop.f32.mrb[0].mxu0
  %v474 = vadd.f32 0.0, %v473
  %475 = vmatprep.mubr.f32.mxu0 0.0
  %476 = vmatmul.mubr.f32.gmra.mrb[0].mxu0 %v157
  %v477 = vpop.f32.mrb[0].mxu0
  %v478 = vadd.f32 0.0, %v477
  %v479 = vpop.f32.mrb[0].mxu0
  %v480 = vadd.f32 0.0, %v479
  %481 = vmatprep.mubr.f32.mxu0 0.0
  %482 = vmatmul.mubr.f32.gmra.mrb[0].mxu0 %v158
  %v483 = vpop.f32.mrb[0].mxu0
  %v484 = vadd.f32 0.0, %v483
  %v485 = vpop.f32.mrb[0].mxu0
  %v486 = vadd.f32 0.0, %v485
  %487 = vmatprep.mubr.f32.mxu0 0.0
  %488 = vmatmul.mubr.f32.gmra.mrb[0].mxu0 %v159
  %v489 = vpop.f32.mrb[0].mxu0
  %v490 = vadd.f32 0.0, %v489
  %v491 = vpop.f32.mrb[0].mxu0
  %v492 = vadd.f32 0.0, %v491
  %493 = vmatprep.mubr.f32.mxu0 0.0
  %494 = vmatmul.mubr.f32.gmra.mrb[0].mxu0 %v160
  %v495 = vpop.f32.mrb[0].mxu0
  %v496 = vadd.f32 0.0, %v495
  %v497 = vpop.f32.mrb[0].mxu0
  %v498 = vadd.f32 0.0, %v497
  %499 = vmatprep.mubr.f32.mxu0 0.0
  %500 = vmatmul.mubr.f32.gmra.mrb[0].mxu0 %v161
  %v501 = vpop.f32.mrb[0].mxu0
  %v502 = vadd.f32 0.0, %v501
  %v503 = vpop.f32.mrb[0].mxu0
  %v504 = vadd.f32 0.0, %v503
  %505 = vmatprep.mubr.f32.mxu0 0.0
  %506 = vmatmul.mubr.f32.gmra.mrb[0].mxu0 %v162
  %v507 = vpop.f32.mrb[0].mxu0
  %v508 = vadd.f32 0.0, %v507
  %v509 = vpop.f32.mrb[0].mxu0
  %v510 = vadd.f32 0.0, %v509
  %511 = vmatprep.mubr.f32.mxu0 0.0
  %512 = vmatmul.mubr.f32.gmra.mrb[0].mxu0 %v163
  %v513 = vpop.f32.mrb[0].mxu0
  %v514 = vadd.f32 0.0, %v513
  %v515 = vpop.f32.mrb[0].mxu0
  %v516 = vadd.f32 0.0, %v515
  %517 = vdwg.mxu0
  %518 = vmatprep.subr.mxu0 %v169
  %519 = vmatpush1.msra.mxu0 %v168
  %520 = vmatprep.subr.mxu0 %v177
  %521 = vmatpush1.msra.mxu0 %v176
  %522 = vmatprep.subr.mxu0 %v185
  %523 = vmatpush1.msra.mxu0 %v184
  %524 = vmatprep.subr.mxu0 %v193
  %525 = vmatpush1.msra.mxu0 %v192
  %526 = vmatprep.subr.mxu0 %v201
  %527 = vmatpush1.msra.mxu0 %v200
  %528 = vmatprep.subr.mxu0 %v209
  %529 = vmatpush1.msra.mxu0 %v208
  %530 = vmatprep.subr.mxu0 %v217
  %531 = vmatpush1.msra.mxu0 %v216
  %532 = vmatprep.subr.mxu0 %v225
  %533 = vmatpush1.msra.mxu0 %v224
  %534 = vmatprep.subr.mxu0 %v233
  %535 = vmatpush1.msra.mxu0 %v232
  %536 = vmatprep.subr.mxu0 %v241
  %537 = vmatpush1.msra.mxu0 %v240
  %538 = vmatprep.subr.mxu0 %v249
  %539 = vmatpush1.msra.mxu0 %v248
  %540 = vmatprep.subr.mxu0 %v257
  %541 = vmatpush1.msra.mxu0 %v256
  %542 = vmatprep.subr.mxu0 %v265
  %543 = vmatpush1.msra.mxu0 %v264
  %544 = vmatprep.subr.mxu0 %v273
  %545 = vmatpush1.msra.mxu0 %v272
  %546 = vmatprep.subr.mxu0 %v281
  %547 = vmatpush1.msra.mxu0 %v280
  %548 = vmatprep.subr.mxu0 %v289
  %549 = vmatpush1.msra.mxu0 %v288
  %550 = vmatprep.subr.mxu0 0.0
  %551 = vmatpush1.msra.mxu0 0.0
  %552 = vmatprep.subr.mxu0 0.0
  %553 = vmatpush1.msra.mxu0 0.0
  %554 = vmatprep.subr.mxu0 0.0
  %555 = vmatpush1.msra.mxu0 0.0
  %556 = vmatprep.subr.mxu0 0.0
  %557 = vmatpush1.msra.mxu0 0.0
  %558 = vmatprep.subr.mxu0 0.0
  %559 = vmatpush1.msra.mxu0 0.0
  %560 = vmatprep.subr.mxu0 0.0
  %561 = vmatpush1.msra.mxu0 0.0
  %562 = vmatprep.subr.mxu0 0.0
  %563 = vmatpush1.msra.mxu0 0.0
  %564 = vmatprep.subr.mxu0 0.0
  %565 = vmatpush1.msra.mxu0 0.0
  %566 = vmatprep.subr.mxu0 0.0
  %567 = vmatpush1.msra.mxu0 0.0
  %568 = vmatprep.subr.mxu0 0.0
  %569 = vmatpush1.msra.mxu0 0.0
  %570 = vmatprep.subr.mxu0 0.0
  %571 = vmatpush1.msra.mxu0 0.0
  %572 = vmatprep.subr.mxu0 0.0
  %573 = vmatpush1.msra.mxu0 0.0
  %574 = vmatprep.subr.mxu0 0.0
  %575 = vmatpush1.msra.mxu0 0.0
  %576 = vmatprep.subr.mxu0 0.0
  %577 = vmatpush1.msra.mxu0 0.0
  %578 = vmatprep.subr.mxu0 0.0
  %579 = vmatpush1.msra.mxu0 0.0
  %580 = vmatprep.subr.mxu0 0.0
  %581 = vmatpush1.msra.mxu0 0.0
  %582 = vmatprep.mubr.f32.mxu0 0.0
  %583 = vmatmul.mubr.f32.gmra.mrb[0].mxu0 %v156
  %v584 = vpop.f32.mrb[0].mxu0
  %v585 = vadd.f32 0.0, %v584
  %v586 = vpop.f32.mrb[0].mxu0
  %v587 = vadd.f32 0.0, %v586
  %588 = vmatprep.mubr.f32.mxu0 0.0
  %589 = vmatmul.mubr.f32.gmra.mrb[0].mxu0 %v157
  %v590 = vpop.f32.mrb[0].mxu0
  %v591 = vadd.f32 0.0, %v590
  %v592 = vpop.f32.mrb[0].mxu0
  %v593 = vadd.f32 0.0, %v592
  %594 = vmatprep.mubr.f32.mxu0 0.0
  %595 = vmatmul.mubr.f32.gmra.mrb[0].mxu0 %v158
  %v596 = vpop.f32.mrb[0].mxu0
  %v597 = vadd.f32 0.0, %v596
  %v598 = vpop.f32.mrb[0].mxu0
  %v599 = vadd.f32 0.0, %v598
  %600 = vmatprep.mubr.f32.mxu0 0.0
  %601 = vmatmul.mubr.f32.gmra.mrb[0].mxu0 %v159
  %v602 = vpop.f32.mrb[0].mxu0
  %v603 = vadd.f32 0.0, %v602
  %v604 = vpop.f32.mrb[0].mxu0
  %v605 = vadd.f32 0.0, %v604
  %606 = vmatprep.mubr.f32.mxu0 0.0
  %607 = vmatmul.mubr.f32.gmra.mrb[0].mxu0 %v160
  %v608 = vpop.f32.mrb[0].mxu0
  %v609 = vadd.f32 0.0, %v608
  %v610 = vpop.f32.mrb[0].mxu0
  %v611 = vadd.f32 0.0, %v610
  %612 = vmatprep.mubr.f32.mxu0 0.0
  %613 = vmatmul.mubr.f32.gmra.mrb[0].mxu0 %v161
  %v614 = vpop.f32.mrb[0].mxu0
  %v615 = vadd.f32 0.0, %v614
  %v616 = vpop.f32.mrb[0].mxu0
  %v617 = vadd.f32 0.0, %v616
  %618 = vmatprep.mubr.f32.mxu0 0.0
  %619 = vmatmul.mubr.f32.gmra.mrb[0].mxu0 %v162
  %v620 = vpop.f32.mrb[0].mxu0
  %v621 = vadd.f32 0.0, %v620
  %v622 = vpop.f32.mrb[0].mxu0
  %v623 = vadd.f32 0.0, %v622
  %624 = vmatprep.mubr.f32.mxu0 0.0
  %625 = vmatmul.mubr.f32.gmra.mrb[0].mxu0 %v163
  %v626 = vpop.f32.mrb[0].mxu0
  %v627 = vadd.f32 0.0, %v626
  %v628 = vpop.f32.mrb[0].mxu0
  %v629 = vadd.f32 0.0, %v628
  %630 = vdwg.mxu0
  %631 = vmatprep.subr.mxu0 %v171
  %632 = vmatpush1.msra.mxu0 %v170
  %633 = vmatprep.subr.mxu0 %v179
  %634 = vmatpush1.msra.mxu0 %v178
  %635 = vmatprep.subr.mxu0 %v187
  %636 = vmatpush1.msra.mxu0 %v186
  %637 = vmatprep.subr.mxu0 %v195
  %638 = vmatpush1.msra.mxu0 %v194
  %639 = vmatprep.subr.mxu0 %v203
  %640 = vmatpush1.msra.mxu0 %v202
  %641 = vmatprep.subr.mxu0 %v211
  %642 = vmatpush1.msra.mxu0 %v210
  %643 = vmatprep.subr.mxu0 %v219
  %644 = vmatpush1.msra.mxu0 %v218
  %645 = vmatprep.subr.mxu0 %v227
  %646 = vmatpush1.msra.mxu0 %v226
  %647 = vmatprep.subr.mxu0 %v235
  %648 = vmatpush1.msra.mxu0 %v234
  %649 = vmatprep.subr.mxu0 %v243
  %650 = vmatpush1.msra.mxu0 %v242
  %651 = vmatprep.subr.mxu0 %v251
  %652 = vmatpush1.msra.mxu0 %v250
  %653 = vmatprep.subr.mxu0 %v259
  %654 = vmatpush1.msra.mxu0 %v258
  %655 = vmatprep.subr.mxu0 %v267
  %656 = vmatpush1.msra.mxu0 %v266
  %657 = vmatprep.subr.mxu0 %v275
  %658 = vmatpush1.msra.mxu0 %v274
  %659 = vmatprep.subr.mxu0 %v283
  %660 = vmatpush1.msra.mxu0 %v282
  %661 = vmatprep.subr.mxu0 %v291
  %662 = vmatpush1.msra.mxu0 %v290
  %663 = vmatprep.subr.mxu0 0.0
  %664 = vmatpush1.msra.mxu0 0.0
  %665 = vmatprep.subr.mxu0 0.0
  %666 = vmatpush1.msra.mxu0 0.0
  %667 = vmatprep.subr.mxu0 0.0
  %668 = vmatpush1.msra.mxu0 0.0
  %669 = vmatprep.subr.mxu0 0.0
  %670 = vmatpush1.msra.mxu0 0.0
  %671 = vmatprep.subr.mxu0 0.0
  %672 = vmatpush1.msra.mxu0 0.0
  %673 = vmatprep.subr.mxu0 0.0
  %674 = vmatpush1.msra.mxu0 0.0
  %675 = vmatprep.subr.mxu0 0.0
  %676 = vmatpush1.msra.mxu0 0.0
  %677 = vmatprep.subr.mxu0 0.0
  %678 = vmatpush1.msra.mxu0 0.0
  %679 = vmatprep.subr.mxu0 0.0
  %680 = vmatpush1.msra.mxu0 0.0
  %681 = vmatprep.subr.mxu0 0.0
  %682 = vmatpush1.msra.mxu0 0.0
  %683 = vmatprep.subr.mxu0 0.0
  %684 = vmatpush1.msra.mxu0 0.0
  %685 = vmatprep.subr.mxu0 0.0
  %686 = vmatpush1.msra.mxu0 0.0
  %687 = vmatprep.subr.mxu0 0.0
  %688 = vmatpush1.msra.mxu0 0.0
  %689 = vmatprep.subr.mxu0 0.0
  %690 = vmatpush1.msra.mxu0 0.0
  %691 = vmatprep.subr.mxu0 0.0
  %692 = vmatpush1.msra.mxu0 0.0
  %693 = vmatprep.subr.mxu0 0.0
  %694 = vmatpush1.msra.mxu0 0.0
  %695 = vmatprep.mubr.f32.mxu0 0.0
  %696 = vmatmul.mubr.f32.gmra.mrb[0].mxu0 %v156
  %v697 = vpop.f32.mrb[0].mxu0
  %v698 = vadd.f32 0.0, %v697
  %v699 = vpop.f32.mrb[0].mxu0
  %v700 = vadd.f32 0.0, %v699
  %701 = vmatprep.mubr.f32.mxu0 0.0
  %702 = vmatmul.mubr.f32.gmra.mrb[0].mxu0 %v157
  %v703 = vpop.f32.mrb[0].mxu0
  %v704 = vadd.f32 0.0, %v703
  %v705 = vpop.f32.mrb[0].mxu0
  %v706 = vadd.f32 0.0, %v705
  %707 = vmatprep.mubr.f32.mxu0 0.0
  %708 = vmatmul.mubr.f32.gmra.mrb[0].mxu0 %v158
  %v709 = vpop.f32.mrb[0].mxu0
  %v710 = vadd.f32 0.0, %v709
  %v711 = vpop.f32.mrb[0].mxu0
  %v712 = vadd.f32 0.0, %v711
  %713 = vmatprep.mubr.f32.mxu0 0.0
  %714 = vmatmul.mubr.f32.gmra.mrb[0].mxu0 %v159
  %v715 = vpop.f32.mrb[0].mxu0
  %v716 = vadd.f32 0.0, %v715
  %v717 = vpop.f32.mrb[0].mxu0
  %v718 = vadd.f32 0.0, %v717
  %719 = vmatprep.mubr.f32.mxu0 0.0
  %720 = vmatmul.mubr.f32.gmra.mrb[0].mxu0 %v160
  %v721 = vpop.f32.mrb[0].mxu0
  %v722 = vadd.f32 0.0, %v721
  %v723 = vpop.f32.mrb[0].mxu0
  %v724 = vadd.f32 0.0, %v723
  %725 = vmatprep.mubr.f32.mxu0 0.0
  %726 = vmatmul.mubr.f32.gmra.mrb[0].mxu0 %v161
  %v727 = vpop.f32.mrb[0].mxu0
  %v728 = vadd.f32 0.0, %v727
  %v729 = vpop.f32.mrb[0].mxu0
  %v730 = vadd.f32 0.0, %v729
  %731 = vmatprep.mubr.f32.mxu0 0.0
  %732 = vmatmul.mubr.f32.gmra.mrb[0].mxu0 %v162
  %v733 = vpop.f32.mrb[0].mxu0
  %v734 = vadd.f32 0.0, %v733
  %v735 = vpop.f32.mrb[0].mxu0
  %v736 = vadd.f32 0.0, %v735
  %737 = vmatprep.mubr.f32.mxu0 0.0
  %738 = vmatmul.mubr.f32.gmra.mrb[0].mxu0 %v163
  %v739 = vpop.f32.mrb[0].mxu0
  %v740 = vadd.f32 0.0, %v739
  %v741 = vpop.f32.mrb[0].mxu0
  %v742 = vadd.f32 0.0, %v741
  %743 = vdwg.mxu0
  %744 = vmatprep.subr.mxu0 %v29
  %745 = vmatpush1.msra.mxu0 %v28
  %746 = vmatprep.subr.mxu0 %v37
  %747 = vmatpush1.msra.mxu0 %v36
  %748 = vmatprep.subr.mxu0 %v45
  %749 = vmatpush1.msra.mxu0 %v44
  %750 = vmatprep.subr.mxu0 %v53
  %751 = vmatpush1.msra.mxu0 %v52
  %752 = vmatprep.subr.mxu0 %v61
  %753 = vmatpush1.msra.mxu0 %v60
  %754 = vmatprep.subr.mxu0 %v69
  %755 = vmatpush1.msra.mxu0 %v68
  %756 = vmatprep.subr.mxu0 %v77
  %757 = vmatpush1.msra.mxu0 %v76
  %758 = vmatprep.subr.mxu0 %v85
  %759 = vmatpush1.msra.mxu0 %v84
  %760 = vmatprep.subr.mxu0 %v93
  %761 = vmatpush1.msra.mxu0 %v92
  %762 = vmatprep.subr.mxu0 %v101
  %763 = vmatpush1.msra.mxu0 %v100
  %764 = vmatprep.subr.mxu0 %v109
  %765 = vmatpush1.msra.mxu0 %v108
  %766 = vmatprep.subr.mxu0 %v117
  %767 = vmatpush1.msra.mxu0 %v116
  %768 = vmatprep.subr.mxu0 %v125
  %769 = vmatpush1.msra.mxu0 %v124
  %770 = vmatprep.subr.mxu0 %v133
  %771 = vmatpush1.msra.mxu0 %v132
  %772 = vmatprep.subr.mxu0 %v141
  %773 = vmatpush1.msra.mxu0 %v140
  %774 = vmatprep.subr.mxu0 %v149
  %775 = vmatpush1.msra.mxu0 %v148
  %776 = vmatprep.subr.mxu0 0.0
  %777 = vmatpush1.msra.mxu0 0.0
  %778 = vmatprep.subr.mxu0 0.0
  %779 = vmatpush1.msra.mxu0 0.0
  %780 = vmatprep.subr.mxu0 0.0
  %781 = vmatpush1.msra.mxu0 0.0
  %782 = vmatprep.subr.mxu0 0.0
  %783 = vmatpush1.msra.mxu0 0.0
  %784 = vmatprep.subr.mxu0 0.0
  %785 = vmatpush1.msra.mxu0 0.0
  %786 = vmatprep.subr.mxu0 0.0
  %787 = vmatpush1.msra.mxu0 0.0
  %788 = vmatprep.subr.mxu0 0.0
  %789 = vmatpush1.msra.mxu0 0.0
  %790 = vmatprep.subr.mxu0 0.0
  %791 = vmatpush1.msra.mxu0 0.0
  %792 = vmatprep.subr.mxu0 0.0
  %793 = vmatpush1.msra.mxu0 0.0
  %794 = vmatprep.subr.mxu0 0.0
  %795 = vmatpush1.msra.mxu0 0.0
  %796 = vmatprep.subr.mxu0 0.0
  %797 = vmatpush1.msra.mxu0 0.0
  %798 = vmatprep.subr.mxu0 0.0
  %799 = vmatpush1.msra.mxu0 0.0
  %800 = vmatprep.subr.mxu0 0.0
  %801 = vmatpush1.msra.mxu0 0.0
  %802 = vmatprep.subr.mxu0 0.0
  %803 = vmatpush1.msra.mxu0 0.0
  %804 = vmatprep.subr.mxu0 0.0
  %805 = vmatpush1.msra.mxu0 0.0
  %806 = vmatprep.subr.mxu0 0.0
  %807 = vmatpush1.msra.mxu0 0.0
  %808 = vmatprep.mubr.f32.mxu0 0.0
  %809 = vmatmul.mubr.f32.gmra.mrb[0].mxu0 %v20
  %v810 = vpop.f32.mrb[0].mxu0
  %v811 = vadd.f32 %v359, %v810
  %v812 = vpop.f32.mrb[0].mxu0
  %v813 = vadd.f32 %v361, %v812
  %814 = vmatprep.mubr.f32.mxu0 0.0
  %815 = vmatmul.mubr.f32.gmra.mrb[0].mxu0 %v21
  %v816 = vpop.f32.mrb[0].mxu0
  %v817 = vadd.f32 %v365, %v816
  %v818 = vpop.f32.mrb[0].mxu0
  %v819 = vadd.f32 %v367, %v818
  %820 = vmatprep.mubr.f32.mxu0 0.0
  %821 = vmatmul.mubr.f32.gmra.mrb[0].mxu0 %v22
  %v822 = vpop.f32.mrb[0].mxu0
  %v823 = vadd.f32 %v371, %v822
  %v824 = vpop.f32.mrb[0].mxu0
  %v825 = vadd.f32 %v373, %v824
  %826 = vmatprep.mubr.f32.mxu0 0.0
  %827 = vmatmul.mubr.f32.gmra.mrb[0].mxu0 %v23
  %v828 = vpop.f32.mrb[0].mxu0
  %v829 = vadd.f32 %v377, %v828
  %v830 = vpop.f32.mrb[0].mxu0
  %v831 = vadd.f32 %v379, %v830
  %832 = vmatprep.mubr.f32.mxu0 0.0
  %833 = vmatmul.mubr.f32.gmra.mrb[0].mxu0 %v24
  %v834 = vpop.f32.mrb[0].mxu0
  %v835 = vadd.f32 %v383, %v834
  %v836 = vpop.f32.mrb[0].mxu0
  %v837 = vadd.f32 %v385, %v836
  %838 = vmatprep.mubr.f32.mxu0 0.0
  %839 = vmatmul.mubr.f32.gmra.mrb[0].mxu0 %v25
  %v840 = vpop.f32.mrb[0].mxu0
  %v841 = vadd.f32 %v389, %v840
  %v842 = vpop.f32.mrb[0].mxu0
  %v843 = vadd.f32 %v391, %v842
  %844 = vmatprep.mubr.f32.mxu0 0.0
  %845 = vmatmul.mubr.f32.gmra.mrb[0].mxu0 %v26
  %v846 = vpop.f32.mrb[0].mxu0
  %v847 = vadd.f32 %v395, %v846
  %v848 = vpop.f32.mrb[0].mxu0
  %v849 = vadd.f32 %v397, %v848
  %850 = vmatprep.mubr.f32.mxu0 0.0
  %851 = vmatmul.mubr.f32.gmra.mrb[0].mxu0 %v27
  %v852 = vpop.f32.mrb[0].mxu0
  %v853 = vadd.f32 %v401, %v852
  %v854 = vpop.f32.mrb[0].mxu0
  %v855 = vadd.f32 %v403, %v854
  %856 = vdwg.mxu0
  %857 = vmatprep.subr.mxu0 %v31
  %858 = vmatpush1.msra.mxu0 %v30
  %859 = vmatprep.subr.mxu0 %v39
  %860 = vmatpush1.msra.mxu0 %v38
  %861 = vmatprep.subr.mxu0 %v47
  %862 = vmatpush1.msra.mxu0 %v46
  %863 = vmatprep.subr.mxu0 %v55
  %864 = vmatpush1.msra.mxu0 %v54
  %865 = vmatprep.subr.mxu0 %v63
  %866 = vmatpush1.msra.mxu0 %v62
  %867 = vmatprep.subr.mxu0 %v71
  %868 = vmatpush1.msra.mxu0 %v70
  %869 = vmatprep.subr.mxu0 %v79
  %870 = vmatpush1.msra.mxu0 %v78
  %871 = vmatprep.subr.mxu0 %v87
  %872 = vmatpush1.msra.mxu0 %v86
  %873 = vmatprep.subr.mxu0 %v95
  %874 = vmatpush1.msra.mxu0 %v94
  %875 = vmatprep.subr.mxu0 %v103
  %876 = vmatpush1.msra.mxu0 %v102
  %877 = vmatprep.subr.mxu0 %v111
  %878 = vmatpush1.msra.mxu0 %v110
  %879 = vmatprep.subr.mxu0 %v119
  %880 = vmatpush1.msra.mxu0 %v118
  %881 = vmatprep.subr.mxu0 %v127
  %882 = vmatpush1.msra.mxu0 %v126
  %883 = vmatprep.subr.mxu0 %v135
  %884 = vmatpush1.msra.mxu0 %v134
  %885 = vmatprep.subr.mxu0 %v143
  %886 = vmatpush1.msra.mxu0 %v142
  %887 = vmatprep.subr.mxu0 %v151
  %888 = vmatpush1.msra.mxu0 %v150
  %889 = vmatprep.subr.mxu0 0.0
  %890 = vmatpush1.msra.mxu0 0.0
  %891 = vmatprep.subr.mxu0 0.0
  %892 = vmatpush1.msra.mxu0 0.0
  %893 = vmatprep.subr.mxu0 0.0
  %894 = vmatpush1.msra.mxu0 0.0
  %895 = vmatprep.subr.mxu0 0.0
  %896 = vmatpush1.msra.mxu0 0.0
  %897 = vmatprep.subr.mxu0 0.0
  %898 = vmatpush1.msra.mxu0 0.0
  %899 = vmatprep.subr.mxu0 0.0
  %900 = vmatpush1.msra.mxu0 0.0
  %901 = vmatprep.subr.mxu0 0.0
  %902 = vmatpush1.msra.mxu0 0.0
  %903 = vmatprep.subr.mxu0 0.0
  %904 = vmatpush1.msra.mxu0 0.0
  %905 = vmatprep.subr.mxu0 0.0
  %906 = vmatpush1.msra.mxu0 0.0
  %907 = vmatprep.subr.mxu0 0.0
  %908 = vmatpush1.msra.mxu0 0.0
  %909 = vmatprep.subr.mxu0 0.0
  %910 = vmatpush1.msra.mxu0 0.0
  %911 = vmatprep.subr.mxu0 0.0
  %912 = vmatpush1.msra.mxu0 0.0
  %913 = vmatprep.subr.mxu0 0.0
  %914 = vmatpush1.msra.mxu0 0.0
  %915 = vmatprep.subr.mxu0 0.0
  %916 = vmatpush1.msra.mxu0 0.0
  %917 = vmatprep.subr.mxu0 0.0
  %918 = vmatpush1.msra.mxu0 0.0
  %919 = vmatprep.subr.mxu0 0.0
  %920 = vmatpush1.msra.mxu0 0.0
  %921 = vmatprep.mubr.f32.mxu0 0.0
  %922 = vmatmul.mubr.f32.gmra.mrb[0].mxu0 %v20
  %v923 = vpop.f32.mrb[0].mxu0
  %v924 = vadd.f32 %v472, %v923
  %v925 = vpop.f32.mrb[0].mxu0
  %v926 = vadd.f32 %v474, %v925
  %927 = vmatprep.mubr.f32.mxu0 0.0
  %928 = vmatmul.mubr.f32.gmra.mrb[0].mxu0 %v21
  %v929 = vpop.f32.mrb[0].mxu0
  %v930 = vadd.f32 %v478, %v929
  %v931 = vpop.f32.mrb[0].mxu0
  %v932 = vadd.f32 %v480, %v931
  %933 = vmatprep.mubr.f32.mxu0 0.0
  %934 = vmatmul.mubr.f32.gmra.mrb[0].mxu0 %v22
  %v935 = vpop.f32.mrb[0].mxu0
  %v936 = vadd.f32 %v484, %v935
  %v937 = vpop.f32.mrb[0].mxu0
  %v938 = vadd.f32 %v486, %v937
  %939 = vmatprep.mubr.f32.mxu0 0.0
  %940 = vmatmul.mubr.f32.gmra.mrb[0].mxu0 %v23
  %v941 = vpop.f32.mrb[0].mxu0
  %v942 = vadd.f32 %v490, %v941
  %v943 = vpop.f32.mrb[0].mxu0
  %v944 = vadd.f32 %v492, %v943
  %945 = vmatprep.mubr.f32.mxu0 0.0
  %946 = vmatmul.mubr.f32.gmra.mrb[0].mxu0 %v24
  %v947 = vpop.f32.mrb[0].mxu0
  %v948 = vadd.f32 %v496, %v947
  %v949 = vpop.f32.mrb[0].mxu0
  %v950 = vadd.f32 %v498, %v949
  %951 = vmatprep.mubr.f32.mxu0 0.0
  %952 = vmatmul.mubr.f32.gmra.mrb[0].mxu0 %v25
  %v953 = vpop.f32.mrb[0].mxu0
  %v954 = vadd.f32 %v502, %v953
  %v955 = vpop.f32.mrb[0].mxu0
  %v956 = vadd.f32 %v504, %v955
  %957 = vmatprep.mubr.f32.mxu0 0.0
  %958 = vmatmul.mubr.f32.gmra.mrb[0].mxu0 %v26
  %v959 = vpop.f32.mrb[0].mxu0
  %v960 = vadd.f32 %v508, %v959
  %v961 = vpop.f32.mrb[0].mxu0
  %v962 = vadd.f32 %v510, %v961
  %963 = vmatprep.mubr.f32.mxu0 0.0
  %964 = vmatmul.mubr.f32.gmra.mrb[0].mxu0 %v27
  %v965 = vpop.f32.mrb[0].mxu0
  %v966 = vadd.f32 %v514, %v965
  %v967 = vpop.f32.mrb[0].mxu0
  %v968 = vadd.f32 %v516, %v967
  %969 = vdwg.mxu0
  %970 = vmatprep.subr.mxu0 %v33
  %971 = vmatpush1.msra.mxu0 %v32
  %972 = vmatprep.subr.mxu0 %v41
  %973 = vmatpush1.msra.mxu0 %v40
  %974 = vmatprep.subr.mxu0 %v49
  %975 = vmatpush1.msra.mxu0 %v48
  %976 = vmatprep.subr.mxu0 %v57
  %977 = vmatpush1.msra.mxu0 %v56
  %978 = vmatprep.subr.mxu0 %v65
  %979 = vmatpush1.msra.mxu0 %v64
  %980 = vmatprep.subr.mxu0 %v73
  %981 = vmatpush1.msra.mxu0 %v72
  %982 = vmatprep.subr.mxu0 %v81
  %983 = vmatpush1.msra.mxu0 %v80
  %984 = vmatprep.subr.mxu0 %v89
  %985 = vmatpush1.msra.mxu0 %v88
  %986 = vmatprep.subr.mxu0 %v97
  %987 = vmatpush1.msra.mxu0 %v96
  %988 = vmatprep.subr.mxu0 %v105
  %989 = vmatpush1.msra.mxu0 %v104
  %990 = vmatprep.subr.mxu0 %v113
  %991 = vmatpush1.msra.mxu0 %v112
  %992 = vmatprep.subr.mxu0 %v121
  %993 = vmatpush1.msra.mxu0 %v120
  %994 = vmatprep.subr.mxu0 %v129
  %995 = vmatpush1.msra.mxu0 %v128
  %996 = vmatprep.subr.mxu0 %v137
  %997 = vmatpush1.msra.mxu0 %v136
  %998 = vmatprep.subr.mxu0 %v145
  %999 = vmatpush1.msra.mxu0 %v144
  %1000 = vmatprep.subr.mxu0 %v153
  %1001 = vmatpush1.msra.mxu0 %v152
  %1002 = vmatprep.subr.mxu0 0.0
  %1003 = vmatpush1.msra.mxu0 0.0
  %1004 = vmatprep.subr.mxu0 0.0
  %1005 = vmatpush1.msra.mxu0 0.0
  %1006 = vmatprep.subr.mxu0 0.0
  %1007 = vmatpush1.msra.mxu0 0.0
  %1008 = vmatprep.subr.mxu0 0.0
  %1009 = vmatpush1.msra.mxu0 0.0
  %1010 = vmatprep.subr.mxu0 0.0
  %1011 = vmatpush1.msra.mxu0 0.0
  %1012 = vmatprep.subr.mxu0 0.0
  %1013 = vmatpush1.msra.mxu0 0.0
  %1014 = vmatprep.subr.mxu0 0.0
  %1015 = vmatpush1.msra.mxu0 0.0
  %1016 = vmatprep.subr.mxu0 0.0
  %1017 = vmatpush1.msra.mxu0 0.0
  %1018 = vmatprep.subr.mxu0 0.0
  %1019 = vmatpush1.msra.mxu0 0.0
  %1020 = vmatprep.subr.mxu0 0.0
  %1021 = vmatpush1.msra.mxu0 0.0
  %1022 = vmatprep.subr.mxu0 0.0
  %1023 = vmatpush1.msra.mxu0 0.0
  %1024 = vmatprep.subr.mxu0 0.0
  %1025 = vmatpush1.msra.mxu0 0.0
  %1026 = vmatprep.subr.mxu0 0.0
  %1027 = vmatpush1.msra.mxu0 0.0
  %1028 = vmatprep.subr.mxu0 0.0
  %1029 = vmatpush1.msra.mxu0 0.0
  %1030 = vmatprep.subr.mxu0 0.0
  %1031 = vmatpush1.msra.mxu0 0.0
  %1032 = vmatprep.subr.mxu0 0.0
  %1033 = vmatpush1.msra.mxu0 0.0
  %1034 = vmatprep.mubr.f32.mxu0 0.0
  %1035 = vmatmul.mubr.f32.gmra.mrb[0].mxu0 %v20
  %v1036 = vpop.f32.mrb[0].mxu0
  %v1037 = vadd.f32 %v585, %v1036
  %v1038 = vpop.f32.mrb[0].mxu0
  %v1039 = vadd.f32 %v587, %v1038
  %1040 = vmatprep.mubr.f32.mxu0 0.0
  %1041 = vmatmul.mubr.f32.gmra.mrb[0].mxu0 %v21
  %v1042 = vpop.f32.mrb[0].mxu0
  %v1043 = vadd.f32 %v591, %v1042
  %v1044 = vpop.f32.mrb[0].mxu0
  %v1045 = vadd.f32 %v593, %v1044
  %1046 = vmatprep.mubr.f32.mxu0 0.0
  %1047 = vmatmul.mubr.f32.gmra.mrb[0].mxu0 %v22
  %v1048 = vpop.f32.mrb[0].mxu0
  %v1049 = vadd.f32 %v597, %v1048
  %v1050 = vpop.f32.mrb[0].mxu0
  %v1051 = vadd.f32 %v599, %v1050
  %1052 = vmatprep.mubr.f32.mxu0 0.0
  %1053 = vmatmul.mubr.f32.gmra.mrb[0].mxu0 %v23
  %v1054 = vpop.f32.mrb[0].mxu0
  %v1055 = vadd.f32 %v603, %v1054
  %v1056 = vpop.f32.mrb[0].mxu0
  %v1057 = vadd.f32 %v605, %v1056
  %1058 = vmatprep.mubr.f32.mxu0 0.0
  %1059 = vmatmul.mubr.f32.gmra.mrb[0].mxu0 %v24
  %v1060 = vpop.f32.mrb[0].mxu0
  %v1061 = vadd.f32 %v609, %v1060
  %v1062 = vpop.f32.mrb[0].mxu0
  %v1063 = vadd.f32 %v611, %v1062
  %1064 = vmatprep.mubr.f32.mxu0 0.0
  %1065 = vmatmul.mubr.f32.gmra.mrb[0].mxu0 %v25
  %v1066 = vpop.f32.mrb[0].mxu0
  %v1067 = vadd.f32 %v615, %v1066
  %v1068 = vpop.f32.mrb[0].mxu0
  %v1069 = vadd.f32 %v617, %v1068
  %1070 = vmatprep.mubr.f32.mxu0 0.0
  %1071 = vmatmul.mubr.f32.gmra.mrb[0].mxu0 %v26
  %v1072 = vpop.f32.mrb[0].mxu0
  %v1073 = vadd.f32 %v621, %v1072
  %v1074 = vpop.f32.mrb[0].mxu0
  %v1075 = vadd.f32 %v623, %v1074
  %1076 = vmatprep.mubr.f32.mxu0 0.0
  %1077 = vmatmul.mubr.f32.gmra.mrb[0].mxu0 %v27
  %v1078 = vpop.f32.mrb[0].mxu0
  %v1079 = vadd.f32 %v627, %v1078
  %v1080 = vpop.f32.mrb[0].mxu0
  %v1081 = vadd.f32 %v629, %v1080
  %1082 = vdwg.mxu0
  %1083 = vmatprep.subr.mxu0 %v35
  %1084 = vmatpush1.msra.mxu0 %v34
  %1085 = vmatprep.subr.mxu0 %v43
  %1086 = vmatpush1.msra.mxu0 %v42
  %1087 = vmatprep.subr.mxu0 %v51
  %1088 = vmatpush1.msra.mxu0 %v50
  %1089 = vmatprep.subr.mxu0 %v59
  %1090 = vmatpush1.msra.mxu0 %v58
  %1091 = vmatprep.subr.mxu0 %v67
  %1092 = vmatpush1.msra.mxu0 %v66
  %1093 = vmatprep.subr.mxu0 %v75
  %1094 = vmatpush1.msra.mxu0 %v74
  %1095 = vmatprep.subr.mxu0 %v83
  %1096 = vmatpush1.msra.mxu0 %v82
  %1097 = vmatprep.subr.mxu0 %v91
  %1098 = vmatpush1.msra.mxu0 %v90
  %1099 = vmatprep.subr.mxu0 %v99
  %1100 = vmatpush1.msra.mxu0 %v98
  %1101 = vmatprep.subr.mxu0 %v107
  %1102 = vmatpush1.msra.mxu0 %v106
  %1103 = vmatprep.subr.mxu0 %v115
  %1104 = vmatpush1.msra.mxu0 %v114
  %1105 = vmatprep.subr.mxu0 %v123
  %1106 = vmatpush1.msra.mxu0 %v122
  %1107 = vmatprep.subr.mxu0 %v131
  %1108 = vmatpush1.msra.mxu0 %v130
  %1109 = vmatprep.subr.mxu0 %v139
  %1110 = vmatpush1.msra.mxu0 %v138
  %1111 = vmatprep.subr.mxu0 %v147
  %1112 = vmatpush1.msra.mxu0 %v146
  %1113 = vmatprep.subr.mxu0 %v155
  %1114 = vmatpush1.msra.mxu0 %v154
  %1115 = vmatprep.subr.mxu0 0.0
  %1116 = vmatpush1.msra.mxu0 0.0
  %1117 = vmatprep.subr.mxu0 0.0
  %1118 = vmatpush1.msra.mxu0 0.0
  %1119 = vmatprep.subr.mxu0 0.0
  %1120 = vmatpush1.msra.mxu0 0.0
  %1121 = vmatprep.subr.mxu0 0.0
  %1122 = vmatpush1.msra.mxu0 0.0
  %1123 = vmatprep.subr.mxu0 0.0
  %1124 = vmatpush1.msra.mxu0 0.0
  %1125 = vmatprep.subr.mxu0 0.0
  %1126 = vmatpush1.msra.mxu0 0.0
  %1127 = vmatprep.subr.mxu0 0.0
  %1128 = vmatpush1.msra.mxu0 0.0
  %1129 = vmatprep.subr.mxu0 0.0
  %1130 = vmatpush1.msra.mxu0 0.0
  %1131 = vmatprep.subr.mxu0 0.0
  %1132 = vmatpush1.msra.mxu0 0.0
  %1133 = vmatprep.subr.mxu0 0.0
  %1134 = vmatpush1.msra.mxu0 0.0
  %1135 = vmatprep.subr.mxu0 0.0
  %1136 = vmatpush1.msra.mxu0 0.0
  %1137 = vmatprep.subr.mxu0 0.0
  %1138 = vmatpush1.msra.mxu0 0.0
  %1139 = vmatprep.subr.mxu0 0.0
  %1140 = vmatpush1.msra.mxu0 0.0
  %1141 = vmatprep.subr.mxu0 0.0
  %1142 = vmatpush1.msra.mxu0 0.0
  %1143 = vmatprep.subr.mxu0 0.0
  %1144 = vmatpush1.msra.mxu0 0.0
  %1145 = vmatprep.subr.mxu0 0.0
  %1146 = vmatpush1.msra.mxu0 0.0
  %1147 = vmatprep.mubr.f32.mxu0 0.0
  %1148 = vmatmul.mubr.f32.gmra.mrb[0].mxu0 %v20
  %v1149 = vpop.f32.mrb[0].mxu0
  %v1150 = vadd.f32 %v698, %v1149
  %v1151 = vpop.f32.mrb[0].mxu0
  %v1152 = vadd.f32 %v700, %v1151
  %1153 = vmatprep.mubr.f32.mxu0 0.0
  %1154 = vmatmul.mubr.f32.gmra.mrb[0].mxu0 %v21
  %v1155 = vpop.f32.mrb[0].mxu0
  %v1156 = vadd.f32 %v704, %v1155
  %v1157 = vpop.f32.mrb[0].mxu0
  %v1158 = vadd.f32 %v706, %v1157
  %1159 = vmatprep.mubr.f32.mxu0 0.0
  %1160 = vmatmul.mubr.f32.gmra.mrb[0].mxu0 %v22
  %v1161 = vpop.f32.mrb[0].mxu0
  %v1162 = vadd.f32 %v710, %v1161
  %v1163 = vpop.f32.mrb[0].mxu0
  %v1164 = vadd.f32 %v712, %v1163
  %1165 = vmatprep.mubr.f32.mxu0 0.0
  %1166 = vmatmul.mubr.f32.gmra.mrb[0].mxu0 %v23
  %v1167 = vpop.f32.mrb[0].mxu0
  %v1168 = vadd.f32 %v716, %v1167
  %v1169 = vpop.f32.mrb[0].mxu0
  %v1170 = vadd.f32 %v718, %v1169
  %1171 = vmatprep.mubr.f32.mxu0 0.0
  %1172 = vmatmul.mubr.f32.gmra.mrb[0].mxu0 %v24
  %v1173 = vpop.f32.mrb[0].mxu0
  %v1174 = vadd.f32 %v722, %v1173
  %v1175 = vpop.f32.mrb[0].mxu0
  %v1176 = vadd.f32 %v724, %v1175
  %1177 = vmatprep.mubr.f32.mxu0 0.0
  %1178 = vmatmul.mubr.f32.gmra.mrb[0].mxu0 %v25
  %v1179 = vpop.f32.mrb[0].mxu0
  %v1180 = vadd.f32 %v728, %v1179
  %v1181 = vpop.f32.mrb[0].mxu0
  %v1182 = vadd.f32 %v730, %v1181
  %1183 = vmatprep.mubr.f32.mxu0 0.0
  %1184 = vmatmul.mubr.f32.gmra.mrb[0].mxu0 %v26
  %v1185 = vpop.f32.mrb[0].mxu0
  %v1186 = vadd.f32 %v734, %v1185
  %v1187 = vpop.f32.mrb[0].mxu0
  %v1188 = vadd.f32 %v736, %v1187
  %1189 = vmatprep.mubr.f32.mxu0 0.0
  %1190 = vmatmul.mubr.f32.gmra.mrb[0].mxu0 %v27
  %v1191 = vpop.f32.mrb[0].mxu0
  %v1192 = vadd.f32 %v740, %v1191
  %v1193 = vpop.f32.mrb[0].mxu0
  %v1194 = vadd.f32 %v742, %v1193
  %1195 = vdwg.mxu0
  %v1196 = vld [vmem:[%s4] sm:$0xff]
  %v1198 = vlaneseq
  %v1199 = vshrl.u32 %v1198, 7
  %v1200 = vsub.s32 0, %v1199
  %v1201 = vrot.slane %v1196, %v1200
  %v1202 = vlaneseq
  %v1203 = vshrl.u32 %v1202, 7
  %v1204 = vsub.s32 1, %v1203
  %v1205 = vrot.slane %v1196, %v1204
  %v1206 = vlaneseq
  %v1207 = vshrl.u32 %v1206, 7
  %v1208 = vsub.s32 2, %v1207
  %v1209 = vrot.slane %v1196, %v1208
  %v1210 = vlaneseq
  %v1211 = vshrl.u32 %v1210, 7
  %v1212 = vsub.s32 3, %v1211
  %v1213 = vrot.slane %v1196, %v1212
  %v1214 = vlaneseq
  %v1215 = vshrl.u32 %v1214, 7
  %v1216 = vsub.s32 4, %v1215
  %v1217 = vrot.slane %v1196, %v1216
  %v1218 = vlaneseq
  %v1219 = vshrl.u32 %v1218, 7
  %v1220 = vsub.s32 5, %v1219
  %v1221 = vrot.slane %v1196, %v1220
  %v1222 = vlaneseq
  %v1223 = vshrl.u32 %v1222, 7
  %v1224 = vsub.s32 6, %v1223
  %v1225 = vrot.slane %v1196, %v1224
  %v1226 = vlaneseq
  %v1227 = vshrl.u32 %v1226, 7
  %v1228 = vsub.s32 7, %v1227
  %v1229 = vrot.slane %v1196, %v1228
  %v1238 = vadd.f32 %v811, %v1201
  %v1239 = vadd.f32 %v813, %v1205
  %v1240 = vadd.f32 %v924, %v1209
  %v1241 = vadd.f32 %v926, %v1213
  %v1242 = vadd.f32 %v1037, %v1217
  %v1243 = vadd.f32 %v1039, %v1221
  %v1244 = vadd.f32 %v1150, %v1225
  %v1245 = vadd.f32 %v1152, %v1229
  %v1246 = vadd.f32 %v817, %v1201
  %v1247 = vadd.f32 %v819, %v1205
  %v1248 = vadd.f32 %v930, %v1209
  %v1249 = vadd.f32 %v932, %v1213
  %v1250 = vadd.f32 %v1043, %v1217
  %v1251 = vadd.f32 %v1045, %v1221
  %v1252 = vadd.f32 %v1156, %v1225
  %v1253 = vadd.f32 %v1158, %v1229
  %v1254 = vadd.f32 %v823, %v1201
  %v1255 = vadd.f32 %v825, %v1205
  %v1256 = vadd.f32 %v936, %v1209
  %v1257 = vadd.f32 %v938, %v1213
  %v1258 = vadd.f32 %v1049, %v1217
  %v1259 = vadd.f32 %v1051, %v1221
  %v1260 = vadd.f32 %v1162, %v1225
  %v1261 = vadd.f32 %v1164, %v1229
  %v1262 = vadd.f32 %v829, %v1201
  %v1263 = vadd.f32 %v831, %v1205
  %v1264 = vadd.f32 %v942, %v1209
  %v1265 = vadd.f32 %v944, %v1213
  %v1266 = vadd.f32 %v1055, %v1217
  %v1267 = vadd.f32 %v1057, %v1221
  %v1268 = vadd.f32 %v1168, %v1225
  %v1269 = vadd.f32 %v1170, %v1229
  %v1270 = vadd.f32 %v835, %v1201
  %v1271 = vadd.f32 %v837, %v1205
  %v1272 = vadd.f32 %v948, %v1209
  %v1273 = vadd.f32 %v950, %v1213
  %v1274 = vadd.f32 %v1061, %v1217
  %v1275 = vadd.f32 %v1063, %v1221
  %v1276 = vadd.f32 %v1174, %v1225
  %v1277 = vadd.f32 %v1176, %v1229
  %v1278 = vadd.f32 %v841, %v1201
  %v1279 = vadd.f32 %v843, %v1205
  %v1280 = vadd.f32 %v954, %v1209
  %v1281 = vadd.f32 %v956, %v1213
  %v1282 = vadd.f32 %v1067, %v1217
  %v1283 = vadd.f32 %v1069, %v1221
  %v1284 = vadd.f32 %v1180, %v1225
  %v1285 = vadd.f32 %v1182, %v1229
  %v1286 = vadd.f32 %v847, %v1201
  %v1287 = vadd.f32 %v849, %v1205
  %v1288 = vadd.f32 %v960, %v1209
  %v1289 = vadd.f32 %v962, %v1213
  %v1290 = vadd.f32 %v1073, %v1217
  %v1291 = vadd.f32 %v1075, %v1221
  %v1292 = vadd.f32 %v1186, %v1225
  %v1293 = vadd.f32 %v1188, %v1229
  %v1294 = vadd.f32 %v853, %v1201
  %v1295 = vadd.f32 %v855, %v1205
  %v1296 = vadd.f32 %v966, %v1209
  %v1297 = vadd.f32 %v968, %v1213
  %v1298 = vadd.f32 %v1079, %v1217
  %v1299 = vadd.f32 %v1081, %v1221
  %v1300 = vadd.f32 %v1192, %v1225
  %v1301 = vadd.f32 %v1194, %v1229
  %1302 = vst [vmem:[%s5] sm:$0xff] %v1238
  %1303 = vst [vmem:[%s5 + $0x8] sm:$0xff] %v1239
  %1304 = vst [vmem:[%s5 + $0x10] sm:$0xff] %v1240
  %1305 = vst [vmem:[%s5 + $0x18] sm:$0xff] %v1241
  %1306 = vst [vmem:[%s5 + $0x20] sm:$0xff] %v1242
  %1307 = vst [vmem:[%s5 + $0x28] sm:$0xff] %v1243
  %1308 = vst [vmem:[%s5 + $0x30] sm:$0xff] %v1244
  %1309 = vst [vmem:[%s5 + $0x38] sm:$0xff] %v1245
  %1310 = vst [vmem:[%s5 + $0x40] sm:$0xff] %v1246
  %1311 = vst [vmem:[%s5 + $0x48] sm:$0xff] %v1247
  %1312 = vst [vmem:[%s5 + $0x50] sm:$0xff] %v1248
  %1313 = vst [vmem:[%s5 + $0x58] sm:$0xff] %v1249
  %1314 = vst [vmem:[%s5 + $0x60] sm:$0xff] %v1250
  %1315 = vst [vmem:[%s5 + $0x68] sm:$0xff] %v1251
  %1316 = vst [vmem:[%s5 + $0x70] sm:$0xff] %v1252
  %1317 = vst [vmem:[%s5 + $0x78] sm:$0xff] %v1253
  %1318 = vst [vmem:[%s5 + $0x80] sm:$0xff] %v1254
  %1319 = vst [vmem:[%s5 + $0x88] sm:$0xff] %v1255
  %1320 = vst [vmem:[%s5 + $0x90] sm:$0xff] %v1256
  %1321 = vst [vmem:[%s5 + $0x98] sm:$0xff] %v1257
  %1322 = vst [vmem:[%s5 + $0xa0] sm:$0xff] %v1258
  %1323 = vst [vmem:[%s5 + $0xa8] sm:$0xff] %v1259
  %1324 = vst [vmem:[%s5 + $0xb0] sm:$0xff] %v1260
  %1325 = vst [vmem:[%s5 + $0xb8] sm:$0xff] %v1261
  %1326 = vst [vmem:[%s5 + $0xc0] sm:$0xff] %v1262
  %1327 = vst [vmem:[%s5 + $0xc8] sm:$0xff] %v1263
  %1328 = vst [vmem:[%s5 + $0xd0] sm:$0xff] %v1264
  %1329 = vst [vmem:[%s5 + $0xd8] sm:$0xff] %v1265
  %1330 = vst [vmem:[%s5 + $0xe0] sm:$0xff] %v1266
  %1331 = vst [vmem:[%s5 + $0xe8] sm:$0xff] %v1267
  %1332 = vst [vmem:[%s5 + $0xf0] sm:$0xff] %v1268
  %1333 = vst [vmem:[%s5 + $0xf8] sm:$0xff] %v1269
  %1334 = vst [vmem:[%s5 + $0x100] sm:$0xff] %v1270
  %1335 = vst [vmem:[%s5 + $0x108] sm:$0xff] %v1271
  %1336 = vst [vmem:[%s5 + $0x110] sm:$0xff] %v1272
  %1337 = vst [vmem:[%s5 + $0x118] sm:$0xff] %v1273
  %1338 = vst [vmem:[%s5 + $0x120] sm:$0xff] %v1274
  %1339 = vst [vmem:[%s5 + $0x128] sm:$0xff] %v1275
  %1340 = vst [vmem:[%s5 + $0x130] sm:$0xff] %v1276
  %1341 = vst [vmem:[%s5 + $0x138] sm:$0xff] %v1277
  %1342 = vst [vmem:[%s5 + $0x140] sm:$0xff] %v1278
  %1343 = vst [vmem:[%s5 + $0x148] sm:$0xff] %v1279
  %1344 = vst [vmem:[%s5 + $0x150] sm:$0xff] %v1280
  %1345 = vst [vmem:[%s5 + $0x158] sm:$0xff] %v1281
  %1346 = vst [vmem:[%s5 + $0x160] sm:$0xff] %v1282
  %1347 = vst [vmem:[%s5 + $0x168] sm:$0xff] %v1283
  %1348 = vst [vmem:[%s5 + $0x170] sm:$0xff] %v1284
  %1349 = vst [vmem:[%s5 + $0x178] sm:$0xff] %v1285
  %1350 = vst [vmem:[%s5 + $0x180] sm:$0xff] %v1286
  %1351 = vst [vmem:[%s5 + $0x188] sm:$0xff] %v1287
  %1352 = vst [vmem:[%s5 + $0x190] sm:$0xff] %v1288
  %1353 = vst [vmem:[%s5 + $0x198] sm:$0xff] %v1289
  %1354 = vst [vmem:[%s5 + $0x1a0] sm:$0xff] %v1290
  %1355 = vst [vmem:[%s5 + $0x1a8] sm:$0xff] %v1291
  %1356 = vst [vmem:[%s5 + $0x1b0] sm:$0xff] %v1292
  %1357 = vst [vmem:[%s5 + $0x1b8] sm:$0xff] %v1293
  %1358 = vst [vmem:[%s5 + $0x1c0] sm:$0xff] %v1294
  %1359 = vst [vmem:[%s5 + $0x1c8] sm:$0xff] %v1295
  %1360 = vst [vmem:[%s5 + $0x1d0] sm:$0xff] %v1296
  %1361 = vst [vmem:[%s5 + $0x1d8] sm:$0xff] %v1297
  %1362 = vst [vmem:[%s5 + $0x1e0] sm:$0xff] %v1298
  %1363 = vst [vmem:[%s5 + $0x1e8] sm:$0xff] %v1299
  %1364 = vst [vmem:[%s5 + $0x1f0] sm:$0xff] %v1300
  %1365 = vst [vmem:[%s5 + $0x1f8] sm:$0xff] %v1301
  // Predicated region
  $region22: #{rnn_forward.6} parent=0 // pred_check
    _
  $region23: #{rnn_forward.6} parent=0 // pred_check_branch
    %1367 = sbr.rel (0) target = $region25
  $region24: #{rnn_forward.6} parent=0 // pred_region
    _
  $region25: #{rnn_forward.6} parent=0 // pred_fallthru
    _
  // Predicated region
  $region26: #{rnn_forward.6} parent=0 // pred_check
    _
  $region27: #{rnn_forward.6} parent=0 // pred_check_branch
    %1369 = sbr.rel (0) target = $region29
  $region28: #{rnn_forward.6} parent=0 // pred_region
    _
  $region29: #{rnn_forward.6} parent=0 // pred_fallthru
    _

// kernel: rnn_forward.5
$region0: #{rnn_forward.5}
  #allocation0 [shape = 'u32[]', space=smem, size = 0x4, offset = 0x4, fixed_abs, tag = 'smem constant byte address 0x4 - core index']
  #allocation1 [shape = 'u32[144,128]{1,0:T(1,128)}', space=vmem, size = 0x12000, scoped, tag = 'internal scratch']
  #allocation2 [shape = 'f32[8,128]{1,0:T(8,128)}', space=vmem, size = 0x1000, scoped, tag = 'scratch operand']
  #allocation3 [shape = 'f32[8,128]{1,0:T(8,128)}', space=vmem, size = 0x1000, scoped, tag = 'scratch operand']
  #allocation4 [shape = 'f32[8,128]{1,0:T(8,128)}', space=vmem, size = 0x1000, scoped, tag = 'scratch operand']
  #allocation5 [shape = 'f32[8,128]{1,0:T(8,128)}', space=vmem, size = 0x1000, scoped, tag = 'scratch operand']
  %s0 = inlined_call_operand.vmem [shape: f32[8,8,1024], index: 0, kind: input, shape index: {}, may-alias: {0,1}]
  %s1 = inlined_call_operand.vmem [shape: f32[8,8,1024], index: 1, kind: input, shape index: {}, may-alias: {0,1}]
  %s2 = inlined_call_operand.vmem [shape: f32[128,512], index: 2, kind: input, shape index: {}]
  %s3 = inlined_call_operand.vmem [shape: f32[128,512], index: 3, kind: input, shape index: {}]
  %s4 = inlined_call_operand.vmem [shape: f32[8,8,128], index: 4, kind: output, shape index: {0}]
  %s5 = inlined_call_operand.vmem [shape: f32[8,8,128], index: 5, kind: output, shape index: {1}]
  %6 = xla_tuple %s4, %s5
  %s7 = sld [smem:[#allocation0]]
  $region84: #{rnn_forward.5} parent=0
    _
  %s9 = ssub.s32 1, %s7
  %s10 = scalar_select 0, %s9, %s7
  $region1: #{rnn_forward.5} parent=0
    #allocation6 [shape = 'u8[131072]{0}', space=vmem, size = 0x20000, scoped, tag = 'input window, operand 0, single buffered']
    #allocation7 [shape = 'u8[131072]{0}', space=vmem, size = 0x20000, scoped, tag = 'input window, operand 1, single buffered']
    // Predicated region
    $region2: #{rnn_forward.5} parent=1 // pred_check
      _
    $region3: #{rnn_forward.5} parent=1 // pred_check_branch
      %12 = sbr.rel (0) target = $region5
    $region4: #{rnn_forward.5} parent=1 // pred_region
      // Predicated region
      $region6: #{rnn_forward.5} parent=4 // pred_check
        _
      $region7: #{rnn_forward.5} parent=4 // pred_check_branch
        %14 = sbr.rel (0) target = $region9
      $region8: #{rnn_forward.5} parent=4 // pred_region
        // Predicated region
        $region10: #{rnn_forward.5} parent=8 // pred_check
          _
        $region11: #{rnn_forward.5} parent=8 // pred_check_branch
          %16 = sbr.rel (0) target = $region13
        $region12: #{rnn_forward.5} parent=8 // pred_region
          loop: start=0, step=1, limit=1
          $region14: #{rnn_forward.5} parent=12 // loop_pre_header
            _
          $region15: #{rnn_forward.5} parent=12 // loop_header
            %s18 = sphi 0, %s22
            %p19 = scmp.ge.s32.totalorder %s18, 1
            %s23 = sphi %s0, %s0
            %s24 = sphi [#allocation6], [#allocation6]
          $region16: #{rnn_forward.5} parent=12 // loop_header_branch
            %21 = sbr.rel (%p19) target = $region20
          $region17: #{rnn_forward.5} parent=12 // loop_body
            %v25 = vld [vmem:[%s23] sm:$0xff]
            %26 = vst [vmem:[%s24] sm:$0xff] %v25
            %v27 = vld [vmem:[%s23 + $0x8] sm:$0xff]
            %28 = vst [vmem:[%s24 + $0x8] sm:$0xff] %v27
            %v29 = vld [vmem:[%s23 + $0x10] sm:$0xff]
            %30 = vst [vmem:[%s24 + $0x10] sm:$0xff] %v29
            %v31 = vld [vmem:[%s23 + $0x18] sm:$0xff]
            %32 = vst [vmem:[%s24 + $0x18] sm:$0xff] %v31
            %v33 = vld [vmem:[%s23 + $0x40] sm:$0xff]
            %34 = vst [vmem:[%s24 + $0x20] sm:$0xff] %v33
            %v35 = vld [vmem:[%s23 + $0x48] sm:$0xff]
            %36 = vst [vmem:[%s24 + $0x28] sm:$0xff] %v35
            %v37 = vld [vmem:[%s23 + $0x50] sm:$0xff]
            %38 = vst [vmem:[%s24 + $0x30] sm:$0xff] %v37
            %v39 = vld [vmem:[%s23 + $0x58] sm:$0xff]
            %40 = vst [vmem:[%s24 + $0x38] sm:$0xff] %v39
            %v41 = vld [vmem:[%s23 + $0x80] sm:$0xff]
            %42 = vst [vmem:[%s24 + $0x40] sm:$0xff] %v41
            %v43 = vld [vmem:[%s23 + $0x88] sm:$0xff]
            %44 = vst [vmem:[%s24 + $0x48] sm:$0xff] %v43
            %v45 = vld [vmem:[%s23 + $0x90] sm:$0xff]
            %46 = vst [vmem:[%s24 + $0x50] sm:$0xff] %v45
            %v47 = vld [vmem:[%s23 + $0x98] sm:$0xff]
            %48 = vst [vmem:[%s24 + $0x58] sm:$0xff] %v47
            %v49 = vld [vmem:[%s23 + $0xc0] sm:$0xff]
            %50 = vst [vmem:[%s24 + $0x60] sm:$0xff] %v49
            %v51 = vld [vmem:[%s23 + $0xc8] sm:$0xff]
            %52 = vst [vmem:[%s24 + $0x68] sm:$0xff] %v51
            %v53 = vld [vmem:[%s23 + $0xd0] sm:$0xff]
            %54 = vst [vmem:[%s24 + $0x70] sm:$0xff] %v53
            %v55 = vld [vmem:[%s23 + $0xd8] sm:$0xff]
            %56 = vst [vmem:[%s24 + $0x78] sm:$0xff] %v55
            %v57 = vld [vmem:[%s23 + $0x100] sm:$0xff]
            %58 = vst [vmem:[%s24 + $0x80] sm:$0xff] %v57
            %v59 = vld [vmem:[%s23 + $0x108] sm:$0xff]
            %60 = vst [vmem:[%s24 + $0x88] sm:$0xff] %v59
            %v61 = vld [vmem:[%s23 + $0x110] sm:$0xff]
            %62 = vst [vmem:[%s24 + $0x90] sm:$0xff] %v61
            %v63 = vld [vmem:[%s23 + $0x118] sm:$0xff]
            %64 = vst [vmem:[%s24 + $0x98] sm:$0xff] %v63
            %v65 = vld [vmem:[%s23 + $0x140] sm:$0xff]
            %66 = vst [vmem:[%s24 + $0xa0] sm:$0xff] %v65
            %v67 = vld [vmem:[%s23 + $0x148] sm:$0xff]
            %68 = vst [vmem:[%s24 + $0xa8] sm:$0xff] %v67
            %v69 = vld [vmem:[%s23 + $0x150] sm:$0xff]
            %70 = vst [vmem:[%s24 + $0xb0] sm:$0xff] %v69
            %v71 = vld [vmem:[%s23 + $0x158] sm:$0xff]
            %72 = vst [vmem:[%s24 + $0xb8] sm:$0xff] %v71
            %v73 = vld [vmem:[%s23 + $0x180] sm:$0xff]
            %74 = vst [vmem:[%s24 + $0xc0] sm:$0xff] %v73
            %v75 = vld [vmem:[%s23 + $0x188] sm:$0xff]
            %76 = vst [vmem:[%s24 + $0xc8] sm:$0xff] %v75
            %v77 = vld [vmem:[%s23 + $0x190] sm:$0xff]
            %78 = vst [vmem:[%s24 + $0xd0] sm:$0xff] %v77
            %v79 = vld [vmem:[%s23 + $0x198] sm:$0xff]
            %80 = vst [vmem:[%s24 + $0xd8] sm:$0xff] %v79
            %v81 = vld [vmem:[%s23 + $0x1c0] sm:$0xff]
            %82 = vst [vmem:[%s24 + $0xe0] sm:$0xff] %v81
            %v83 = vld [vmem:[%s23 + $0x1c8] sm:$0xff]
            %84 = vst [vmem:[%s24 + $0xe8] sm:$0xff] %v83
            %v85 = vld [vmem:[%s23 + $0x1d0] sm:$0xff]
            %86 = vst [vmem:[%s24 + $0xf0] sm:$0xff] %v85
            %v87 = vld [vmem:[%s23 + $0x1d8] sm:$0xff]
            %88 = vst [vmem:[%s24 + $0xf8] sm:$0xff] %v87
          $region18: #{rnn_forward.5} parent=12 // loop_footer
            %s22 = sadd.s32 1, %s18
          $region19: #{rnn_forward.5} parent=12 // loop_footer_branch
            %17 = sbr.rel target = $region15
          $region20: #{rnn_forward.5} parent=12 // loop_exit
            _
        $region13: #{rnn_forward.5} parent=8 // pred_fallthru
          _
        // Predicated region
        $region21: #{rnn_forward.5} parent=8 // pred_check
          _
        $region22: #{rnn_forward.5} parent=8 // pred_check_branch
          %90 = sbr.rel target = $region24
        $region23: #{rnn_forward.5} parent=8 // pred_region
          _
        $region24: #{rnn_forward.5} parent=8 // pred_fallthru
          _
      $region9: #{rnn_forward.5} parent=4 // pred_fallthru
        _
      %91 = vnop
    $region5: #{rnn_forward.5} parent=1 // pred_fallthru
      _
    // Predicated region
    $region25: #{rnn_forward.5} parent=1 // pred_check
      _
    $region26: #{rnn_forward.5} parent=1 // pred_check_branch
      %93 = sbr.rel (0) target = $region28
    $region27: #{rnn_forward.5} parent=1 // pred_region
      %s94 = ssub.s32 0, 0
      %s95 = smul.u32 8, %s94
      %s96 = smul.addr %s95, 8
      %s97 = sadd.s32 4, %s96
      %s98 = smul.addr %s97, 8
      %s99 = scalar_lea.vmem %s1, %s98
      // Predicated region
      $region29: #{rnn_forward.5} parent=27 // pred_check
        _
      $region30: #{rnn_forward.5} parent=27 // pred_check_branch
        %101 = sbr.rel (0) target = $region32
      $region31: #{rnn_forward.5} parent=27 // pred_region
        // Predicated region
        $region33: #{rnn_forward.5} parent=31 // pred_check
          _
        $region34: #{rnn_forward.5} parent=31 // pred_check_branch
          %103 = sbr.rel (0) target = $region36
        $region35: #{rnn_forward.5} parent=31 // pred_region
          loop: start=0, step=1, limit=1
          $region37: #{rnn_forward.5} parent=35 // loop_pre_header
            _
          $region38: #{rnn_forward.5} parent=35 // loop_header
            %s105 = sphi 0, %s109
            %p106 = scmp.ge.s32.totalorder %s105, 1
            %s110 = sphi %s99, %s99
            %s111 = sphi [#allocation7], [#allocation7]
          $region39: #{rnn_forward.5} parent=35 // loop_header_branch
            %108 = sbr.rel (%p106) target = $region43
          $region40: #{rnn_forward.5} parent=35 // loop_body
            %v112 = vld [vmem:[%s110] sm:$0xff]
            %113 = vst [vmem:[%s111] sm:$0xff] %v112
            %v114 = vld [vmem:[%s110 + $0x8] sm:$0xff]
            %115 = vst [vmem:[%s111 + $0x8] sm:$0xff] %v114
            %v116 = vld [vmem:[%s110 + $0x10] sm:$0xff]
            %117 = vst [vmem:[%s111 + $0x10] sm:$0xff] %v116
            %v118 = vld [vmem:[%s110 + $0x18] sm:$0xff]
            %119 = vst [vmem:[%s111 + $0x18] sm:$0xff] %v118
            %v120 = vld [vmem:[%s110 + $0x40] sm:$0xff]
            %121 = vst [vmem:[%s111 + $0x20] sm:$0xff] %v120
            %v122 = vld [vmem:[%s110 + $0x48] sm:$0xff]
            %123 = vst [vmem:[%s111 + $0x28] sm:$0xff] %v122
            %v124 = vld [vmem:[%s110 + $0x50] sm:$0xff]
            %125 = vst [vmem:[%s111 + $0x30] sm:$0xff] %v124
            %v126 = vld [vmem:[%s110 + $0x58] sm:$0xff]
            %127 = vst [vmem:[%s111 + $0x38] sm:$0xff] %v126
            %v128 = vld [vmem:[%s110 + $0x80] sm:$0xff]
            %129 = vst [vmem:[%s111 + $0x40] sm:$0xff] %v128
            %v130 = vld [vmem:[%s110 + $0x88] sm:$0xff]
            %131 = vst [vmem:[%s111 + $0x48] sm:$0xff] %v130
            %v132 = vld [vmem:[%s110 + $0x90] sm:$0xff]
            %133 = vst [vmem:[%s111 + $0x50] sm:$0xff] %v132
            %v134 = vld [vmem:[%s110 + $0x98] sm:$0xff]
            %135 = vst [vmem:[%s111 + $0x58] sm:$0xff] %v134
            %v136 = vld [vmem:[%s110 + $0xc0] sm:$0xff]
            %137 = vst [vmem:[%s111 + $0x60] sm:$0xff] %v136
            %v138 = vld [vmem:[%s110 + $0xc8] sm:$0xff]
            %139 = vst [vmem:[%s111 + $0x68] sm:$0xff] %v138
            %v140 = vld [vmem:[%s110 + $0xd0] sm:$0xff]
            %141 = vst [vmem:[%s111 + $0x70] sm:$0xff] %v140
            %v142 = vld [vmem:[%s110 + $0xd8] sm:$0xff]
            %143 = vst [vmem:[%s111 + $0x78] sm:$0xff] %v142
            %v144 = vld [vmem:[%s110 + $0x100] sm:$0xff]
            %145 = vst [vmem:[%s111 + $0x80] sm:$0xff] %v144
            %v146 = vld [vmem:[%s110 + $0x108] sm:$0xff]
            %147 = vst [vmem:[%s111 + $0x88] sm:$0xff] %v146
            %v148 = vld [vmem:[%s110 + $0x110] sm:$0xff]
            %149 = vst [vmem:[%s111 + $0x90] sm:$0xff] %v148
            %v150 = vld [vmem:[%s110 + $0x118] sm:$0xff]
            %151 = vst [vmem:[%s111 + $0x98] sm:$0xff] %v150
            %v152 = vld [vmem:[%s110 + $0x140] sm:$0xff]
            %153 = vst [vmem:[%s111 + $0xa0] sm:$0xff] %v152
            %v154 = vld [vmem:[%s110 + $0x148] sm:$0xff]
            %155 = vst [vmem:[%s111 + $0xa8] sm:$0xff] %v154
            %v156 = vld [vmem:[%s110 + $0x150] sm:$0xff]
            %157 = vst [vmem:[%s111 + $0xb0] sm:$0xff] %v156
            %v158 = vld [vmem:[%s110 + $0x158] sm:$0xff]
            %159 = vst [vmem:[%s111 + $0xb8] sm:$0xff] %v158
            %v160 = vld [vmem:[%s110 + $0x180] sm:$0xff]
            %161 = vst [vmem:[%s111 + $0xc0] sm:$0xff] %v160
            %v162 = vld [vmem:[%s110 + $0x188] sm:$0xff]
            %163 = vst [vmem:[%s111 + $0xc8] sm:$0xff] %v162
            %v164 = vld [vmem:[%s110 + $0x190] sm:$0xff]
            %165 = vst [vmem:[%s111 + $0xd0] sm:$0xff] %v164
            %v166 = vld [vmem:[%s110 + $0x198] sm:$0xff]
            %167 = vst [vmem:[%s111 + $0xd8] sm:$0xff] %v166
            %v168 = vld [vmem:[%s110 + $0x1c0] sm:$0xff]
            %169 = vst [vmem:[%s111 + $0xe0] sm:$0xff] %v168
            %v170 = vld [vmem:[%s110 + $0x1c8] sm:$0xff]
            %171 = vst [vmem:[%s111 + $0xe8] sm:$0xff] %v170
            %v172 = vld [vmem:[%s110 + $0x1d0] sm:$0xff]
            %173 = vst [vmem:[%s111 + $0xf0] sm:$0xff] %v172
            %v174 = vld [vmem:[%s110 + $0x1d8] sm:$0xff]
            %175 = vst [vmem:[%s111 + $0xf8] sm:$0xff] %v174
          $region41: #{rnn_forward.5} parent=35 // loop_footer
            %s109 = sadd.s32 1, %s105
          $region42: #{rnn_forward.5} parent=35 // loop_footer_branch
            %104 = sbr.rel target = $region38
          $region43: #{rnn_forward.5} parent=35 // loop_exit
            _
        $region36: #{rnn_forward.5} parent=31 // pred_fallthru
          _
        // Predicated region
        $region44: #{rnn_forward.5} parent=31 // pred_check
          _
        $region45: #{rnn_forward.5} parent=31 // pred_check_branch
          %177 = sbr.rel target = $region47
        $region46: #{rnn_forward.5} parent=31 // pred_region
          _
        $region47: #{rnn_forward.5} parent=31 // pred_fallthru
          _
      $region32: #{rnn_forward.5} parent=27 // pred_fallthru
        _
      %178 = vnop
    $region28: #{rnn_forward.5} parent=1 // pred_fallthru
      _
    // Predicated region
    $region48: #{rnn_forward.5} parent=1 // pred_check
      _
    $region49: #{rnn_forward.5} parent=1 // pred_check_branch
      %180 = sbr.rel (0) target = $region51
    $region50: #{rnn_forward.5} parent=1 // pred_region
      _
    $region51: #{rnn_forward.5} parent=1 // pred_fallthru
      _
    // Predicated region
    $region52: #{rnn_forward.5} parent=1 // pred_check
      _
    $region53: #{rnn_forward.5} parent=1 // pred_check_branch
      %182 = sbr.rel (0) target = $region55
    $region54: #{rnn_forward.5} parent=1 // pred_region
      _
    $region55: #{rnn_forward.5} parent=1 // pred_fallthru
      _
    // Predicated region
    $region56: #{rnn_forward.5} parent=1 // pred_check
      _
    $region57: #{rnn_forward.5} parent=1 // pred_check_branch
      %184 = sbr.rel (0) target = $region59
    $region58: #{rnn_forward.5} parent=1 // pred_region
      _
    $region59: #{rnn_forward.5} parent=1 // pred_fallthru
      _
    // Predicated region
    $region60: #{rnn_forward.5} parent=1 // pred_check
      _
    $region61: #{rnn_forward.5} parent=1 // pred_check_branch
      %186 = sbr.rel (0) target = $region63
    $region62: #{rnn_forward.5} parent=1 // pred_region
      _
    $region63: #{rnn_forward.5} parent=1 // pred_fallthru
      _
    %s187 = ssub.s32 0, 0
    %s188 = smul.u32 8, %s187
    %p189 = scmp.lt.s32.totalorder %s188, 7
    %s190 = scalar_select %p189, %s188, 7
    %s191 = smul.addr %s190, 8
    %s192 = scalar_lea.vmem %s5, %s191
    %s193 = ssub.s32 0, 0
    %s194 = smul.u32 8, %s193
    %s195 = ssub.s32 0, 0
    %s196 = smul.u32 8, %s195
    %p197 = scmp.lt.s32.totalorder %s196, 7
    %s198 = scalar_select %p197, %s196, 7
    %s199 = smul.addr %s198, 8
    %s200 = scalar_lea.vmem %s5, %s199
    %s201 = ssub.s32 0, 0
    %s202 = smul.u32 8, %s201
    %p203 = scmp.eq.s32.totalorder 0, 0
    // Predicated region
    $region64: #{rnn_forward.5} parent=1 // pred_check
      %p204 = pneg %p203
    $region65: #{rnn_forward.5} parent=1 // pred_check_branch
      %206 = sbr.rel (%p204) target = $region67
    $region66: #{rnn_forward.5} parent=1 // pred_region
      %207 = vst [vmem:[#allocation2] sm:$0xff] 0.0
      %208 = vst [vmem:[#allocation3] sm:$0xff] 0.0
      %209 = vst [vmem:[#allocation4] sm:$0xff] 0.0
      %210 = vst [vmem:[#allocation5] sm:$0xff] 0.0
    $region67: #{rnn_forward.5} parent=1 // pred_fallthru
      _
    %v211 = vld [vmem:[%s2] sm:$0xff]
    %v212 = vld [vmem:[%s2 + $0x8] sm:$0xff]
    %v213 = vld [vmem:[%s2 + $0x10] sm:$0xff]
    %v214 = vld [vmem:[%s2 + $0x18] sm:$0xff]
    %v215 = vld [vmem:[%s2 + $0x20] sm:$0xff]
    %v216 = vld [vmem:[%s2 + $0x28] sm:$0xff]
    %v217 = vld [vmem:[%s2 + $0x30] sm:$0xff]
    %v218 = vld [vmem:[%s2 + $0x38] sm:$0xff]
    %v219 = vld [vmem:[%s2 + $0x40] sm:$0xff]
    %v220 = vld [vmem:[%s2 + $0x48] sm:$0xff]
    %v221 = vld [vmem:[%s2 + $0x50] sm:$0xff]
    %v222 = vld [vmem:[%s2 + $0x58] sm:$0xff]
    %v223 = vld [vmem:[%s2 + $0x60] sm:$0xff]
    %v224 = vld [vmem:[%s2 + $0x68] sm:$0xff]
    %v225 = vld [vmem:[%s2 + $0x70] sm:$0xff]
    %v226 = vld [vmem:[%s2 + $0x78] sm:$0xff]
    %v227 = vld [vmem:[%s2 + $0x80] sm:$0xff]
    %v228 = vld [vmem:[%s2 + $0x88] sm:$0xff]
    %v229 = vld [vmem:[%s2 + $0x90] sm:$0xff]
    %v230 = vld [vmem:[%s2 + $0x98] sm:$0xff]
    %v231 = vld [vmem:[%s2 + $0xa0] sm:$0xff]
    %v232 = vld [vmem:[%s2 + $0xa8] sm:$0xff]
    %v233 = vld [vmem:[%s2 + $0xb0] sm:$0xff]
    %v234 = vld [vmem:[%s2 + $0xb8] sm:$0xff]
    %v235 = vld [vmem:[%s2 + $0xc0] sm:$0xff]
    %v236 = vld [vmem:[%s2 + $0xc8] sm:$0xff]
    %v237 = vld [vmem:[%s2 + $0xd0] sm:$0xff]
    %v238 = vld [vmem:[%s2 + $0xd8] sm:$0xff]
    %v239 = vld [vmem:[%s2 + $0xe0] sm:$0xff]
    %v240 = vld [vmem:[%s2 + $0xe8] sm:$0xff]
    %v241 = vld [vmem:[%s2 + $0xf0] sm:$0xff]
    %v242 = vld [vmem:[%s2 + $0xf8] sm:$0xff]
    %v243 = vld [vmem:[%s2 + $0x100] sm:$0xff]
    %v244 = vld [vmem:[%s2 + $0x108] sm:$0xff]
    %v245 = vld [vmem:[%s2 + $0x110] sm:$0xff]
    %v246 = vld [vmem:[%s2 + $0x118] sm:$0xff]
    %v247 = vld [vmem:[%s2 + $0x120] sm:$0xff]
    %v248 = vld [vmem:[%s2 + $0x128] sm:$0xff]
    %v249 = vld [vmem:[%s2 + $0x130] sm:$0xff]
    %v250 = vld [vmem:[%s2 + $0x138] sm:$0xff]
    %v251 = vld [vmem:[%s2 + $0x140] sm:$0xff]
    %v252 = vld [vmem:[%s2 + $0x148] sm:$0xff]
    %v253 = vld [vmem:[%s2 + $0x150] sm:$0xff]
    %v254 = vld [vmem:[%s2 + $0x158] sm:$0xff]
    %v255 = vld [vmem:[%s2 + $0x160] sm:$0xff]
    %v256 = vld [vmem:[%s2 + $0x168] sm:$0xff]
    %v257 = vld [vmem:[%s2 + $0x170] sm:$0xff]
    %v258 = vld [vmem:[%s2 + $0x178] sm:$0xff]
    %v259 = vld [vmem:[%s2 + $0x180] sm:$0xff]
    %v260 = vld [vmem:[%s2 + $0x188] sm:$0xff]
    %v261 = vld [vmem:[%s2 + $0x190] sm:$0xff]
    %v262 = vld [vmem:[%s2 + $0x198] sm:$0xff]
    %v263 = vld [vmem:[%s2 + $0x1a0] sm:$0xff]
    %v264 = vld [vmem:[%s2 + $0x1a8] sm:$0xff]
    %v265 = vld [vmem:[%s2 + $0x1b0] sm:$0xff]
    %v266 = vld [vmem:[%s2 + $0x1b8] sm:$0xff]
    %v267 = vld [vmem:[%s2 + $0x1c0] sm:$0xff]
    %v268 = vld [vmem:[%s2 + $0x1c8] sm:$0xff]
    %v269 = vld [vmem:[%s2 + $0x1d0] sm:$0xff]
    %v270 = vld [vmem:[%s2 + $0x1d8] sm:$0xff]
    %v271 = vld [vmem:[%s2 + $0x1e0] sm:$0xff]
    %v272 = vld [vmem:[%s2 + $0x1e8] sm:$0xff]
    %v273 = vld [vmem:[%s2 + $0x1f0] sm:$0xff]
    %v274 = vld [vmem:[%s2 + $0x1f8] sm:$0xff]
    %v275 = vld [vmem:[%s3] sm:$0xff]
    %v276 = vld [vmem:[%s3 + $0x8] sm:$0xff]
    %v277 = vld [vmem:[%s3 + $0x10] sm:$0xff]
    %v278 = vld [vmem:[%s3 + $0x18] sm:$0xff]
    %v279 = vld [vmem:[%s3 + $0x20] sm:$0xff]
    %v280 = vld [vmem:[%s3 + $0x28] sm:$0xff]
    %v281 = vld [vmem:[%s3 + $0x30] sm:$0xff]
    %v282 = vld [vmem:[%s3 + $0x38] sm:$0xff]
    %v283 = vld [vmem:[%s3 + $0x40] sm:$0xff]
    %v284 = vld [vmem:[%s3 + $0x48] sm:$0xff]
    %v285 = vld [vmem:[%s3 + $0x50] sm:$0xff]
    %v286 = vld [vmem:[%s3 + $0x58] sm:$0xff]
    %v287 = vld [vmem:[%s3 + $0x60] sm:$0xff]
    %v288 = vld [vmem:[%s3 + $0x68] sm:$0xff]
    %v289 = vld [vmem:[%s3 + $0x70] sm:$0xff]
    %v290 = vld [vmem:[%s3 + $0x78] sm:$0xff]
    %v291 = vld [vmem:[%s3 + $0x80] sm:$0xff]
    %v292 = vld [vmem:[%s3 + $0x88] sm:$0xff]
    %v293 = vld [vmem:[%s3 + $0x90] sm:$0xff]
    %v294 = vld [vmem:[%s3 + $0x98] sm:$0xff]
    %v295 = vld [vmem:[%s3 + $0xa0] sm:$0xff]
    %v296 = vld [vmem:[%s3 + $0xa8] sm:$0xff]
    %v297 = vld [vmem:[%s3 + $0xb0] sm:$0xff]
    %v298 = vld [vmem:[%s3 + $0xb8] sm:$0xff]
    %v299 = vld [vmem:[%s3 + $0xc0] sm:$0xff]
    %v300 = vld [vmem:[%s3 + $0xc8] sm:$0xff]
    %v301 = vld [vmem:[%s3 + $0xd0] sm:$0xff]
    %v302 = vld [vmem:[%s3 + $0xd8] sm:$0xff]
    %v303 = vld [vmem:[%s3 + $0xe0] sm:$0xff]
    %v304 = vld [vmem:[%s3 + $0xe8] sm:$0xff]
    %v305 = vld [vmem:[%s3 + $0xf0] sm:$0xff]
    %v306 = vld [vmem:[%s3 + $0xf8] sm:$0xff]
    %v307 = vld [vmem:[%s3 + $0x100] sm:$0xff]
    %v308 = vld [vmem:[%s3 + $0x108] sm:$0xff]
    %v309 = vld [vmem:[%s3 + $0x110] sm:$0xff]
    %v310 = vld [vmem:[%s3 + $0x118] sm:$0xff]
    %v311 = vld [vmem:[%s3 + $0x120] sm:$0xff]
    %v312 = vld [vmem:[%s3 + $0x128] sm:$0xff]
    %v313 = vld [vmem:[%s3 + $0x130] sm:$0xff]
    %v314 = vld [vmem:[%s3 + $0x138] sm:$0xff]
    %v315 = vld [vmem:[%s3 + $0x140] sm:$0xff]
    %v316 = vld [vmem:[%s3 + $0x148] sm:$0xff]
    %v317 = vld [vmem:[%s3 + $0x150] sm:$0xff]
    %v318 = vld [vmem:[%s3 + $0x158] sm:$0xff]
    %v319 = vld [vmem:[%s3 + $0x160] sm:$0xff]
    %v320 = vld [vmem:[%s3 + $0x168] sm:$0xff]
    %v321 = vld [vmem:[%s3 + $0x170] sm:$0xff]
    %v322 = vld [vmem:[%s3 + $0x178] sm:$0xff]
    %v323 = vld [vmem:[%s3 + $0x180] sm:$0xff]
    %v324 = vld [vmem:[%s3 + $0x188] sm:$0xff]
    %v325 = vld [vmem:[%s3 + $0x190] sm:$0xff]
    %v326 = vld [vmem:[%s3 + $0x198] sm:$0xff]
    %v327 = vld [vmem:[%s3 + $0x1a0] sm:$0xff]
    %v328 = vld [vmem:[%s3 + $0x1a8] sm:$0xff]
    %v329 = vld [vmem:[%s3 + $0x1b0] sm:$0xff]
    %v330 = vld [vmem:[%s3 + $0x1b8] sm:$0xff]
    %v331 = vld [vmem:[%s3 + $0x1c0] sm:$0xff]
    %v332 = vld [vmem:[%s3 + $0x1c8] sm:$0xff]
    %v333 = vld [vmem:[%s3 + $0x1d0] sm:$0xff]
    %v334 = vld [vmem:[%s3 + $0x1d8] sm:$0xff]
    %v335 = vld [vmem:[%s3 + $0x1e0] sm:$0xff]
    %v336 = vld [vmem:[%s3 + $0x1e8] sm:$0xff]
    %v337 = vld [vmem:[%s3 + $0x1f0] sm:$0xff]
    %v338 = vld [vmem:[%s3 + $0x1f8] sm:$0xff]
    %v339 = vld [vmem:[#allocation6] sm:$0xff]
    %v340 = vld [vmem:[#allocation6 + $0x8] sm:$0xff]
    %v341 = vld [vmem:[#allocation6 + $0x10] sm:$0xff]
    %v342 = vld [vmem:[#allocation6 + $0x18] sm:$0xff]
    %v343 = vld [vmem:[#allocation2] sm:$0xff]
    %v344 = vld [vmem:[#allocation3] sm:$0xff]
    %345 = vmatprep.subr.mxu0 %v212
    %346 = vmatpush1.msra.mxu0 %v211
    %347 = vmatprep.subr.mxu0 %v216
    %348 = vmatpush1.msra.mxu0 %v215
    %349 = vmatprep.subr.mxu0 %v220
    %350 = vmatpush1.msra.mxu0 %v219
    %351 = vmatprep.subr.mxu0 %v224
    %352 = vmatpush1.msra.mxu0 %v223
    %353 = vmatprep.subr.mxu0 %v228
    %354 = vmatpush1.msra.mxu0 %v227
    %355 = vmatprep.subr.mxu0 %v232
    %356 = vmatpush1.msra.mxu0 %v231
    %357 = vmatprep.subr.mxu0 %v236
    %358 = vmatpush1.msra.mxu0 %v235
    %359 = vmatprep.subr.mxu0 %v240
    %360 = vmatpush1.msra.mxu0 %v239
    %361 = vmatprep.subr.mxu0 %v244
    %362 = vmatpush1.msra.mxu0 %v243
    %363 = vmatprep.subr.mxu0 %v248
    %364 = vmatpush1.msra.mxu0 %v247
    %365 = vmatprep.subr.mxu0 %v252
    %366 = vmatpush1.msra.mxu0 %v251
    %367 = vmatprep.subr.mxu0 %v256
    %368 = vmatpush1.msra.mxu0 %v255
    %369 = vmatprep.subr.mxu0 %v260
    %370 = vmatpush1.msra.mxu0 %v259
    %371 = vmatprep.subr.mxu0 %v264
    %372 = vmatpush1.msra.mxu0 %v263
    %373 = vmatprep.subr.mxu0 %v268
    %374 = vmatpush1.msra.mxu0 %v267
    %375 = vmatprep.subr.mxu0 %v272
    %376 = vmatpush1.msra.mxu0 %v271
    %377 = vmatprep.subr.mxu0 0.0
    %378 = vmatpush1.msra.mxu0 0.0
    %379 = vmatprep.subr.mxu0 0.0
    %380 = vmatpush1.msra.mxu0 0.0
    %381 = vmatprep.subr.mxu0 0.0
    %382 = vmatpush1.msra.mxu0 0.0
    %383 = vmatprep.subr.mxu0 0.0
    %384 = vmatpush1.msra.mxu0 0.0
    %385 = vmatprep.subr.mxu0 0.0
    %386 = vmatpush1.msra.mxu0 0.0
    %387 = vmatprep.subr.mxu0 0.0
    %388 = vmatpush1.msra.mxu0 0.0
    %389 = vmatprep.subr.mxu0 0.0
    %390 = vmatpush1.msra.mxu0 0.0
    %391 = vmatprep.subr.mxu0 0.0
    %392 = vmatpush1.msra.mxu0 0.0
    %393 = vmatprep.subr.mxu0 0.0
    %394 = vmatpush1.msra.mxu0 0.0
    %395 = vmatprep.subr.mxu0 0.0
    %396 = vmatpush1.msra.mxu0 0.0
    %397 = vmatprep.subr.mxu0 0.0
    %398 = vmatpush1.msra.mxu0 0.0
    %399 = vmatprep.subr.mxu0 0.0
    %400 = vmatpush1.msra.mxu0 0.0
    %401 = vmatprep.subr.mxu0 0.0
    %402 = vmatpush1.msra.mxu0 0.0
    %403 = vmatprep.subr.mxu0 0.0
    %404 = vmatpush1.msra.mxu0 0.0
    %405 = vmatprep.subr.mxu0 0.0
    %406 = vmatpush1.msra.mxu0 0.0
    %407 = vmatprep.subr.mxu0 0.0
    %408 = vmatpush1.msra.mxu0 0.0
    %409 = vmatprep.mubr.f32.mxu0 0.0
    %410 = vmatmul.mubr.f32.gmra.mrb[0].mxu0 %v343
    %v411 = vpop.f32.mrb[0].mxu0
    %v412 = vadd.f32 0.0, %v411
    %v413 = vpop.f32.mrb[0].mxu0
    %v414 = vadd.f32 0.0, %v413
    %415 = vdwg.mxu0
    %416 = vmatprep.subr.mxu0 %v214
    %417 = vmatpush1.msra.mxu0 %v213
    %418 = vmatprep.subr.mxu0 %v218
    %419 = vmatpush1.msra.mxu0 %v217
    %420 = vmatprep.subr.mxu0 %v222
    %421 = vmatpush1.msra.mxu0 %v221
    %422 = vmatprep.subr.mxu0 %v226
    %423 = vmatpush1.msra.mxu0 %v225
    %424 = vmatprep.subr.mxu0 %v230
    %425 = vmatpush1.msra.mxu0 %v229
    %426 = vmatprep.subr.mxu0 %v234
    %427 = vmatpush1.msra.mxu0 %v233
    %428 = vmatprep.subr.mxu0 %v238
    %429 = vmatpush1.msra.mxu0 %v237
    %430 = vmatprep.subr.mxu0 %v242
    %431 = vmatpush1.msra.mxu0 %v241
    %432 = vmatprep.subr.mxu0 %v246
    %433 = vmatpush1.msra.mxu0 %v245
    %434 = vmatprep.subr.mxu0 %v250
    %435 = vmatpush1.msra.mxu0 %v249
    %436 = vmatprep.subr.mxu0 %v254
    %437 = vmatpush1.msra.mxu0 %v253
    %438 = vmatprep.subr.mxu0 %v258
    %439 = vmatpush1.msra.mxu0 %v257
    %440 = vmatprep.subr.mxu0 %v262
    %441 = vmatpush1.msra.mxu0 %v261
    %442 = vmatprep.subr.mxu0 %v266
    %443 = vmatpush1.msra.mxu0 %v265
    %444 = vmatprep.subr.mxu0 %v270
    %445 = vmatpush1.msra.mxu0 %v269
    %446 = vmatprep.subr.mxu0 %v274
    %447 = vmatpush1.msra.mxu0 %v273
    %448 = vmatprep.subr.mxu0 0.0
    %449 = vmatpush1.msra.mxu0 0.0
    %450 = vmatprep.subr.mxu0 0.0
    %451 = vmatpush1.msra.mxu0 0.0
    %452 = vmatprep.subr.mxu0 0.0
    %453 = vmatpush1.msra.mxu0 0.0
    %454 = vmatprep.subr.mxu0 0.0
    %455 = vmatpush1.msra.mxu0 0.0
    %456 = vmatprep.subr.mxu0 0.0
    %457 = vmatpush1.msra.mxu0 0.0
    %458 = vmatprep.subr.mxu0 0.0
    %459 = vmatpush1.msra.mxu0 0.0
    %460 = vmatprep.subr.mxu0 0.0
    %461 = vmatpush1.msra.mxu0 0.0
    %462 = vmatprep.subr.mxu0 0.0
    %463 = vmatpush1.msra.mxu0 0.0
    %464 = vmatprep.subr.mxu0 0.0
    %465 = vmatpush1.msra.mxu0 0.0
    %466 = vmatprep.subr.mxu0 0.0
    %467 = vmatpush1.msra.mxu0 0.0
    %468 = vmatprep.subr.mxu0 0.0
    %469 = vmatpush1.msra.mxu0 0.0
    %470 = vmatprep.subr.mxu0 0.0
    %471 = vmatpush1.msra.mxu0 0.0
    %472 = vmatprep.subr.mxu0 0.0
    %473 = vmatpush1.msra.mxu0 0.0
    %474 = vmatprep.subr.mxu0 0.0
    %475 = vmatpush1.msra.mxu0 0.0
    %476 = vmatprep.subr.mxu0 0.0
    %477 = vmatpush1.msra.mxu0 0.0
    %478 = vmatprep.subr.mxu0 0.0
    %479 = vmatpush1.msra.mxu0 0.0
    %480 = vmatprep.mubr.f32.mxu0 0.0
    %481 = vmatmul.mubr.f32.gmra.mrb[0].mxu0 %v343
    %v482 = vpop.f32.mrb[0].mxu0
    %v483 = vadd.f32 0.0, %v482
    %v484 = vpop.f32.mrb[0].mxu0
    %v485 = vadd.f32 0.0, %v484
    %486 = vdwg.mxu0
    %v487 = vadd.f32 %v339, %v412
    %v488 = vadd.f32 %v340, %v414
    %v489 = vadd.f32 %v341, %v483
    %v490 = vadd.f32 %v342, %v485
    %v491 = vxor.u32 %v487, 2147483648
    %v492 = vxor.u32 %v488, 2147483648
    %v493 = vxor.u32 %v489, 2147483648
    %v494 = vmul.f32 %v491, 1.442695
    %v495 = vpow.pop %v494
    %v496 = vmul.f32 %v492, 1.442695
    %v497 = vpow.pop %v496
    %v498 = vmul.f32 %v493, 1.442695
    %v499 = vpow.pop %v498
    %v500 = vadd.f32 %v495, 1.0
    %v501 = vadd.f32 %v497, 1.0
    %v502 = vadd.f32 %v499, 1.0
    %v503 = vrcp.pop %v500
    %v504 = vmul.f32 1.0, %v503
    %v505 = vrcp.pop %v501
    %v506 = vmul.f32 1.0, %v505
    %v507 = vrcp.pop %v502
    %v508 = vmul.f32 1.0, %v507
    %v509 = vtanh.pop %v490
    %v510 = vmul.f32 %v506, %v344
    %v511 = vmul.f32 %v504, %v509
    %v512 = vadd.f32 %v510, %v511
    %v513 = vtanh.pop %v512
    %v514 = vmul.f32 %v508, %v513
    %515 = vst [vmem:[#allocation2] sm:$0xff] %v514
    %516 = vst [vmem:[#allocation3] sm:$0xff] %v512
    %517 = vst [vmem:[%s4] sm:$0xff] %v514
    %s518 = scalar_lea.vmem [#allocation7], 224
    %v519 = vld [vmem:[%s518] sm:$0xff]
    %v520 = vld [vmem:[%s518 + $0x8] sm:$0xff]
    %v521 = vld [vmem:[%s518 + $0x10] sm:$0xff]
    %v522 = vld [vmem:[%s518 + $0x18] sm:$0xff]
    %v523 = vld [vmem:[#allocation4] sm:$0xff]
    %v524 = vld [vmem:[#allocation5] sm:$0xff]
    %525 = vmatprep.subr.mxu0 %v276
    %526 = vmatpush1.msra.mxu0 %v275
    %527 = vmatprep.subr.mxu0 %v280
    %528 = vmatpush1.msra.mxu0 %v279
    %529 = vmatprep.subr.mxu0 %v284
    %530 = vmatpush1.msra.mxu0 %v283
    %531 = vmatprep.subr.mxu0 %v288
    %532 = vmatpush1.msra.mxu0 %v287
    %533 = vmatprep.subr.mxu0 %v292
    %534 = vmatpush1.msra.mxu0 %v291
    %535 = vmatprep.subr.mxu0 %v296
    %536 = vmatpush1.msra.mxu0 %v295
    %537 = vmatprep.subr.mxu0 %v300
    %538 = vmatpush1.msra.mxu0 %v299
    %539 = vmatprep.subr.mxu0 %v304
    %540 = vmatpush1.msra.mxu0 %v303
    %541 = vmatprep.subr.mxu0 %v308
    %542 = vmatpush1.msra.mxu0 %v307
    %543 = vmatprep.subr.mxu0 %v312
    %544 = vmatpush1.msra.mxu0 %v311
    %545 = vmatprep.subr.mxu0 %v316
    %546 = vmatpush1.msra.mxu0 %v315
    %547 = vmatprep.subr.mxu0 %v320
    %548 = vmatpush1.msra.mxu0 %v319
    %549 = vmatprep.subr.mxu0 %v324
    %550 = vmatpush1.msra.mxu0 %v323
    %551 = vmatprep.subr.mxu0 %v328
    %552 = vmatpush1.msra.mxu0 %v327
    %553 = vmatprep.subr.mxu0 %v332
    %554 = vmatpush1.msra.mxu0 %v331
    %555 = vmatprep.subr.mxu0 %v336
    %556 = vmatpush1.msra.mxu0 %v335
    %557 = vmatprep.subr.mxu0 0.0
    %558 = vmatpush1.msra.mxu0 0.0
    %559 = vmatprep.subr.mxu0 0.0
    %560 = vmatpush1.msra.mxu0 0.0
    %561 = vmatprep.subr.mxu0 0.0
    %562 = vmatpush1.msra.mxu0 0.0
    %563 = vmatprep.subr.mxu0 0.0
    %564 = vmatpush1.msra.mxu0 0.0
    %565 = vmatprep.subr.mxu0 0.0
    %566 = vmatpush1.msra.mxu0 0.0
    %567 = vmatprep.subr.mxu0 0.0
    %568 = vmatpush1.msra.mxu0 0.0
    %569 = vmatprep.subr.mxu0 0.0
    %570 = vmatpush1.msra.mxu0 0.0
    %571 = vmatprep.subr.mxu0 0.0
    %572 = vmatpush1.msra.mxu0 0.0
    %573 = vmatprep.subr.mxu0 0.0
    %574 = vmatpush1.msra.mxu0 0.0
    %575 = vmatprep.subr.mxu0 0.0
    %576 = vmatpush1.msra.mxu0 0.0
    %577 = vmatprep.subr.mxu0 0.0
    %578 = vmatpush1.msra.mxu0 0.0
    %579 = vmatprep.subr.mxu0 0.0
    %580 = vmatpush1.msra.mxu0 0.0
    %581 = vmatprep.subr.mxu0 0.0
    %582 = vmatpush1.msra.mxu0 0.0
    %583 = vmatprep.subr.mxu0 0.0
    %584 = vmatpush1.msra.mxu0 0.0
    %585 = vmatprep.subr.mxu0 0.0
    %586 = vmatpush1.msra.mxu0 0.0
    %587 = vmatprep.subr.mxu0 0.0
    %588 = vmatpush1.msra.mxu0 0.0
    %589 = vmatprep.mubr.f32.mxu0 0.0
    %590 = vmatmul.mubr.f32.gmra.mrb[0].mxu0 %v523
    %v591 = vpop.f32.mrb[0].mxu0
    %v592 = vadd.f32 0.0, %v591
    %v593 = vpop.f32.mrb[0].mxu0
    %v594 = vadd.f32 0.0, %v593
    %595 = vdwg.mxu0
    %596 = vmatprep.subr.mxu0 %v278
    %597 = vmatpush1.msra.mxu0 %v277
    %598 = vmatprep.subr.mxu0 %v282
    %599 = vmatpush1.msra.mxu0 %v281
    %600 = vmatprep.subr.mxu0 %v286
    %601 = vmatpush1.msra.mxu0 %v285
    %602 = vmatprep.subr.mxu0 %v290
    %603 = vmatpush1.msra.mxu0 %v289
    %604 = vmatprep.subr.mxu0 %v294
    %605 = vmatpush1.msra.mxu0 %v293
    %606 = vmatprep.subr.mxu0 %v298
    %607 = vmatpush1.msra.mxu0 %v297
    %608 = vmatprep.subr.mxu0 %v302
    %609 = vmatpush1.msra.mxu0 %v301
    %610 = vmatprep.subr.mxu0 %v306
    %611 = vmatpush1.msra.mxu0 %v305
    %612 = vmatprep.subr.mxu0 %v310
    %613 = vmatpush1.msra.mxu0 %v309
    %614 = vmatprep.subr.mxu0 %v314
    %615 = vmatpush1.msra.mxu0 %v313
    %616 = vmatprep.subr.mxu0 %v318
    %617 = vmatpush1.msra.mxu0 %v317
    %618 = vmatprep.subr.mxu0 %v322
    %619 = vmatpush1.msra.mxu0 %v321
    %620 = vmatprep.subr.mxu0 %v326
    %621 = vmatpush1.msra.mxu0 %v325
    %622 = vmatprep.subr.mxu0 %v330
    %623 = vmatpush1.msra.mxu0 %v329
    %624 = vmatprep.subr.mxu0 %v334
    %625 = vmatpush1.msra.mxu0 %v333
    %626 = vmatprep.subr.mxu0 %v338
    %627 = vmatpush1.msra.mxu0 %v337
    %628 = vmatprep.subr.mxu0 0.0
    %629 = vmatpush1.msra.mxu0 0.0
    %630 = vmatprep.subr.mxu0 0.0
    %631 = vmatpush1.msra.mxu0 0.0
    %632 = vmatprep.subr.mxu0 0.0
    %633 = vmatpush1.msra.mxu0 0.0
    %634 = vmatprep.subr.mxu0 0.0
    %635 = vmatpush1.msra.mxu0 0.0
    %636 = vmatprep.subr.mxu0 0.0
    %637 = vmatpush1.msra.mxu0 0.0
    %638 = vmatprep.subr.mxu0 0.0
    %639 = vmatpush1.msra.mxu0 0.0
    %640 = vmatprep.subr.mxu0 0.0
    %641 = vmatpush1.msra.mxu0 0.0
    %642 = vmatprep.subr.mxu0 0.0
    %643 = vmatpush1.msra.mxu0 0.0
    %644 = vmatprep.subr.mxu0 0.0
    %645 = vmatpush1.msra.mxu0 0.0
    %646 = vmatprep.subr.mxu0 0.0
    %647 = vmatpush1.msra.mxu0 0.0
    %648 = vmatprep.subr.mxu0 0.0
    %649 = vmatpush1.msra.mxu0 0.0
    %650 = vmatprep.subr.mxu0 0.0
    %651 = vmatpush1.msra.mxu0 0.0
    %652 = vmatprep.subr.mxu0 0.0
    %653 = vmatpush1.msra.mxu0 0.0
    %654 = vmatprep.subr.mxu0 0.0
    %655 = vmatpush1.msra.mxu0 0.0
    %656 = vmatprep.subr.mxu0 0.0
    %657 = vmatpush1.msra.mxu0 0.0
    %658 = vmatprep.subr.mxu0 0.0
    %659 = vmatpush1.msra.mxu0 0.0
    %660 = vmatprep.mubr.f32.mxu0 0.0
    %661 = vmatmul.mubr.f32.gmra.mrb[0].mxu0 %v523
    %v662 = vpop.f32.mrb[0].mxu0
    %v663 = vadd.f32 0.0, %v662
    %v664 = vpop.f32.mrb[0].mxu0
    %v665 = vadd.f32 0.0, %v664
    %666 = vdwg.mxu0
    %v667 = vadd.f32 %v519, %v592
    %v668 = vadd.f32 %v520, %v594
    %v669 = vadd.f32 %v521, %v663
    %v670 = vadd.f32 %v522, %v665
    %v671 = vxor.u32 %v667, 2147483648
    %v672 = vxor.u32 %v668, 2147483648
    %v673 = vxor.u32 %v669, 2147483648
    %v674 = vmul.f32 %v671, 1.442695
    %v675 = vpow.pop %v674
    %v676 = vmul.f32 %v672, 1.442695
    %v677 = vpow.pop %v676
    %v678 = vmul.f32 %v673, 1.442695
    %v679 = vpow.pop %v678
    %v680 = vadd.f32 %v675, 1.0
    %v681 = vadd.f32 %v677, 1.0
    %v682 = vadd.f32 %v679, 1.0
    %v683 = vrcp.pop %v680
    %v684 = vmul.f32 1.0, %v683
    %v685 = vrcp.pop %v681
    %v686 = vmul.f32 1.0, %v685
    %v687 = vrcp.pop %v682
    %v688 = vmul.f32 1.0, %v687
    %v689 = vtanh.pop %v670
    %v690 = vmul.f32 %v686, %v524
    %v691 = vmul.f32 %v684, %v689
    %v692 = vadd.f32 %v690, %v691
    %v693 = vtanh.pop %v692
    %v694 = vmul.f32 %v688, %v693
    %695 = vst [vmem:[#allocation4] sm:$0xff] %v694
    %696 = vst [vmem:[#allocation5] sm:$0xff] %v692
    %s697 = scalar_lea.vmem %s200, 56
    %698 = vst [vmem:[%s697] sm:$0xff] %v694
    %s699 = scalar_lea.vmem [#allocation6], 32
    %v700 = vld [vmem:[%s699] sm:$0xff]
    %v701 = vld [vmem:[%s699 + $0x8] sm:$0xff]
    %v702 = vld [vmem:[%s699 + $0x10] sm:$0xff]
    %v703 = vld [vmem:[%s699 + $0x18] sm:$0xff]
    %v704 = vld [vmem:[#allocation2] sm:$0xff]
    %v705 = vld [vmem:[#allocation3] sm:$0xff]
    %706 = vmatprep.subr.mxu0 %v212
    %707 = vmatpush1.msra.mxu0 %v211
    %708 = vmatprep.subr.mxu0 %v216
    %709 = vmatpush1.msra.mxu0 %v215
    %710 = vmatprep.subr.mxu0 %v220
    %711 = vmatpush1.msra.mxu0 %v219
    %712 = vmatprep.subr.mxu0 %v224
    %713 = vmatpush1.msra.mxu0 %v223
    %714 = vmatprep.subr.mxu0 %v228
    %715 = vmatpush1.msra.mxu0 %v227
    %716 = vmatprep.subr.mxu0 %v232
    %717 = vmatpush1.msra.mxu0 %v231
    %718 = vmatprep.subr.mxu0 %v236
    %719 = vmatpush1.msra.mxu0 %v235
    %720 = vmatprep.subr.mxu0 %v240
    %721 = vmatpush1.msra.mxu0 %v239
    %722 = vmatprep.subr.mxu0 %v244
    %723 = vmatpush1.msra.mxu0 %v243
    %724 = vmatprep.subr.mxu0 %v248
    %725 = vmatpush1.msra.mxu0 %v247
    %726 = vmatprep.subr.mxu0 %v252
    %727 = vmatpush1.msra.mxu0 %v251
    %728 = vmatprep.subr.mxu0 %v256
    %729 = vmatpush1.msra.mxu0 %v255
    %730 = vmatprep.subr.mxu0 %v260
    %731 = vmatpush1.msra.mxu0 %v259
    %732 = vmatprep.subr.mxu0 %v264
    %733 = vmatpush1.msra.mxu0 %v263
    %734 = vmatprep.subr.mxu0 %v268
    %735 = vmatpush1.msra.mxu0 %v267
    %736 = vmatprep.subr.mxu0 %v272
    %737 = vmatpush1.msra.mxu0 %v271
    %738 = vmatprep.subr.mxu0 0.0
    %739 = vmatpush1.msra.mxu0 0.0
    %740 = vmatprep.subr.mxu0 0.0
    %741 = vmatpush1.msra.mxu0 0.0
    %742 = vmatprep.subr.mxu0 0.0
    %743 = vmatpush1.msra.mxu0 0.0
    %744 = vmatprep.subr.mxu0 0.0
    %745 = vmatpush1.msra.mxu0 0.0
    %746 = vmatprep.subr.mxu0 0.0
    %747 = vmatpush1.msra.mxu0 0.0
    %748 = vmatprep.subr.mxu0 0.0
    %749 = vmatpush1.msra.mxu0 0.0
    %750 = vmatprep.subr.mxu0 0.0
    %751 = vmatpush1.msra.mxu0 0.0
    %752 = vmatprep.subr.mxu0 0.0
    %753 = vmatpush1.msra.mxu0 0.0
    %754 = vmatprep.subr.mxu0 0.0
    %755 = vmatpush1.msra.mxu0 0.0
    %756 = vmatprep.subr.mxu0 0.0
    %757 = vmatpush1.msra.mxu0 0.0
    %758 = vmatprep.subr.mxu0 0.0
    %759 = vmatpush1.msra.mxu0 0.0
    %760 = vmatprep.subr.mxu0 0.0
    %761 = vmatpush1.msra.mxu0 0.0
    %762 = vmatprep.subr.mxu0 0.0
    %763 = vmatpush1.msra.mxu0 0.0
    %764 = vmatprep.subr.mxu0 0.0
    %765 = vmatpush1.msra.mxu0 0.0
    %766 = vmatprep.subr.mxu0 0.0
    %767 = vmatpush1.msra.mxu0 0.0
    %768 = vmatprep.subr.mxu0 0.0
    %769 = vmatpush1.msra.mxu0 0.0
    %770 = vmatprep.mubr.f32.mxu0 0.0
    %771 = vmatmul.mubr.f32.gmra.mrb[0].mxu0 %v704
    %v772 = vpop.f32.mrb[0].mxu0
    %v773 = vadd.f32 0.0, %v772
    %v774 = vpop.f32.mrb[0].mxu0
    %v775 = vadd.f32 0.0, %v774
    %776 = vdwg.mxu0
    %777 = vmatprep.subr.mxu0 %v214
    %778 = vmatpush1.msra.mxu0 %v213
    %779 = vmatprep.subr.mxu0 %v218
    %780 = vmatpush1.msra.mxu0 %v217
    %781 = vmatprep.subr.mxu0 %v222
    %782 = vmatpush1.msra.mxu0 %v221
    %783 = vmatprep.subr.mxu0 %v226
    %784 = vmatpush1.msra.mxu0 %v225
    %785 = vmatprep.subr.mxu0 %v230
    %786 = vmatpush1.msra.mxu0 %v229
    %787 = vmatprep.subr.mxu0 %v234
    %788 = vmatpush1.msra.mxu0 %v233
    %789 = vmatprep.subr.mxu0 %v238
    %790 = vmatpush1.msra.mxu0 %v237
    %791 = vmatprep.subr.mxu0 %v242
    %792 = vmatpush1.msra.mxu0 %v241
    %793 = vmatprep.subr.mxu0 %v246
    %794 = vmatpush1.msra.mxu0 %v245
    %795 = vmatprep.subr.mxu0 %v250
    %796 = vmatpush1.msra.mxu0 %v249
    %797 = vmatprep.subr.mxu0 %v254
    %798 = vmatpush1.msra.mxu0 %v253
    %799 = vmatprep.subr.mxu0 %v258
    %800 = vmatpush1.msra.mxu0 %v257
    %801 = vmatprep.subr.mxu0 %v262
    %802 = vmatpush1.msra.mxu0 %v261
    %803 = vmatprep.subr.mxu0 %v266
    %804 = vmatpush1.msra.mxu0 %v265
    %805 = vmatprep.subr.mxu0 %v270
    %806 = vmatpush1.msra.mxu0 %v269
    %807 = vmatprep.subr.mxu0 %v274
    %808 = vmatpush1.msra.mxu0 %v273
    %809 = vmatprep.subr.mxu0 0.0
    %810 = vmatpush1.msra.mxu0 0.0
    %811 = vmatprep.subr.mxu0 0.0
    %812 = vmatpush1.msra.mxu0 0.0
    %813 = vmatprep.subr.mxu0 0.0
    %814 = vmatpush1.msra.mxu0 0.0
    %815 = vmatprep.subr.mxu0 0.0
    %816 = vmatpush1.msra.mxu0 0.0
    %817 = vmatprep.subr.mxu0 0.0
    %818 = vmatpush1.msra.mxu0 0.0
    %819 = vmatprep.subr.mxu0 0.0
    %820 = vmatpush1.msra.mxu0 0.0
    %821 = vmatprep.subr.mxu0 0.0
    %822 = vmatpush1.msra.mxu0 0.0
    %823 = vmatprep.subr.mxu0 0.0
    %824 = vmatpush1.msra.mxu0 0.0
    %825 = vmatprep.subr.mxu0 0.0
    %826 = vmatpush1.msra.mxu0 0.0
    %827 = vmatprep.subr.mxu0 0.0
    %828 = vmatpush1.msra.mxu0 0.0
    %829 = vmatprep.subr.mxu0 0.0
    %830 = vmatpush1.msra.mxu0 0.0
    %831 = vmatprep.subr.mxu0 0.0
    %832 = vmatpush1.msra.mxu0 0.0
    %833 = vmatprep.subr.mxu0 0.0
    %834 = vmatpush1.msra.mxu0 0.0
    %835 = vmatprep.subr.mxu0 0.0
    %836 = vmatpush1.msra.mxu0 0.0
    %837 = vmatprep.subr.mxu0 0.0
    %838 = vmatpush1.msra.mxu0 0.0
    %839 = vmatprep.subr.mxu0 0.0
    %840 = vmatpush1.msra.mxu0 0.0
    %841 = vmatprep.mubr.f32.mxu0 0.0
    %842 = vmatmul.mubr.f32.gmra.mrb[0].mxu0 %v704
    %v843 = vpop.f32.mrb[0].mxu0
    %v844 = vadd.f32 0.0, %v843
    %v845 = vpop.f32.mrb[0].mxu0
    %v846 = vadd.f32 0.0, %v845
    %847 = vdwg.mxu0
    %v848 = vadd.f32 %v700, %v773
    %v849 = vadd.f32 %v701, %v775
    %v850 = vadd.f32 %v702, %v844
    %v851 = vadd.f32 %v703, %v846
    %v852 = vxor.u32 %v848, 2147483648
    %v853 = vxor.u32 %v849, 2147483648
    %v854 = vxor.u32 %v850, 2147483648
    %v855 = vmul.f32 %v852, 1.442695
    %v856 = vpow.pop %v855
    %v857 = vmul.f32 %v853, 1.442695
    %v858 = vpow.pop %v857
    %v859 = vmul.f32 %v854, 1.442695
    %v860 = vpow.pop %v859
    %v861 = vadd.f32 %v856, 1.0
    %v862 = vadd.f32 %v858, 1.0
    %v863 = vadd.f32 %v860, 1.0
    %v864 = vrcp.pop %v861
    %v865 = vmul.f32 1.0, %v864
    %v866 = vrcp.pop %v862
    %v867 = vmul.f32 1.0, %v866
    %v868 = vrcp.pop %v863
    %v869 = vmul.f32 1.0, %v868
    %v870 = vtanh.pop %v851
    %v871 = vmul.f32 %v867, %v705
    %v872 = vmul.f32 %v865, %v870
    %v873 = vadd.f32 %v871, %v872
    %v874 = vtanh.pop %v873
    %v875 = vmul.f32 %v869, %v874
    %876 = vst [vmem:[#allocation2] sm:$0xff] %v875
    %877 = vst [vmem:[#allocation3] sm:$0xff] %v873
    %s878 = scalar_lea.vmem %s4, 8
    %879 = vst [vmem:[%s878] sm:$0xff] %v875
    %s880 = scalar_lea.vmem [#allocation7], 192
    %v881 = vld [vmem:[%s880] sm:$0xff]
    %v882 = vld [vmem:[%s880 + $0x8] sm:$0xff]
    %v883 = vld [vmem:[%s880 + $0x10] sm:$0xff]
    %v884 = vld [vmem:[%s880 + $0x18] sm:$0xff]
    %v885 = vld [vmem:[#allocation4] sm:$0xff]
    %v886 = vld [vmem:[#allocation5] sm:$0xff]
    %887 = vmatprep.subr.mxu0 %v276
    %888 = vmatpush1.msra.mxu0 %v275
    %889 = vmatprep.subr.mxu0 %v280
    %890 = vmatpush1.msra.mxu0 %v279
    %891 = vmatprep.subr.mxu0 %v284
    %892 = vmatpush1.msra.mxu0 %v283
    %893 = vmatprep.subr.mxu0 %v288
    %894 = vmatpush1.msra.mxu0 %v287
    %895 = vmatprep.subr.mxu0 %v292
    %896 = vmatpush1.msra.mxu0 %v291
    %897 = vmatprep.subr.mxu0 %v296
    %898 = vmatpush1.msra.mxu0 %v295
    %899 = vmatprep.subr.mxu0 %v300
    %900 = vmatpush1.msra.mxu0 %v299
    %901 = vmatprep.subr.mxu0 %v304
    %902 = vmatpush1.msra.mxu0 %v303
    %903 = vmatprep.subr.mxu0 %v308
    %904 = vmatpush1.msra.mxu0 %v307
    %905 = vmatprep.subr.mxu0 %v312
    %906 = vmatpush1.msra.mxu0 %v311
    %907 = vmatprep.subr.mxu0 %v316
    %908 = vmatpush1.msra.mxu0 %v315
    %909 = vmatprep.subr.mxu0 %v320
    %910 = vmatpush1.msra.mxu0 %v319
    %911 = vmatprep.subr.mxu0 %v324
    %912 = vmatpush1.msra.mxu0 %v323
    %913 = vmatprep.subr.mxu0 %v328
    %914 = vmatpush1.msra.mxu0 %v327
    %915 = vmatprep.subr.mxu0 %v332
    %916 = vmatpush1.msra.mxu0 %v331
    %917 = vmatprep.subr.mxu0 %v336
    %918 = vmatpush1.msra.mxu0 %v335
    %919 = vmatprep.subr.mxu0 0.0
    %920 = vmatpush1.msra.mxu0 0.0
    %921 = vmatprep.subr.mxu0 0.0
    %922 = vmatpush1.msra.mxu0 0.0
    %923 = vmatprep.subr.mxu0 0.0
    %924 = vmatpush1.msra.mxu0 0.0
    %925 = vmatprep.subr.mxu0 0.0
    %926 = vmatpush1.msra.mxu0 0.0
    %927 = vmatprep.subr.mxu0 0.0
    %928 = vmatpush1.msra.mxu0 0.0
    %929 = vmatprep.subr.mxu0 0.0
    %930 = vmatpush1.msra.mxu0 0.0
    %931 = vmatprep.subr.mxu0 0.0
    %932 = vmatpush1.msra.mxu0 0.0
    %933 = vmatprep.subr.mxu0 0.0
    %934 = vmatpush1.msra.mxu0 0.0
    %935 = vmatprep.subr.mxu0 0.0
    %936 = vmatpush1.msra.mxu0 0.0
    %937 = vmatprep.subr.mxu0 0.0
    %938 = vmatpush1.msra.mxu0 0.0
    %939 = vmatprep.subr.mxu0 0.0
    %940 = vmatpush1.msra.mxu0 0.0
    %941 = vmatprep.subr.mxu0 0.0
    %942 = vmatpush1.msra.mxu0 0.0
    %943 = vmatprep.subr.mxu0 0.0
    %944 = vmatpush1.msra.mxu0 0.0
    %945 = vmatprep.subr.mxu0 0.0
    %946 = vmatpush1.msra.mxu0 0.0
    %947 = vmatprep.subr.mxu0 0.0
    %948 = vmatpush1.msra.mxu0 0.0
    %949 = vmatprep.subr.mxu0 0.0
    %950 = vmatpush1.msra.mxu0 0.0
    %951 = vmatprep.mubr.f32.mxu0 0.0
    %952 = vmatmul.mubr.f32.gmra.mrb[0].mxu0 %v885
    %v953 = vpop.f32.mrb[0].mxu0
    %v954 = vadd.f32 0.0, %v953
    %v955 = vpop.f32.mrb[0].mxu0
    %v956 = vadd.f32 0.0, %v955
    %957 = vdwg.mxu0
    %958 = vmatprep.subr.mxu0 %v278
    %959 = vmatpush1.msra.mxu0 %v277
    %960 = vmatprep.subr.mxu0 %v282
    %961 = vmatpush1.msra.mxu0 %v281
    %962 = vmatprep.subr.mxu0 %v286
    %963 = vmatpush1.msra.mxu0 %v285
    %964 = vmatprep.subr.mxu0 %v290
    %965 = vmatpush1.msra.mxu0 %v289
    %966 = vmatprep.subr.mxu0 %v294
    %967 = vmatpush1.msra.mxu0 %v293
    %968 = vmatprep.subr.mxu0 %v298
    %969 = vmatpush1.msra.mxu0 %v297
    %970 = vmatprep.subr.mxu0 %v302
    %971 = vmatpush1.msra.mxu0 %v301
    %972 = vmatprep.subr.mxu0 %v306
    %973 = vmatpush1.msra.mxu0 %v305
    %974 = vmatprep.subr.mxu0 %v310
    %975 = vmatpush1.msra.mxu0 %v309
    %976 = vmatprep.subr.mxu0 %v314
    %977 = vmatpush1.msra.mxu0 %v313
    %978 = vmatprep.subr.mxu0 %v318
    %979 = vmatpush1.msra.mxu0 %v317
    %980 = vmatprep.subr.mxu0 %v322
    %981 = vmatpush1.msra.mxu0 %v321
    %982 = vmatprep.subr.mxu0 %v326
    %983 = vmatpush1.msra.mxu0 %v325
    %984 = vmatprep.subr.mxu0 %v330
    %985 = vmatpush1.msra.mxu0 %v329
    %986 = vmatprep.subr.mxu0 %v334
    %987 = vmatpush1.msra.mxu0 %v333
    %988 = vmatprep.subr.mxu0 %v338
    %989 = vmatpush1.msra.mxu0 %v337
    %990 = vmatprep.subr.mxu0 0.0
    %991 = vmatpush1.msra.mxu0 0.0
    %992 = vmatprep.subr.mxu0 0.0
    %993 = vmatpush1.msra.mxu0 0.0
    %994 = vmatprep.subr.mxu0 0.0
    %995 = vmatpush1.msra.mxu0 0.0
    %996 = vmatprep.subr.mxu0 0.0
    %997 = vmatpush1.msra.mxu0 0.0
    %998 = vmatprep.subr.mxu0 0.0
    %999 = vmatpush1.msra.mxu0 0.0
    %1000 = vmatprep.subr.mxu0 0.0
    %1001 = vmatpush1.msra.mxu0 0.0
    %1002 = vmatprep.subr.mxu0 0.0
    %1003 = vmatpush1.msra.mxu0 0.0
    %1004 = vmatprep.subr.mxu0 0.0
    %1005 = vmatpush1.msra.mxu0 0.0
    %1006 = vmatprep.subr.mxu0 0.0
    %1007 = vmatpush1.msra.mxu0 0.0
    %1008 = vmatprep.subr.mxu0 0.0
    %1009 = vmatpush1.msra.mxu0 0.0
    %1010 = vmatprep.subr.mxu0 0.0
    %1011 = vmatpush1.msra.mxu0 0.0
    %1012 = vmatprep.subr.mxu0 0.0
    %1013 = vmatpush1.msra.mxu0 0.0
    %1014 = vmatprep.subr.mxu0 0.0
    %1015 = vmatpush1.msra.mxu0 0.0
    %1016 = vmatprep.subr.mxu0 0.0
    %1017 = vmatpush1.msra.mxu0 0.0
    %1018 = vmatprep.subr.mxu0 0.0
    %1019 = vmatpush1.msra.mxu0 0.0
    %1020 = vmatprep.subr.mxu0 0.0
    %1021 = vmatpush1.msra.mxu0 0.0
    %1022 = vmatprep.mubr.f32.mxu0 0.0
    %1023 = vmatmul.mubr.f32.gmra.mrb[0].mxu0 %v885
    %v1024 = vpop.f32.mrb[0].mxu0
    %v1025 = vadd.f32 0.0, %v1024
    %v1026 = vpop.f32.mrb[0].mxu0
    %v1027 = vadd.f32 0.0, %v1026
    %1028 = vdwg.mxu0
    %v1029 = vadd.f32 %v881, %v954
    %v1030 = vadd.f32 %v882, %v956
    %v1031 = vadd.f32 %v883, %v1025
    %v1032 = vadd.f32 %v884, %v1027
    %v1033 = vxor.u32 %v1029, 2147483648
    %v1034 = vxor.u32 %v1030, 2147483648
    %v1035 = vxor.u32 %v1031, 2147483648
    %v1036 = vmul.f32 %v1033, 1.442695
    %v1037 = vpow.pop %v1036
    %v1038 = vmul.f32 %v1034, 1.442695
    %v1039 = vpow.pop %v1038
    %v1040 = vmul.f32 %v1035, 1.442695
    %v1041 = vpow.pop %v1040
    %v1042 = vadd.f32 %v1037, 1.0
    %v1043 = vadd.f32 %v1039, 1.0
    %v1044 = vadd.f32 %v1041, 1.0
    %v1045 = vrcp.pop %v1042
    %v1046 = vmul.f32 1.0, %v1045
    %v1047 = vrcp.pop %v1043
    %v1048 = vmul.f32 1.0, %v1047
    %v1049 = vrcp.pop %v1044
    %v1050 = vmul.f32 1.0, %v1049
    %v1051 = vtanh.pop %v1032
    %v1052 = vmul.f32 %v1048, %v886
    %v1053 = vmul.f32 %v1046, %v1051
    %v1054 = vadd.f32 %v1052, %v1053
    %v1055 = vtanh.pop %v1054
    %v1056 = vmul.f32 %v1050, %v1055
    %1057 = vst [vmem:[#allocation4] sm:$0xff] %v1056
    %1058 = vst [vmem:[#allocation5] sm:$0xff] %v1054
    %s1059 = scalar_lea.vmem %s200, 48
    %1060 = vst [vmem:[%s1059] sm:$0xff] %v1056
    %s1061 = scalar_lea.vmem [#allocation6], 64
    %v1062 = vld [vmem:[%s1061] sm:$0xff]
    %v1063 = vld [vmem:[%s1061 + $0x8] sm:$0xff]
    %v1064 = vld [vmem:[%s1061 + $0x10] sm:$0xff]
    %v1065 = vld [vmem:[%s1061 + $0x18] sm:$0xff]
    %v1066 = vld [vmem:[#allocation2] sm:$0xff]
    %v1067 = vld [vmem:[#allocation3] sm:$0xff]
    %1068 = vmatprep.subr.mxu0 %v212
    %1069 = vmatpush1.msra.mxu0 %v211
    %1070 = vmatprep.subr.mxu0 %v216
    %1071 = vmatpush1.msra.mxu0 %v215
    %1072 = vmatprep.subr.mxu0 %v220
    %1073 = vmatpush1.msra.mxu0 %v219
    %1074 = vmatprep.subr.mxu0 %v224
    %1075 = vmatpush1.msra.mxu0 %v223
    %1076 = vmatprep.subr.mxu0 %v228
    %1077 = vmatpush1.msra.mxu0 %v227
    %1078 = vmatprep.subr.mxu0 %v232
    %1079 = vmatpush1.msra.mxu0 %v231
    %1080 = vmatprep.subr.mxu0 %v236
    %1081 = vmatpush1.msra.mxu0 %v235
    %1082 = vmatprep.subr.mxu0 %v240
    %1083 = vmatpush1.msra.mxu0 %v239
    %1084 = vmatprep.subr.mxu0 %v244
    %1085 = vmatpush1.msra.mxu0 %v243
    %1086 = vmatprep.subr.mxu0 %v248
    %1087 = vmatpush1.msra.mxu0 %v247
    %1088 = vmatprep.subr.mxu0 %v252
    %1089 = vmatpush1.msra.mxu0 %v251
    %1090 = vmatprep.subr.mxu0 %v256
    %1091 = vmatpush1.msra.mxu0 %v255
    %1092 = vmatprep.subr.mxu0 %v260
    %1093 = vmatpush1.msra.mxu0 %v259
    %1094 = vmatprep.subr.mxu0 %v264
    %1095 = vmatpush1.msra.mxu0 %v263
    %1096 = vmatprep.subr.mxu0 %v268
    %1097 = vmatpush1.msra.mxu0 %v267
    %1098 = vmatprep.subr.mxu0 %v272
    %1099 = vmatpush1.msra.mxu0 %v271
    %1100 = vmatprep.subr.mxu0 0.0
    %1101 = vmatpush1.msra.mxu0 0.0
    %1102 = vmatprep.subr.mxu0 0.0
    %1103 = vmatpush1.msra.mxu0 0.0
    %1104 = vmatprep.subr.mxu0 0.0
    %1105 = vmatpush1.msra.mxu0 0.0
    %1106 = vmatprep.subr.mxu0 0.0
    %1107 = vmatpush1.msra.mxu0 0.0
    %1108 = vmatprep.subr.mxu0 0.0
    %1109 = vmatpush1.msra.mxu0 0.0
    %1110 = vmatprep.subr.mxu0 0.0
    %1111 = vmatpush1.msra.mxu0 0.0
    %1112 = vmatprep.subr.mxu0 0.0
    %1113 = vmatpush1.msra.mxu0 0.0
    %1114 = vmatprep.subr.mxu0 0.0
    %1115 = vmatpush1.msra.mxu0 0.0
    %1116 = vmatprep.subr.mxu0 0.0
    %1117 = vmatpush1.msra.mxu0 0.0
    %1118 = vmatprep.subr.mxu0 0.0
    %1119 = vmatpush1.msra.mxu0 0.0
    %1120 = vmatprep.subr.mxu0 0.0
    %1121 = vmatpush1.msra.mxu0 0.0
    %1122 = vmatprep.subr.mxu0 0.0
    %1123 = vmatpush1.msra.mxu0 0.0
    %1124 = vmatprep.subr.mxu0 0.0
    %1125 = vmatpush1.msra.mxu0 0.0
    %1126 = vmatprep.subr.mxu0 0.0
    %1127 = vmatpush1.msra.mxu0 0.0
    %1128 = vmatprep.subr.mxu0 0.0
    %1129 = vmatpush1.msra.mxu0 0.0
    %1130 = vmatprep.subr.mxu0 0.0
    %1131 = vmatpush1.msra.mxu0 0.0
    %1132 = vmatprep.mubr.f32.mxu0 0.0
    %1133 = vmatmul.mubr.f32.gmra.mrb[0].mxu0 %v1066
    %v1134 = vpop.f32.mrb[0].mxu0
    %v1135 = vadd.f32 0.0, %v1134
    %v1136 = vpop.f32.mrb[0].mxu0
    %v1137 = vadd.f32 0.0, %v1136
    %1138 = vdwg.mxu0
    %1139 = vmatprep.subr.mxu0 %v214
    %1140 = vmatpush1.msra.mxu0 %v213
    %1141 = vmatprep.subr.mxu0 %v218
    %1142 = vmatpush1.msra.mxu0 %v217
    %1143 = vmatprep.subr.mxu0 %v222
    %1144 = vmatpush1.msra.mxu0 %v221
    %1145 = vmatprep.subr.mxu0 %v226
    %1146 = vmatpush1.msra.mxu0 %v225
    %1147 = vmatprep.subr.mxu0 %v230
    %1148 = vmatpush1.msra.mxu0 %v229
    %1149 = vmatprep.subr.mxu0 %v234
    %1150 = vmatpush1.msra.mxu0 %v233
    %1151 = vmatprep.subr.mxu0 %v238
    %1152 = vmatpush1.msra.mxu0 %v237
    %1153 = vmatprep.subr.mxu0 %v242
    %1154 = vmatpush1.msra.mxu0 %v241
    %1155 = vmatprep.subr.mxu0 %v246
    %1156 = vmatpush1.msra.mxu0 %v245
    %1157 = vmatprep.subr.mxu0 %v250
    %1158 = vmatpush1.msra.mxu0 %v249
    %1159 = vmatprep.subr.mxu0 %v254
    %1160 = vmatpush1.msra.mxu0 %v253
    %1161 = vmatprep.subr.mxu0 %v258
    %1162 = vmatpush1.msra.mxu0 %v257
    %1163 = vmatprep.subr.mxu0 %v262
    %1164 = vmatpush1.msra.mxu0 %v261
    %1165 = vmatprep.subr.mxu0 %v266
    %1166 = vmatpush1.msra.mxu0 %v265
    %1167 = vmatprep.subr.mxu0 %v270
    %1168 = vmatpush1.msra.mxu0 %v269
    %1169 = vmatprep.subr.mxu0 %v274
    %1170 = vmatpush1.msra.mxu0 %v273
    %1171 = vmatprep.subr.mxu0 0.0
    %1172 = vmatpush1.msra.mxu0 0.0
    %1173 = vmatprep.subr.mxu0 0.0
    %1174 = vmatpush1.msra.mxu0 0.0
    %1175 = vmatprep.subr.mxu0 0.0
    %1176 = vmatpush1.msra.mxu0 0.0
    %1177 = vmatprep.subr.mxu0 0.0
    %1178 = vmatpush1.msra.mxu0 0.0
    %1179 = vmatprep.subr.mxu0 0.0
    %1180 = vmatpush1.msra.mxu0 0.0
    %1181 = vmatprep.subr.mxu0 0.0
    %1182 = vmatpush1.msra.mxu0 0.0
    %1183 = vmatprep.subr.mxu0 0.0
    %1184 = vmatpush1.msra.mxu0 0.0
    %1185 = vmatprep.subr.mxu0 0.0
    %1186 = vmatpush1.msra.mxu0 0.0
    %1187 = vmatprep.subr.mxu0 0.0
    %1188 = vmatpush1.msra.mxu0 0.0
    %1189 = vmatprep.subr.mxu0 0.0
    %1190 = vmatpush1.msra.mxu0 0.0
    %1191 = vmatprep.subr.mxu0 0.0
    %1192 = vmatpush1.msra.mxu0 0.0
    %1193 = vmatprep.subr.mxu0 0.0
    %1194 = vmatpush1.msra.mxu0 0.0
    %1195 = vmatprep.subr.mxu0 0.0
    %1196 = vmatpush1.msra.mxu0 0.0
    %1197 = vmatprep.subr.mxu0 0.0
    %1198 = vmatpush1.msra.mxu0 0.0
    %1199 = vmatprep.subr.mxu0 0.0
    %1200 = vmatpush1.msra.mxu0 0.0
    %1201 = vmatprep.subr.mxu0 0.0
    %1202 = vmatpush1.msra.mxu0 0.0
    %1203 = vmatprep.mubr.f32.mxu0 0.0
    %1204 = vmatmul.mubr.f32.gmra.mrb[0].mxu0 %v1066
    %v1205 = vpop.f32.mrb[0].mxu0
    %v1206 = vadd.f32 0.0, %v1205
    %v1207 = vpop.f32.mrb[0].mxu0
    %v1208 = vadd.f32 0.0, %v1207
    %1209 = vdwg.mxu0
    %v1210 = vadd.f32 %v1062, %v1135
    %v1211 = vadd.f32 %v1063, %v1137
    %v1212 = vadd.f32 %v1064, %v1206
    %v1213 = vadd.f32 %v1065, %v1208
    %v1214 = vxor.u32 %v1210, 2147483648
    %v1215 = vxor.u32 %v1211, 2147483648
    %v1216 = vxor.u32 %v1212, 2147483648
    %v1217 = vmul.f32 %v1214, 1.442695
    %v1218 = vpow.pop %v1217
    %v1219 = vmul.f32 %v1215, 1.442695
    %v1220 = vpow.pop %v1219
    %v1221 = vmul.f32 %v1216, 1.442695
    %v1222 = vpow.pop %v1221
    %v1223 = vadd.f32 %v1218, 1.0
    %v1224 = vadd.f32 %v1220, 1.0
    %v1225 = vadd.f32 %v1222, 1.0
    %v1226 = vrcp.pop %v1223
    %v1227 = vmul.f32 1.0, %v1226
    %v1228 = vrcp.pop %v1224
    %v1229 = vmul.f32 1.0, %v1228
    %v1230 = vrcp.pop %v1225
    %v1231 = vmul.f32 1.0, %v1230
    %v1232 = vtanh.pop %v1213
    %v1233 = vmul.f32 %v1229, %v1067
    %v1234 = vmul.f32 %v1227, %v1232
    %v1235 = vadd.f32 %v1233, %v1234
    %v1236 = vtanh.pop %v1235
    %v1237 = vmul.f32 %v1231, %v1236
    %1238 = vst [vmem:[#allocation2] sm:$0xff] %v1237
    %1239 = vst [vmem:[#allocation3] sm:$0xff] %v1235
    %s1240 = scalar_lea.vmem %s4, 16
    %1241 = vst [vmem:[%s1240] sm:$0xff] %v1237
    %s1242 = scalar_lea.vmem [#allocation7], 160
    %v1243 = vld [vmem:[%s1242] sm:$0xff]
    %v1244 = vld [vmem:[%s1242 + $0x8] sm:$0xff]
    %v1245 = vld [vmem:[%s1242 + $0x10] sm:$0xff]
    %v1246 = vld [vmem:[%s1242 + $0x18] sm:$0xff]
    %v1247 = vld [vmem:[#allocation4] sm:$0xff]
    %v1248 = vld [vmem:[#allocation5] sm:$0xff]
    %1249 = vmatprep.subr.mxu0 %v276
    %1250 = vmatpush1.msra.mxu0 %v275
    %1251 = vmatprep.subr.mxu0 %v280
    %1252 = vmatpush1.msra.mxu0 %v279
    %1253 = vmatprep.subr.mxu0 %v284
    %1254 = vmatpush1.msra.mxu0 %v283
    %1255 = vmatprep.subr.mxu0 %v288
    %1256 = vmatpush1.msra.mxu0 %v287
    %1257 = vmatprep.subr.mxu0 %v292
    %1258 = vmatpush1.msra.mxu0 %v291
    %1259 = vmatprep.subr.mxu0 %v296
    %1260 = vmatpush1.msra.mxu0 %v295
    %1261 = vmatprep.subr.mxu0 %v300
    %1262 = vmatpush1.msra.mxu0 %v299
    %1263 = vmatprep.subr.mxu0 %v304
    %1264 = vmatpush1.msra.mxu0 %v303
    %1265 = vmatprep.subr.mxu0 %v308
    %1266 = vmatpush1.msra.mxu0 %v307
    %1267 = vmatprep.subr.mxu0 %v312
    %1268 = vmatpush1.msra.mxu0 %v311
    %1269 = vmatprep.subr.mxu0 %v316
    %1270 = vmatpush1.msra.mxu0 %v315
    %1271 = vmatprep.subr.mxu0 %v320
    %1272 = vmatpush1.msra.mxu0 %v319
    %1273 = vmatprep.subr.mxu0 %v324
    %1274 = vmatpush1.msra.mxu0 %v323
    %1275 = vmatprep.subr.mxu0 %v328
    %1276 = vmatpush1.msra.mxu0 %v327
    %1277 = vmatprep.subr.mxu0 %v332
    %1278 = vmatpush1.msra.mxu0 %v331
    %1279 = vmatprep.subr.mxu0 %v336
    %1280 = vmatpush1.msra.mxu0 %v335
    %1281 = vmatprep.subr.mxu0 0.0
    %1282 = vmatpush1.msra.mxu0 0.0
    %1283 = vmatprep.subr.mxu0 0.0
    %1284 = vmatpush1.msra.mxu0 0.0
    %1285 = vmatprep.subr.mxu0 0.0
    %1286 = vmatpush1.msra.mxu0 0.0
    %1287 = vmatprep.subr.mxu0 0.0
    %1288 = vmatpush1.msra.mxu0 0.0
    %1289 = vmatprep.subr.mxu0 0.0
    %1290 = vmatpush1.msra.mxu0 0.0
    %1291 = vmatprep.subr.mxu0 0.0
    %1292 = vmatpush1.msra.mxu0 0.0
    %1293 = vmatprep.subr.mxu0 0.0
    %1294 = vmatpush1.msra.mxu0 0.0
    %1295 = vmatprep.subr.mxu0 0.0
    %1296 = vmatpush1.msra.mxu0 0.0
    %1297 = vmatprep.subr.mxu0 0.0
    %1298 = vmatpush1.msra.mxu0 0.0
    %1299 = vmatprep.subr.mxu0 0.0
    %1300 = vmatpush1.msra.mxu0 0.0
    %1301 = vmatprep.subr.mxu0 0.0
    %1302 = vmatpush1.msra.mxu0 0.0
    %1303 = vmatprep.subr.mxu0 0.0
    %1304 = vmatpush1.msra.mxu0 0.0
    %1305 = vmatprep.subr.mxu0 0.0
    %1306 = vmatpush1.msra.mxu0 0.0
    %1307 = vmatprep.subr.mxu0 0.0
    %1308 = vmatpush1.msra.mxu0 0.0
    %1309 = vmatprep.subr.mxu0 0.0
    %1310 = vmatpush1.msra.mxu0 0.0
    %1311 = vmatprep.subr.mxu0 0.0
    %1312 = vmatpush1.msra.mxu0 0.0
    %1313 = vmatprep.mubr.f32.mxu0 0.0
    %1314 = vmatmul.mubr.f32.gmra.mrb[0].mxu0 %v1247
    %v1315 = vpop.f32.mrb[0].mxu0
    %v1316 = vadd.f32 0.0, %v1315
    %v1317 = vpop.f32.mrb[0].mxu0
    %v1318 = vadd.f32 0.0, %v1317
    %1319 = vdwg.mxu0
    %1320 = vmatprep.subr.mxu0 %v278
    %1321 = vmatpush1.msra.mxu0 %v277
    %1322 = vmatprep.subr.mxu0 %v282
    %1323 = vmatpush1.msra.mxu0 %v281
    %1324 = vmatprep.subr.mxu0 %v286
    %1325 = vmatpush1.msra.mxu0 %v285
    %1326 = vmatprep.subr.mxu0 %v290
    %1327 = vmatpush1.msra.mxu0 %v289
    %1328 = vmatprep.subr.mxu0 %v294
    %1329 = vmatpush1.msra.mxu0 %v293
    %1330 = vmatprep.subr.mxu0 %v298
    %1331 = vmatpush1.msra.mxu0 %v297
    %1332 = vmatprep.subr.mxu0 %v302
    %1333 = vmatpush1.msra.mxu0 %v301
    %1334 = vmatprep.subr.mxu0 %v306
    %1335 = vmatpush1.msra.mxu0 %v305
    %1336 = vmatprep.subr.mxu0 %v310
    %1337 = vmatpush1.msra.mxu0 %v309
    %1338 = vmatprep.subr.mxu0 %v314
    %1339 = vmatpush1.msra.mxu0 %v313
    %1340 = vmatprep.subr.mxu0 %v318
    %1341 = vmatpush1.msra.mxu0 %v317
    %1342 = vmatprep.subr.mxu0 %v322
    %1343 = vmatpush1.msra.mxu0 %v321
    %1344 = vmatprep.subr.mxu0 %v326
    %1345 = vmatpush1.msra.mxu0 %v325
    %1346 = vmatprep.subr.mxu0 %v330
    %1347 = vmatpush1.msra.mxu0 %v329
    %1348 = vmatprep.subr.mxu0 %v334
    %1349 = vmatpush1.msra.mxu0 %v333
    %1350 = vmatprep.subr.mxu0 %v338
    %1351 = vmatpush1.msra.mxu0 %v337
    %1352 = vmatprep.subr.mxu0 0.0
    %1353 = vmatpush1.msra.mxu0 0.0
    %1354 = vmatprep.subr.mxu0 0.0
    %1355 = vmatpush1.msra.mxu0 0.0
    %1356 = vmatprep.subr.mxu0 0.0
    %1357 = vmatpush1.msra.mxu0 0.0
    %1358 = vmatprep.subr.mxu0 0.0
    %1359 = vmatpush1.msra.mxu0 0.0
    %1360 = vmatprep.subr.mxu0 0.0
    %1361 = vmatpush1.msra.mxu0 0.0
    %1362 = vmatprep.subr.mxu0 0.0
    %1363 = vmatpush1.msra.mxu0 0.0
    %1364 = vmatprep.subr.mxu0 0.0
    %1365 = vmatpush1.msra.mxu0 0.0
    %1366 = vmatprep.subr.mxu0 0.0
    %1367 = vmatpush1.msra.mxu0 0.0
    %1368 = vmatprep.subr.mxu0 0.0
    %1369 = vmatpush1.msra.mxu0 0.0
    %1370 = vmatprep.subr.mxu0 0.0
    %1371 = vmatpush1.msra.mxu0 0.0
    %1372 = vmatprep.subr.mxu0 0.0
    %1373 = vmatpush1.msra.mxu0 0.0
    %1374 = vmatprep.subr.mxu0 0.0
    %1375 = vmatpush1.msra.mxu0 0.0
    %1376 = vmatprep.subr.mxu0 0.0
    %1377 = vmatpush1.msra.mxu0 0.0
    %1378 = vmatprep.subr.mxu0 0.0
    %1379 = vmatpush1.msra.mxu0 0.0
    %1380 = vmatprep.subr.mxu0 0.0
    %1381 = vmatpush1.msra.mxu0 0.0
    %1382 = vmatprep.subr.mxu0 0.0
    %1383 = vmatpush1.msra.mxu0 0.0
    %1384 = vmatprep.mubr.f32.mxu0 0.0
    %1385 = vmatmul.mubr.f32.gmra.mrb[0].mxu0 %v1247
    %v1386 = vpop.f32.mrb[0].mxu0
    %v1387 = vadd.f32 0.0, %v1386
    %v1388 = vpop.f32.mrb[0].mxu0
    %v1389 = vadd.f32 0.0, %v1388
    %1390 = vdwg.mxu0
    %v1391 = vadd.f32 %v1243, %v1316
    %v1392 = vadd.f32 %v1244, %v1318
    %v1393 = vadd.f32 %v1245, %v1387
    %v1394 = vadd.f32 %v1246, %v1389
    %v1395 = vxor.u32 %v1391, 2147483648
    %v1396 = vxor.u32 %v1392, 2147483648
    %v1397 = vxor.u32 %v1393, 2147483648
    %v1398 = vmul.f32 %v1395, 1.442695
    %v1399 = vpow.pop %v1398
    %v1400 = vmul.f32 %v1396, 1.442695
    %v1401 = vpow.pop %v1400
    %v1402 = vmul.f32 %v1397, 1.442695
    %v1403 = vpow.pop %v1402
    %v1404 = vadd.f32 %v1399, 1.0
    %v1405 = vadd.f32 %v1401, 1.0
    %v1406 = vadd.f32 %v1403, 1.0
    %v1407 = vrcp.pop %v1404
    %v1408 = vmul.f32 1.0, %v1407
    %v1409 = vrcp.pop %v1405
    %v1410 = vmul.f32 1.0, %v1409
    %v1411 = vrcp.pop %v1406
    %v1412 = vmul.f32 1.0, %v1411
    %v1413 = vtanh.pop %v1394
    %v1414 = vmul.f32 %v1410, %v1248
    %v1415 = vmul.f32 %v1408, %v1413
    %v1416 = vadd.f32 %v1414, %v1415
    %v1417 = vtanh.pop %v1416
    %v1418 = vmul.f32 %v1412, %v1417
    %1419 = vst [vmem:[#allocation4] sm:$0xff] %v1418
    %1420 = vst [vmem:[#allocation5] sm:$0xff] %v1416
    %s1421 = scalar_lea.vmem %s200, 40
    %1422 = vst [vmem:[%s1421] sm:$0xff] %v1418
    %s1423 = scalar_lea.vmem [#allocation6], 96
    %v1424 = vld [vmem:[%s1423] sm:$0xff]
    %v1425 = vld [vmem:[%s1423 + $0x8] sm:$0xff]
    %v1426 = vld [vmem:[%s1423 + $0x10] sm:$0xff]
    %v1427 = vld [vmem:[%s1423 + $0x18] sm:$0xff]
    %v1428 = vld [vmem:[#allocation2] sm:$0xff]
    %v1429 = vld [vmem:[#allocation3] sm:$0xff]
    %1430 = vmatprep.subr.mxu0 %v212
    %1431 = vmatpush1.msra.mxu0 %v211
    %1432 = vmatprep.subr.mxu0 %v216
    %1433 = vmatpush1.msra.mxu0 %v215
    %1434 = vmatprep.subr.mxu0 %v220
    %1435 = vmatpush1.msra.mxu0 %v219
    %1436 = vmatprep.subr.mxu0 %v224
    %1437 = vmatpush1.msra.mxu0 %v223
    %1438 = vmatprep.subr.mxu0 %v228
    %1439 = vmatpush1.msra.mxu0 %v227
    %1440 = vmatprep.subr.mxu0 %v232
    %1441 = vmatpush1.msra.mxu0 %v231
    %1442 = vmatprep.subr.mxu0 %v236
    %1443 = vmatpush1.msra.mxu0 %v235
    %1444 = vmatprep.subr.mxu0 %v240
    %1445 = vmatpush1.msra.mxu0 %v239
    %1446 = vmatprep.subr.mxu0 %v244
    %1447 = vmatpush1.msra.mxu0 %v243
    %1448 = vmatprep.subr.mxu0 %v248
    %1449 = vmatpush1.msra.mxu0 %v247
    %1450 = vmatprep.subr.mxu0 %v252
    %1451 = vmatpush1.msra.mxu0 %v251
    %1452 = vmatprep.subr.mxu0 %v256
    %1453 = vmatpush1.msra.mxu0 %v255
    %1454 = vmatprep.subr.mxu0 %v260
    %1455 = vmatpush1.msra.mxu0 %v259
    %1456 = vmatprep.subr.mxu0 %v264
    %1457 = vmatpush1.msra.mxu0 %v263
    %1458 = vmatprep.subr.mxu0 %v268
    %1459 = vmatpush1.msra.mxu0 %v267
    %1460 = vmatprep.subr.mxu0 %v272
    %1461 = vmatpush1.msra.mxu0 %v271
    %1462 = vmatprep.subr.mxu0 0.0
    %1463 = vmatpush1.msra.mxu0 0.0
    %1464 = vmatprep.subr.mxu0 0.0
    %1465 = vmatpush1.msra.mxu0 0.0
    %1466 = vmatprep.subr.mxu0 0.0
    %1467 = vmatpush1.msra.mxu0 0.0
    %1468 = vmatprep.subr.mxu0 0.0
    %1469 = vmatpush1.msra.mxu0 0.0
    %1470 = vmatprep.subr.mxu0 0.0
    %1471 = vmatpush1.msra.mxu0 0.0
    %1472 = vmatprep.subr.mxu0 0.0
    %1473 = vmatpush1.msra.mxu0 0.0
    %1474 = vmatprep.subr.mxu0 0.0
    %1475 = vmatpush1.msra.mxu0 0.0
    %1476 = vmatprep.subr.mxu0 0.0
    %1477 = vmatpush1.msra.mxu0 0.0
    %1478 = vmatprep.subr.mxu0 0.0
    %1479 = vmatpush1.msra.mxu0 0.0
    %1480 = vmatprep.subr.mxu0 0.0
    %1481 = vmatpush1.msra.mxu0 0.0
    %1482 = vmatprep.subr.mxu0 0.0
    %1483 = vmatpush1.msra.mxu0 0.0
    %1484 = vmatprep.subr.mxu0 0.0
    %1485 = vmatpush1.msra.mxu0 0.0
    %1486 = vmatprep.subr.mxu0 0.0
    %1487 = vmatpush1.msra.mxu0 0.0
    %1488 = vmatprep.subr.mxu0 0.0
    %1489 = vmatpush1.msra.mxu0 0.0
    %1490 = vmatprep.subr.mxu0 0.0
    %1491 = vmatpush1.msra.mxu0 0.0
    %1492 = vmatprep.subr.mxu0 0.0
    %1493 = vmatpush1.msra.mxu0 0.0
    %1494 = vmatprep.mubr.f32.mxu0 0.0
    %1495 = vmatmul.mubr.f32.gmra.mrb[0].mxu0 %v1428
    %v1496 = vpop.f32.mrb[0].mxu0
    %v1497 = vadd.f32 0.0, %v1496
    %v1498 = vpop.f32.mrb[0].mxu0
    %v1499 = vadd.f32 0.0, %v1498
    %1500 = vdwg.mxu0
    %1501 = vmatprep.subr.mxu0 %v214
    %1502 = vmatpush1.msra.mxu0 %v213
    %1503 = vmatprep.subr.mxu0 %v218
    %1504 = vmatpush1.msra.mxu0 %v217
    %1505 = vmatprep.subr.mxu0 %v222
    %1506 = vmatpush1.msra.mxu0 %v221
    %1507 = vmatprep.subr.mxu0 %v226
    %1508 = vmatpush1.msra.mxu0 %v225
    %1509 = vmatprep.subr.mxu0 %v230
    %1510 = vmatpush1.msra.mxu0 %v229
    %1511 = vmatprep.subr.mxu0 %v234
    %1512 = vmatpush1.msra.mxu0 %v233
    %1513 = vmatprep.subr.mxu0 %v238
    %1514 = vmatpush1.msra.mxu0 %v237
    %1515 = vmatprep.subr.mxu0 %v242
    %1516 = vmatpush1.msra.mxu0 %v241
    %1517 = vmatprep.subr.mxu0 %v246
    %1518 = vmatpush1.msra.mxu0 %v245
    %1519 = vmatprep.subr.mxu0 %v250
    %1520 = vmatpush1.msra.mxu0 %v249
    %1521 = vmatprep.subr.mxu0 %v254
    %1522 = vmatpush1.msra.mxu0 %v253
    %1523 = vmatprep.subr.mxu0 %v258
    %1524 = vmatpush1.msra.mxu0 %v257
    %1525 = vmatprep.subr.mxu0 %v262
    %1526 = vmatpush1.msra.mxu0 %v261
    %1527 = vmatprep.subr.mxu0 %v266
    %1528 = vmatpush1.msra.mxu0 %v265
    %1529 = vmatprep.subr.mxu0 %v270
    %1530 = vmatpush1.msra.mxu0 %v269
    %1531 = vmatprep.subr.mxu0 %v274
    %1532 = vmatpush1.msra.mxu0 %v273
    %1533 = vmatprep.subr.mxu0 0.0
    %1534 = vmatpush1.msra.mxu0 0.0
    %1535 = vmatprep.subr.mxu0 0.0
    %1536 = vmatpush1.msra.mxu0 0.0
    %1537 = vmatprep.subr.mxu0 0.0
    %1538 = vmatpush1.msra.mxu0 0.0
    %1539 = vmatprep.subr.mxu0 0.0
    %1540 = vmatpush1.msra.mxu0 0.0
    %1541 = vmatprep.subr.mxu0 0.0
    %1542 = vmatpush1.msra.mxu0 0.0
    %1543 = vmatprep.subr.mxu0 0.0
    %1544 = vmatpush1.msra.mxu0 0.0
    %1545 = vmatprep.subr.mxu0 0.0
    %1546 = vmatpush1.msra.mxu0 0.0
    %1547 = vmatprep.subr.mxu0 0.0
    %1548 = vmatpush1.msra.mxu0 0.0
    %1549 = vmatprep.subr.mxu0 0.0
    %1550 = vmatpush1.msra.mxu0 0.0
    %1551 = vmatprep.subr.mxu0 0.0
    %1552 = vmatpush1.msra.mxu0 0.0
    %1553 = vmatprep.subr.mxu0 0.0
    %1554 = vmatpush1.msra.mxu0 0.0
    %1555 = vmatprep.subr.mxu0 0.0
    %1556 = vmatpush1.msra.mxu0 0.0
    %1557 = vmatprep.subr.mxu0 0.0
    %1558 = vmatpush1.msra.mxu0 0.0
    %1559 = vmatprep.subr.mxu0 0.0
    %1560 = vmatpush1.msra.mxu0 0.0
    %1561 = vmatprep.subr.mxu0 0.0
    %1562 = vmatpush1.msra.mxu0 0.0
    %1563 = vmatprep.subr.mxu0 0.0
    %1564 = vmatpush1.msra.mxu0 0.0
    %1565 = vmatprep.mubr.f32.mxu0 0.0
    %1566 = vmatmul.mubr.f32.gmra.mrb[0].mxu0 %v1428
    %v1567 = vpop.f32.mrb[0].mxu0
    %v1568 = vadd.f32 0.0, %v1567
    %v1569 = vpop.f32.mrb[0].mxu0
    %v1570 = vadd.f32 0.0, %v1569
    %1571 = vdwg.mxu0
    %v1572 = vadd.f32 %v1424, %v1497
    %v1573 = vadd.f32 %v1425, %v1499
    %v1574 = vadd.f32 %v1426, %v1568
    %v1575 = vadd.f32 %v1427, %v1570
    %v1576 = vxor.u32 %v1572, 2147483648
    %v1577 = vxor.u32 %v1573, 2147483648
    %v1578 = vxor.u32 %v1574, 2147483648
    %v1579 = vmul.f32 %v1576, 1.442695
    %v1580 = vpow.pop %v1579
    %v1581 = vmul.f32 %v1577, 1.442695
    %v1582 = vpow.pop %v1581
    %v1583 = vmul.f32 %v1578, 1.442695
    %v1584 = vpow.pop %v1583
    %v1585 = vadd.f32 %v1580, 1.0
    %v1586 = vadd.f32 %v1582, 1.0
    %v1587 = vadd.f32 %v1584, 1.0
    %v1588 = vrcp.pop %v1585
    %v1589 = vmul.f32 1.0, %v1588
    %v1590 = vrcp.pop %v1586
    %v1591 = vmul.f32 1.0, %v1590
    %v1592 = vrcp.pop %v1587
    %v1593 = vmul.f32 1.0, %v1592
    %v1594 = vtanh.pop %v1575
    %v1595 = vmul.f32 %v1591, %v1429
    %v1596 = vmul.f32 %v1589, %v1594
    %v1597 = vadd.f32 %v1595, %v1596
    %v1598 = vtanh.pop %v1597
    %v1599 = vmul.f32 %v1593, %v1598
    %1600 = vst [vmem:[#allocation2] sm:$0xff] %v1599
    %1601 = vst [vmem:[#allocation3] sm:$0xff] %v1597
    %s1602 = scalar_lea.vmem %s4, 24
    %1603 = vst [vmem:[%s1602] sm:$0xff] %v1599
    %s1604 = scalar_lea.vmem [#allocation7], 128
    %v1605 = vld [vmem:[%s1604] sm:$0xff]
    %v1606 = vld [vmem:[%s1604 + $0x8] sm:$0xff]
    %v1607 = vld [vmem:[%s1604 + $0x10] sm:$0xff]
    %v1608 = vld [vmem:[%s1604 + $0x18] sm:$0xff]
    %v1609 = vld [vmem:[#allocation4] sm:$0xff]
    %v1610 = vld [vmem:[#allocation5] sm:$0xff]
    %1611 = vmatprep.subr.mxu0 %v276
    %1612 = vmatpush1.msra.mxu0 %v275
    %1613 = vmatprep.subr.mxu0 %v280
    %1614 = vmatpush1.msra.mxu0 %v279
    %1615 = vmatprep.subr.mxu0 %v284
    %1616 = vmatpush1.msra.mxu0 %v283
    %1617 = vmatprep.subr.mxu0 %v288
    %1618 = vmatpush1.msra.mxu0 %v287
    %1619 = vmatprep.subr.mxu0 %v292
    %1620 = vmatpush1.msra.mxu0 %v291
    %1621 = vmatprep.subr.mxu0 %v296
    %1622 = vmatpush1.msra.mxu0 %v295
    %1623 = vmatprep.subr.mxu0 %v300
    %1624 = vmatpush1.msra.mxu0 %v299
    %1625 = vmatprep.subr.mxu0 %v304
    %1626 = vmatpush1.msra.mxu0 %v303
    %1627 = vmatprep.subr.mxu0 %v308
    %1628 = vmatpush1.msra.mxu0 %v307
    %1629 = vmatprep.subr.mxu0 %v312
    %1630 = vmatpush1.msra.mxu0 %v311
    %1631 = vmatprep.subr.mxu0 %v316
    %1632 = vmatpush1.msra.mxu0 %v315
    %1633 = vmatprep.subr.mxu0 %v320
    %1634 = vmatpush1.msra.mxu0 %v319
    %1635 = vmatprep.subr.mxu0 %v324
    %1636 = vmatpush1.msra.mxu0 %v323
    %1637 = vmatprep.subr.mxu0 %v328
    %1638 = vmatpush1.msra.mxu0 %v327
    %1639 = vmatprep.subr.mxu0 %v332
    %1640 = vmatpush1.msra.mxu0 %v331
    %1641 = vmatprep.subr.mxu0 %v336
    %1642 = vmatpush1.msra.mxu0 %v335
    %1643 = vmatprep.subr.mxu0 0.0
    %1644 = vmatpush1.msra.mxu0 0.0
    %1645 = vmatprep.subr.mxu0 0.0
    %1646 = vmatpush1.msra.mxu0 0.0
    %1647 = vmatprep.subr.mxu0 0.0
    %1648 = vmatpush1.msra.mxu0 0.0
    %1649 = vmatprep.subr.mxu0 0.0
    %1650 = vmatpush1.msra.mxu0 0.0
    %1651 = vmatprep.subr.mxu0 0.0
    %1652 = vmatpush1.msra.mxu0 0.0
    %1653 = vmatprep.subr.mxu0 0.0
    %1654 = vmatpush1.msra.mxu0 0.0
    %1655 = vmatprep.subr.mxu0 0.0
    %1656 = vmatpush1.msra.mxu0 0.0
    %1657 = vmatprep.subr.mxu0 0.0
    %1658 = vmatpush1.msra.mxu0 0.0
    %1659 = vmatprep.subr.mxu0 0.0
    %1660 = vmatpush1.msra.mxu0 0.0
    %1661 = vmatprep.subr.mxu0 0.0
    %1662 = vmatpush1.msra.mxu0 0.0
    %1663 = vmatprep.subr.mxu0 0.0
    %1664 = vmatpush1.msra.mxu0 0.0
    %1665 = vmatprep.subr.mxu0 0.0
    %1666 = vmatpush1.msra.mxu0 0.0
    %1667 = vmatprep.subr.mxu0 0.0
    %1668 = vmatpush1.msra.mxu0 0.0
    %1669 = vmatprep.subr.mxu0 0.0
    %1670 = vmatpush1.msra.mxu0 0.0
    %1671 = vmatprep.subr.mxu0 0.0
    %1672 = vmatpush1.msra.mxu0 0.0
    %1673 = vmatprep.subr.mxu0 0.0
    %1674 = vmatpush1.msra.mxu0 0.0
    %1675 = vmatprep.mubr.f32.mxu0 0.0
    %1676 = vmatmul.mubr.f32.gmra.mrb[0].mxu0 %v1609
    %v1677 = vpop.f32.mrb[0].mxu0
    %v1678 = vadd.f32 0.0, %v1677
    %v1679 = vpop.f32.mrb[0].mxu0
    %v1680 = vadd.f32 0.0, %v1679
    %1681 = vdwg.mxu0
    %1682 = vmatprep.subr.mxu0 %v278
    %1683 = vmatpush1.msra.mxu0 %v277
    %1684 = vmatprep.subr.mxu0 %v282
    %1685 = vmatpush1.msra.mxu0 %v281
    %1686 = vmatprep.subr.mxu0 %v286
    %1687 = vmatpush1.msra.mxu0 %v285
    %1688 = vmatprep.subr.mxu0 %v290
    %1689 = vmatpush1.msra.mxu0 %v289
    %1690 = vmatprep.subr.mxu0 %v294
    %1691 = vmatpush1.msra.mxu0 %v293
    %1692 = vmatprep.subr.mxu0 %v298
    %1693 = vmatpush1.msra.mxu0 %v297
    %1694 = vmatprep.subr.mxu0 %v302
    %1695 = vmatpush1.msra.mxu0 %v301
    %1696 = vmatprep.subr.mxu0 %v306
    %1697 = vmatpush1.msra.mxu0 %v305
    %1698 = vmatprep.subr.mxu0 %v310
    %1699 = vmatpush1.msra.mxu0 %v309
    %1700 = vmatprep.subr.mxu0 %v314
    %1701 = vmatpush1.msra.mxu0 %v313
    %1702 = vmatprep.subr.mxu0 %v318
    %1703 = vmatpush1.msra.mxu0 %v317
    %1704 = vmatprep.subr.mxu0 %v322
    %1705 = vmatpush1.msra.mxu0 %v321
    %1706 = vmatprep.subr.mxu0 %v326
    %1707 = vmatpush1.msra.mxu0 %v325
    %1708 = vmatprep.subr.mxu0 %v330
    %1709 = vmatpush1.msra.mxu0 %v329
    %1710 = vmatprep.subr.mxu0 %v334
    %1711 = vmatpush1.msra.mxu0 %v333
    %1712 = vmatprep.subr.mxu0 %v338
    %1713 = vmatpush1.msra.mxu0 %v337
    %1714 = vmatprep.subr.mxu0 0.0
    %1715 = vmatpush1.msra.mxu0 0.0
    %1716 = vmatprep.subr.mxu0 0.0
    %1717 = vmatpush1.msra.mxu0 0.0
    %1718 = vmatprep.subr.mxu0 0.0
    %1719 = vmatpush1.msra.mxu0 0.0
    %1720 = vmatprep.subr.mxu0 0.0
    %1721 = vmatpush1.msra.mxu0 0.0
    %1722 = vmatprep.subr.mxu0 0.0
    %1723 = vmatpush1.msra.mxu0 0.0
    %1724 = vmatprep.subr.mxu0 0.0
    %1725 = vmatpush1.msra.mxu0 0.0
    %1726 = vmatprep.subr.mxu0 0.0
    %1727 = vmatpush1.msra.mxu0 0.0
    %1728 = vmatprep.subr.mxu0 0.0
    %1729 = vmatpush1.msra.mxu0 0.0
    %1730 = vmatprep.subr.mxu0 0.0
    %1731 = vmatpush1.msra.mxu0 0.0
    %1732 = vmatprep.subr.mxu0 0.0
    %1733 = vmatpush1.msra.mxu0 0.0
    %1734 = vmatprep.subr.mxu0 0.0
    %1735 = vmatpush1.msra.mxu0 0.0
    %1736 = vmatprep.subr.mxu0 0.0
    %1737 = vmatpush1.msra.mxu0 0.0
    %1738 = vmatprep.subr.mxu0 0.0
    %1739 = vmatpush1.msra.mxu0 0.0
    %1740 = vmatprep.subr.mxu0 0.0
    %1741 = vmatpush1.msra.mxu0 0.0
    %1742 = vmatprep.subr.mxu0 0.0
    %1743 = vmatpush1.msra.mxu0 0.0
    %1744 = vmatprep.subr.mxu0 0.0
    %1745 = vmatpush1.msra.mxu0 0.0
    %1746 = vmatprep.mubr.f32.mxu0 0.0
    %1747 = vmatmul.mubr.f32.gmra.mrb[0].mxu0 %v1609
    %v1748 = vpop.f32.mrb[0].mxu0
    %v1749 = vadd.f32 0.0, %v1748
    %v1750 = vpop.f32.mrb[0].mxu0
    %v1751 = vadd.f32 0.0, %v1750
    %1752 = vdwg.mxu0
    %v1753 = vadd.f32 %v1605, %v1678
    %v1754 = vadd.f32 %v1606, %v1680
    %v1755 = vadd.f32 %v1607, %v1749
    %v1756 = vadd.f32 %v1608, %v1751
    %v1757 = vxor.u32 %v1753, 2147483648
    %v1758 = vxor.u32 %v1754, 2147483648
    %v1759 = vxor.u32 %v1755, 2147483648
    %v1760 = vmul.f32 %v1757, 1.442695
    %v1761 = vpow.pop %v1760
    %v1762 = vmul.f32 %v1758, 1.442695
    %v1763 = vpow.pop %v1762
    %v1764 = vmul.f32 %v1759, 1.442695
    %v1765 = vpow.pop %v1764
    %v1766 = vadd.f32 %v1761, 1.0
    %v1767 = vadd.f32 %v1763, 1.0
    %v1768 = vadd.f32 %v1765, 1.0
    %v1769 = vrcp.pop %v1766
    %v1770 = vmul.f32 1.0, %v1769
    %v1771 = vrcp.pop %v1767
    %v1772 = vmul.f32 1.0, %v1771
    %v1773 = vrcp.pop %v1768
    %v1774 = vmul.f32 1.0, %v1773
    %v1775 = vtanh.pop %v1756
    %v1776 = vmul.f32 %v1772, %v1610
    %v1777 = vmul.f32 %v1770, %v1775
    %v1778 = vadd.f32 %v1776, %v1777
    %v1779 = vtanh.pop %v1778
    %v1780 = vmul.f32 %v1774, %v1779
    %1781 = vst [vmem:[#allocation4] sm:$0xff] %v1780
    %1782 = vst [vmem:[#allocation5] sm:$0xff] %v1778
    %s1783 = scalar_lea.vmem %s200, 32
    %1784 = vst [vmem:[%s1783] sm:$0xff] %v1780
    %s1785 = scalar_lea.vmem [#allocation6], 128
    %v1786 = vld [vmem:[%s1785] sm:$0xff]
    %v1787 = vld [vmem:[%s1785 + $0x8] sm:$0xff]
    %v1788 = vld [vmem:[%s1785 + $0x10] sm:$0xff]
    %v1789 = vld [vmem:[%s1785 + $0x18] sm:$0xff]
    %v1790 = vld [vmem:[#allocation2] sm:$0xff]
    %v1791 = vld [vmem:[#allocation3] sm:$0xff]
    %1792 = vmatprep.subr.mxu0 %v212
    %1793 = vmatpush1.msra.mxu0 %v211
    %1794 = vmatprep.subr.mxu0 %v216
    %1795 = vmatpush1.msra.mxu0 %v215
    %1796 = vmatprep.subr.mxu0 %v220
    %1797 = vmatpush1.msra.mxu0 %v219
    %1798 = vmatprep.subr.mxu0 %v224
    %1799 = vmatpush1.msra.mxu0 %v223
    %1800 = vmatprep.subr.mxu0 %v228
    %1801 = vmatpush1.msra.mxu0 %v227
    %1802 = vmatprep.subr.mxu0 %v232
    %1803 = vmatpush1.msra.mxu0 %v231
    %1804 = vmatprep.subr.mxu0 %v236
    %1805 = vmatpush1.msra.mxu0 %v235
    %1806 = vmatprep.subr.mxu0 %v240
    %1807 = vmatpush1.msra.mxu0 %v239
    %1808 = vmatprep.subr.mxu0 %v244
    %1809 = vmatpush1.msra.mxu0 %v243
    %1810 = vmatprep.subr.mxu0 %v248
    %1811 = vmatpush1.msra.mxu0 %v247
    %1812 = vmatprep.subr.mxu0 %v252
    %1813 = vmatpush1.msra.mxu0 %v251
    %1814 = vmatprep.subr.mxu0 %v256
    %1815 = vmatpush1.msra.mxu0 %v255
    %1816 = vmatprep.subr.mxu0 %v260
    %1817 = vmatpush1.msra.mxu0 %v259
    %1818 = vmatprep.subr.mxu0 %v264
    %1819 = vmatpush1.msra.mxu0 %v263
    %1820 = vmatprep.subr.mxu0 %v268
    %1821 = vmatpush1.msra.mxu0 %v267
    %1822 = vmatprep.subr.mxu0 %v272
    %1823 = vmatpush1.msra.mxu0 %v271
    %1824 = vmatprep.subr.mxu0 0.0
    %1825 = vmatpush1.msra.mxu0 0.0
    %1826 = vmatprep.subr.mxu0 0.0
    %1827 = vmatpush1.msra.mxu0 0.0
    %1828 = vmatprep.subr.mxu0 0.0
    %1829 = vmatpush1.msra.mxu0 0.0
    %1830 = vmatprep.subr.mxu0 0.0
    %1831 = vmatpush1.msra.mxu0 0.0
    %1832 = vmatprep.subr.mxu0 0.0
    %1833 = vmatpush1.msra.mxu0 0.0
    %1834 = vmatprep.subr.mxu0 0.0
    %1835 = vmatpush1.msra.mxu0 0.0
    %1836 = vmatprep.subr.mxu0 0.0
    %1837 = vmatpush1.msra.mxu0 0.0
    %1838 = vmatprep.subr.mxu0 0.0
    %1839 = vmatpush1.msra.mxu0 0.0
    %1840 = vmatprep.subr.mxu0 0.0
    %1841 = vmatpush1.msra.mxu0 0.0
    %1842 = vmatprep.subr.mxu0 0.0
    %1843 = vmatpush1.msra.mxu0 0.0
    %1844 = vmatprep.subr.mxu0 0.0
    %1845 = vmatpush1.msra.mxu0 0.0
    %1846 = vmatprep.subr.mxu0 0.0
    %1847 = vmatpush1.msra.mxu0 0.0
    %1848 = vmatprep.subr.mxu0 0.0
    %1849 = vmatpush1.msra.mxu0 0.0
    %1850 = vmatprep.subr.mxu0 0.0
    %1851 = vmatpush1.msra.mxu0 0.0
    %1852 = vmatprep.subr.mxu0 0.0
    %1853 = vmatpush1.msra.mxu0 0.0
    %1854 = vmatprep.subr.mxu0 0.0
    %1855 = vmatpush1.msra.mxu0 0.0
    %1856 = vmatprep.mubr.f32.mxu0 0.0
    %1857 = vmatmul.mubr.f32.gmra.mrb[0].mxu0 %v1790
    %v1858 = vpop.f32.mrb[0].mxu0
    %v1859 = vadd.f32 0.0, %v1858
    %v1860 = vpop.f32.mrb[0].mxu0
    %v1861 = vadd.f32 0.0, %v1860
    %1862 = vdwg.mxu0
    %1863 = vmatprep.subr.mxu0 %v214
    %1864 = vmatpush1.msra.mxu0 %v213
    %1865 = vmatprep.subr.mxu0 %v218
    %1866 = vmatpush1.msra.mxu0 %v217
    %1867 = vmatprep.subr.mxu0 %v222
    %1868 = vmatpush1.msra.mxu0 %v221
    %1869 = vmatprep.subr.mxu0 %v226
    %1870 = vmatpush1.msra.mxu0 %v225
    %1871 = vmatprep.subr.mxu0 %v230
    %1872 = vmatpush1.msra.mxu0 %v229
    %1873 = vmatprep.subr.mxu0 %v234
    %1874 = vmatpush1.msra.mxu0 %v233
    %1875 = vmatprep.subr.mxu0 %v238
    %1876 = vmatpush1.msra.mxu0 %v237
    %1877 = vmatprep.subr.mxu0 %v242
    %1878 = vmatpush1.msra.mxu0 %v241
    %1879 = vmatprep.subr.mxu0 %v246
    %1880 = vmatpush1.msra.mxu0 %v245
    %1881 = vmatprep.subr.mxu0 %v250
    %1882 = vmatpush1.msra.mxu0 %v249
    %1883 = vmatprep.subr.mxu0 %v254
    %1884 = vmatpush1.msra.mxu0 %v253
    %1885 = vmatprep.subr.mxu0 %v258
    %1886 = vmatpush1.msra.mxu0 %v257
    %1887 = vmatprep.subr.mxu0 %v262
    %1888 = vmatpush1.msra.mxu0 %v261
    %1889 = vmatprep.subr.mxu0 %v266
    %1890 = vmatpush1.msra.mxu0 %v265
    %1891 = vmatprep.subr.mxu0 %v270
    %1892 = vmatpush1.msra.mxu0 %v269
    %1893 = vmatprep.subr.mxu0 %v274
    %1894 = vmatpush1.msra.mxu0 %v273
    %1895 = vmatprep.subr.mxu0 0.0
    %1896 = vmatpush1.msra.mxu0 0.0
    %1897 = vmatprep.subr.mxu0 0.0
    %1898 = vmatpush1.msra.mxu0 0.0
    %1899 = vmatprep.subr.mxu0 0.0
    %1900 = vmatpush1.msra.mxu0 0.0
    %1901 = vmatprep.subr.mxu0 0.0
    %1902 = vmatpush1.msra.mxu0 0.0
    %1903 = vmatprep.subr.mxu0 0.0
    %1904 = vmatpush1.msra.mxu0 0.0
    %1905 = vmatprep.subr.mxu0 0.0
    %1906 = vmatpush1.msra.mxu0 0.0
    %1907 = vmatprep.subr.mxu0 0.0
    %1908 = vmatpush1.msra.mxu0 0.0
    %1909 = vmatprep.subr.mxu0 0.0
    %1910 = vmatpush1.msra.mxu0 0.0
    %1911 = vmatprep.subr.mxu0 0.0
    %1912 = vmatpush1.msra.mxu0 0.0
    %1913 = vmatprep.subr.mxu0 0.0
    %1914 = vmatpush1.msra.mxu0 0.0
    %1915 = vmatprep.subr.mxu0 0.0
    %1916 = vmatpush1.msra.mxu0 0.0
    %1917 = vmatprep.subr.mxu0 0.0
    %1918 = vmatpush1.msra.mxu0 0.0
    %1919 = vmatprep.subr.mxu0 0.0
    %1920 = vmatpush1.msra.mxu0 0.0
    %1921 = vmatprep.subr.mxu0 0.0
    %1922 = vmatpush1.msra.mxu0 0.0
    %1923 = vmatprep.subr.mxu0 0.0
    %1924 = vmatpush1.msra.mxu0 0.0
    %1925 = vmatprep.subr.mxu0 0.0
    %1926 = vmatpush1.msra.mxu0 0.0
    %1927 = vmatprep.mubr.f32.mxu0 0.0
    %1928 = vmatmul.mubr.f32.gmra.mrb[0].mxu0 %v1790
    %v1929 = vpop.f32.mrb[0].mxu0
    %v1930 = vadd.f32 0.0, %v1929
    %v1931 = vpop.f32.mrb[0].mxu0
    %v1932 = vadd.f32 0.0, %v1931
    %1933 = vdwg.mxu0
    %v1934 = vadd.f32 %v1786, %v1859
    %v1935 = vadd.f32 %v1787, %v1861
    %v1936 = vadd.f32 %v1788, %v1930
    %v1937 = vadd.f32 %v1789, %v1932
    %v1938 = vxor.u32 %v1934, 2147483648
    %v1939 = vxor.u32 %v1935, 2147483648
    %v1940 = vxor.u32 %v1936, 2147483648
    %v1941 = vmul.f32 %v1938, 1.442695
    %v1942 = vpow.pop %v1941
    %v1943 = vmul.f32 %v1939, 1.442695
    %v1944 = vpow.pop %v1943
    %v1945 = vmul.f32 %v1940, 1.442695
    %v1946 = vpow.pop %v1945
    %v1947 = vadd.f32 %v1942, 1.0
    %v1948 = vadd.f32 %v1944, 1.0
    %v1949 = vadd.f32 %v1946, 1.0
    %v1950 = vrcp.pop %v1947
    %v1951 = vmul.f32 1.0, %v1950
    %v1952 = vrcp.pop %v1948
    %v1953 = vmul.f32 1.0, %v1952
    %v1954 = vrcp.pop %v1949
    %v1955 = vmul.f32 1.0, %v1954
    %v1956 = vtanh.pop %v1937
    %v1957 = vmul.f32 %v1953, %v1791
    %v1958 = vmul.f32 %v1951, %v1956
    %v1959 = vadd.f32 %v1957, %v1958
    %v1960 = vtanh.pop %v1959
    %v1961 = vmul.f32 %v1955, %v1960
    %1962 = vst [vmem:[#allocation2] sm:$0xff] %v1961
    %1963 = vst [vmem:[#allocation3] sm:$0xff] %v1959
    %s1964 = scalar_lea.vmem %s4, 32
    %1965 = vst [vmem:[%s1964] sm:$0xff] %v1961
    %s1966 = scalar_lea.vmem [#allocation7], 96
    %v1967 = vld [vmem:[%s1966] sm:$0xff]
    %v1968 = vld [vmem:[%s1966 + $0x8] sm:$0xff]
    %v1969 = vld [vmem:[%s1966 + $0x10] sm:$0xff]
    %v1970 = vld [vmem:[%s1966 + $0x18] sm:$0xff]
    %v1971 = vld [vmem:[#allocation4] sm:$0xff]
    %v1972 = vld [vmem:[#allocation5] sm:$0xff]
    %1973 = vmatprep.subr.mxu0 %v276
    %1974 = vmatpush1.msra.mxu0 %v275
    %1975 = vmatprep.subr.mxu0 %v280
    %1976 = vmatpush1.msra.mxu0 %v279
    %1977 = vmatprep.subr.mxu0 %v284
    %1978 = vmatpush1.msra.mxu0 %v283
    %1979 = vmatprep.subr.mxu0 %v288
    %1980 = vmatpush1.msra.mxu0 %v287
    %1981 = vmatprep.subr.mxu0 %v292
    %1982 = vmatpush1.msra.mxu0 %v291
    %1983 = vmatprep.subr.mxu0 %v296
    %1984 = vmatpush1.msra.mxu0 %v295
    %1985 = vmatprep.subr.mxu0 %v300
    %1986 = vmatpush1.msra.mxu0 %v299
    %1987 = vmatprep.subr.mxu0 %v304
    %1988 = vmatpush1.msra.mxu0 %v303
    %1989 = vmatprep.subr.mxu0 %v308
    %1990 = vmatpush1.msra.mxu0 %v307
    %1991 = vmatprep.subr.mxu0 %v312
    %1992 = vmatpush1.msra.mxu0 %v311
    %1993 = vmatprep.subr.mxu0 %v316
    %1994 = vmatpush1.msra.mxu0 %v315
    %1995 = vmatprep.subr.mxu0 %v320
    %1996 = vmatpush1.msra.mxu0 %v319
    %1997 = vmatprep.subr.mxu0 %v324
    %1998 = vmatpush1.msra.mxu0 %v323
    %1999 = vmatprep.subr.mxu0 %v328
    %2000 = vmatpush1.msra.mxu0 %v327
    %2001 = vmatprep.subr.mxu0 %v332
    %2002 = vmatpush1.msra.mxu0 %v331
    %2003 = vmatprep.subr.mxu0 %v336
    %2004 = vmatpush1.msra.mxu0 %v335
    %2005 = vmatprep.subr.mxu0 0.0
    %2006 = vmatpush1.msra.mxu0 0.0
    %2007 = vmatprep.subr.mxu0 0.0
    %2008 = vmatpush1.msra.mxu0 0.0
    %2009 = vmatprep.subr.mxu0 0.0
    %2010 = vmatpush1.msra.mxu0 0.0
    %2011 = vmatprep.subr.mxu0 0.0
    %2012 = vmatpush1.msra.mxu0 0.0
    %2013 = vmatprep.subr.mxu0 0.0
    %2014 = vmatpush1.msra.mxu0 0.0
    %2015 = vmatprep.subr.mxu0 0.0
    %2016 = vmatpush1.msra.mxu0 0.0
    %2017 = vmatprep.subr.mxu0 0.0
    %2018 = vmatpush1.msra.mxu0 0.0
    %2019 = vmatprep.subr.mxu0 0.0
    %2020 = vmatpush1.msra.mxu0 0.0
    %2021 = vmatprep.subr.mxu0 0.0
    %2022 = vmatpush1.msra.mxu0 0.0
    %2023 = vmatprep.subr.mxu0 0.0
    %2024 = vmatpush1.msra.mxu0 0.0
    %2025 = vmatprep.subr.mxu0 0.0
    %2026 = vmatpush1.msra.mxu0 0.0
    %2027 = vmatprep.subr.mxu0 0.0
    %2028 = vmatpush1.msra.mxu0 0.0
    %2029 = vmatprep.subr.mxu0 0.0
    %2030 = vmatpush1.msra.mxu0 0.0
    %2031 = vmatprep.subr.mxu0 0.0
    %2032 = vmatpush1.msra.mxu0 0.0
    %2033 = vmatprep.subr.mxu0 0.0
    %2034 = vmatpush1.msra.mxu0 0.0
    %2035 = vmatprep.subr.mxu0 0.0
    %2036 = vmatpush1.msra.mxu0 0.0
    %2037 = vmatprep.mubr.f32.mxu0 0.0
    %2038 = vmatmul.mubr.f32.gmra.mrb[0].mxu0 %v1971
    %v2039 = vpop.f32.mrb[0].mxu0
    %v2040 = vadd.f32 0.0, %v2039
    %v2041 = vpop.f32.mrb[0].mxu0
    %v2042 = vadd.f32 0.0, %v2041
    %2043 = vdwg.mxu0
    %2044 = vmatprep.subr.mxu0 %v278
    %2045 = vmatpush1.msra.mxu0 %v277
    %2046 = vmatprep.subr.mxu0 %v282
    %2047 = vmatpush1.msra.mxu0 %v281
    %2048 = vmatprep.subr.mxu0 %v286
    %2049 = vmatpush1.msra.mxu0 %v285
    %2050 = vmatprep.subr.mxu0 %v290
    %2051 = vmatpush1.msra.mxu0 %v289
    %2052 = vmatprep.subr.mxu0 %v294
    %2053 = vmatpush1.msra.mxu0 %v293
    %2054 = vmatprep.subr.mxu0 %v298
    %2055 = vmatpush1.msra.mxu0 %v297
    %2056 = vmatprep.subr.mxu0 %v302
    %2057 = vmatpush1.msra.mxu0 %v301
    %2058 = vmatprep.subr.mxu0 %v306
    %2059 = vmatpush1.msra.mxu0 %v305
    %2060 = vmatprep.subr.mxu0 %v310
    %2061 = vmatpush1.msra.mxu0 %v309
    %2062 = vmatprep.subr.mxu0 %v314
    %2063 = vmatpush1.msra.mxu0 %v313
    %2064 = vmatprep.subr.mxu0 %v318
    %2065 = vmatpush1.msra.mxu0 %v317
    %2066 = vmatprep.subr.mxu0 %v322
    %2067 = vmatpush1.msra.mxu0 %v321
    %2068 = vmatprep.subr.mxu0 %v326
    %2069 = vmatpush1.msra.mxu0 %v325
    %2070 = vmatprep.subr.mxu0 %v330
    %2071 = vmatpush1.msra.mxu0 %v329
    %2072 = vmatprep.subr.mxu0 %v334
    %2073 = vmatpush1.msra.mxu0 %v333
    %2074 = vmatprep.subr.mxu0 %v338
    %2075 = vmatpush1.msra.mxu0 %v337
    %2076 = vmatprep.subr.mxu0 0.0
    %2077 = vmatpush1.msra.mxu0 0.0
    %2078 = vmatprep.subr.mxu0 0.0
    %2079 = vmatpush1.msra.mxu0 0.0
    %2080 = vmatprep.subr.mxu0 0.0
    %2081 = vmatpush1.msra.mxu0 0.0
    %2082 = vmatprep.subr.mxu0 0.0
    %2083 = vmatpush1.msra.mxu0 0.0
    %2084 = vmatprep.subr.mxu0 0.0
    %2085 = vmatpush1.msra.mxu0 0.0
    %2086 = vmatprep.subr.mxu0 0.0
    %2087 = vmatpush1.msra.mxu0 0.0
    %2088 = vmatprep.subr.mxu0 0.0
    %2089 = vmatpush1.msra.mxu0 0.0
    %2090 = vmatprep.subr.mxu0 0.0
    %2091 = vmatpush1.msra.mxu0 0.0
    %2092 = vmatprep.subr.mxu0 0.0
    %2093 = vmatpush1.msra.mxu0 0.0
    %2094 = vmatprep.subr.mxu0 0.0
    %2095 = vmatpush1.msra.mxu0 0.0
    %2096 = vmatprep.subr.mxu0 0.0
    %2097 = vmatpush1.msra.mxu0 0.0
    %2098 = vmatprep.subr.mxu0 0.0
    %2099 = vmatpush1.msra.mxu0 0.0
    %2100 = vmatprep.subr.mxu0 0.0
    %2101 = vmatpush1.msra.mxu0 0.0
    %2102 = vmatprep.subr.mxu0 0.0
    %2103 = vmatpush1.msra.mxu0 0.0
    %2104 = vmatprep.subr.mxu0 0.0
    %2105 = vmatpush1.msra.mxu0 0.0
    %2106 = vmatprep.subr.mxu0 0.0
    %2107 = vmatpush1.msra.mxu0 0.0
    %2108 = vmatprep.mubr.f32.mxu0 0.0
    %2109 = vmatmul.mubr.f32.gmra.mrb[0].mxu0 %v1971
    %v2110 = vpop.f32.mrb[0].mxu0
    %v2111 = vadd.f32 0.0, %v2110
    %v2112 = vpop.f32.mrb[0].mxu0
    %v2113 = vadd.f32 0.0, %v2112
    %2114 = vdwg.mxu0
    %v2115 = vadd.f32 %v1967, %v2040
    %v2116 = vadd.f32 %v1968, %v2042
    %v2117 = vadd.f32 %v1969, %v2111
    %v2118 = vadd.f32 %v1970, %v2113
    %v2119 = vxor.u32 %v2115, 2147483648
    %v2120 = vxor.u32 %v2116, 2147483648
    %v2121 = vxor.u32 %v2117, 2147483648
    %v2122 = vmul.f32 %v2119, 1.442695
    %v2123 = vpow.pop %v2122
    %v2124 = vmul.f32 %v2120, 1.442695
    %v2125 = vpow.pop %v2124
    %v2126 = vmul.f32 %v2121, 1.442695
    %v2127 = vpow.pop %v2126
    %v2128 = vadd.f32 %v2123, 1.0
    %v2129 = vadd.f32 %v2125, 1.0
    %v2130 = vadd.f32 %v2127, 1.0
    %v2131 = vrcp.pop %v2128
    %v2132 = vmul.f32 1.0, %v2131
    %v2133 = vrcp.pop %v2129
    %v2134 = vmul.f32 1.0, %v2133
    %v2135 = vrcp.pop %v2130
    %v2136 = vmul.f32 1.0, %v2135
    %v2137 = vtanh.pop %v2118
    %v2138 = vmul.f32 %v2134, %v1972
    %v2139 = vmul.f32 %v2132, %v2137
    %v2140 = vadd.f32 %v2138, %v2139
    %v2141 = vtanh.pop %v2140
    %v2142 = vmul.f32 %v2136, %v2141
    %2143 = vst [vmem:[#allocation4] sm:$0xff] %v2142
    %2144 = vst [vmem:[#allocation5] sm:$0xff] %v2140
    %s2145 = scalar_lea.vmem %s200, 24
    %2146 = vst [vmem:[%s2145] sm:$0xff] %v2142
    %s2147 = scalar_lea.vmem [#allocation6], 160
    %v2148 = vld [vmem:[%s2147] sm:$0xff]
    %v2149 = vld [vmem:[%s2147 + $0x8] sm:$0xff]
    %v2150 = vld [vmem:[%s2147 + $0x10] sm:$0xff]
    %v2151 = vld [vmem:[%s2147 + $0x18] sm:$0xff]
    %v2152 = vld [vmem:[#allocation2] sm:$0xff]
    %v2153 = vld [vmem:[#allocation3] sm:$0xff]
    %2154 = vmatprep.subr.mxu0 %v212
    %2155 = vmatpush1.msra.mxu0 %v211
    %2156 = vmatprep.subr.mxu0 %v216
    %2157 = vmatpush1.msra.mxu0 %v215
    %2158 = vmatprep.subr.mxu0 %v220
    %2159 = vmatpush1.msra.mxu0 %v219
    %2160 = vmatprep.subr.mxu0 %v224
    %2161 = vmatpush1.msra.mxu0 %v223
    %2162 = vmatprep.subr.mxu0 %v228
    %2163 = vmatpush1.msra.mxu0 %v227
    %2164 = vmatprep.subr.mxu0 %v232
    %2165 = vmatpush1.msra.mxu0 %v231
    %2166 = vmatprep.subr.mxu0 %v236
    %2167 = vmatpush1.msra.mxu0 %v235
    %2168 = vmatprep.subr.mxu0 %v240
    %2169 = vmatpush1.msra.mxu0 %v239
    %2170 = vmatprep.subr.mxu0 %v244
    %2171 = vmatpush1.msra.mxu0 %v243
    %2172 = vmatprep.subr.mxu0 %v248
    %2173 = vmatpush1.msra.mxu0 %v247
    %2174 = vmatprep.subr.mxu0 %v252
    %2175 = vmatpush1.msra.mxu0 %v251
    %2176 = vmatprep.subr.mxu0 %v256
    %2177 = vmatpush1.msra.mxu0 %v255
    %2178 = vmatprep.subr.mxu0 %v260
    %2179 = vmatpush1.msra.mxu0 %v259
    %2180 = vmatprep.subr.mxu0 %v264
    %2181 = vmatpush1.msra.mxu0 %v263
    %2182 = vmatprep.subr.mxu0 %v268
    %2183 = vmatpush1.msra.mxu0 %v267
    %2184 = vmatprep.subr.mxu0 %v272
    %2185 = vmatpush1.msra.mxu0 %v271
    %2186 = vmatprep.subr.mxu0 0.0
    %2187 = vmatpush1.msra.mxu0 0.0
    %2188 = vmatprep.subr.mxu0 0.0
    %2189 = vmatpush1.msra.mxu0 0.0
    %2190 = vmatprep.subr.mxu0 0.0
    %2191 = vmatpush1.msra.mxu0 0.0
    %2192 = vmatprep.subr.mxu0 0.0
    %2193 = vmatpush1.msra.mxu0 0.0
    %2194 = vmatprep.subr.mxu0 0.0
    %2195 = vmatpush1.msra.mxu0 0.0
    %2196 = vmatprep.subr.mxu0 0.0
    %2197 = vmatpush1.msra.mxu0 0.0
    %2198 = vmatprep.subr.mxu0 0.0
    %2199 = vmatpush1.msra.mxu0 0.0
    %2200 = vmatprep.subr.mxu0 0.0
    %2201 = vmatpush1.msra.mxu0 0.0
    %2202 = vmatprep.subr.mxu0 0.0
    %2203 = vmatpush1.msra.mxu0 0.0
    %2204 = vmatprep.subr.mxu0 0.0
    %2205 = vmatpush1.msra.mxu0 0.0
    %2206 = vmatprep.subr.mxu0 0.0
    %2207 = vmatpush1.msra.mxu0 0.0
    %2208 = vmatprep.subr.mxu0 0.0
    %2209 = vmatpush1.msra.mxu0 0.0
    %2210 = vmatprep.subr.mxu0 0.0
    %2211 = vmatpush1.msra.mxu0 0.0
    %2212 = vmatprep.subr.mxu0 0.0
    %2213 = vmatpush1.msra.mxu0 0.0
    %2214 = vmatprep.subr.mxu0 0.0
    %2215 = vmatpush1.msra.mxu0 0.0
    %2216 = vmatprep.subr.mxu0 0.0
    %2217 = vmatpush1.msra.mxu0 0.0
    %2218 = vmatprep.mubr.f32.mxu0 0.0
    %2219 = vmatmul.mubr.f32.gmra.mrb[0].mxu0 %v2152
    %v2220 = vpop.f32.mrb[0].mxu0
    %v2221 = vadd.f32 0.0, %v2220
    %v2222 = vpop.f32.mrb[0].mxu0
    %v2223 = vadd.f32 0.0, %v2222
    %2224 = vdwg.mxu0
    %2225 = vmatprep.subr.mxu0 %v214
    %2226 = vmatpush1.msra.mxu0 %v213
    %2227 = vmatprep.subr.mxu0 %v218
    %2228 = vmatpush1.msra.mxu0 %v217
    %2229 = vmatprep.subr.mxu0 %v222
    %2230 = vmatpush1.msra.mxu0 %v221
    %2231 = vmatprep.subr.mxu0 %v226
    %2232 = vmatpush1.msra.mxu0 %v225
    %2233 = vmatprep.subr.mxu0 %v230
    %2234 = vmatpush1.msra.mxu0 %v229
    %2235 = vmatprep.subr.mxu0 %v234
    %2236 = vmatpush1.msra.mxu0 %v233
    %2237 = vmatprep.subr.mxu0 %v238
    %2238 = vmatpush1.msra.mxu0 %v237
    %2239 = vmatprep.subr.mxu0 %v242
    %2240 = vmatpush1.msra.mxu0 %v241
    %2241 = vmatprep.subr.mxu0 %v246
    %2242 = vmatpush1.msra.mxu0 %v245
    %2243 = vmatprep.subr.mxu0 %v250
    %2244 = vmatpush1.msra.mxu0 %v249
    %2245 = vmatprep.subr.mxu0 %v254
    %2246 = vmatpush1.msra.mxu0 %v253
    %2247 = vmatprep.subr.mxu0 %v258
    %2248 = vmatpush1.msra.mxu0 %v257
    %2249 = vmatprep.subr.mxu0 %v262
    %2250 = vmatpush1.msra.mxu0 %v261
    %2251 = vmatprep.subr.mxu0 %v266
    %2252 = vmatpush1.msra.mxu0 %v265
    %2253 = vmatprep.subr.mxu0 %v270
    %2254 = vmatpush1.msra.mxu0 %v269
    %2255 = vmatprep.subr.mxu0 %v274
    %2256 = vmatpush1.msra.mxu0 %v273
    %2257 = vmatprep.subr.mxu0 0.0
    %2258 = vmatpush1.msra.mxu0 0.0
    %2259 = vmatprep.subr.mxu0 0.0
    %2260 = vmatpush1.msra.mxu0 0.0
    %2261 = vmatprep.subr.mxu0 0.0
    %2262 = vmatpush1.msra.mxu0 0.0
    %2263 = vmatprep.subr.mxu0 0.0
    %2264 = vmatpush1.msra.mxu0 0.0
    %2265 = vmatprep.subr.mxu0 0.0
    %2266 = vmatpush1.msra.mxu0 0.0
    %2267 = vmatprep.subr.mxu0 0.0
    %2268 = vmatpush1.msra.mxu0 0.0
    %2269 = vmatprep.subr.mxu0 0.0
    %2270 = vmatpush1.msra.mxu0 0.0
    %2271 = vmatprep.subr.mxu0 0.0
    %2272 = vmatpush1.msra.mxu0 0.0
    %2273 = vmatprep.subr.mxu0 0.0
    %2274 = vmatpush1.msra.mxu0 0.0
    %2275 = vmatprep.subr.mxu0 0.0
    %2276 = vmatpush1.msra.mxu0 0.0
    %2277 = vmatprep.subr.mxu0 0.0
    %2278 = vmatpush1.msra.mxu0 0.0
    %2279 = vmatprep.subr.mxu0 0.0
    %2280 = vmatpush1.msra.mxu0 0.0
    %2281 = vmatprep.subr.mxu0 0.0
    %2282 = vmatpush1.msra.mxu0 0.0
    %2283 = vmatprep.subr.mxu0 0.0
    %2284 = vmatpush1.msra.mxu0 0.0
    %2285 = vmatprep.subr.mxu0 0.0
    %2286 = vmatpush1.msra.mxu0 0.0
    %2287 = vmatprep.subr.mxu0 0.0
    %2288 = vmatpush1.msra.mxu0 0.0
    %2289 = vmatprep.mubr.f32.mxu0 0.0
    %2290 = vmatmul.mubr.f32.gmra.mrb[0].mxu0 %v2152
    %v2291 = vpop.f32.mrb[0].mxu0
    %v2292 = vadd.f32 0.0, %v2291
    %v2293 = vpop.f32.mrb[0].mxu0
    %v2294 = vadd.f32 0.0, %v2293
    %2295 = vdwg.mxu0
    %v2296 = vadd.f32 %v2148, %v2221
    %v2297 = vadd.f32 %v2149, %v2223
    %v2298 = vadd.f32 %v2150, %v2292
    %v2299 = vadd.f32 %v2151, %v2294
    %v2300 = vxor.u32 %v2296, 2147483648
    %v2301 = vxor.u32 %v2297, 2147483648
    %v2302 = vxor.u32 %v2298, 2147483648
    %v2303 = vmul.f32 %v2300, 1.442695
    %v2304 = vpow.pop %v2303
    %v2305 = vmul.f32 %v2301, 1.442695
    %v2306 = vpow.pop %v2305
    %v2307 = vmul.f32 %v2302, 1.442695
    %v2308 = vpow.pop %v2307
    %v2309 = vadd.f32 %v2304, 1.0
    %v2310 = vadd.f32 %v2306, 1.0
    %v2311 = vadd.f32 %v2308, 1.0
    %v2312 = vrcp.pop %v2309
    %v2313 = vmul.f32 1.0, %v2312
    %v2314 = vrcp.pop %v2310
    %v2315 = vmul.f32 1.0, %v2314
    %v2316 = vrcp.pop %v2311
    %v2317 = vmul.f32 1.0, %v2316
    %v2318 = vtanh.pop %v2299
    %v2319 = vmul.f32 %v2315, %v2153
    %v2320 = vmul.f32 %v2313, %v2318
    %v2321 = vadd.f32 %v2319, %v2320
    %v2322 = vtanh.pop %v2321
    %v2323 = vmul.f32 %v2317, %v2322
    %2324 = vst [vmem:[#allocation2] sm:$0xff] %v2323
    %2325 = vst [vmem:[#allocation3] sm:$0xff] %v2321
    %s2326 = scalar_lea.vmem %s4, 40
    %2327 = vst [vmem:[%s2326] sm:$0xff] %v2323
    %s2328 = scalar_lea.vmem [#allocation7], 64
    %v2329 = vld [vmem:[%s2328] sm:$0xff]
    %v2330 = vld [vmem:[%s2328 + $0x8] sm:$0xff]
    %v2331 = vld [vmem:[%s2328 + $0x10] sm:$0xff]
    %v2332 = vld [vmem:[%s2328 + $0x18] sm:$0xff]
    %v2333 = vld [vmem:[#allocation4] sm:$0xff]
    %v2334 = vld [vmem:[#allocation5] sm:$0xff]
    %2335 = vmatprep.subr.mxu0 %v276
    %2336 = vmatpush1.msra.mxu0 %v275
    %2337 = vmatprep.subr.mxu0 %v280
    %2338 = vmatpush1.msra.mxu0 %v279
    %2339 = vmatprep.subr.mxu0 %v284
    %2340 = vmatpush1.msra.mxu0 %v283
    %2341 = vmatprep.subr.mxu0 %v288
    %2342 = vmatpush1.msra.mxu0 %v287
    %2343 = vmatprep.subr.mxu0 %v292
    %2344 = vmatpush1.msra.mxu0 %v291
    %2345 = vmatprep.subr.mxu0 %v296
    %2346 = vmatpush1.msra.mxu0 %v295
    %2347 = vmatprep.subr.mxu0 %v300
    %2348 = vmatpush1.msra.mxu0 %v299
    %2349 = vmatprep.subr.mxu0 %v304
    %2350 = vmatpush1.msra.mxu0 %v303
    %2351 = vmatprep.subr.mxu0 %v308
    %2352 = vmatpush1.msra.mxu0 %v307
    %2353 = vmatprep.subr.mxu0 %v312
    %2354 = vmatpush1.msra.mxu0 %v311
    %2355 = vmatprep.subr.mxu0 %v316
    %2356 = vmatpush1.msra.mxu0 %v315
    %2357 = vmatprep.subr.mxu0 %v320
    %2358 = vmatpush1.msra.mxu0 %v319
    %2359 = vmatprep.subr.mxu0 %v324
    %2360 = vmatpush1.msra.mxu0 %v323
    %2361 = vmatprep.subr.mxu0 %v328
    %2362 = vmatpush1.msra.mxu0 %v327
    %2363 = vmatprep.subr.mxu0 %v332
    %2364 = vmatpush1.msra.mxu0 %v331
    %2365 = vmatprep.subr.mxu0 %v336
    %2366 = vmatpush1.msra.mxu0 %v335
    %2367 = vmatprep.subr.mxu0 0.0
    %2368 = vmatpush1.msra.mxu0 0.0
    %2369 = vmatprep.subr.mxu0 0.0
    %2370 = vmatpush1.msra.mxu0 0.0
    %2371 = vmatprep.subr.mxu0 0.0
    %2372 = vmatpush1.msra.mxu0 0.0
    %2373 = vmatprep.subr.mxu0 0.0
    %2374 = vmatpush1.msra.mxu0 0.0
    %2375 = vmatprep.subr.mxu0 0.0
    %2376 = vmatpush1.msra.mxu0 0.0
    %2377 = vmatprep.subr.mxu0 0.0
    %2378 = vmatpush1.msra.mxu0 0.0
    %2379 = vmatprep.subr.mxu0 0.0
    %2380 = vmatpush1.msra.mxu0 0.0
    %2381 = vmatprep.subr.mxu0 0.0
    %2382 = vmatpush1.msra.mxu0 0.0
    %2383 = vmatprep.subr.mxu0 0.0
    %2384 = vmatpush1.msra.mxu0 0.0
    %2385 = vmatprep.subr.mxu0 0.0
    %2386 = vmatpush1.msra.mxu0 0.0
    %2387 = vmatprep.subr.mxu0 0.0
    %2388 = vmatpush1.msra.mxu0 0.0
    %2389 = vmatprep.subr.mxu0 0.0
    %2390 = vmatpush1.msra.mxu0 0.0
    %2391 = vmatprep.subr.mxu0 0.0
    %2392 = vmatpush1.msra.mxu0 0.0
    %2393 = vmatprep.subr.mxu0 0.0
    %2394 = vmatpush1.msra.mxu0 0.0
    %2395 = vmatprep.subr.mxu0 0.0
    %2396 = vmatpush1.msra.mxu0 0.0
    %2397 = vmatprep.subr.mxu0 0.0
    %2398 = vmatpush1.msra.mxu0 0.0
    %2399 = vmatprep.mubr.f32.mxu0 0.0
    %2400 = vmatmul.mubr.f32.gmra.mrb[0].mxu0 %v2333
    %v2401 = vpop.f32.mrb[0].mxu0
    %v2402 = vadd.f32 0.0, %v2401
    %v2403 = vpop.f32.mrb[0].mxu0
    %v2404 = vadd.f32 0.0, %v2403
    %2405 = vdwg.mxu0
    %2406 = vmatprep.subr.mxu0 %v278
    %2407 = vmatpush1.msra.mxu0 %v277
    %2408 = vmatprep.subr.mxu0 %v282
    %2409 = vmatpush1.msra.mxu0 %v281
    %2410 = vmatprep.subr.mxu0 %v286
    %2411 = vmatpush1.msra.mxu0 %v285
    %2412 = vmatprep.subr.mxu0 %v290
    %2413 = vmatpush1.msra.mxu0 %v289
    %2414 = vmatprep.subr.mxu0 %v294
    %2415 = vmatpush1.msra.mxu0 %v293
    %2416 = vmatprep.subr.mxu0 %v298
    %2417 = vmatpush1.msra.mxu0 %v297
    %2418 = vmatprep.subr.mxu0 %v302
    %2419 = vmatpush1.msra.mxu0 %v301
    %2420 = vmatprep.subr.mxu0 %v306
    %2421 = vmatpush1.msra.mxu0 %v305
    %2422 = vmatprep.subr.mxu0 %v310
    %2423 = vmatpush1.msra.mxu0 %v309
    %2424 = vmatprep.subr.mxu0 %v314
    %2425 = vmatpush1.msra.mxu0 %v313
    %2426 = vmatprep.subr.mxu0 %v318
    %2427 = vmatpush1.msra.mxu0 %v317
    %2428 = vmatprep.subr.mxu0 %v322
    %2429 = vmatpush1.msra.mxu0 %v321
    %2430 = vmatprep.subr.mxu0 %v326
    %2431 = vmatpush1.msra.mxu0 %v325
    %2432 = vmatprep.subr.mxu0 %v330
    %2433 = vmatpush1.msra.mxu0 %v329
    %2434 = vmatprep.subr.mxu0 %v334
    %2435 = vmatpush1.msra.mxu0 %v333
    %2436 = vmatprep.subr.mxu0 %v338
    %2437 = vmatpush1.msra.mxu0 %v337
    %2438 = vmatprep.subr.mxu0 0.0
    %2439 = vmatpush1.msra.mxu0 0.0
    %2440 = vmatprep.subr.mxu0 0.0
    %2441 = vmatpush1.msra.mxu0 0.0
    %2442 = vmatprep.subr.mxu0 0.0
    %2443 = vmatpush1.msra.mxu0 0.0
    %2444 = vmatprep.subr.mxu0 0.0
    %2445 = vmatpush1.msra.mxu0 0.0
    %2446 = vmatprep.subr.mxu0 0.0
    %2447 = vmatpush1.msra.mxu0 0.0
    %2448 = vmatprep.subr.mxu0 0.0
    %2449 = vmatpush1.msra.mxu0 0.0
    %2450 = vmatprep.subr.mxu0 0.0
    %2451 = vmatpush1.msra.mxu0 0.0
    %2452 = vmatprep.subr.mxu0 0.0
    %2453 = vmatpush1.msra.mxu0 0.0
    %2454 = vmatprep.subr.mxu0 0.0
    %2455 = vmatpush1.msra.mxu0 0.0
    %2456 = vmatprep.subr.mxu0 0.0
    %2457 = vmatpush1.msra.mxu0 0.0
    %2458 = vmatprep.subr.mxu0 0.0
    %2459 = vmatpush1.msra.mxu0 0.0
    %2460 = vmatprep.subr.mxu0 0.0
    %2461 = vmatpush1.msra.mxu0 0.0
    %2462 = vmatprep.subr.mxu0 0.0
    %2463 = vmatpush1.msra.mxu0 0.0
    %2464 = vmatprep.subr.mxu0 0.0
    %2465 = vmatpush1.msra.mxu0 0.0
    %2466 = vmatprep.subr.mxu0 0.0
    %2467 = vmatpush1.msra.mxu0 0.0
    %2468 = vmatprep.subr.mxu0 0.0
    %2469 = vmatpush1.msra.mxu0 0.0
    %2470 = vmatprep.mubr.f32.mxu0 0.0
    %2471 = vmatmul.mubr.f32.gmra.mrb[0].mxu0 %v2333
    %v2472 = vpop.f32.mrb[0].mxu0
    %v2473 = vadd.f32 0.0, %v2472
    %v2474 = vpop.f32.mrb[0].mxu0
    %v2475 = vadd.f32 0.0, %v2474
    %2476 = vdwg.mxu0
    %v2477 = vadd.f32 %v2329, %v2402
    %v2478 = vadd.f32 %v2330, %v2404
    %v2479 = vadd.f32 %v2331, %v2473
    %v2480 = vadd.f32 %v2332, %v2475
    %v2481 = vxor.u32 %v2477, 2147483648
    %v2482 = vxor.u32 %v2478, 2147483648
    %v2483 = vxor.u32 %v2479, 2147483648
    %v2484 = vmul.f32 %v2481, 1.442695
    %v2485 = vpow.pop %v2484
    %v2486 = vmul.f32 %v2482, 1.442695
    %v2487 = vpow.pop %v2486
    %v2488 = vmul.f32 %v2483, 1.442695
    %v2489 = vpow.pop %v2488
    %v2490 = vadd.f32 %v2485, 1.0
    %v2491 = vadd.f32 %v2487, 1.0
    %v2492 = vadd.f32 %v2489, 1.0
    %v2493 = vrcp.pop %v2490
    %v2494 = vmul.f32 1.0, %v2493
    %v2495 = vrcp.pop %v2491
    %v2496 = vmul.f32 1.0, %v2495
    %v2497 = vrcp.pop %v2492
    %v2498 = vmul.f32 1.0, %v2497
    %v2499 = vtanh.pop %v2480
    %v2500 = vmul.f32 %v2496, %v2334
    %v2501 = vmul.f32 %v2494, %v2499
    %v2502 = vadd.f32 %v2500, %v2501
    %v2503 = vtanh.pop %v2502
    %v2504 = vmul.f32 %v2498, %v2503
    %2505 = vst [vmem:[#allocation4] sm:$0xff] %v2504
    %2506 = vst [vmem:[#allocation5] sm:$0xff] %v2502
    %s2507 = scalar_lea.vmem %s200, 16
    %2508 = vst [vmem:[%s2507] sm:$0xff] %v2504
    %s2509 = scalar_lea.vmem [#allocation6], 192
    %v2510 = vld [vmem:[%s2509] sm:$0xff]
    %v2511 = vld [vmem:[%s2509 + $0x8] sm:$0xff]
    %v2512 = vld [vmem:[%s2509 + $0x10] sm:$0xff]
    %v2513 = vld [vmem:[%s2509 + $0x18] sm:$0xff]
    %v2514 = vld [vmem:[#allocation2] sm:$0xff]
    %v2515 = vld [vmem:[#allocation3] sm:$0xff]
    %2516 = vmatprep.subr.mxu0 %v212
    %2517 = vmatpush1.msra.mxu0 %v211
    %2518 = vmatprep.subr.mxu0 %v216
    %2519 = vmatpush1.msra.mxu0 %v215
    %2520 = vmatprep.subr.mxu0 %v220
    %2521 = vmatpush1.msra.mxu0 %v219
    %2522 = vmatprep.subr.mxu0 %v224
    %2523 = vmatpush1.msra.mxu0 %v223
    %2524 = vmatprep.subr.mxu0 %v228
    %2525 = vmatpush1.msra.mxu0 %v227
    %2526 = vmatprep.subr.mxu0 %v232
    %2527 = vmatpush1.msra.mxu0 %v231
    %2528 = vmatprep.subr.mxu0 %v236
    %2529 = vmatpush1.msra.mxu0 %v235
    %2530 = vmatprep.subr.mxu0 %v240
    %2531 = vmatpush1.msra.mxu0 %v239
    %2532 = vmatprep.subr.mxu0 %v244
    %2533 = vmatpush1.msra.mxu0 %v243
    %2534 = vmatprep.subr.mxu0 %v248
    %2535 = vmatpush1.msra.mxu0 %v247
    %2536 = vmatprep.subr.mxu0 %v252
    %2537 = vmatpush1.msra.mxu0 %v251
    %2538 = vmatprep.subr.mxu0 %v256
    %2539 = vmatpush1.msra.mxu0 %v255
    %2540 = vmatprep.subr.mxu0 %v260
    %2541 = vmatpush1.msra.mxu0 %v259
    %2542 = vmatprep.subr.mxu0 %v264
    %2543 = vmatpush1.msra.mxu0 %v263
    %2544 = vmatprep.subr.mxu0 %v268
    %2545 = vmatpush1.msra.mxu0 %v267
    %2546 = vmatprep.subr.mxu0 %v272
    %2547 = vmatpush1.msra.mxu0 %v271
    %2548 = vmatprep.subr.mxu0 0.0
    %2549 = vmatpush1.msra.mxu0 0.0
    %2550 = vmatprep.subr.mxu0 0.0
    %2551 = vmatpush1.msra.mxu0 0.0
    %2552 = vmatprep.subr.mxu0 0.0
    %2553 = vmatpush1.msra.mxu0 0.0
    %2554 = vmatprep.subr.mxu0 0.0
    %2555 = vmatpush1.msra.mxu0 0.0
    %2556 = vmatprep.subr.mxu0 0.0
    %2557 = vmatpush1.msra.mxu0 0.0
    %2558 = vmatprep.subr.mxu0 0.0
    %2559 = vmatpush1.msra.mxu0 0.0
    %2560 = vmatprep.subr.mxu0 0.0
    %2561 = vmatpush1.msra.mxu0 0.0
    %2562 = vmatprep.subr.mxu0 0.0
    %2563 = vmatpush1.msra.mxu0 0.0
    %2564 = vmatprep.subr.mxu0 0.0
    %2565 = vmatpush1.msra.mxu0 0.0
    %2566 = vmatprep.subr.mxu0 0.0
    %2567 = vmatpush1.msra.mxu0 0.0
    %2568 = vmatprep.subr.mxu0 0.0
    %2569 = vmatpush1.msra.mxu0 0.0
    %2570 = vmatprep.subr.mxu0 0.0
    %2571 = vmatpush1.msra.mxu0 0.0
    %2572 = vmatprep.subr.mxu0 0.0
    %2573 = vmatpush1.msra.mxu0 0.0
    %2574 = vmatprep.subr.mxu0 0.0
    %2575 = vmatpush1.msra.mxu0 0.0
    %2576 = vmatprep.subr.mxu0 0.0
    %2577 = vmatpush1.msra.mxu0 0.0
    %2578 = vmatprep.subr.mxu0 0.0
    %2579 = vmatpush1.msra.mxu0 0.0
    %2580 = vmatprep.mubr.f32.mxu0 0.0
    %2581 = vmatmul.mubr.f32.gmra.mrb[0].mxu0 %v2514
    %v2582 = vpop.f32.mrb[0].mxu0
    %v2583 = vadd.f32 0.0, %v2582
    %v2584 = vpop.f32.mrb[0].mxu0
    %v2585 = vadd.f32 0.0, %v2584
    %2586 = vdwg.mxu0
    %2587 = vmatprep.subr.mxu0 %v214
    %2588 = vmatpush1.msra.mxu0 %v213
    %2589 = vmatprep.subr.mxu0 %v218
    %2590 = vmatpush1.msra.mxu0 %v217
    %2591 = vmatprep.subr.mxu0 %v222
    %2592 = vmatpush1.msra.mxu0 %v221
    %2593 = vmatprep.subr.mxu0 %v226
    %2594 = vmatpush1.msra.mxu0 %v225
    %2595 = vmatprep.subr.mxu0 %v230
    %2596 = vmatpush1.msra.mxu0 %v229
    %2597 = vmatprep.subr.mxu0 %v234
    %2598 = vmatpush1.msra.mxu0 %v233
    %2599 = vmatprep.subr.mxu0 %v238
    %2600 = vmatpush1.msra.mxu0 %v237
    %2601 = vmatprep.subr.mxu0 %v242
    %2602 = vmatpush1.msra.mxu0 %v241
    %2603 = vmatprep.subr.mxu0 %v246
    %2604 = vmatpush1.msra.mxu0 %v245
    %2605 = vmatprep.subr.mxu0 %v250
    %2606 = vmatpush1.msra.mxu0 %v249
    %2607 = vmatprep.subr.mxu0 %v254
    %2608 = vmatpush1.msra.mxu0 %v253
    %2609 = vmatprep.subr.mxu0 %v258
    %2610 = vmatpush1.msra.mxu0 %v257
    %2611 = vmatprep.subr.mxu0 %v262
    %2612 = vmatpush1.msra.mxu0 %v261
    %2613 = vmatprep.subr.mxu0 %v266
    %2614 = vmatpush1.msra.mxu0 %v265
    %2615 = vmatprep.subr.mxu0 %v270
    %2616 = vmatpush1.msra.mxu0 %v269
    %2617 = vmatprep.subr.mxu0 %v274
    %2618 = vmatpush1.msra.mxu0 %v273
    %2619 = vmatprep.subr.mxu0 0.0
    %2620 = vmatpush1.msra.mxu0 0.0
    %2621 = vmatprep.subr.mxu0 0.0
    %2622 = vmatpush1.msra.mxu0 0.0
    %2623 = vmatprep.subr.mxu0 0.0
    %2624 = vmatpush1.msra.mxu0 0.0
    %2625 = vmatprep.subr.mxu0 0.0
    %2626 = vmatpush1.msra.mxu0 0.0
    %2627 = vmatprep.subr.mxu0 0.0
    %2628 = vmatpush1.msra.mxu0 0.0
    %2629 = vmatprep.subr.mxu0 0.0
    %2630 = vmatpush1.msra.mxu0 0.0
    %2631 = vmatprep.subr.mxu0 0.0
    %2632 = vmatpush1.msra.mxu0 0.0
    %2633 = vmatprep.subr.mxu0 0.0
    %2634 = vmatpush1.msra.mxu0 0.0
    %2635 = vmatprep.subr.mxu0 0.0
    %2636 = vmatpush1.msra.mxu0 0.0
    %2637 = vmatprep.subr.mxu0 0.0
    %2638 = vmatpush1.msra.mxu0 0.0
    %2639 = vmatprep.subr.mxu0 0.0
    %2640 = vmatpush1.msra.mxu0 0.0
    %2641 = vmatprep.subr.mxu0 0.0
    %2642 = vmatpush1.msra.mxu0 0.0
    %2643 = vmatprep.subr.mxu0 0.0
    %2644 = vmatpush1.msra.mxu0 0.0
    %2645 = vmatprep.subr.mxu0 0.0
    %2646 = vmatpush1.msra.mxu0 0.0
    %2647 = vmatprep.subr.mxu0 0.0
    %2648 = vmatpush1.msra.mxu0 0.0
    %2649 = vmatprep.subr.mxu0 0.0
    %2650 = vmatpush1.msra.mxu0 0.0
    %2651 = vmatprep.mubr.f32.mxu0 0.0
    %2652 = vmatmul.mubr.f32.gmra.mrb[0].mxu0 %v2514
    %v2653 = vpop.f32.mrb[0].mxu0
    %v2654 = vadd.f32 0.0, %v2653
    %v2655 = vpop.f32.mrb[0].mxu0
    %v2656 = vadd.f32 0.0, %v2655
    %2657 = vdwg.mxu0
    %v2658 = vadd.f32 %v2510, %v2583
    %v2659 = vadd.f32 %v2511, %v2585
    %v2660 = vadd.f32 %v2512, %v2654
    %v2661 = vadd.f32 %v2513, %v2656
    %v2662 = vxor.u32 %v2658, 2147483648
    %v2663 = vxor.u32 %v2659, 2147483648
    %v2664 = vxor.u32 %v2660, 2147483648
    %v2665 = vmul.f32 %v2662, 1.442695
    %v2666 = vpow.pop %v2665
    %v2667 = vmul.f32 %v2663, 1.442695
    %v2668 = vpow.pop %v2667
    %v2669 = vmul.f32 %v2664, 1.442695
    %v2670 = vpow.pop %v2669
    %v2671 = vadd.f32 %v2666, 1.0
    %v2672 = vadd.f32 %v2668, 1.0
    %v2673 = vadd.f32 %v2670, 1.0
    %v2674 = vrcp.pop %v2671
    %v2675 = vmul.f32 1.0, %v2674
    %v2676 = vrcp.pop %v2672
    %v2677 = vmul.f32 1.0, %v2676
    %v2678 = vrcp.pop %v2673
    %v2679 = vmul.f32 1.0, %v2678
    %v2680 = vtanh.pop %v2661
    %v2681 = vmul.f32 %v2677, %v2515
    %v2682 = vmul.f32 %v2675, %v2680
    %v2683 = vadd.f32 %v2681, %v2682
    %v2684 = vtanh.pop %v2683
    %v2685 = vmul.f32 %v2679, %v2684
    %2686 = vst [vmem:[#allocation2] sm:$0xff] %v2685
    %2687 = vst [vmem:[#allocation3] sm:$0xff] %v2683
    %s2688 = scalar_lea.vmem %s4, 48
    %2689 = vst [vmem:[%s2688] sm:$0xff] %v2685
    %s2690 = scalar_lea.vmem [#allocation7], 32
    %v2691 = vld [vmem:[%s2690] sm:$0xff]
    %v2692 = vld [vmem:[%s2690 + $0x8] sm:$0xff]
    %v2693 = vld [vmem:[%s2690 + $0x10] sm:$0xff]
    %v2694 = vld [vmem:[%s2690 + $0x18] sm:$0xff]
    %v2695 = vld [vmem:[#allocation4] sm:$0xff]
    %v2696 = vld [vmem:[#allocation5] sm:$0xff]
    %2697 = vmatprep.subr.mxu0 %v276
    %2698 = vmatpush1.msra.mxu0 %v275
    %2699 = vmatprep.subr.mxu0 %v280
    %2700 = vmatpush1.msra.mxu0 %v279
    %2701 = vmatprep.subr.mxu0 %v284
    %2702 = vmatpush1.msra.mxu0 %v283
    %2703 = vmatprep.subr.mxu0 %v288
    %2704 = vmatpush1.msra.mxu0 %v287
    %2705 = vmatprep.subr.mxu0 %v292
    %2706 = vmatpush1.msra.mxu0 %v291
    %2707 = vmatprep.subr.mxu0 %v296
    %2708 = vmatpush1.msra.mxu0 %v295
    %2709 = vmatprep.subr.mxu0 %v300
    %2710 = vmatpush1.msra.mxu0 %v299
    %2711 = vmatprep.subr.mxu0 %v304
    %2712 = vmatpush1.msra.mxu0 %v303
    %2713 = vmatprep.subr.mxu0 %v308
    %2714 = vmatpush1.msra.mxu0 %v307
    %2715 = vmatprep.subr.mxu0 %v312
    %2716 = vmatpush1.msra.mxu0 %v311
    %2717 = vmatprep.subr.mxu0 %v316
    %2718 = vmatpush1.msra.mxu0 %v315
    %2719 = vmatprep.subr.mxu0 %v320
    %2720 = vmatpush1.msra.mxu0 %v319
    %2721 = vmatprep.subr.mxu0 %v324
    %2722 = vmatpush1.msra.mxu0 %v323
    %2723 = vmatprep.subr.mxu0 %v328
    %2724 = vmatpush1.msra.mxu0 %v327
    %2725 = vmatprep.subr.mxu0 %v332
    %2726 = vmatpush1.msra.mxu0 %v331
    %2727 = vmatprep.subr.mxu0 %v336
    %2728 = vmatpush1.msra.mxu0 %v335
    %2729 = vmatprep.subr.mxu0 0.0
    %2730 = vmatpush1.msra.mxu0 0.0
    %2731 = vmatprep.subr.mxu0 0.0
    %2732 = vmatpush1.msra.mxu0 0.0
    %2733 = vmatprep.subr.mxu0 0.0
    %2734 = vmatpush1.msra.mxu0 0.0
    %2735 = vmatprep.subr.mxu0 0.0
    %2736 = vmatpush1.msra.mxu0 0.0
    %2737 = vmatprep.subr.mxu0 0.0
    %2738 = vmatpush1.msra.mxu0 0.0
    %2739 = vmatprep.subr.mxu0 0.0
    %2740 = vmatpush1.msra.mxu0 0.0
    %2741 = vmatprep.subr.mxu0 0.0
    %2742 = vmatpush1.msra.mxu0 0.0
    %2743 = vmatprep.subr.mxu0 0.0
    %2744 = vmatpush1.msra.mxu0 0.0
    %2745 = vmatprep.subr.mxu0 0.0
    %2746 = vmatpush1.msra.mxu0 0.0
    %2747 = vmatprep.subr.mxu0 0.0
    %2748 = vmatpush1.msra.mxu0 0.0
    %2749 = vmatprep.subr.mxu0 0.0
    %2750 = vmatpush1.msra.mxu0 0.0
    %2751 = vmatprep.subr.mxu0 0.0
    %2752 = vmatpush1.msra.mxu0 0.0
    %2753 = vmatprep.subr.mxu0 0.0
    %2754 = vmatpush1.msra.mxu0 0.0
    %2755 = vmatprep.subr.mxu0 0.0
    %2756 = vmatpush1.msra.mxu0 0.0
    %2757 = vmatprep.subr.mxu0 0.0
    %2758 = vmatpush1.msra.mxu0 0.0
    %2759 = vmatprep.subr.mxu0 0.0
    %2760 = vmatpush1.msra.mxu0 0.0
    %2761 = vmatprep.mubr.f32.mxu0 0.0
    %2762 = vmatmul.mubr.f32.gmra.mrb[0].mxu0 %v2695
    %v2763 = vpop.f32.mrb[0].mxu0
    %v2764 = vadd.f32 0.0, %v2763
    %v2765 = vpop.f32.mrb[0].mxu0
    %v2766 = vadd.f32 0.0, %v2765
    %2767 = vdwg.mxu0
    %2768 = vmatprep.subr.mxu0 %v278
    %2769 = vmatpush1.msra.mxu0 %v277
    %2770 = vmatprep.subr.mxu0 %v282
    %2771 = vmatpush1.msra.mxu0 %v281
    %2772 = vmatprep.subr.mxu0 %v286
    %2773 = vmatpush1.msra.mxu0 %v285
    %2774 = vmatprep.subr.mxu0 %v290
    %2775 = vmatpush1.msra.mxu0 %v289
    %2776 = vmatprep.subr.mxu0 %v294
    %2777 = vmatpush1.msra.mxu0 %v293
    %2778 = vmatprep.subr.mxu0 %v298
    %2779 = vmatpush1.msra.mxu0 %v297
    %2780 = vmatprep.subr.mxu0 %v302
    %2781 = vmatpush1.msra.mxu0 %v301
    %2782 = vmatprep.subr.mxu0 %v306
    %2783 = vmatpush1.msra.mxu0 %v305
    %2784 = vmatprep.subr.mxu0 %v310
    %2785 = vmatpush1.msra.mxu0 %v309
    %2786 = vmatprep.subr.mxu0 %v314
    %2787 = vmatpush1.msra.mxu0 %v313
    %2788 = vmatprep.subr.mxu0 %v318
    %2789 = vmatpush1.msra.mxu0 %v317
    %2790 = vmatprep.subr.mxu0 %v322
    %2791 = vmatpush1.msra.mxu0 %v321
    %2792 = vmatprep.subr.mxu0 %v326
    %2793 = vmatpush1.msra.mxu0 %v325
    %2794 = vmatprep.subr.mxu0 %v330
    %2795 = vmatpush1.msra.mxu0 %v329
    %2796 = vmatprep.subr.mxu0 %v334
    %2797 = vmatpush1.msra.mxu0 %v333
    %2798 = vmatprep.subr.mxu0 %v338
    %2799 = vmatpush1.msra.mxu0 %v337
    %2800 = vmatprep.subr.mxu0 0.0
    %2801 = vmatpush1.msra.mxu0 0.0
    %2802 = vmatprep.subr.mxu0 0.0
    %2803 = vmatpush1.msra.mxu0 0.0
    %2804 = vmatprep.subr.mxu0 0.0
    %2805 = vmatpush1.msra.mxu0 0.0
    %2806 = vmatprep.subr.mxu0 0.0
    %2807 = vmatpush1.msra.mxu0 0.0
    %2808 = vmatprep.subr.mxu0 0.0
    %2809 = vmatpush1.msra.mxu0 0.0
    %2810 = vmatprep.subr.mxu0 0.0
    %2811 = vmatpush1.msra.mxu0 0.0
    %2812 = vmatprep.subr.mxu0 0.0
    %2813 = vmatpush1.msra.mxu0 0.0
    %2814 = vmatprep.subr.mxu0 0.0
    %2815 = vmatpush1.msra.mxu0 0.0
    %2816 = vmatprep.subr.mxu0 0.0
    %2817 = vmatpush1.msra.mxu0 0.0
    %2818 = vmatprep.subr.mxu0 0.0
    %2819 = vmatpush1.msra.mxu0 0.0
    %2820 = vmatprep.subr.mxu0 0.0
    %2821 = vmatpush1.msra.mxu0 0.0
    %2822 = vmatprep.subr.mxu0 0.0
    %2823 = vmatpush1.msra.mxu0 0.0
    %2824 = vmatprep.subr.mxu0 0.0
    %2825 = vmatpush1.msra.mxu0 0.0
    %2826 = vmatprep.subr.mxu0 0.0
    %2827 = vmatpush1.msra.mxu0 0.0
    %2828 = vmatprep.subr.mxu0 0.0
    %2829 = vmatpush1.msra.mxu0 0.0
    %2830 = vmatprep.subr.mxu0 0.0
    %2831 = vmatpush1.msra.mxu0 0.0
    %2832 = vmatprep.mubr.f32.mxu0 0.0
    %2833 = vmatmul.mubr.f32.gmra.mrb[0].mxu0 %v2695
    %v2834 = vpop.f32.mrb[0].mxu0
    %v2835 = vadd.f32 0.0, %v2834
    %v2836 = vpop.f32.mrb[0].mxu0
    %v2837 = vadd.f32 0.0, %v2836
    %2838 = vdwg.mxu0
    %v2839 = vadd.f32 %v2691, %v2764
    %v2840 = vadd.f32 %v2692, %v2766
    %v2841 = vadd.f32 %v2693, %v2835
    %v2842 = vadd.f32 %v2694, %v2837
    %v2843 = vxor.u32 %v2839, 2147483648
    %v2844 = vxor.u32 %v2840, 2147483648
    %v2845 = vxor.u32 %v2841, 2147483648
    %v2846 = vmul.f32 %v2843, 1.442695
    %v2847 = vpow.pop %v2846
    %v2848 = vmul.f32 %v2844, 1.442695
    %v2849 = vpow.pop %v2848
    %v2850 = vmul.f32 %v2845, 1.442695
    %v2851 = vpow.pop %v2850
    %v2852 = vadd.f32 %v2847, 1.0
    %v2853 = vadd.f32 %v2849, 1.0
    %v2854 = vadd.f32 %v2851, 1.0
    %v2855 = vrcp.pop %v2852
    %v2856 = vmul.f32 1.0, %v2855
    %v2857 = vrcp.pop %v2853
    %v2858 = vmul.f32 1.0, %v2857
    %v2859 = vrcp.pop %v2854
    %v2860 = vmul.f32 1.0, %v2859
    %v2861 = vtanh.pop %v2842
    %v2862 = vmul.f32 %v2858, %v2696
    %v2863 = vmul.f32 %v2856, %v2861
    %v2864 = vadd.f32 %v2862, %v2863
    %v2865 = vtanh.pop %v2864
    %v2866 = vmul.f32 %v2860, %v2865
    %2867 = vst [vmem:[#allocation4] sm:$0xff] %v2866
    %2868 = vst [vmem:[#allocation5] sm:$0xff] %v2864
    %s2869 = scalar_lea.vmem %s200, 8
    %2870 = vst [vmem:[%s2869] sm:$0xff] %v2866
    %s2871 = scalar_lea.vmem [#allocation6], 224
    %v2872 = vld [vmem:[%s2871] sm:$0xff]
    %v2873 = vld [vmem:[%s2871 + $0x8] sm:$0xff]
    %v2874 = vld [vmem:[%s2871 + $0x10] sm:$0xff]
    %v2875 = vld [vmem:[%s2871 + $0x18] sm:$0xff]
    %v2876 = vld [vmem:[#allocation2] sm:$0xff]
    %v2877 = vld [vmem:[#allocation3] sm:$0xff]
    %2878 = vmatprep.subr.mxu0 %v212
    %2879 = vmatpush1.msra.mxu0 %v211
    %2880 = vmatprep.subr.mxu0 %v216
    %2881 = vmatpush1.msra.mxu0 %v215
    %2882 = vmatprep.subr.mxu0 %v220
    %2883 = vmatpush1.msra.mxu0 %v219
    %2884 = vmatprep.subr.mxu0 %v224
    %2885 = vmatpush1.msra.mxu0 %v223
    %2886 = vmatprep.subr.mxu0 %v228
    %2887 = vmatpush1.msra.mxu0 %v227
    %2888 = vmatprep.subr.mxu0 %v232
    %2889 = vmatpush1.msra.mxu0 %v231
    %2890 = vmatprep.subr.mxu0 %v236
    %2891 = vmatpush1.msra.mxu0 %v235
    %2892 = vmatprep.subr.mxu0 %v240
    %2893 = vmatpush1.msra.mxu0 %v239
    %2894 = vmatprep.subr.mxu0 %v244
    %2895 = vmatpush1.msra.mxu0 %v243
    %2896 = vmatprep.subr.mxu0 %v248
    %2897 = vmatpush1.msra.mxu0 %v247
    %2898 = vmatprep.subr.mxu0 %v252
    %2899 = vmatpush1.msra.mxu0 %v251
    %2900 = vmatprep.subr.mxu0 %v256
    %2901 = vmatpush1.msra.mxu0 %v255
    %2902 = vmatprep.subr.mxu0 %v260
    %2903 = vmatpush1.msra.mxu0 %v259
    %2904 = vmatprep.subr.mxu0 %v264
    %2905 = vmatpush1.msra.mxu0 %v263
    %2906 = vmatprep.subr.mxu0 %v268
    %2907 = vmatpush1.msra.mxu0 %v267
    %2908 = vmatprep.subr.mxu0 %v272
    %2909 = vmatpush1.msra.mxu0 %v271
    %2910 = vmatprep.subr.mxu0 0.0
    %2911 = vmatpush1.msra.mxu0 0.0
    %2912 = vmatprep.subr.mxu0 0.0
    %2913 = vmatpush1.msra.mxu0 0.0
    %2914 = vmatprep.subr.mxu0 0.0
    %2915 = vmatpush1.msra.mxu0 0.0
    %2916 = vmatprep.subr.mxu0 0.0
    %2917 = vmatpush1.msra.mxu0 0.0
    %2918 = vmatprep.subr.mxu0 0.0
    %2919 = vmatpush1.msra.mxu0 0.0
    %2920 = vmatprep.subr.mxu0 0.0
    %2921 = vmatpush1.msra.mxu0 0.0
    %2922 = vmatprep.subr.mxu0 0.0
    %2923 = vmatpush1.msra.mxu0 0.0
    %2924 = vmatprep.subr.mxu0 0.0
    %2925 = vmatpush1.msra.mxu0 0.0
    %2926 = vmatprep.subr.mxu0 0.0
    %2927 = vmatpush1.msra.mxu0 0.0
    %2928 = vmatprep.subr.mxu0 0.0
    %2929 = vmatpush1.msra.mxu0 0.0
    %2930 = vmatprep.subr.mxu0 0.0
    %2931 = vmatpush1.msra.mxu0 0.0
    %2932 = vmatprep.subr.mxu0 0.0
    %2933 = vmatpush1.msra.mxu0 0.0
    %2934 = vmatprep.subr.mxu0 0.0
    %2935 = vmatpush1.msra.mxu0 0.0
    %2936 = vmatprep.subr.mxu0 0.0
    %2937 = vmatpush1.msra.mxu0 0.0
    %2938 = vmatprep.subr.mxu0 0.0
    %2939 = vmatpush1.msra.mxu0 0.0
    %2940 = vmatprep.subr.mxu0 0.0
    %2941 = vmatpush1.msra.mxu0 0.0
    %2942 = vmatprep.mubr.f32.mxu0 0.0
    %2943 = vmatmul.mubr.f32.gmra.mrb[0].mxu0 %v2876
    %v2944 = vpop.f32.mrb[0].mxu0
    %v2945 = vadd.f32 0.0, %v2944
    %v2946 = vpop.f32.mrb[0].mxu0
    %v2947 = vadd.f32 0.0, %v2946
    %2948 = vdwg.mxu0
    %2949 = vmatprep.subr.mxu0 %v214
    %2950 = vmatpush1.msra.mxu0 %v213
    %2951 = vmatprep.subr.mxu0 %v218
    %2952 = vmatpush1.msra.mxu0 %v217
    %2953 = vmatprep.subr.mxu0 %v222
    %2954 = vmatpush1.msra.mxu0 %v221
    %2955 = vmatprep.subr.mxu0 %v226
    %2956 = vmatpush1.msra.mxu0 %v225
    %2957 = vmatprep.subr.mxu0 %v230
    %2958 = vmatpush1.msra.mxu0 %v229
    %2959 = vmatprep.subr.mxu0 %v234
    %2960 = vmatpush1.msra.mxu0 %v233
    %2961 = vmatprep.subr.mxu0 %v238
    %2962 = vmatpush1.msra.mxu0 %v237
    %2963 = vmatprep.subr.mxu0 %v242
    %2964 = vmatpush1.msra.mxu0 %v241
    %2965 = vmatprep.subr.mxu0 %v246
    %2966 = vmatpush1.msra.mxu0 %v245
    %2967 = vmatprep.subr.mxu0 %v250
    %2968 = vmatpush1.msra.mxu0 %v249
    %2969 = vmatprep.subr.mxu0 %v254
    %2970 = vmatpush1.msra.mxu0 %v253
    %2971 = vmatprep.subr.mxu0 %v258
    %2972 = vmatpush1.msra.mxu0 %v257
    %2973 = vmatprep.subr.mxu0 %v262
    %2974 = vmatpush1.msra.mxu0 %v261
    %2975 = vmatprep.subr.mxu0 %v266
    %2976 = vmatpush1.msra.mxu0 %v265
    %2977 = vmatprep.subr.mxu0 %v270
    %2978 = vmatpush1.msra.mxu0 %v269
    %2979 = vmatprep.subr.mxu0 %v274
    %2980 = vmatpush1.msra.mxu0 %v273
    %2981 = vmatprep.subr.mxu0 0.0
    %2982 = vmatpush1.msra.mxu0 0.0
    %2983 = vmatprep.subr.mxu0 0.0
    %2984 = vmatpush1.msra.mxu0 0.0
    %2985 = vmatprep.subr.mxu0 0.0
    %2986 = vmatpush1.msra.mxu0 0.0
    %2987 = vmatprep.subr.mxu0 0.0
    %2988 = vmatpush1.msra.mxu0 0.0
    %2989 = vmatprep.subr.mxu0 0.0
    %2990 = vmatpush1.msra.mxu0 0.0
    %2991 = vmatprep.subr.mxu0 0.0
    %2992 = vmatpush1.msra.mxu0 0.0
    %2993 = vmatprep.subr.mxu0 0.0
    %2994 = vmatpush1.msra.mxu0 0.0
    %2995 = vmatprep.subr.mxu0 0.0
    %2996 = vmatpush1.msra.mxu0 0.0
    %2997 = vmatprep.subr.mxu0 0.0
    %2998 = vmatpush1.msra.mxu0 0.0
    %2999 = vmatprep.subr.mxu0 0.0
    %3000 = vmatpush1.msra.mxu0 0.0
    %3001 = vmatprep.subr.mxu0 0.0
    %3002 = vmatpush1.msra.mxu0 0.0
    %3003 = vmatprep.subr.mxu0 0.0
    %3004 = vmatpush1.msra.mxu0 0.0
    %3005 = vmatprep.subr.mxu0 0.0
    %3006 = vmatpush1.msra.mxu0 0.0
    %3007 = vmatprep.subr.mxu0 0.0
    %3008 = vmatpush1.msra.mxu0 0.0
    %3009 = vmatprep.subr.mxu0 0.0
    %3010 = vmatpush1.msra.mxu0 0.0
    %3011 = vmatprep.subr.mxu0 0.0
    %3012 = vmatpush1.msra.mxu0 0.0
    %3013 = vmatprep.mubr.f32.mxu0 0.0
    %3014 = vmatmul.mubr.f32.gmra.mrb[0].mxu0 %v2876
    %v3015 = vpop.f32.mrb[0].mxu0
    %v3016 = vadd.f32 0.0, %v3015
    %v3017 = vpop.f32.mrb[0].mxu0
    %v3018 = vadd.f32 0.0, %v3017
    %3019 = vdwg.mxu0
    %v3020 = vadd.f32 %v2872, %v2945
    %v3021 = vadd.f32 %v2873, %v2947
    %v3022 = vadd.f32 %v2874, %v3016
    %v3023 = vadd.f32 %v2875, %v3018
    %v3024 = vxor.u32 %v3020, 2147483648
    %v3025 = vxor.u32 %v3021, 2147483648
    %v3026 = vxor.u32 %v3022, 2147483648
    %v3027 = vmul.f32 %v3024, 1.442695
    %v3028 = vpow.pop %v3027
    %v3029 = vmul.f32 %v3025, 1.442695
    %v3030 = vpow.pop %v3029
    %v3031 = vmul.f32 %v3026, 1.442695
    %v3032 = vpow.pop %v3031
    %v3033 = vadd.f32 %v3028, 1.0
    %v3034 = vadd.f32 %v3030, 1.0
    %v3035 = vadd.f32 %v3032, 1.0
    %v3036 = vrcp.pop %v3033
    %v3037 = vmul.f32 1.0, %v3036
    %v3038 = vrcp.pop %v3034
    %v3039 = vmul.f32 1.0, %v3038
    %v3040 = vrcp.pop %v3035
    %v3041 = vmul.f32 1.0, %v3040
    %v3042 = vtanh.pop %v3023
    %v3043 = vmul.f32 %v3039, %v2877
    %v3044 = vmul.f32 %v3037, %v3042
    %v3045 = vadd.f32 %v3043, %v3044
    %v3046 = vtanh.pop %v3045
    %v3047 = vmul.f32 %v3041, %v3046
    %3048 = vst [vmem:[#allocation2] sm:$0xff] %v3047
    %3049 = vst [vmem:[#allocation3] sm:$0xff] %v3045
    %s3050 = scalar_lea.vmem %s4, 56
    %3051 = vst [vmem:[%s3050] sm:$0xff] %v3047
    %v3052 = vld [vmem:[#allocation7] sm:$0xff]
    %v3053 = vld [vmem:[#allocation7 + $0x8] sm:$0xff]
    %v3054 = vld [vmem:[#allocation7 + $0x10] sm:$0xff]
    %v3055 = vld [vmem:[#allocation7 + $0x18] sm:$0xff]
    %v3056 = vld [vmem:[#allocation4] sm:$0xff]
    %v3057 = vld [vmem:[#allocation5] sm:$0xff]
    %3058 = vmatprep.subr.mxu0 %v276
    %3059 = vmatpush1.msra.mxu0 %v275
    %3060 = vmatprep.subr.mxu0 %v280
    %3061 = vmatpush1.msra.mxu0 %v279
    %3062 = vmatprep.subr.mxu0 %v284
    %3063 = vmatpush1.msra.mxu0 %v283
    %3064 = vmatprep.subr.mxu0 %v288
    %3065 = vmatpush1.msra.mxu0 %v287
    %3066 = vmatprep.subr.mxu0 %v292
    %3067 = vmatpush1.msra.mxu0 %v291
    %3068 = vmatprep.subr.mxu0 %v296
    %3069 = vmatpush1.msra.mxu0 %v295
    %3070 = vmatprep.subr.mxu0 %v300
    %3071 = vmatpush1.msra.mxu0 %v299
    %3072 = vmatprep.subr.mxu0 %v304
    %3073 = vmatpush1.msra.mxu0 %v303
    %3074 = vmatprep.subr.mxu0 %v308
    %3075 = vmatpush1.msra.mxu0 %v307
    %3076 = vmatprep.subr.mxu0 %v312
    %3077 = vmatpush1.msra.mxu0 %v311
    %3078 = vmatprep.subr.mxu0 %v316
    %3079 = vmatpush1.msra.mxu0 %v315
    %3080 = vmatprep.subr.mxu0 %v320
    %3081 = vmatpush1.msra.mxu0 %v319
    %3082 = vmatprep.subr.mxu0 %v324
    %3083 = vmatpush1.msra.mxu0 %v323
    %3084 = vmatprep.subr.mxu0 %v328
    %3085 = vmatpush1.msra.mxu0 %v327
    %3086 = vmatprep.subr.mxu0 %v332
    %3087 = vmatpush1.msra.mxu0 %v331
    %3088 = vmatprep.subr.mxu0 %v336
    %3089 = vmatpush1.msra.mxu0 %v335
    %3090 = vmatprep.subr.mxu0 0.0
    %3091 = vmatpush1.msra.mxu0 0.0
    %3092 = vmatprep.subr.mxu0 0.0
    %3093 = vmatpush1.msra.mxu0 0.0
    %3094 = vmatprep.subr.mxu0 0.0
    %3095 = vmatpush1.msra.mxu0 0.0
    %3096 = vmatprep.subr.mxu0 0.0
    %3097 = vmatpush1.msra.mxu0 0.0
    %3098 = vmatprep.subr.mxu0 0.0
    %3099 = vmatpush1.msra.mxu0 0.0
    %3100 = vmatprep.subr.mxu0 0.0
    %3101 = vmatpush1.msra.mxu0 0.0
    %3102 = vmatprep.subr.mxu0 0.0
    %3103 = vmatpush1.msra.mxu0 0.0
    %3104 = vmatprep.subr.mxu0 0.0
    %3105 = vmatpush1.msra.mxu0 0.0
    %3106 = vmatprep.subr.mxu0 0.0
    %3107 = vmatpush1.msra.mxu0 0.0
    %3108 = vmatprep.subr.mxu0 0.0
    %3109 = vmatpush1.msra.mxu0 0.0
    %3110 = vmatprep.subr.mxu0 0.0
    %3111 = vmatpush1.msra.mxu0 0.0
    %3112 = vmatprep.subr.mxu0 0.0
    %3113 = vmatpush1.msra.mxu0 0.0
    %3114 = vmatprep.subr.mxu0 0.0
    %3115 = vmatpush1.msra.mxu0 0.0
    %3116 = vmatprep.subr.mxu0 0.0
    %3117 = vmatpush1.msra.mxu0 0.0
    %3118 = vmatprep.subr.mxu0 0.0
    %3119 = vmatpush1.msra.mxu0 0.0
    %3120 = vmatprep.subr.mxu0 0.0
    %3121 = vmatpush1.msra.mxu0 0.0
    %3122 = vmatprep.mubr.f32.mxu0 0.0
    %3123 = vmatmul.mubr.f32.gmra.mrb[0].mxu0 %v3056
    %v3124 = vpop.f32.mrb[0].mxu0
    %v3125 = vadd.f32 0.0, %v3124
    %v3126 = vpop.f32.mrb[0].mxu0
    %v3127 = vadd.f32 0.0, %v3126
    %3128 = vdwg.mxu0
    %3129 = vmatprep.subr.mxu0 %v278
    %3130 = vmatpush1.msra.mxu0 %v277
    %3131 = vmatprep.subr.mxu0 %v282
    %3132 = vmatpush1.msra.mxu0 %v281
    %3133 = vmatprep.subr.mxu0 %v286
    %3134 = vmatpush1.msra.mxu0 %v285
    %3135 = vmatprep.subr.mxu0 %v290
    %3136 = vmatpush1.msra.mxu0 %v289
    %3137 = vmatprep.subr.mxu0 %v294
    %3138 = vmatpush1.msra.mxu0 %v293
    %3139 = vmatprep.subr.mxu0 %v298
    %3140 = vmatpush1.msra.mxu0 %v297
    %3141 = vmatprep.subr.mxu0 %v302
    %3142 = vmatpush1.msra.mxu0 %v301
    %3143 = vmatprep.subr.mxu0 %v306
    %3144 = vmatpush1.msra.mxu0 %v305
    %3145 = vmatprep.subr.mxu0 %v310
    %3146 = vmatpush1.msra.mxu0 %v309
    %3147 = vmatprep.subr.mxu0 %v314
    %3148 = vmatpush1.msra.mxu0 %v313
    %3149 = vmatprep.subr.mxu0 %v318
    %3150 = vmatpush1.msra.mxu0 %v317
    %3151 = vmatprep.subr.mxu0 %v322
    %3152 = vmatpush1.msra.mxu0 %v321
    %3153 = vmatprep.subr.mxu0 %v326
    %3154 = vmatpush1.msra.mxu0 %v325
    %3155 = vmatprep.subr.mxu0 %v330
    %3156 = vmatpush1.msra.mxu0 %v329
    %3157 = vmatprep.subr.mxu0 %v334
    %3158 = vmatpush1.msra.mxu0 %v333
    %3159 = vmatprep.subr.mxu0 %v338
    %3160 = vmatpush1.msra.mxu0 %v337
    %3161 = vmatprep.subr.mxu0 0.0
    %3162 = vmatpush1.msra.mxu0 0.0
    %3163 = vmatprep.subr.mxu0 0.0
    %3164 = vmatpush1.msra.mxu0 0.0
    %3165 = vmatprep.subr.mxu0 0.0
    %3166 = vmatpush1.msra.mxu0 0.0
    %3167 = vmatprep.subr.mxu0 0.0
    %3168 = vmatpush1.msra.mxu0 0.0
    %3169 = vmatprep.subr.mxu0 0.0
    %3170 = vmatpush1.msra.mxu0 0.0
    %3171 = vmatprep.subr.mxu0 0.0
    %3172 = vmatpush1.msra.mxu0 0.0
    %3173 = vmatprep.subr.mxu0 0.0
    %3174 = vmatpush1.msra.mxu0 0.0
    %3175 = vmatprep.subr.mxu0 0.0
    %3176 = vmatpush1.msra.mxu0 0.0
    %3177 = vmatprep.subr.mxu0 0.0
    %3178 = vmatpush1.msra.mxu0 0.0
    %3179 = vmatprep.subr.mxu0 0.0
    %3180 = vmatpush1.msra.mxu0 0.0
    %3181 = vmatprep.subr.mxu0 0.0
    %3182 = vmatpush1.msra.mxu0 0.0
    %3183 = vmatprep.subr.mxu0 0.0
    %3184 = vmatpush1.msra.mxu0 0.0
    %3185 = vmatprep.subr.mxu0 0.0
    %3186 = vmatpush1.msra.mxu0 0.0
    %3187 = vmatprep.subr.mxu0 0.0
    %3188 = vmatpush1.msra.mxu0 0.0
    %3189 = vmatprep.subr.mxu0 0.0
    %3190 = vmatpush1.msra.mxu0 0.0
    %3191 = vmatprep.subr.mxu0 0.0
    %3192 = vmatpush1.msra.mxu0 0.0
    %3193 = vmatprep.mubr.f32.mxu0 0.0
    %3194 = vmatmul.mubr.f32.gmra.mrb[0].mxu0 %v3056
    %v3195 = vpop.f32.mrb[0].mxu0
    %v3196 = vadd.f32 0.0, %v3195
    %v3197 = vpop.f32.mrb[0].mxu0
    %v3198 = vadd.f32 0.0, %v3197
    %3199 = vdwg.mxu0
    %v3200 = vadd.f32 %v3052, %v3125
    %v3201 = vadd.f32 %v3053, %v3127
    %v3202 = vadd.f32 %v3054, %v3196
    %v3203 = vadd.f32 %v3055, %v3198
    %v3204 = vxor.u32 %v3200, 2147483648
    %v3205 = vxor.u32 %v3201, 2147483648
    %v3206 = vxor.u32 %v3202, 2147483648
    %v3207 = vmul.f32 %v3204, 1.442695
    %v3208 = vpow.pop %v3207
    %v3209 = vmul.f32 %v3205, 1.442695
    %v3210 = vpow.pop %v3209
    %v3211 = vmul.f32 %v3206, 1.442695
    %v3212 = vpow.pop %v3211
    %v3213 = vadd.f32 %v3208, 1.0
    %v3214 = vadd.f32 %v3210, 1.0
    %v3215 = vadd.f32 %v3212, 1.0
    %v3216 = vrcp.pop %v3213
    %v3217 = vmul.f32 1.0, %v3216
    %v3218 = vrcp.pop %v3214
    %v3219 = vmul.f32 1.0, %v3218
    %v3220 = vrcp.pop %v3215
    %v3221 = vmul.f32 1.0, %v3220
    %v3222 = vtanh.pop %v3203
    %v3223 = vmul.f32 %v3219, %v3057
    %v3224 = vmul.f32 %v3217, %v3222
    %v3225 = vadd.f32 %v3223, %v3224
    %v3226 = vtanh.pop %v3225
    %v3227 = vmul.f32 %v3221, %v3226
    %3228 = vst [vmem:[#allocation4] sm:$0xff] %v3227
    %3229 = vst [vmem:[#allocation5] sm:$0xff] %v3225
    %3230 = vst [vmem:[%s200] sm:$0xff] %v3227
    %s3231 = ssub.s32 0, 0
    %s3232 = smul.u32 8, %s3231
    %p3233 = scmp.lt.s32.totalorder %s3232, 7
    %s3234 = scalar_select %p3233, %s3232, 7
    %s3235 = smul.addr %s3234, 8
    %s3236 = scalar_lea.vmem %s5, %s3235
    // Predicated region
    $region68: #{rnn_forward.5} parent=1 // pred_check
      _
    $region69: #{rnn_forward.5} parent=1 // pred_check_branch
      %3238 = sbr.rel (0) target = $region71
    $region70: #{rnn_forward.5} parent=1 // pred_region
      _
    $region71: #{rnn_forward.5} parent=1 // pred_fallthru
      _
    // Predicated region
    $region72: #{rnn_forward.5} parent=1 // pred_check
      _
    $region73: #{rnn_forward.5} parent=1 // pred_check_branch
      %3240 = sbr.rel (0) target = $region75
    $region74: #{rnn_forward.5} parent=1 // pred_region
      %s3241 = ssub.s32 0, 0
      %s3242 = smul.u32 8, %s3241
    $region75: #{rnn_forward.5} parent=1 // pred_fallthru
      _
    // Predicated region
    $region76: #{rnn_forward.5} parent=1 // pred_check
      _
    $region77: #{rnn_forward.5} parent=1 // pred_check_branch
      %3244 = sbr.rel (0) target = $region79
    $region78: #{rnn_forward.5} parent=1 // pred_region
      _
    $region79: #{rnn_forward.5} parent=1 // pred_fallthru
      _
    // Predicated region
    $region80: #{rnn_forward.5} parent=1 // pred_check
      _
    $region81: #{rnn_forward.5} parent=1 // pred_check_branch
      %3246 = sbr.rel (0) target = $region83
    $region82: #{rnn_forward.5} parent=1 // pred_region
      %s3247 = ssub.s32 0, 0
      %s3248 = smul.u32 8, %s3247
      %p3249 = scmp.lt.s32.totalorder %s3248, 7
      %s3250 = scalar_select %p3249, %s3248, 7
      %s3251 = smul.addr %s3250, 8
      %s3252 = scalar_lea.vmem %s5, %s3251
    $region83: #{rnn_forward.5} parent=1 // pred_fallthru
      _

</llo_original>
